<compile_context>
chip_gen: v5e
topology: v5e:2x2
jax: 0.10.0
libtpu: 0.0.40
codegen_flags: <defaults>
</compile_context>

<pallas_src>
import functools

import jax
import jax.numpy as jnp
from jax.experimental import pallas as pl
from jax.experimental.pallas import tpu as pltpu


_TILE_MAX = 2048                      # max output rows per grid step
_TILE_BUDGET_BYTES = 10 * 1024 * 1024 # in-kernel working-set target per step
_VMEM_LIMIT_CACHE = None


def _cdiv(a, m):
    return -(-a // m)


def _round_up(a, m):
    return _cdiv(a, m) * m


def _vmem_limit_bytes():
    global _VMEM_LIMIT_CACHE
    if _VMEM_LIMIT_CACHE is None:
        cap = 64 * 1024 * 1024                      # v7x-safe fallback
        try:
            cap = int(getattr(pltpu.get_tpu_info(), "vmem_capacity_bytes", cap)) or cap
        except Exception:
            pass
        _VMEM_LIMIT_CACHE = max(32 * 1024 * 1024,
                                min((cap * 7) // 10, 96 * 1024 * 1024))
    return _VMEM_LIMIT_CACHE


# ----------------------------------------------------------------------------
# Pallas kernel: (pre-LeakyReLU) -> im2col conv1d -> bias -> (+residuals)
#                -> (*scale) -> (tanh); boundaries handled by row masking.
# ----------------------------------------------------------------------------
def _conv1d_kernel(*refs, K, dilation, t_in, t_tile, halo_blk, pad_left,
                   pre_leaky, post_tanh, n_res, out_scale):
    xm_ref, xl_ref, xr_ref, w_ref, b_ref = refs[:5]
    res_refs = refs[5:5 + n_res]
    o_ref = refs[5 + n_res]

    base = pl.program_id(1) * t_tile        # first output row of this tile

    def _prep(block, g0):
        # Zero rows whose global input index is outside [0, t_in); fuse the
        # LeakyReLU pre-activation (leaky(0) == 0 keeps padding invariant).
        rows = block.shape[0]
        g = g0 + jax.lax.broadcasted_iota(jnp.int32, (rows, 1), 0)
        valid = (g >= 0) & (g < t_in)
        v = jnp.where(valid, block, jnp.zeros_like(block))
        if pre_leaky is not None:
            v32 = v.astype(jnp.float32)
            v = jnp.where(v32 >= 0, v32,
                          jnp.float32(pre_leaky) * v32).astype(block.dtype)
        return v

    xl = _prep(xl_ref[0], base - halo_blk)          # (halo_blk, Cin)
    xm = _prep(xm_ref[0], base)                     # (t_tile,  Cin)
    xr = _prep(xr_ref[0], base + t_tile)            # (halo_blk, Cin)
    win = jnp.concatenate([xl, xm, xr], axis=0)     # (t_tile + 2*halo_blk, Cin)

    off0 = halo_blk - pad_left
    cols = [win[off0 + k * dilation: off0 + k * dilation + t_tile, :]
            for k in range(K)]
    im2col = cols[0] if K == 1 else jnp.concatenate(cols, axis=1)

    acc = jnp.dot(im2col, w_ref[...], preferred_element_type=jnp.float32)
    acc = acc + b_ref[...]                          # (1, Cout) f32 broadcast
    for r_ref in res_refs:
        acc = acc + r_ref[0].astype(jnp.float32)
    if out_scale != 1.0:
        acc = acc * jnp.float32(out_scale)
    if post_tanh:
        acc = jnp.tanh(acc)
    o_ref[0] = acc.astype(o_ref.dtype)


# ----------------------------------------------------------------------------
# Tiled conv1d: out[b, q, :] = sum_k x[b, q + k*d - pad_left, :] @ w[k]
# (rows of x outside [0, T) are treated as zero; no padded copies are made)
# ----------------------------------------------------------------------------
def conv1d_pallas(x, w, b, *, dilation=1, pad_left=0, out_len,
                  pre_leaky=None, post_tanh=False, residuals=(),
                  out_scale=1.0, out_dtype=jnp.bfloat16):
    B, T_in, Cin = x.shape
    K, _, Cout = w.shape
    halo = dilation * (K - 1)
    halo_blk = _round_up(max(halo, pad_left, 1), 16)   # bf16 sublane packing

    n_res = len(residuals)
    per_row = (2 * K * Cin            # im2col window (bf16)
               + 6 * Cin              # x tile (double-buffered) + window copy
               + 4 * Cout             # f32 accumulator
               + 4 * Cout             # output tile (double-buffered)
               + n_res * 4 * Cout)    # residual tiles (double-buffered)
    t_tile = min(_TILE_BUDGET_BYTES // max(per_row, 1), _TILE_MAX,
                 _round_up(out_len, halo_blk))
    if out_len > 2 * halo_blk:        # keep >=2 time tiles for the 2 v7x cores
        t_tile = min(t_tile, _round_up(_cdiv(out_len, 2), halo_blk))
    t_tile = max(halo_blk, (t_tile // halo_blk) * halo_blk)
    R = t_tile // halo_blk
    n_t = _cdiv(out_len, t_tile)
    n_main = _cdiv(T_in, t_tile)
    n_halo = _cdiv(T_in, halo_blk)

    xb = x.astype(jnp.bfloat16)
    w2 = w.reshape(K * Cin, Cout).astype(jnp.bfloat16)
    bb = b.reshape(1, Cout).astype(jnp.float32)

    in_specs = [
        pl.BlockSpec((1, t_tile, Cin),
                     lambda bi, ti: (bi, jnp.minimum(ti, n_main - 1), 0)),
        pl.BlockSpec((1, halo_blk, Cin),
                     lambda bi, ti: (bi, jnp.maximum(ti * R - 1, 0), 0)),
        pl.BlockSpec((1, halo_blk, Cin),
                     lambda bi, ti: (bi, jnp.minimum((ti + 1) * R, n_halo - 1), 0)),
        pl.BlockSpec((K * Cin, Cout), lambda bi, ti: (0, 0)),
        pl.BlockSpec((1, Cout), lambda bi, ti: (0, 0)),
    ]
    inputs = [xb, xb, xb, w2, bb]
    for r in residuals:
        inputs.append(r.astype(jnp.bfloat16))
        in_specs.append(pl.BlockSpec((1, t_tile, Cout),
                                     lambda bi, ti: (bi, ti, 0)))

    kernel = functools.partial(
        _conv1d_kernel, K=K, dilation=dilation, t_in=T_in, t_tile=t_tile,
        halo_blk=halo_blk, pad_left=pad_left, pre_leaky=pre_leaky,
        post_tanh=post_tanh, n_res=n_res, out_scale=float(out_scale))

    out_itemsize = jnp.dtype(out_dtype).itemsize
    cost = pl.CostEstimate(
        flops=2 * B * out_len * K * Cin * Cout,
        transcendentals=(B * out_len * Cout) if post_tanh else 0,
        bytes_accessed=(xb.size * 2 + w2.size * 2 + bb.size * 4
                        + B * out_len * Cout * (out_itemsize + 2 * n_res)))

    return pl.pallas_call(
        kernel,
        out_shape=jax.ShapeDtypeStruct((B, out_len, Cout), out_dtype),
        grid=(B, n_t),
        in_specs=in_specs,
        out_specs=pl.BlockSpec((1, t_tile, Cout), lambda bi, ti: (bi, ti, 0)),
        compiler_params=pltpu.CompilerParams(
            dimension_semantics=("parallel", "parallel"),
            vmem_limit_bytes=_vmem_limit_bytes()),
        cost_estimate=cost,
    )(*inputs)


# ----------------------------------------------------------------------------
# ConvTranspose1d: ALL polyphase filters fused into a single conv1d call with
# a combined (W, Cin, stride*Cout) weight; interleave is a free reshape.
#   y[q*stride + r] = sum_j x[q + M0_r - j] @ wt[:, :, rem_r + j*stride]
# ----------------------------------------------------------------------------
def conv_transpose1d_pallas(x, wt, b, *, kernel_size, stride, padding,
                            pre_leaky=None):
    B, T, Cin = x.shape
    Cout = wt.shape[1]
    K = kernel_size
    L_out = (T - 1) * stride - 2 * padding + K

    if stride == 1:
        w = jnp.flip(jnp.transpose(wt, (2, 0, 1)), axis=0)    # (K, Cin, Cout)
        return conv1d_pallas(x, w, b, dilation=1, pad_left=K - 1 - padding,
                             out_len=L_out, pre_leaky=pre_leaky)

    Tq = _cdiv(L_out, stride)
    phase = []
    for r in range(stride):
        rem = (r + padding) % stride
        ks = list(range(rem, K, stride))
        Kr = len(ks)
        M0 = (r + padding) // stride
        pad_l = (Kr - 1) - M0 if Kr > 0 else 0
        phase.append((ks, Kr, M0, pad_l))
    PadL = max((p[3] for p in phase if p[1] > 0), default=0)
    M0max = max((p[2] for p in phase if p[1] > 0), default=0)
    W = PadL + M0max + 1

    # Combined polyphase conv weight (zero for taps absent from a phase).
    wc = jnp.zeros((W, Cin, stride, Cout), wt.dtype)
    for r, (ks, Kr, _M0, pad_l) in enumerate(phase):
        for jj in range(Kr):
            wc = wc.at[PadL - pad_l + jj, :, r, :].set(wt[:, :, ks[Kr - 1 - jj]])
    wc = wc.reshape(W, Cin, stride * Cout)
    bc = jnp.tile(b.reshape(1, Cout), (stride, 1)).reshape(stride * Cout)

    y = conv1d_pallas(x, wc, bc, dilation=1, pad_left=PadL, out_len=Tq,
                      pre_leaky=pre_leaky)                 # (B, Tq, stride*Cout)
    y = y.reshape(B, Tq * stride, Cout)                    # free interleave
    if Tq * stride != L_out:
        y = y[:, :L_out, :]
    return y


# ----------------------------------------------------------------------------
# Parameter initialization (deterministic, synthetic); weights stored in bf16
# ----------------------------------------------------------------------------
def init_params(key, n_mels, hidden_dim, ks_up, ks_res, dilations):
    def nrm(k, shape, dtype=jnp.float32):
        return (0.1 * jax.random.normal(k, shape, dtype=jnp.float32)).astype(dtype)

    keys = iter(jax.random.split(key, 256))
    params = {}
    params["pre_w"] = nrm(next(keys), (7, n_mels, hidden_dim), jnp.bfloat16)
    params["pre_b"] = nrm(next(keys), (hidden_dim,))

    ch = hidden_dim
    params["ups"] = []
    params["res"] = []
    for ku in ks_up:
        ch_out = ch // 2
        params["ups"].append({
            "w": nrm(next(keys), (ch, ch_out, ku), jnp.bfloat16),  # ConvT layout
            "b": nrm(next(keys), (ch_out,)),
        })
        stage = []
        for kr in ks_res:
            blk = []
            for _d in dilations:
                blk.append({
                    "w": nrm(next(keys), (kr, ch_out, ch_out), jnp.bfloat16),
                    "b": nrm(next(keys), (ch_out,)),
                })
            stage.append(blk)
        params["res"].append(stage)
        ch = ch_out

    params["post_w"] = nrm(next(keys), (7, ch, 1), jnp.bfloat16)
    params["post_b"] = nrm(next(keys), (1,))
    return params


# ----------------------------------------------------------------------------
# HiFiGAN generator forward  (HiFiGAN.forward == generator(spectrogram))
# ----------------------------------------------------------------------------
def hifigan_forward(spectrogram, params, *, ks_up, ks_res, dilations,
                    relu_slope=0.1):
    # spectrogram: (B, n_mels, T)  (PyTorch NCT)  ->  internal NTC, bf16
    x = jnp.transpose(spectrogram, (0, 2, 1)).astype(jnp.bfloat16)
    T = x.shape[1]

    # conv_pre: Conv1d(n_mels, hidden, 7, padding=3)
    x = conv1d_pallas(x, params["pre_w"], params["pre_b"],
                      dilation=1, pad_left=3, out_len=T)

    n_blocks = len(ks_res)
    for i, ku in enumerate(ks_up):
        stride = ku // 2
        padding = (ku - stride) // 2
        up = params["ups"][i]
        # LeakyReLU fused as pre-activation of the fused polyphase ConvT.
        x = conv_transpose1d_pallas(x, up["w"], up["b"], kernel_size=ku,
                                    stride=stride, padding=padding,
                                    pre_leaky=relu_slope)
        Tcur = x.shape[1]
        # MRF: per-conv residual adds, the running MRF sum and the 1/n scale
        # are all fused into the conv epilogues (no separate XLA add passes).
        acc = None
        for j, kr in enumerate(ks_res):
            xr = x
            for m, d in enumerate(dilations):
                blk = params["res"][i][j][m]
                pad = d * (kr - 1) // 2
                is_last = (m == len(dilations) - 1)
                extra = [acc] if (is_last and acc is not None) else []
                scale = (1.0 / n_blocks) if (is_last and j == n_blocks - 1) else 1.0
                xr = conv1d_pallas(xr, blk["w"], blk["b"], dilation=d,
                                   pad_left=pad, out_len=Tcur,
                                   pre_leaky=relu_slope,
                                   residuals=[xr] + extra, out_scale=scale)
            acc = xr
        x = acc

    # LeakyReLU -> conv_post(ch, 1, 7, padding=3) -> tanh (all fused), f32 out
    x = conv1d_pallas(x, params["post_w"], params["post_b"], dilation=1,
                      pad_left=3, out_len=x.shape[1], pre_leaky=relu_slope,
                      post_tanh=True, out_dtype=jnp.float32)

    # back to PyTorch NCT: (B, 1, T_out)
    return jnp.transpose(x, (0, 2, 1))


# TODO(synk): Discriminator is not exercised by HiFiGAN.forward(), so it is
# intentionally not implemented here.


if __name__ == "__main__":
    # Small, forward-consistent config.
    B, n_mels, T = 2, 8, 16
    hidden_dim = 32
    kernel_sizes_upsampling = [4, 4]      # strides 2, 2 -> T_out = 64
    kernel_sizes_residual = [3]
    dilations = [1, 3]
    relu_slope = 0.1

    key = jax.random.PRNGKey(0)
    k_spec, k_par = jax.random.split(key)
    spectrogram = jax.random.normal(k_spec, (B, n_mels, T), dtype=jnp.float32)
    params = init_params(k_par, n_mels, hidden_dim, kernel_sizes_upsampling,
                         kernel_sizes_residual, dilations)

    fwd = jax.jit(functools.partial(
        hifigan_forward,
        ks_up=tuple(kernel_sizes_upsampling),
        ks_res=tuple(kernel_sizes_residual),
        dilations=tuple(dilations),
        relu_slope=relu_slope))

    out = jax.block_until_ready(fwd(spectrogram, params))

    expected_T = T
    for ku in kernel_sizes_upsampling:
        expected_T *= ku // 2
    assert out.shape == (B, 1, expected_T), out.shape
    assert bool(jnp.all(jnp.isfinite(out)))
    assert bool(jnp.all(jnp.abs(out) <= 1.0))      # tanh output range
    print("KERNEL_OK")
</pallas_src>

<mosaic_0001>
module attributes {stable_mosaic.version = 11 : i64} {
  func.func @_conv1d_kernel(%arg0: i32, %arg1: i32, %arg2: memref<1x16x8xbf16, #tpu.memory_space<vmem>>, %arg3: memref<1x16x8xbf16, #tpu.memory_space<vmem>>, %arg4: memref<1x16x8xbf16, #tpu.memory_space<vmem>>, %arg5: memref<56x32xbf16, #tpu.memory_space<vmem>>, %arg6: memref<1x32xf32, #tpu.memory_space<vmem>>, %arg7: memref<1x16x32xbf16, #tpu.memory_space<vmem>>) attributes {dimension_semantics = [#tpu.dimension_semantics<parallel>, #tpu.dimension_semantics<parallel>], iteration_bounds = array<i64: 2, 1>, scalar_prefetch = 0 : i64, scratch_operands = 0 : i64, tpu.core_type = #tpu.core_type<tc>, window_params = [{transform_indices = @transform_0, window_bounds = array<i64: 1, 16, 8>}, {transform_indices = @transform_1, window_bounds = array<i64: 1, 16, 8>}, {transform_indices = @transform_2, window_bounds = array<i64: 1, 16, 8>}, {pipeline_mode = #tpu.pipeline_mode<synchronous>, transform_indices = @transform_3, window_bounds = array<i64: 56, 32>}, {pipeline_mode = #tpu.pipeline_mode<synchronous>, transform_indices = @transform_4, window_bounds = array<i64: 1, 32>}, {transform_indices = @transform_5, window_bounds = array<i64: 1, 16, 32>}]} {
    %c16_i32 = arith.constant 16 : i32
    %0 = arith.muli %arg1, %c16_i32 : i32
    %c0 = arith.constant 0 : index
    %c0_0 = arith.constant 0 : index
    %c0_1 = arith.constant 0 : index
    %1 = vector.load %arg3[%c0, %c0_0, %c0_1] : memref<1x16x8xbf16, #tpu.memory_space<vmem>>, vector<1x16x8xbf16>
    %2 = vector.shape_cast %1 : vector<1x16x8xbf16> to vector<16x8xbf16>
    %c16_i32_2 = arith.constant 16 : i32
    %3 = arith.subi %0, %c16_i32_2 : i32
    %4 = tpu.iota {dimensions = array<i32: 0>} : vector<16x1xi32>
    %5 = vector.broadcast %3 : i32 to vector<16x1xi32>
    %6 = arith.addi %5, %4 : vector<16x1xi32>
    %c0_i32 = arith.constant 0 : i32
    %7 = vector.broadcast %c0_i32 : i32 to vector<16x1xi32>
    %8 = arith.cmpi sge, %6, %7 : vector<16x1xi32>
    %c16_i32_3 = arith.constant 16 : i32
    %9 = vector.broadcast %c16_i32_3 : i32 to vector<16x1xi32>
    %10 = arith.cmpi slt, %6, %9 : vector<16x1xi32>
    %11 = arith.andi %8, %10 : vector<16x1xi1>
    %cst = arith.constant 0.000000e+00 : bf16
    %12 = vector.broadcast %cst : bf16 to vector<16x8xbf16>
    %13 = vector.shape_cast %11 : vector<16x1xi1> to vector<16x1xi1>
    %14 = vector.broadcast %13 : vector<16x1xi1> to vector<16x8xi1>
    %15 = arith.select %14, %2, %12 : vector<16x8xi1>, vector<16x8xbf16>
    %c0_4 = arith.constant 0 : index
    %c0_5 = arith.constant 0 : index
    %c0_6 = arith.constant 0 : index
    %16 = vector.load %arg2[%c0_4, %c0_5, %c0_6] : memref<1x16x8xbf16, #tpu.memory_space<vmem>>, vector<1x16x8xbf16>
    %17 = vector.shape_cast %16 : vector<1x16x8xbf16> to vector<16x8xbf16>
    %18 = tpu.iota {dimensions = array<i32: 0>} : vector<16x1xi32>
    %19 = vector.broadcast %0 : i32 to vector<16x1xi32>
    %20 = arith.addi %19, %18 : vector<16x1xi32>
    %c0_i32_7 = arith.constant 0 : i32
    %21 = vector.broadcast %c0_i32_7 : i32 to vector<16x1xi32>
    %22 = arith.cmpi sge, %20, %21 : vector<16x1xi32>
    %c16_i32_8 = arith.constant 16 : i32
    %23 = vector.broadcast %c16_i32_8 : i32 to vector<16x1xi32>
    %24 = arith.cmpi slt, %20, %23 : vector<16x1xi32>
    %25 = arith.andi %22, %24 : vector<16x1xi1>
    %cst_9 = arith.constant 0.000000e+00 : bf16
    %26 = vector.broadcast %cst_9 : bf16 to vector<16x8xbf16>
    %27 = vector.shape_cast %25 : vector<16x1xi1> to vector<16x1xi1>
    %28 = vector.broadcast %27 : vector<16x1xi1> to vector<16x8xi1>
    %29 = arith.select %28, %17, %26 : vector<16x8xi1>, vector<16x8xbf16>
    %c0_10 = arith.constant 0 : index
    %c0_11 = arith.constant 0 : index
    %c0_12 = arith.constant 0 : index
    %30 = vector.load %arg4[%c0_10, %c0_11, %c0_12] : memref<1x16x8xbf16, #tpu.memory_space<vmem>>, vector<1x16x8xbf16>
    %31 = vector.shape_cast %30 : vector<1x16x8xbf16> to vector<16x8xbf16>
    %c16_i32_13 = arith.constant 16 : i32
    %32 = arith.addi %0, %c16_i32_13 : i32
    %33 = tpu.iota {dimensions = array<i32: 0>} : vector<16x1xi32>
    %34 = vector.broadcast %32 : i32 to vector<16x1xi32>
    %35 = arith.addi %34, %33 : vector<16x1xi32>
    %c0_i32_14 = arith.constant 0 : i32
    %36 = vector.broadcast %c0_i32_14 : i32 to vector<16x1xi32>
    %37 = arith.cmpi sge, %35, %36 : vector<16x1xi32>
    %c16_i32_15 = arith.constant 16 : i32
    %38 = vector.broadcast %c16_i32_15 : i32 to vector<16x1xi32>
    %39 = arith.cmpi slt, %35, %38 : vector<16x1xi32>
    %40 = arith.andi %37, %39 : vector<16x1xi1>
    %cst_16 = arith.constant 0.000000e+00 : bf16
    %41 = vector.broadcast %cst_16 : bf16 to vector<16x8xbf16>
    %42 = vector.shape_cast %40 : vector<16x1xi1> to vector<16x1xi1>
    %43 = vector.broadcast %42 : vector<16x1xi1> to vector<16x8xi1>
    %44 = arith.select %43, %31, %41 : vector<16x8xi1>, vector<16x8xbf16>
    %45 = tpu.concatenate %15, %29, %44 in 0 : vector<16x8xbf16>, vector<16x8xbf16>, vector<16x8xbf16> -> vector<48x8xbf16>
    %46 = vector.extract_strided_slice %45 {offsets = [13, 0], sizes = [16, 8], strides = [1, 1]} : vector<48x8xbf16> to vector<16x8xbf16>
    %47 = vector.extract_strided_slice %45 {offsets = [14, 0], sizes = [16, 8], strides = [1, 1]} : vector<48x8xbf16> to vector<16x8xbf16>
    %48 = vector.extract_strided_slice %45 {offsets = [15, 0], sizes = [16, 8], strides = [1, 1]} : vector<48x8xbf16> to vector<16x8xbf16>
    %49 = vector.extract_strided_slice %45 {offsets = [16, 0], sizes = [16, 8], strides = [1, 1]} : vector<48x8xbf16> to vector<16x8xbf16>
    %50 = vector.extract_strided_slice %45 {offsets = [17, 0], sizes = [16, 8], strides = [1, 1]} : vector<48x8xbf16> to vector<16x8xbf16>
    %51 = vector.extract_strided_slice %45 {offsets = [18, 0], sizes = [16, 8], strides = [1, 1]} : vector<48x8xbf16> to vector<16x8xbf16>
    %52 = vector.extract_strided_slice %45 {offsets = [19, 0], sizes = [16, 8], strides = [1, 1]} : vector<48x8xbf16> to vector<16x8xbf16>
    %53 = tpu.concatenate %46, %47, %48, %49, %50, %51, %52 in 1 : vector<16x8xbf16>, vector<16x8xbf16>, vector<16x8xbf16>, vector<16x8xbf16>, vector<16x8xbf16>, vector<16x8xbf16>, vector<16x8xbf16> -> vector<16x56xbf16>
    %c0_17 = arith.constant 0 : index
    %c0_18 = arith.constant 0 : index
    %54 = vector.load %arg5[%c0_17, %c0_18] : memref<56x32xbf16, #tpu.memory_space<vmem>>, vector<56x32xbf16>
    %cst_19 = arith.constant dense<0.000000e+00> : vector<16x32xf32>
    %55 = tpu.matmul %53, %54, %cst_19 {dimension_numbers = #tpu.dot_dimension_numbers<[1], [0], [0], [1], [0, 0, 1, 1], [], []>} : vector<16x56xbf16>, vector<56x32xbf16>, vector<16x32xf32> -> vector<16x32xf32>
    %c0_20 = arith.constant 0 : index
    %c0_21 = arith.constant 0 : index
    %56 = vector.load %arg6[%c0_20, %c0_21] : memref<1x32xf32, #tpu.memory_space<vmem>>, vector<1x32xf32>
    %57 = vector.broadcast %56 : vector<1x32xf32> to vector<16x32xf32>
    %58 = arith.addf %55, %57 : vector<16x32xf32>
    %59 = arith.truncf %58 : vector<16x32xf32> to vector<16x32xbf16>
    %c0_22 = arith.constant 0 : index
    %c0_23 = arith.constant 0 : index
    %c0_24 = arith.constant 0 : index
    %60 = vector.load %arg7[%c0_22, %c0_23, %c0_24] : memref<1x16x32xbf16, #tpu.memory_space<vmem>>, vector<1x16x32xbf16>
    %61 = vector.shape_cast %60 : vector<1x16x32xbf16> to vector<16x32xbf16>
    %62 = vector.shape_cast %59 : vector<16x32xbf16> to vector<1x16x32xbf16>
    tpu.vector_store %arg7[%c0_22, %c0_23, %c0_24], %62 {strides = array<i32>} : memref<1x16x32xbf16, #tpu.memory_space<vmem>>, vector<1x16x32xbf16>,
    return
  }
  func.func @transform_0(%arg0: i32, %arg1: i32) -> (i32, i32, i32) {
    %c0_i32 = arith.constant 0 : i32
    %0 = arith.minsi %arg1, %c0_i32 : i32
    %c0_i32_0 = arith.constant 0 : i32
    %c0_i32_1 = arith.constant 0 : i32
    return %arg0, %0, %c0_i32_0 : i32, i32, i32
  }
  func.func @transform_1(%arg0: i32, %arg1: i32) -> (i32, i32, i32) {
    %c1_i32 = arith.constant 1 : i32
    %0 = arith.muli %arg1, %c1_i32 : i32
    %c1_i32_0 = arith.constant 1 : i32
    %1 = arith.subi %0, %c1_i32_0 : i32
    %c0_i32 = arith.constant 0 : i32
    %2 = arith.maxsi %1, %c0_i32 : i32
    %c0_i32_1 = arith.constant 0 : i32
    %c0_i32_2 = arith.constant 0 : i32
    return %arg0, %2, %c0_i32_1 : i32, i32, i32
  }
  func.func @transform_2(%arg0: i32, %arg1: i32) -> (i32, i32, i32) {
    %c1_i32 = arith.constant 1 : i32
    %0 = arith.addi %arg1, %c1_i32 : i32
    %c1_i32_0 = arith.constant 1 : i32
    %1 = arith.muli %0, %c1_i32_0 : i32
    %c0_i32 = arith.constant 0 : i32
    %2 = arith.minsi %1, %c0_i32 : i32
    %c0_i32_1 = arith.constant 0 : i32
    %c0_i32_2 = arith.constant 0 : i32
    return %arg0, %2, %c0_i32_1 : i32, i32, i32
  }
  func.func @transform_3(%arg0: i32, %arg1: i32) -> (i32, i32) {
    %c0_i32 = arith.constant 0 : i32
    %c0_i32_0 = arith.constant 0 : i32
    %c0_i32_1 = arith.constant 0 : i32
    return %c0_i32, %c0_i32_0 : i32, i32
  }
  func.func @transform_4(%arg0: i32, %arg1: i32) -> (i32, i32) {
    %c0_i32 = arith.constant 0 : i32
    %c0_i32_0 = arith.constant 0 : i32
    %c0_i32_1 = arith.constant 0 : i32
    return %c0_i32, %c0_i32_0 : i32, i32
  }
  func.func @transform_5(%arg0: i32, %arg1: i32) -> (i32, i32, i32) {
    %c0_i32 = arith.constant 0 : i32
    %c0_i32_0 = arith.constant 0 : i32
    return %arg0, %arg1, %c0_i32 : i32, i32, i32
  }
}

module attributes {stable_mosaic.version = 11 : i64} {
  func.func @_conv1d_kernel(%arg0: i32, %arg1: i32, %arg2: memref<1x16x32xbf16, #tpu.memory_space<vmem>>, %arg3: memref<1x16x32xbf16, #tpu.memory_space<vmem>>, %arg4: memref<1x16x32xbf16, #tpu.memory_space<vmem>>, %arg5: memref<96x32xbf16, #tpu.memory_space<vmem>>, %arg6: memref<1x32xf32, #tpu.memory_space<vmem>>, %arg7: memref<1x16x32xbf16, #tpu.memory_space<vmem>>) attributes {dimension_semantics = [#tpu.dimension_semantics<parallel>, #tpu.dimension_semantics<parallel>], iteration_bounds = array<i64: 2, 1>, scalar_prefetch = 0 : i64, scratch_operands = 0 : i64, tpu.core_type = #tpu.core_type<tc>, window_params = [{transform_indices = @transform_0, window_bounds = array<i64: 1, 16, 32>}, {transform_indices = @transform_1, window_bounds = array<i64: 1, 16, 32>}, {transform_indices = @transform_2, window_bounds = array<i64: 1, 16, 32>}, {pipeline_mode = #tpu.pipeline_mode<synchronous>, transform_indices = @transform_3, window_bounds = array<i64: 96, 32>}, {pipeline_mode = #tpu.pipeline_mode<synchronous>, transform_indices = @transform_4, window_bounds = array<i64: 1, 32>}, {transform_indices = @transform_5, window_bounds = array<i64: 1, 16, 32>}]} {
    %c16_i32 = arith.constant 16 : i32
    %0 = arith.muli %arg1, %c16_i32 : i32
    %c0 = arith.constant 0 : index
    %c0_0 = arith.constant 0 : index
    %c0_1 = arith.constant 0 : index
    %1 = vector.load %arg3[%c0, %c0_0, %c0_1] : memref<1x16x32xbf16, #tpu.memory_space<vmem>>, vector<1x16x32xbf16>
    %2 = vector.shape_cast %1 : vector<1x16x32xbf16> to vector<16x32xbf16>
    %c16_i32_2 = arith.constant 16 : i32
    %3 = arith.subi %0, %c16_i32_2 : i32
    %4 = tpu.iota {dimensions = array<i32: 0>} : vector<16x1xi32>
    %5 = vector.broadcast %3 : i32 to vector<16x1xi32>
    %6 = arith.addi %5, %4 : vector<16x1xi32>
    %c0_i32 = arith.constant 0 : i32
    %7 = vector.broadcast %c0_i32 : i32 to vector<16x1xi32>
    %8 = arith.cmpi sge, %6, %7 : vector<16x1xi32>
    %c16_i32_3 = arith.constant 16 : i32
    %9 = vector.broadcast %c16_i32_3 : i32 to vector<16x1xi32>
    %10 = arith.cmpi slt, %6, %9 : vector<16x1xi32>
    %11 = arith.andi %8, %10 : vector<16x1xi1>
    %cst = arith.constant 0.000000e+00 : bf16
    %12 = vector.broadcast %cst : bf16 to vector<16x32xbf16>
    %13 = vector.shape_cast %11 : vector<16x1xi1> to vector<16x1xi1>
    %14 = vector.broadcast %13 : vector<16x1xi1> to vector<16x32xi1>
    %15 = arith.select %14, %2, %12 : vector<16x32xi1>, vector<16x32xbf16>
    %16 = arith.extf %15 : vector<16x32xbf16> to vector<16x32xf32>
    %cst_4 = arith.constant 0.000000e+00 : f32
    %17 = vector.broadcast %cst_4 : f32 to vector<16x32xf32>
    %18 = arith.cmpf oge, %16, %17 : vector<16x32xf32>
    %cst_5 = arith.constant 1.000000e-01 : f32
    %19 = vector.broadcast %cst_5 : f32 to vector<16x32xf32>
    %20 = arith.mulf %19, %16 : vector<16x32xf32>
    %21 = arith.select %18, %16, %20 : vector<16x32xi1>, vector<16x32xf32>
    %22 = arith.truncf %21 : vector<16x32xf32> to vector<16x32xbf16>
    %c0_6 = arith.constant 0 : index
    %c0_7 = arith.constant 0 : index
    %c0_8 = arith.constant 0 : index
    %23 = vector.load %arg2[%c0_6, %c0_7, %c0_8] : memref<1x16x32xbf16, #tpu.memory_space<vmem>>, vector<1x16x32xbf16>
    %24 = vector.shape_cast %23 : vector<1x16x32xbf16> to vector<16x32xbf16>
    %25 = tpu.iota {dimensions = array<i32: 0>} : vector<16x1xi32>
    %26 = vector.broadcast %0 : i32 to vector<16x1xi32>
    %27 = arith.addi %26, %25 : vector<16x1xi32>
    %c0_i32_9 = arith.constant 0 : i32
    %28 = vector.broadcast %c0_i32_9 : i32 to vector<16x1xi32>
    %29 = arith.cmpi sge, %27, %28 : vector<16x1xi32>
    %c16_i32_10 = arith.constant 16 : i32
    %30 = vector.broadcast %c16_i32_10 : i32 to vector<16x1xi32>
    %31 = arith.cmpi slt, %27, %30 : vector<16x1xi32>
    %32 = arith.andi %29, %31 : vector<16x1xi1>
    %cst_11 = arith.constant 0.000000e+00 : bf16
    %33 = vector.broadcast %cst_11 : bf16 to vector<16x32xbf16>
    %34 = vector.shape_cast %32 : vector<16x1xi1> to vector<16x1xi1>
    %35 = vector.broadcast %34 : vector<16x1xi1> to vector<16x32xi1>
    %36 = arith.select %35, %24, %33 : vector<16x32xi1>, vector<16x32xbf16>
    %37 = arith.extf %36 : vector<16x32xbf16> to vector<16x32xf32>
    %cst_12 = arith.constant 0.000000e+00 : f32
    %38 = vector.broadcast %cst_12 : f32 to vector<16x32xf32>
    %39 = arith.cmpf oge, %37, %38 : vector<16x32xf32>
    %cst_13 = arith.constant 1.000000e-01 : f32
    %40 = vector.broadcast %cst_13 : f32 to vector<16x32xf32>
    %41 = arith.mulf %40, %37 : vector<16x32xf32>
    %42 = arith.select %39, %37, %41 : vector<16x32xi1>, vector<16x32xf32>
    %43 = arith.truncf %42 : vector<16x32xf32> to vector<16x32xbf16>
    %c0_14 = arith.constant 0 : index
    %c0_15 = arith.constant 0 : index
    %c0_16 = arith.constant 0 : index
    %44 = vector.load %arg4[%c0_14, %c0_15, %c0_16] : memref<1x16x32xbf16, #tpu.memory_space<vmem>>, vector<1x16x32xbf16>
    %45 = vector.shape_cast %44 : vector<1x16x32xbf16> to vector<16x32xbf16>
    %c16_i32_17 = arith.constant 16 : i32
    %46 = arith.addi %0, %c16_i32_17 : i32
    %47 = tpu.iota {dimensions = array<i32: 0>} : vector<16x1xi32>
    %48 = vector.broadcast %46 : i32 to vector<16x1xi32>
    %49 = arith.addi %48, %47 : vector<16x1xi32>
    %c0_i32_18 = arith.constant 0 : i32
    %50 = vector.broadcast %c0_i32_18 : i32 to vector<16x1xi32>
    %51 = arith.cmpi sge, %49, %50 : vector<16x1xi32>
    %c16_i32_19 = arith.constant 16 : i32
    %52 = vector.broadcast %c16_i32_19 : i32 to vector<16x1xi32>
    %53 = arith.cmpi slt, %49, %52 : vector<16x1xi32>
    %54 = arith.andi %51, %53 : vector<16x1xi1>
    %cst_20 = arith.constant 0.000000e+00 : bf16
    %55 = vector.broadcast %cst_20 : bf16 to vector<16x32xbf16>
    %56 = vector.shape_cast %54 : vector<16x1xi1> to vector<16x1xi1>
    %57 = vector.broadcast %56 : vector<16x1xi1> to vector<16x32xi1>
    %58 = arith.select %57, %45, %55 : vector<16x32xi1>, vector<16x32xbf16>
    %59 = arith.extf %58 : vector<16x32xbf16> to vector<16x32xf32>
    %cst_21 = arith.constant 0.000000e+00 : f32
    %60 = vector.broadcast %cst_21 : f32 to vector<16x32xf32>
    %61 = arith.cmpf oge, %59, %60 : vector<16x32xf32>
    %cst_22 = arith.constant 1.000000e-01 : f32
    %62 = vector.broadcast %cst_22 : f32 to vector<16x32xf32>
    %63 = arith.mulf %62, %59 : vector<16x32xf32>
    %64 = arith.select %61, %59, %63 : vector<16x32xi1>, vector<16x32xf32>
    %65 = arith.truncf %64 : vector<16x32xf32> to vector<16x32xbf16>
    %66 = tpu.concatenate %22, %43, %65 in 0 : vector<16x32xbf16>, vector<16x32xbf16>, vector<16x32xbf16> -> vector<48x32xbf16>
    %67 = vector.extract_strided_slice %66 {offsets = [15, 0], sizes = [16, 32], strides = [1, 1]} : vector<48x32xbf16> to vector<16x32xbf16>
    %68 = vector.extract_strided_slice %66 {offsets = [16, 0], sizes = [16, 32], strides = [1, 1]} : vector<48x32xbf16> to vector<16x32xbf16>
    %69 = vector.extract_strided_slice %66 {offsets = [17, 0], sizes = [16, 32], strides = [1, 1]} : vector<48x32xbf16> to vector<16x32xbf16>
    %70 = tpu.concatenate %67, %68, %69 in 1 : vector<16x32xbf16>, vector<16x32xbf16>, vector<16x32xbf16> -> vector<16x96xbf16>
    %c0_23 = arith.constant 0 : index
    %c0_24 = arith.constant 0 : index
    %71 = vector.load %arg5[%c0_23, %c0_24] : memref<96x32xbf16, #tpu.memory_space<vmem>>, vector<96x32xbf16>
    %cst_25 = arith.constant dense<0.000000e+00> : vector<16x32xf32>
    %72 = tpu.matmul %70, %71, %cst_25 {dimension_numbers = #tpu.dot_dimension_numbers<[1], [0], [0], [1], [0, 0, 1, 1], [], []>} : vector<16x96xbf16>, vector<96x32xbf16>, vector<16x32xf32> -> vector<16x32xf32>
    %c0_26 = arith.constant 0 : index
    %c0_27 = arith.constant 0 : index
    %73 = vector.load %arg6[%c0_26, %c0_27] : memref<1x32xf32, #tpu.memory_space<vmem>>, vector<1x32xf32>
    %74 = vector.broadcast %73 : vector<1x32xf32> to vector<16x32xf32>
    %75 = arith.addf %72, %74 : vector<16x32xf32>
    %76 = arith.truncf %75 : vector<16x32xf32> to vector<16x32xbf16>
    %c0_28 = arith.constant 0 : index
    %c0_29 = arith.constant 0 : index
    %c0_30 = arith.constant 0 : index
    %77 = vector.load %arg7[%c0_28, %c0_29, %c0_30] : memref<1x16x32xbf16, #tpu.memory_space<vmem>>, vector<1x16x32xbf16>
    %78 = vector.shape_cast %77 : vector<1x16x32xbf16> to vector<16x32xbf16>
    %79 = vector.shape_cast %76 : vector<16x32xbf16> to vector<1x16x32xbf16>
    tpu.vector_store %arg7[%c0_28, %c0_29, %c0_30], %79 {strides = array<i32>} : memref<1x16x32xbf16, #tpu.memory_space<vmem>>, vector<1x16x32xbf16>,
    return
  }
  func.func @transform_0(%arg0: i32, %arg1: i32) -> (i32, i32, i32) {
    %c0_i32 = arith.constant 0 : i32
    %0 = arith.minsi %arg1, %c0_i32 : i32
    %c0_i32_0 = arith.constant 0 : i32
    %c0_i32_1 = arith.constant 0 : i32
    return %arg0, %0, %c0_i32_0 : i32, i32, i32
  }
  func.func @transform_1(%arg0: i32, %arg1: i32) -> (i32, i32, i32) {
    %c1_i32 = arith.constant 1 : i32
    %0 = arith.muli %arg1, %c1_i32 : i32
    %c1_i32_0 = arith.constant 1 : i32
    %1 = arith.subi %0, %c1_i32_0 : i32
    %c0_i32 = arith.constant 0 : i32
    %2 = arith.maxsi %1, %c0_i32 : i32
    %c0_i32_1 = arith.constant 0 : i32
    %c0_i32_2 = arith.constant 0 : i32
    return %arg0, %2, %c0_i32_1 : i32, i32, i32
  }
  func.func @transform_2(%arg0: i32, %arg1: i32) -> (i32, i32, i32) {
    %c1_i32 = arith.constant 1 : i32
    %0 = arith.addi %arg1, %c1_i32 : i32
    %c1_i32_0 = arith.constant 1 : i32
    %1 = arith.muli %0, %c1_i32_0 : i32
    %c0_i32 = arith.constant 0 : i32
    %2 = arith.minsi %1, %c0_i32 : i32
    %c0_i32_1 = arith.constant 0 : i32
    %c0_i32_2 = arith.constant 0 : i32
    return %arg0, %2, %c0_i32_1 : i32, i32, i32
  }
  func.func @transform_3(%arg0: i32, %arg1: i32) -> (i32, i32) {
    %c0_i32 = arith.constant 0 : i32
    %c0_i32_0 = arith.constant 0 : i32
    %c0_i32_1 = arith.constant 0 : i32
    return %c0_i32, %c0_i32_0 : i32, i32
  }
  func.func @transform_4(%arg0: i32, %arg1: i32) -> (i32, i32) {
    %c0_i32 = arith.constant 0 : i32
    %c0_i32_0 = arith.constant 0 : i32
    %c0_i32_1 = arith.constant 0 : i32
    return %c0_i32, %c0_i32_0 : i32, i32
  }
  func.func @transform_5(%arg0: i32, %arg1: i32) -> (i32, i32, i32) {
    %c0_i32 = arith.constant 0 : i32
    %c0_i32_0 = arith.constant 0 : i32
    return %arg0, %arg1, %c0_i32 : i32, i32, i32
  }
}

module attributes {stable_mosaic.version = 11 : i64} {
  func.func @_conv1d_kernel(%arg0: i32, %arg1: i32, %arg2: memref<1x32x16xbf16, #tpu.memory_space<vmem>>, %arg3: memref<1x16x16xbf16, #tpu.memory_space<vmem>>, %arg4: memref<1x16x16xbf16, #tpu.memory_space<vmem>>, %arg5: memref<48x16xbf16, #tpu.memory_space<vmem>>, %arg6: memref<1x16xf32, #tpu.memory_space<vmem>>, %arg7: memref<1x32x16xbf16, #tpu.memory_space<vmem>>, %arg8: memref<1x32x16xbf16, #tpu.memory_space<vmem>>) attributes {dimension_semantics = [#tpu.dimension_semantics<parallel>, #tpu.dimension_semantics<parallel>], iteration_bounds = array<i64: 2, 1>, scalar_prefetch = 0 : i64, scratch_operands = 0 : i64, tpu.core_type = #tpu.core_type<tc>, window_params = [{transform_indices = @transform_0, window_bounds = array<i64: 1, 32, 16>}, {transform_indices = @transform_1, window_bounds = array<i64: 1, 16, 16>}, {transform_indices = @transform_2, window_bounds = array<i64: 1, 16, 16>}, {pipeline_mode = #tpu.pipeline_mode<synchronous>, transform_indices = @transform_3, window_bounds = array<i64: 48, 16>}, {pipeline_mode = #tpu.pipeline_mode<synchronous>, transform_indices = @transform_4, window_bounds = array<i64: 1, 16>}, {transform_indices = @transform_5, window_bounds = array<i64: 1, 32, 16>}, {transform_indices = @transform_6, window_bounds = array<i64: 1, 32, 16>}]} {
    %c32_i32 = arith.constant 32 : i32
    %0 = arith.muli %arg1, %c32_i32 : i32
    %c0 = arith.constant 0 : index
    %c0_0 = arith.constant 0 : index
    %c0_1 = arith.constant 0 : index
    %1 = vector.load %arg3[%c0, %c0_0, %c0_1] : memref<1x16x16xbf16, #tpu.memory_space<vmem>>, vector<1x16x16xbf16>
    %2 = vector.shape_cast %1 : vector<1x16x16xbf16> to vector<16x16xbf16>
    %c16_i32 = arith.constant 16 : i32
    %3 = arith.subi %0, %c16_i32 : i32
    %4 = tpu.iota {dimensions = array<i32: 0>} : vector<16x1xi32>
    %5 = vector.broadcast %3 : i32 to vector<16x1xi32>
    %6 = arith.addi %5, %4 : vector<16x1xi32>
    %c0_i32 = arith.constant 0 : i32
    %7 = vector.broadcast %c0_i32 : i32 to vector<16x1xi32>
    %8 = arith.cmpi sge, %6, %7 : vector<16x1xi32>
    %c32_i32_2 = arith.constant 32 : i32
    %9 = vector.broadcast %c32_i32_2 : i32 to vector<16x1xi32>
    %10 = arith.cmpi slt, %6, %9 : vector<16x1xi32>
    %11 = arith.andi %8, %10 : vector<16x1xi1>
    %cst = arith.constant 0.000000e+00 : bf16
    %12 = vector.broadcast %cst : bf16 to vector<16x16xbf16>
    %13 = vector.shape_cast %11 : vector<16x1xi1> to vector<16x1xi1>
    %14 = vector.broadcast %13 : vector<16x1xi1> to vector<16x16xi1>
    %15 = arith.select %14, %2, %12 : vector<16x16xi1>, vector<16x16xbf16>
    %16 = arith.extf %15 : vector<16x16xbf16> to vector<16x16xf32>
    %cst_3 = arith.constant 0.000000e+00 : f32
    %17 = vector.broadcast %cst_3 : f32 to vector<16x16xf32>
    %18 = arith.cmpf oge, %16, %17 : vector<16x16xf32>
    %cst_4 = arith.constant 1.000000e-01 : f32
    %19 = vector.broadcast %cst_4 : f32 to vector<16x16xf32>
    %20 = arith.mulf %19, %16 : vector<16x16xf32>
    %21 = arith.select %18, %16, %20 : vector<16x16xi1>, vector<16x16xf32>
    %22 = arith.truncf %21 : vector<16x16xf32> to vector<16x16xbf16>
    %c0_5 = arith.constant 0 : index
    %c0_6 = arith.constant 0 : index
    %c0_7 = arith.constant 0 : index
    %23 = vector.load %arg2[%c0_5, %c0_6, %c0_7] : memref<1x32x16xbf16, #tpu.memory_space<vmem>>, vector<1x32x16xbf16>
    %24 = vector.shape_cast %23 : vector<1x32x16xbf16> to vector<32x16xbf16>
    %25 = tpu.iota {dimensions = array<i32: 0>} : vector<32x1xi32>
    %26 = vector.broadcast %0 : i32 to vector<32x1xi32>
    %27 = arith.addi %26, %25 : vector<32x1xi32>
    %c0_i32_8 = arith.constant 0 : i32
    %28 = vector.broadcast %c0_i32_8 : i32 to vector<32x1xi32>
    %29 = arith.cmpi sge, %27, %28 : vector<32x1xi32>
    %c32_i32_9 = arith.constant 32 : i32
    %30 = vector.broadcast %c32_i32_9 : i32 to vector<32x1xi32>
    %31 = arith.cmpi slt, %27, %30 : vector<32x1xi32>
    %32 = arith.andi %29, %31 : vector<32x1xi1>
    %cst_10 = arith.constant 0.000000e+00 : bf16
    %33 = vector.broadcast %cst_10 : bf16 to vector<32x16xbf16>
    %34 = vector.shape_cast %32 : vector<32x1xi1> to vector<32x1xi1>
    %35 = vector.broadcast %34 : vector<32x1xi1> to vector<32x16xi1>
    %36 = arith.select %35, %24, %33 : vector<32x16xi1>, vector<32x16xbf16>
    %37 = arith.extf %36 : vector<32x16xbf16> to vector<32x16xf32>
    %cst_11 = arith.constant 0.000000e+00 : f32
    %38 = vector.broadcast %cst_11 : f32 to vector<32x16xf32>
    %39 = arith.cmpf oge, %37, %38 : vector<32x16xf32>
    %cst_12 = arith.constant 1.000000e-01 : f32
    %40 = vector.broadcast %cst_12 : f32 to vector<32x16xf32>
    %41 = arith.mulf %40, %37 : vector<32x16xf32>
    %42 = arith.select %39, %37, %41 : vector<32x16xi1>, vector<32x16xf32>
    %43 = arith.truncf %42 : vector<32x16xf32> to vector<32x16xbf16>
    %c0_13 = arith.constant 0 : index
    %c0_14 = arith.constant 0 : index
    %c0_15 = arith.constant 0 : index
    %44 = vector.load %arg4[%c0_13, %c0_14, %c0_15] : memref<1x16x16xbf16, #tpu.memory_space<vmem>>, vector<1x16x16xbf16>
    %45 = vector.shape_cast %44 : vector<1x16x16xbf16> to vector<16x16xbf16>
    %c32_i32_16 = arith.constant 32 : i32
    %46 = arith.addi %0, %c32_i32_16 : i32
    %47 = tpu.iota {dimensions = array<i32: 0>} : vector<16x1xi32>
    %48 = vector.broadcast %46 : i32 to vector<16x1xi32>
    %49 = arith.addi %48, %47 : vector<16x1xi32>
    %c0_i32_17 = arith.constant 0 : i32
    %50 = vector.broadcast %c0_i32_17 : i32 to vector<16x1xi32>
    %51 = arith.cmpi sge, %49, %50 : vector<16x1xi32>
    %c32_i32_18 = arith.constant 32 : i32
    %52 = vector.broadcast %c32_i32_18 : i32 to vector<16x1xi32>
    %53 = arith.cmpi slt, %49, %52 : vector<16x1xi32>
    %54 = arith.andi %51, %53 : vector<16x1xi1>
    %cst_19 = arith.constant 0.000000e+00 : bf16
    %55 = vector.broadcast %cst_19 : bf16 to vector<16x16xbf16>
    %56 = vector.shape_cast %54 : vector<16x1xi1> to vector<16x1xi1>
    %57 = vector.broadcast %56 : vector<16x1xi1> to vector<16x16xi1>
    %58 = arith.select %57, %45, %55 : vector<16x16xi1>, vector<16x16xbf16>
    %59 = arith.extf %58 : vector<16x16xbf16> to vector<16x16xf32>
    %cst_20 = arith.constant 0.000000e+00 : f32
    %60 = vector.broadcast %cst_20 : f32 to vector<16x16xf32>
    %61 = arith.cmpf oge, %59, %60 : vector<16x16xf32>
    %cst_21 = arith.constant 1.000000e-01 : f32
    %62 = vector.broadcast %cst_21 : f32 to vector<16x16xf32>
    %63 = arith.mulf %62, %59 : vector<16x16xf32>
    %64 = arith.select %61, %59, %63 : vector<16x16xi1>, vector<16x16xf32>
    %65 = arith.truncf %64 : vector<16x16xf32> to vector<16x16xbf16>
    %66 = tpu.concatenate %22, %43, %65 in 0 : vector<16x16xbf16>, vector<32x16xbf16>, vector<16x16xbf16> -> vector<64x16xbf16>
    %67 = vector.extract_strided_slice %66 {offsets = [15, 0], sizes = [32, 16], strides = [1, 1]} : vector<64x16xbf16> to vector<32x16xbf16>
    %68 = vector.extract_strided_slice %66 {offsets = [16, 0], sizes = [32, 16], strides = [1, 1]} : vector<64x16xbf16> to vector<32x16xbf16>
    %69 = vector.extract_strided_slice %66 {offsets = [17, 0], sizes = [32, 16], strides = [1, 1]} : vector<64x16xbf16> to vector<32x16xbf16>
    %70 = tpu.concatenate %67, %68, %69 in 1 : vector<32x16xbf16>, vector<32x16xbf16>, vector<32x16xbf16> -> vector<32x48xbf16>
    %c0_22 = arith.constant 0 : index
    %c0_23 = arith.constant 0 : index
    %71 = vector.load %arg5[%c0_22, %c0_23] : memref<48x16xbf16, #tpu.memory_space<vmem>>, vector<48x16xbf16>
    %cst_24 = arith.constant dense<0.000000e+00> : vector<32x16xf32>
    %72 = tpu.matmul %70, %71, %cst_24 {dimension_numbers = #tpu.dot_dimension_numbers<[1], [0], [0], [1], [0, 0, 1, 1], [], []>} : vector<32x48xbf16>, vector<48x16xbf16>, vector<32x16xf32> -> vector<32x16xf32>
    %c0_25 = arith.constant 0 : index
    %c0_26 = arith.constant 0 : index
    %73 = vector.load %arg6[%c0_25, %c0_26] : memref<1x16xf32, #tpu.memory_space<vmem>>, vector<1x16xf32>
    %74 = vector.broadcast %73 : vector<1x16xf32> to vector<32x16xf32>
    %75 = arith.addf %72, %74 : vector<32x16xf32>
    %c0_27 = arith.constant 0 : index
    %c0_28 = arith.constant 0 : index
    %c0_29 = arith.constant 0 : index
    %76 = vector.load %arg7[%c0_27, %c0_28, %c0_29] : memref<1x32x16xbf16, #tpu.memory_space<vmem>>, vector<1x32x16xbf16>
    %77 = vector.shape_cast %76 : vector<1x32x16xbf16> to vector<32x16xbf16>
    %78 = arith.extf %77 : vector<32x16xbf16> to vector<32x16xf32>
    %79 = arith.addf %75, %78 : vector<32x16xf32>
    %80 = arith.truncf %79 : vector<32x16xf32> to vector<32x16xbf16>
    %c0_30 = arith.constant 0 : index
    %c0_31 = arith.constant 0 : index
    %c0_32 = arith.constant 0 : index
    %81 = vector.load %arg8[%c0_30, %c0_31, %c0_32] : memref<1x32x16xbf16, #tpu.memory_space<vmem>>, vector<1x32x16xbf16>
    %82 = vector.shape_cast %81 : vector<1x32x16xbf16> to vector<32x16xbf16>
    %83 = vector.shape_cast %80 : vector<32x16xbf16> to vector<1x32x16xbf16>
    tpu.vector_store %arg8[%c0_30, %c0_31, %c0_32], %83 {strides = array<i32>} : memref<1x32x16xbf16, #tpu.memory_space<vmem>>, vector<1x32x16xbf16>,
    return
  }
  func.func @transform_0(%arg0: i32, %arg1: i32) -> (i32, i32, i32) {
    %c0_i32 = arith.constant 0 : i32
    %0 = arith.minsi %arg1, %c0_i32 : i32
    %c0_i32_0 = arith.constant 0 : i32
    %c0_i32_1 = arith.constant 0 : i32
    return %arg0, %0, %c0_i32_0 : i32, i32, i32
  }
  func.func @transform_1(%arg0: i32, %arg1: i32) -> (i32, i32, i32) {
    %c2_i32 = arith.constant 2 : i32
    %0 = arith.muli %arg1, %c2_i32 : i32
    %c1_i32 = arith.constant 1 : i32
    %1 = arith.subi %0, %c1_i32 : i32
    %c0_i32 = arith.constant 0 : i32
    %2 = arith.maxsi %1, %c0_i32 : i32
    %c0_i32_0 = arith.constant 0 : i32
    %c0_i32_1 = arith.constant 0 : i32
    return %arg0, %2, %c0_i32_0 : i32, i32, i32
  }
  func.func @transform_2(%arg0: i32, %arg1: i32) -> (i32, i32, i32) {
    %c1_i32 = arith.constant 1 : i32
    %0 = arith.addi %arg1, %c1_i32 : i32
    %c2_i32 = arith.constant 2 : i32
    %1 = arith.muli %0, %c2_i32 : i32
    %c1_i32_0 = arith.constant 1 : i32
    %2 = arith.minsi %1, %c1_i32_0 : i32
    %c0_i32 = arith.constant 0 : i32
    %c0_i32_1 = arith.constant 0 : i32
    return %arg0, %2, %c0_i32 : i32, i32, i32
  }
  func.func @transform_3(%arg0: i32, %arg1: i32) -> (i32, i32) {
    %c0_i32 = arith.constant 0 : i32
    %c0_i32_0 = arith.constant 0 : i32
    %c0_i32_1 = arith.constant 0 : i32
    return %c0_i32, %c0_i32_0 : i32, i32
  }
  func.func @transform_4(%arg0: i32, %arg1: i32) -> (i32, i32) {
    %c0_i32 = arith.constant 0 : i32
    %c0_i32_0 = arith.constant 0 : i32
    %c0_i32_1 = arith.constant 0 : i32
    return %c0_i32, %c0_i32_0 : i32, i32
  }
  func.func @transform_5(%arg0: i32, %arg1: i32) -> (i32, i32, i32) {
    %c0_i32 = arith.constant 0 : i32
    %c0_i32_0 = arith.constant 0 : i32
    return %arg0, %arg1, %c0_i32 : i32, i32, i32
  }
  func.func @transform_6(%arg0: i32, %arg1: i32) -> (i32, i32, i32) {
    %c0_i32 = arith.constant 0 : i32
    %c0_i32_0 = arith.constant 0 : i32
    return %arg0, %arg1, %c0_i32 : i32, i32, i32
  }
}

module attributes {stable_mosaic.version = 11 : i64} {
  func.func @_conv1d_kernel(%arg0: i32, %arg1: i32, %arg2: memref<1x32x16xbf16, #tpu.memory_space<vmem>>, %arg3: memref<1x16x16xbf16, #tpu.memory_space<vmem>>, %arg4: memref<1x16x16xbf16, #tpu.memory_space<vmem>>, %arg5: memref<48x16xbf16, #tpu.memory_space<vmem>>, %arg6: memref<1x16xf32, #tpu.memory_space<vmem>>, %arg7: memref<1x32x16xbf16, #tpu.memory_space<vmem>>, %arg8: memref<1x32x16xbf16, #tpu.memory_space<vmem>>) attributes {dimension_semantics = [#tpu.dimension_semantics<parallel>, #tpu.dimension_semantics<parallel>], iteration_bounds = array<i64: 2, 1>, scalar_prefetch = 0 : i64, scratch_operands = 0 : i64, tpu.core_type = #tpu.core_type<tc>, window_params = [{transform_indices = @transform_0, window_bounds = array<i64: 1, 32, 16>}, {transform_indices = @transform_1, window_bounds = array<i64: 1, 16, 16>}, {transform_indices = @transform_2, window_bounds = array<i64: 1, 16, 16>}, {pipeline_mode = #tpu.pipeline_mode<synchronous>, transform_indices = @transform_3, window_bounds = array<i64: 48, 16>}, {pipeline_mode = #tpu.pipeline_mode<synchronous>, transform_indices = @transform_4, window_bounds = array<i64: 1, 16>}, {transform_indices = @transform_5, window_bounds = array<i64: 1, 32, 16>}, {transform_indices = @transform_6, window_bounds = array<i64: 1, 32, 16>}]} {
    %c32_i32 = arith.constant 32 : i32
    %0 = arith.muli %arg1, %c32_i32 : i32
    %c0 = arith.constant 0 : index
    %c0_0 = arith.constant 0 : index
    %c0_1 = arith.constant 0 : index
    %1 = vector.load %arg3[%c0, %c0_0, %c0_1] : memref<1x16x16xbf16, #tpu.memory_space<vmem>>, vector<1x16x16xbf16>
    %2 = vector.shape_cast %1 : vector<1x16x16xbf16> to vector<16x16xbf16>
    %c16_i32 = arith.constant 16 : i32
    %3 = arith.subi %0, %c16_i32 : i32
    %4 = tpu.iota {dimensions = array<i32: 0>} : vector<16x1xi32>
    %5 = vector.broadcast %3 : i32 to vector<16x1xi32>
    %6 = arith.addi %5, %4 : vector<16x1xi32>
    %c0_i32 = arith.constant 0 : i32
    %7 = vector.broadcast %c0_i32 : i32 to vector<16x1xi32>
    %8 = arith.cmpi sge, %6, %7 : vector<16x1xi32>
    %c32_i32_2 = arith.constant 32 : i32
    %9 = vector.broadcast %c32_i32_2 : i32 to vector<16x1xi32>
    %10 = arith.cmpi slt, %6, %9 : vector<16x1xi32>
    %11 = arith.andi %8, %10 : vector<16x1xi1>
    %cst = arith.constant 0.000000e+00 : bf16
    %12 = vector.broadcast %cst : bf16 to vector<16x16xbf16>
    %13 = vector.shape_cast %11 : vector<16x1xi1> to vector<16x1xi1>
    %14 = vector.broadcast %13 : vector<16x1xi1> to vector<16x16xi1>
    %15 = arith.select %14, %2, %12 : vector<16x16xi1>, vector<16x16xbf16>
    %16 = arith.extf %15 : vector<16x16xbf16> to vector<16x16xf32>
    %cst_3 = arith.constant 0.000000e+00 : f32
    %17 = vector.broadcast %cst_3 : f32 to vector<16x16xf32>
    %18 = arith.cmpf oge, %16, %17 : vector<16x16xf32>
    %cst_4 = arith.constant 1.000000e-01 : f32
    %19 = vector.broadcast %cst_4 : f32 to vector<16x16xf32>
    %20 = arith.mulf %19, %16 : vector<16x16xf32>
    %21 = arith.select %18, %16, %20 : vector<16x16xi1>, vector<16x16xf32>
    %22 = arith.truncf %21 : vector<16x16xf32> to vector<16x16xbf16>
    %c0_5 = arith.constant 0 : index
    %c0_6 = arith.constant 0 : index
    %c0_7 = arith.constant 0 : index
    %23 = vector.load %arg2[%c0_5, %c0_6, %c0_7] : memref<1x32x16xbf16, #tpu.memory_space<vmem>>, vector<1x32x16xbf16>
    %24 = vector.shape_cast %23 : vector<1x32x16xbf16> to vector<32x16xbf16>
    %25 = tpu.iota {dimensions = array<i32: 0>} : vector<32x1xi32>
    %26 = vector.broadcast %0 : i32 to vector<32x1xi32>
    %27 = arith.addi %26, %25 : vector<32x1xi32>
    %c0_i32_8 = arith.constant 0 : i32
    %28 = vector.broadcast %c0_i32_8 : i32 to vector<32x1xi32>
    %29 = arith.cmpi sge, %27, %28 : vector<32x1xi32>
    %c32_i32_9 = arith.constant 32 : i32
    %30 = vector.broadcast %c32_i32_9 : i32 to vector<32x1xi32>
    %31 = arith.cmpi slt, %27, %30 : vector<32x1xi32>
    %32 = arith.andi %29, %31 : vector<32x1xi1>
    %cst_10 = arith.constant 0.000000e+00 : bf16
    %33 = vector.broadcast %cst_10 : bf16 to vector<32x16xbf16>
    %34 = vector.shape_cast %32 : vector<32x1xi1> to vector<32x1xi1>
    %35 = vector.broadcast %34 : vector<32x1xi1> to vector<32x16xi1>
    %36 = arith.select %35, %24, %33 : vector<32x16xi1>, vector<32x16xbf16>
    %37 = arith.extf %36 : vector<32x16xbf16> to vector<32x16xf32>
    %cst_11 = arith.constant 0.000000e+00 : f32
    %38 = vector.broadcast %cst_11 : f32 to vector<32x16xf32>
    %39 = arith.cmpf oge, %37, %38 : vector<32x16xf32>
    %cst_12 = arith.constant 1.000000e-01 : f32
    %40 = vector.broadcast %cst_12 : f32 to vector<32x16xf32>
    %41 = arith.mulf %40, %37 : vector<32x16xf32>
    %42 = arith.select %39, %37, %41 : vector<32x16xi1>, vector<32x16xf32>
    %43 = arith.truncf %42 : vector<32x16xf32> to vector<32x16xbf16>
    %c0_13 = arith.constant 0 : index
    %c0_14 = arith.constant 0 : index
    %c0_15 = arith.constant 0 : index
    %44 = vector.load %arg4[%c0_13, %c0_14, %c0_15] : memref<1x16x16xbf16, #tpu.memory_space<vmem>>, vector<1x16x16xbf16>
    %45 = vector.shape_cast %44 : vector<1x16x16xbf16> to vector<16x16xbf16>
    %c32_i32_16 = arith.constant 32 : i32
    %46 = arith.addi %0, %c32_i32_16 : i32
    %47 = tpu.iota {dimensions = array<i32: 0>} : vector<16x1xi32>
    %48 = vector.broadcast %46 : i32 to vector<16x1xi32>
    %49 = arith.addi %48, %47 : vector<16x1xi32>
    %c0_i32_17 = arith.constant 0 : i32
    %50 = vector.broadcast %c0_i32_17 : i32 to vector<16x1xi32>
    %51 = arith.cmpi sge, %49, %50 : vector<16x1xi32>
    %c32_i32_18 = arith.constant 32 : i32
    %52 = vector.broadcast %c32_i32_18 : i32 to vector<16x1xi32>
    %53 = arith.cmpi slt, %49, %52 : vector<16x1xi32>
    %54 = arith.andi %51, %53 : vector<16x1xi1>
    %cst_19 = arith.constant 0.000000e+00 : bf16
    %55 = vector.broadcast %cst_19 : bf16 to vector<16x16xbf16>
    %56 = vector.shape_cast %54 : vector<16x1xi1> to vector<16x1xi1>
    %57 = vector.broadcast %56 : vector<16x1xi1> to vector<16x16xi1>
    %58 = arith.select %57, %45, %55 : vector<16x16xi1>, vector<16x16xbf16>
    %59 = arith.extf %58 : vector<16x16xbf16> to vector<16x16xf32>
    %cst_20 = arith.constant 0.000000e+00 : f32
    %60 = vector.broadcast %cst_20 : f32 to vector<16x16xf32>
    %61 = arith.cmpf oge, %59, %60 : vector<16x16xf32>
    %cst_21 = arith.constant 1.000000e-01 : f32
    %62 = vector.broadcast %cst_21 : f32 to vector<16x16xf32>
    %63 = arith.mulf %62, %59 : vector<16x16xf32>
    %64 = arith.select %61, %59, %63 : vector<16x16xi1>, vector<16x16xf32>
    %65 = arith.truncf %64 : vector<16x16xf32> to vector<16x16xbf16>
    %66 = tpu.concatenate %22, %43, %65 in 0 : vector<16x16xbf16>, vector<32x16xbf16>, vector<16x16xbf16> -> vector<64x16xbf16>
    %67 = vector.extract_strided_slice %66 {offsets = [13, 0], sizes = [32, 16], strides = [1, 1]} : vector<64x16xbf16> to vector<32x16xbf16>
    %68 = vector.extract_strided_slice %66 {offsets = [16, 0], sizes = [32, 16], strides = [1, 1]} : vector<64x16xbf16> to vector<32x16xbf16>
    %69 = vector.extract_strided_slice %66 {offsets = [19, 0], sizes = [32, 16], strides = [1, 1]} : vector<64x16xbf16> to vector<32x16xbf16>
    %70 = tpu.concatenate %67, %68, %69 in 1 : vector<32x16xbf16>, vector<32x16xbf16>, vector<32x16xbf16> -> vector<32x48xbf16>
    %c0_22 = arith.constant 0 : index
    %c0_23 = arith.constant 0 : index
    %71 = vector.load %arg5[%c0_22, %c0_23] : memref<48x16xbf16, #tpu.memory_space<vmem>>, vector<48x16xbf16>
    %cst_24 = arith.constant dense<0.000000e+00> : vector<32x16xf32>
    %72 = tpu.matmul %70, %71, %cst_24 {dimension_numbers = #tpu.dot_dimension_numbers<[1], [0], [0], [1], [0, 0, 1, 1], [], []>} : vector<32x48xbf16>, vector<48x16xbf16>, vector<32x16xf32> -> vector<32x16xf32>
    %c0_25 = arith.constant 0 : index
    %c0_26 = arith.constant 0 : index
    %73 = vector.load %arg6[%c0_25, %c0_26] : memref<1x16xf32, #tpu.memory_space<vmem>>, vector<1x16xf32>
    %74 = vector.broadcast %73 : vector<1x16xf32> to vector<32x16xf32>
    %75 = arith.addf %72, %74 : vector<32x16xf32>
    %c0_27 = arith.constant 0 : index
    %c0_28 = arith.constant 0 : index
    %c0_29 = arith.constant 0 : index
    %76 = vector.load %arg7[%c0_27, %c0_28, %c0_29] : memref<1x32x16xbf16, #tpu.memory_space<vmem>>, vector<1x32x16xbf16>
    %77 = vector.shape_cast %76 : vector<1x32x16xbf16> to vector<32x16xbf16>
    %78 = arith.extf %77 : vector<32x16xbf16> to vector<32x16xf32>
    %79 = arith.addf %75, %78 : vector<32x16xf32>
    %80 = arith.truncf %79 : vector<32x16xf32> to vector<32x16xbf16>
    %c0_30 = arith.constant 0 : index
    %c0_31 = arith.constant 0 : index
    %c0_32 = arith.constant 0 : index
    %81 = vector.load %arg8[%c0_30, %c0_31, %c0_32] : memref<1x32x16xbf16, #tpu.memory_space<vmem>>, vector<1x32x16xbf16>
    %82 = vector.shape_cast %81 : vector<1x32x16xbf16> to vector<32x16xbf16>
    %83 = vector.shape_cast %80 : vector<32x16xbf16> to vector<1x32x16xbf16>
    tpu.vector_store %arg8[%c0_30, %c0_31, %c0_32], %83 {strides = array<i32>} : memref<1x32x16xbf16, #tpu.memory_space<vmem>>, vector<1x32x16xbf16>,
    return
  }
  func.func @transform_0(%arg0: i32, %arg1: i32) -> (i32, i32, i32) {
    %c0_i32 = arith.constant 0 : i32
    %0 = arith.minsi %arg1, %c0_i32 : i32
    %c0_i32_0 = arith.constant 0 : i32
    %c0_i32_1 = arith.constant 0 : i32
    return %arg0, %0, %c0_i32_0 : i32, i32, i32
  }
  func.func @transform_1(%arg0: i32, %arg1: i32) -> (i32, i32, i32) {
    %c2_i32 = arith.constant 2 : i32
    %0 = arith.muli %arg1, %c2_i32 : i32
    %c1_i32 = arith.constant 1 : i32
    %1 = arith.subi %0, %c1_i32 : i32
    %c0_i32 = arith.constant 0 : i32
    %2 = arith.maxsi %1, %c0_i32 : i32
    %c0_i32_0 = arith.constant 0 : i32
    %c0_i32_1 = arith.constant 0 : i32
    return %arg0, %2, %c0_i32_0 : i32, i32, i32
  }
  func.func @transform_2(%arg0: i32, %arg1: i32) -> (i32, i32, i32) {
    %c1_i32 = arith.constant 1 : i32
    %0 = arith.addi %arg1, %c1_i32 : i32
    %c2_i32 = arith.constant 2 : i32
    %1 = arith.muli %0, %c2_i32 : i32
    %c1_i32_0 = arith.constant 1 : i32
    %2 = arith.minsi %1, %c1_i32_0 : i32
    %c0_i32 = arith.constant 0 : i32
    %c0_i32_1 = arith.constant 0 : i32
    return %arg0, %2, %c0_i32 : i32, i32, i32
  }
  func.func @transform_3(%arg0: i32, %arg1: i32) -> (i32, i32) {
    %c0_i32 = arith.constant 0 : i32
    %c0_i32_0 = arith.constant 0 : i32
    %c0_i32_1 = arith.constant 0 : i32
    return %c0_i32, %c0_i32_0 : i32, i32
  }
  func.func @transform_4(%arg0: i32, %arg1: i32) -> (i32, i32) {
    %c0_i32 = arith.constant 0 : i32
    %c0_i32_0 = arith.constant 0 : i32
    %c0_i32_1 = arith.constant 0 : i32
    return %c0_i32, %c0_i32_0 : i32, i32
  }
  func.func @transform_5(%arg0: i32, %arg1: i32) -> (i32, i32, i32) {
    %c0_i32 = arith.constant 0 : i32
    %c0_i32_0 = arith.constant 0 : i32
    return %arg0, %arg1, %c0_i32 : i32, i32, i32
  }
  func.func @transform_6(%arg0: i32, %arg1: i32) -> (i32, i32, i32) {
    %c0_i32 = arith.constant 0 : i32
    %c0_i32_0 = arith.constant 0 : i32
    return %arg0, %arg1, %c0_i32 : i32, i32, i32
  }
}

module attributes {stable_mosaic.version = 11 : i64} {
  func.func @_conv1d_kernel(%arg0: i32, %arg1: i32, %arg2: memref<1x32x16xbf16, #tpu.memory_space<vmem>>, %arg3: memref<1x16x16xbf16, #tpu.memory_space<vmem>>, %arg4: memref<1x16x16xbf16, #tpu.memory_space<vmem>>, %arg5: memref<48x16xbf16, #tpu.memory_space<vmem>>, %arg6: memref<1x16xf32, #tpu.memory_space<vmem>>, %arg7: memref<1x32x16xbf16, #tpu.memory_space<vmem>>) attributes {dimension_semantics = [#tpu.dimension_semantics<parallel>, #tpu.dimension_semantics<parallel>], iteration_bounds = array<i64: 2, 1>, scalar_prefetch = 0 : i64, scratch_operands = 0 : i64, tpu.core_type = #tpu.core_type<tc>, window_params = [{transform_indices = @transform_0, window_bounds = array<i64: 1, 32, 16>}, {transform_indices = @transform_1, window_bounds = array<i64: 1, 16, 16>}, {transform_indices = @transform_2, window_bounds = array<i64: 1, 16, 16>}, {pipeline_mode = #tpu.pipeline_mode<synchronous>, transform_indices = @transform_3, window_bounds = array<i64: 48, 16>}, {pipeline_mode = #tpu.pipeline_mode<synchronous>, transform_indices = @transform_4, window_bounds = array<i64: 1, 16>}, {transform_indices = @transform_5, window_bounds = array<i64: 1, 32, 16>}]} {
    %c32_i32 = arith.constant 32 : i32
    %0 = arith.muli %arg1, %c32_i32 : i32
    %c0 = arith.constant 0 : index
    %c0_0 = arith.constant 0 : index
    %c0_1 = arith.constant 0 : index
    %1 = vector.load %arg3[%c0, %c0_0, %c0_1] : memref<1x16x16xbf16, #tpu.memory_space<vmem>>, vector<1x16x16xbf16>
    %2 = vector.shape_cast %1 : vector<1x16x16xbf16> to vector<16x16xbf16>
    %c16_i32 = arith.constant 16 : i32
    %3 = arith.subi %0, %c16_i32 : i32
    %4 = tpu.iota {dimensions = array<i32: 0>} : vector<16x1xi32>
    %5 = vector.broadcast %3 : i32 to vector<16x1xi32>
    %6 = arith.addi %5, %4 : vector<16x1xi32>
    %c0_i32 = arith.constant 0 : i32
    %7 = vector.broadcast %c0_i32 : i32 to vector<16x1xi32>
    %8 = arith.cmpi sge, %6, %7 : vector<16x1xi32>
    %c32_i32_2 = arith.constant 32 : i32
    %9 = vector.broadcast %c32_i32_2 : i32 to vector<16x1xi32>
    %10 = arith.cmpi slt, %6, %9 : vector<16x1xi32>
    %11 = arith.andi %8, %10 : vector<16x1xi1>
    %cst = arith.constant 0.000000e+00 : bf16
    %12 = vector.broadcast %cst : bf16 to vector<16x16xbf16>
    %13 = vector.shape_cast %11 : vector<16x1xi1> to vector<16x1xi1>
    %14 = vector.broadcast %13 : vector<16x1xi1> to vector<16x16xi1>
    %15 = arith.select %14, %2, %12 : vector<16x16xi1>, vector<16x16xbf16>
    %16 = arith.extf %15 : vector<16x16xbf16> to vector<16x16xf32>
    %cst_3 = arith.constant 0.000000e+00 : f32
    %17 = vector.broadcast %cst_3 : f32 to vector<16x16xf32>
    %18 = arith.cmpf oge, %16, %17 : vector<16x16xf32>
    %cst_4 = arith.constant 1.000000e-01 : f32
    %19 = vector.broadcast %cst_4 : f32 to vector<16x16xf32>
    %20 = arith.mulf %19, %16 : vector<16x16xf32>
    %21 = arith.select %18, %16, %20 : vector<16x16xi1>, vector<16x16xf32>
    %22 = arith.truncf %21 : vector<16x16xf32> to vector<16x16xbf16>
    %c0_5 = arith.constant 0 : index
    %c0_6 = arith.constant 0 : index
    %c0_7 = arith.constant 0 : index
    %23 = vector.load %arg2[%c0_5, %c0_6, %c0_7] : memref<1x32x16xbf16, #tpu.memory_space<vmem>>, vector<1x32x16xbf16>
    %24 = vector.shape_cast %23 : vector<1x32x16xbf16> to vector<32x16xbf16>
    %25 = tpu.iota {dimensions = array<i32: 0>} : vector<32x1xi32>
    %26 = vector.broadcast %0 : i32 to vector<32x1xi32>
    %27 = arith.addi %26, %25 : vector<32x1xi32>
    %c0_i32_8 = arith.constant 0 : i32
    %28 = vector.broadcast %c0_i32_8 : i32 to vector<32x1xi32>
    %29 = arith.cmpi sge, %27, %28 : vector<32x1xi32>
    %c32_i32_9 = arith.constant 32 : i32
    %30 = vector.broadcast %c32_i32_9 : i32 to vector<32x1xi32>
    %31 = arith.cmpi slt, %27, %30 : vector<32x1xi32>
    %32 = arith.andi %29, %31 : vector<32x1xi1>
    %cst_10 = arith.constant 0.000000e+00 : bf16
    %33 = vector.broadcast %cst_10 : bf16 to vector<32x16xbf16>
    %34 = vector.shape_cast %32 : vector<32x1xi1> to vector<32x1xi1>
    %35 = vector.broadcast %34 : vector<32x1xi1> to vector<32x16xi1>
    %36 = arith.select %35, %24, %33 : vector<32x16xi1>, vector<32x16xbf16>
    %37 = arith.extf %36 : vector<32x16xbf16> to vector<32x16xf32>
    %cst_11 = arith.constant 0.000000e+00 : f32
    %38 = vector.broadcast %cst_11 : f32 to vector<32x16xf32>
    %39 = arith.cmpf oge, %37, %38 : vector<32x16xf32>
    %cst_12 = arith.constant 1.000000e-01 : f32
    %40 = vector.broadcast %cst_12 : f32 to vector<32x16xf32>
    %41 = arith.mulf %40, %37 : vector<32x16xf32>
    %42 = arith.select %39, %37, %41 : vector<32x16xi1>, vector<32x16xf32>
    %43 = arith.truncf %42 : vector<32x16xf32> to vector<32x16xbf16>
    %c0_13 = arith.constant 0 : index
    %c0_14 = arith.constant 0 : index
    %c0_15 = arith.constant 0 : index
    %44 = vector.load %arg4[%c0_13, %c0_14, %c0_15] : memref<1x16x16xbf16, #tpu.memory_space<vmem>>, vector<1x16x16xbf16>
    %45 = vector.shape_cast %44 : vector<1x16x16xbf16> to vector<16x16xbf16>
    %c32_i32_16 = arith.constant 32 : i32
    %46 = arith.addi %0, %c32_i32_16 : i32
    %47 = tpu.iota {dimensions = array<i32: 0>} : vector<16x1xi32>
    %48 = vector.broadcast %46 : i32 to vector<16x1xi32>
    %49 = arith.addi %48, %47 : vector<16x1xi32>
    %c0_i32_17 = arith.constant 0 : i32
    %50 = vector.broadcast %c0_i32_17 : i32 to vector<16x1xi32>
    %51 = arith.cmpi sge, %49, %50 : vector<16x1xi32>
    %c32_i32_18 = arith.constant 32 : i32
    %52 = vector.broadcast %c32_i32_18 : i32 to vector<16x1xi32>
    %53 = arith.cmpi slt, %49, %52 : vector<16x1xi32>
    %54 = arith.andi %51, %53 : vector<16x1xi1>
    %cst_19 = arith.constant 0.000000e+00 : bf16
    %55 = vector.broadcast %cst_19 : bf16 to vector<16x16xbf16>
    %56 = vector.shape_cast %54 : vector<16x1xi1> to vector<16x1xi1>
    %57 = vector.broadcast %56 : vector<16x1xi1> to vector<16x16xi1>
    %58 = arith.select %57, %45, %55 : vector<16x16xi1>, vector<16x16xbf16>
    %59 = arith.extf %58 : vector<16x16xbf16> to vector<16x16xf32>
    %cst_20 = arith.constant 0.000000e+00 : f32
    %60 = vector.broadcast %cst_20 : f32 to vector<16x16xf32>
    %61 = arith.cmpf oge, %59, %60 : vector<16x16xf32>
    %cst_21 = arith.constant 1.000000e-01 : f32
    %62 = vector.broadcast %cst_21 : f32 to vector<16x16xf32>
    %63 = arith.mulf %62, %59 : vector<16x16xf32>
    %64 = arith.select %61, %59, %63 : vector<16x16xi1>, vector<16x16xf32>
    %65 = arith.truncf %64 : vector<16x16xf32> to vector<16x16xbf16>
    %66 = tpu.concatenate %22, %43, %65 in 0 : vector<16x16xbf16>, vector<32x16xbf16>, vector<16x16xbf16> -> vector<64x16xbf16>
    %67 = vector.extract_strided_slice %66 {offsets = [15, 0], sizes = [32, 16], strides = [1, 1]} : vector<64x16xbf16> to vector<32x16xbf16>
    %68 = vector.extract_strided_slice %66 {offsets = [16, 0], sizes = [32, 16], strides = [1, 1]} : vector<64x16xbf16> to vector<32x16xbf16>
    %69 = vector.extract_strided_slice %66 {offsets = [17, 0], sizes = [32, 16], strides = [1, 1]} : vector<64x16xbf16> to vector<32x16xbf16>
    %70 = tpu.concatenate %67, %68, %69 in 1 : vector<32x16xbf16>, vector<32x16xbf16>, vector<32x16xbf16> -> vector<32x48xbf16>
    %c0_22 = arith.constant 0 : index
    %c0_23 = arith.constant 0 : index
    %71 = vector.load %arg5[%c0_22, %c0_23] : memref<48x16xbf16, #tpu.memory_space<vmem>>, vector<48x16xbf16>
    %cst_24 = arith.constant dense<0.000000e+00> : vector<32x16xf32>
    %72 = tpu.matmul %70, %71, %cst_24 {dimension_numbers = #tpu.dot_dimension_numbers<[1], [0], [0], [1], [0, 0, 1, 1], [], []>} : vector<32x48xbf16>, vector<48x16xbf16>, vector<32x16xf32> -> vector<32x16xf32>
    %c0_25 = arith.constant 0 : index
    %c0_26 = arith.constant 0 : index
    %73 = vector.load %arg6[%c0_25, %c0_26] : memref<1x16xf32, #tpu.memory_space<vmem>>, vector<1x16xf32>
    %74 = vector.broadcast %73 : vector<1x16xf32> to vector<32x16xf32>
    %75 = arith.addf %72, %74 : vector<32x16xf32>
    %76 = arith.truncf %75 : vector<32x16xf32> to vector<32x16xbf16>
    %c0_27 = arith.constant 0 : index
    %c0_28 = arith.constant 0 : index
    %c0_29 = arith.constant 0 : index
    %77 = vector.load %arg7[%c0_27, %c0_28, %c0_29] : memref<1x32x16xbf16, #tpu.memory_space<vmem>>, vector<1x32x16xbf16>
    %78 = vector.shape_cast %77 : vector<1x32x16xbf16> to vector<32x16xbf16>
    %79 = vector.shape_cast %76 : vector<32x16xbf16> to vector<1x32x16xbf16>
    tpu.vector_store %arg7[%c0_27, %c0_28, %c0_29], %79 {strides = array<i32>} : memref<1x32x16xbf16, #tpu.memory_space<vmem>>, vector<1x32x16xbf16>,
    return
  }
  func.func @transform_0(%arg0: i32, %arg1: i32) -> (i32, i32, i32) {
    %c0_i32 = arith.constant 0 : i32
    %0 = arith.minsi %arg1, %c0_i32 : i32
    %c0_i32_0 = arith.constant 0 : i32
    %c0_i32_1 = arith.constant 0 : i32
    return %arg0, %0, %c0_i32_0 : i32, i32, i32
  }
  func.func @transform_1(%arg0: i32, %arg1: i32) -> (i32, i32, i32) {
    %c2_i32 = arith.constant 2 : i32
    %0 = arith.muli %arg1, %c2_i32 : i32
    %c1_i32 = arith.constant 1 : i32
    %1 = arith.subi %0, %c1_i32 : i32
    %c0_i32 = arith.constant 0 : i32
    %2 = arith.maxsi %1, %c0_i32 : i32
    %c0_i32_0 = arith.constant 0 : i32
    %c0_i32_1 = arith.constant 0 : i32
    return %arg0, %2, %c0_i32_0 : i32, i32, i32
  }
  func.func @transform_2(%arg0: i32, %arg1: i32) -> (i32, i32, i32) {
    %c1_i32 = arith.constant 1 : i32
    %0 = arith.addi %arg1, %c1_i32 : i32
    %c2_i32 = arith.constant 2 : i32
    %1 = arith.muli %0, %c2_i32 : i32
    %c1_i32_0 = arith.constant 1 : i32
    %2 = arith.minsi %1, %c1_i32_0 : i32
    %c0_i32 = arith.constant 0 : i32
    %c0_i32_1 = arith.constant 0 : i32
    return %arg0, %2, %c0_i32 : i32, i32, i32
  }
  func.func @transform_3(%arg0: i32, %arg1: i32) -> (i32, i32) {
    %c0_i32 = arith.constant 0 : i32
    %c0_i32_0 = arith.constant 0 : i32
    %c0_i32_1 = arith.constant 0 : i32
    return %c0_i32, %c0_i32_0 : i32, i32
  }
  func.func @transform_4(%arg0: i32, %arg1: i32) -> (i32, i32) {
    %c0_i32 = arith.constant 0 : i32
    %c0_i32_0 = arith.constant 0 : i32
    %c0_i32_1 = arith.constant 0 : i32
    return %c0_i32, %c0_i32_0 : i32, i32
  }
  func.func @transform_5(%arg0: i32, %arg1: i32) -> (i32, i32, i32) {
    %c0_i32 = arith.constant 0 : i32
    %c0_i32_0 = arith.constant 0 : i32
    return %arg0, %arg1, %c0_i32 : i32, i32, i32
  }
}

module attributes {stable_mosaic.version = 11 : i64} {
  func.func @_conv1d_kernel(%arg0: i32, %arg1: i32, %arg2: memref<1x32x8xbf16, #tpu.memory_space<vmem>>, %arg3: memref<1x16x8xbf16, #tpu.memory_space<vmem>>, %arg4: memref<1x16x8xbf16, #tpu.memory_space<vmem>>, %arg5: memref<24x8xbf16, #tpu.memory_space<vmem>>, %arg6: memref<1x8xf32, #tpu.memory_space<vmem>>, %arg7: memref<1x32x8xbf16, #tpu.memory_space<vmem>>, %arg8: memref<1x32x8xbf16, #tpu.memory_space<vmem>>) attributes {dimension_semantics = [#tpu.dimension_semantics<parallel>, #tpu.dimension_semantics<parallel>], iteration_bounds = array<i64: 2, 2>, scalar_prefetch = 0 : i64, scratch_operands = 0 : i64, tpu.core_type = #tpu.core_type<tc>, window_params = [{transform_indices = @transform_0, window_bounds = array<i64: 1, 32, 8>}, {transform_indices = @transform_1, window_bounds = array<i64: 1, 16, 8>}, {transform_indices = @transform_2, window_bounds = array<i64: 1, 16, 8>}, {pipeline_mode = #tpu.pipeline_mode<synchronous>, transform_indices = @transform_3, window_bounds = array<i64: 24, 8>}, {pipeline_mode = #tpu.pipeline_mode<synchronous>, transform_indices = @transform_4, window_bounds = array<i64: 1, 8>}, {transform_indices = @transform_5, window_bounds = array<i64: 1, 32, 8>}, {transform_indices = @transform_6, window_bounds = array<i64: 1, 32, 8>}]} {
    %c32_i32 = arith.constant 32 : i32
    %0 = arith.muli %arg1, %c32_i32 : i32
    %c0 = arith.constant 0 : index
    %c0_0 = arith.constant 0 : index
    %c0_1 = arith.constant 0 : index
    %1 = vector.load %arg3[%c0, %c0_0, %c0_1] : memref<1x16x8xbf16, #tpu.memory_space<vmem>>, vector<1x16x8xbf16>
    %2 = vector.shape_cast %1 : vector<1x16x8xbf16> to vector<16x8xbf16>
    %c16_i32 = arith.constant 16 : i32
    %3 = arith.subi %0, %c16_i32 : i32
    %4 = tpu.iota {dimensions = array<i32: 0>} : vector<16x1xi32>
    %5 = vector.broadcast %3 : i32 to vector<16x1xi32>
    %6 = arith.addi %5, %4 : vector<16x1xi32>
    %c0_i32 = arith.constant 0 : i32
    %7 = vector.broadcast %c0_i32 : i32 to vector<16x1xi32>
    %8 = arith.cmpi sge, %6, %7 : vector<16x1xi32>
    %c64_i32 = arith.constant 64 : i32
    %9 = vector.broadcast %c64_i32 : i32 to vector<16x1xi32>
    %10 = arith.cmpi slt, %6, %9 : vector<16x1xi32>
    %11 = arith.andi %8, %10 : vector<16x1xi1>
    %cst = arith.constant 0.000000e+00 : bf16
    %12 = vector.broadcast %cst : bf16 to vector<16x8xbf16>
    %13 = vector.shape_cast %11 : vector<16x1xi1> to vector<16x1xi1>
    %14 = vector.broadcast %13 : vector<16x1xi1> to vector<16x8xi1>
    %15 = arith.select %14, %2, %12 : vector<16x8xi1>, vector<16x8xbf16>
    %16 = arith.extf %15 : vector<16x8xbf16> to vector<16x8xf32>
    %cst_2 = arith.constant 0.000000e+00 : f32
    %17 = vector.broadcast %cst_2 : f32 to vector<16x8xf32>
    %18 = arith.cmpf oge, %16, %17 : vector<16x8xf32>
    %cst_3 = arith.constant 1.000000e-01 : f32
    %19 = vector.broadcast %cst_3 : f32 to vector<16x8xf32>
    %20 = arith.mulf %19, %16 : vector<16x8xf32>
    %21 = arith.select %18, %16, %20 : vector<16x8xi1>, vector<16x8xf32>
    %22 = arith.truncf %21 : vector<16x8xf32> to vector<16x8xbf16>
    %c0_4 = arith.constant 0 : index
    %c0_5 = arith.constant 0 : index
    %c0_6 = arith.constant 0 : index
    %23 = vector.load %arg2[%c0_4, %c0_5, %c0_6] : memref<1x32x8xbf16, #tpu.memory_space<vmem>>, vector<1x32x8xbf16>
    %24 = vector.shape_cast %23 : vector<1x32x8xbf16> to vector<32x8xbf16>
    %25 = tpu.iota {dimensions = array<i32: 0>} : vector<32x1xi32>
    %26 = vector.broadcast %0 : i32 to vector<32x1xi32>
    %27 = arith.addi %26, %25 : vector<32x1xi32>
    %c0_i32_7 = arith.constant 0 : i32
    %28 = vector.broadcast %c0_i32_7 : i32 to vector<32x1xi32>
    %29 = arith.cmpi sge, %27, %28 : vector<32x1xi32>
    %c64_i32_8 = arith.constant 64 : i32
    %30 = vector.broadcast %c64_i32_8 : i32 to vector<32x1xi32>
    %31 = arith.cmpi slt, %27, %30 : vector<32x1xi32>
    %32 = arith.andi %29, %31 : vector<32x1xi1>
    %cst_9 = arith.constant 0.000000e+00 : bf16
    %33 = vector.broadcast %cst_9 : bf16 to vector<32x8xbf16>
    %34 = vector.shape_cast %32 : vector<32x1xi1> to vector<32x1xi1>
    %35 = vector.broadcast %34 : vector<32x1xi1> to vector<32x8xi1>
    %36 = arith.select %35, %24, %33 : vector<32x8xi1>, vector<32x8xbf16>
    %37 = arith.extf %36 : vector<32x8xbf16> to vector<32x8xf32>
    %cst_10 = arith.constant 0.000000e+00 : f32
    %38 = vector.broadcast %cst_10 : f32 to vector<32x8xf32>
    %39 = arith.cmpf oge, %37, %38 : vector<32x8xf32>
    %cst_11 = arith.constant 1.000000e-01 : f32
    %40 = vector.broadcast %cst_11 : f32 to vector<32x8xf32>
    %41 = arith.mulf %40, %37 : vector<32x8xf32>
    %42 = arith.select %39, %37, %41 : vector<32x8xi1>, vector<32x8xf32>
    %43 = arith.truncf %42 : vector<32x8xf32> to vector<32x8xbf16>
    %c0_12 = arith.constant 0 : index
    %c0_13 = arith.constant 0 : index
    %c0_14 = arith.constant 0 : index
    %44 = vector.load %arg4[%c0_12, %c0_13, %c0_14] : memref<1x16x8xbf16, #tpu.memory_space<vmem>>, vector<1x16x8xbf16>
    %45 = vector.shape_cast %44 : vector<1x16x8xbf16> to vector<16x8xbf16>
    %c32_i32_15 = arith.constant 32 : i32
    %46 = arith.addi %0, %c32_i32_15 : i32
    %47 = tpu.iota {dimensions = array<i32: 0>} : vector<16x1xi32>
    %48 = vector.broadcast %46 : i32 to vector<16x1xi32>
    %49 = arith.addi %48, %47 : vector<16x1xi32>
    %c0_i32_16 = arith.constant 0 : i32
    %50 = vector.broadcast %c0_i32_16 : i32 to vector<16x1xi32>
    %51 = arith.cmpi sge, %49, %50 : vector<16x1xi32>
    %c64_i32_17 = arith.constant 64 : i32
    %52 = vector.broadcast %c64_i32_17 : i32 to vector<16x1xi32>
    %53 = arith.cmpi slt, %49, %52 : vector<16x1xi32>
    %54 = arith.andi %51, %53 : vector<16x1xi1>
    %cst_18 = arith.constant 0.000000e+00 : bf16
    %55 = vector.broadcast %cst_18 : bf16 to vector<16x8xbf16>
    %56 = vector.shape_cast %54 : vector<16x1xi1> to vector<16x1xi1>
    %57 = vector.broadcast %56 : vector<16x1xi1> to vector<16x8xi1>
    %58 = arith.select %57, %45, %55 : vector<16x8xi1>, vector<16x8xbf16>
    %59 = arith.extf %58 : vector<16x8xbf16> to vector<16x8xf32>
    %cst_19 = arith.constant 0.000000e+00 : f32
    %60 = vector.broadcast %cst_19 : f32 to vector<16x8xf32>
    %61 = arith.cmpf oge, %59, %60 : vector<16x8xf32>
    %cst_20 = arith.constant 1.000000e-01 : f32
    %62 = vector.broadcast %cst_20 : f32 to vector<16x8xf32>
    %63 = arith.mulf %62, %59 : vector<16x8xf32>
    %64 = arith.select %61, %59, %63 : vector<16x8xi1>, vector<16x8xf32>
    %65 = arith.truncf %64 : vector<16x8xf32> to vector<16x8xbf16>
    %66 = tpu.concatenate %22, %43, %65 in 0 : vector<16x8xbf16>, vector<32x8xbf16>, vector<16x8xbf16> -> vector<64x8xbf16>
    %67 = vector.extract_strided_slice %66 {offsets = [15, 0], sizes = [32, 8], strides = [1, 1]} : vector<64x8xbf16> to vector<32x8xbf16>
    %68 = vector.extract_strided_slice %66 {offsets = [16, 0], sizes = [32, 8], strides = [1, 1]} : vector<64x8xbf16> to vector<32x8xbf16>
    %69 = vector.extract_strided_slice %66 {offsets = [17, 0], sizes = [32, 8], strides = [1, 1]} : vector<64x8xbf16> to vector<32x8xbf16>
    %70 = tpu.concatenate %67, %68, %69 in 1 : vector<32x8xbf16>, vector<32x8xbf16>, vector<32x8xbf16> -> vector<32x24xbf16>
    %c0_21 = arith.constant 0 : index
    %c0_22 = arith.constant 0 : index
    %71 = vector.load %arg5[%c0_21, %c0_22] : memref<24x8xbf16, #tpu.memory_space<vmem>>, vector<24x8xbf16>
    %cst_23 = arith.constant dense<0.000000e+00> : vector<32x8xf32>
    %72 = tpu.matmul %70, %71, %cst_23 {dimension_numbers = #tpu.dot_dimension_numbers<[1], [0], [0], [1], [0, 0, 1, 1], [], []>} : vector<32x24xbf16>, vector<24x8xbf16>, vector<32x8xf32> -> vector<32x8xf32>
    %c0_24 = arith.constant 0 : index
    %c0_25 = arith.constant 0 : index
    %73 = vector.load %arg6[%c0_24, %c0_25] : memref<1x8xf32, #tpu.memory_space<vmem>>, vector<1x8xf32>
    %74 = vector.broadcast %73 : vector<1x8xf32> to vector<32x8xf32>
    %75 = arith.addf %72, %74 : vector<32x8xf32>
    %c0_26 = arith.constant 0 : index
    %c0_27 = arith.constant 0 : index
    %c0_28 = arith.constant 0 : index
    %76 = vector.load %arg7[%c0_26, %c0_27, %c0_28] : memref<1x32x8xbf16, #tpu.memory_space<vmem>>, vector<1x32x8xbf16>
    %77 = vector.shape_cast %76 : vector<1x32x8xbf16> to vector<32x8xbf16>
    %78 = arith.extf %77 : vector<32x8xbf16> to vector<32x8xf32>
    %79 = arith.addf %75, %78 : vector<32x8xf32>
    %80 = arith.truncf %79 : vector<32x8xf32> to vector<32x8xbf16>
    %c0_29 = arith.constant 0 : index
    %c0_30 = arith.constant 0 : index
    %c0_31 = arith.constant 0 : index
    %81 = vector.load %arg8[%c0_29, %c0_30, %c0_31] : memref<1x32x8xbf16, #tpu.memory_space<vmem>>, vector<1x32x8xbf16>
    %82 = vector.shape_cast %81 : vector<1x32x8xbf16> to vector<32x8xbf16>
    %83 = vector.shape_cast %80 : vector<32x8xbf16> to vector<1x32x8xbf16>
    tpu.vector_store %arg8[%c0_29, %c0_30, %c0_31], %83 {strides = array<i32>} : memref<1x32x8xbf16, #tpu.memory_space<vmem>>, vector<1x32x8xbf16>,
    return
  }
  func.func @transform_0(%arg0: i32, %arg1: i32) -> (i32, i32, i32) {
    %c1_i32 = arith.constant 1 : i32
    %0 = arith.minsi %arg1, %c1_i32 : i32
    %c0_i32 = arith.constant 0 : i32
    %c0_i32_0 = arith.constant 0 : i32
    return %arg0, %0, %c0_i32 : i32, i32, i32
  }
  func.func @transform_1(%arg0: i32, %arg1: i32) -> (i32, i32, i32) {
    %c2_i32 = arith.constant 2 : i32
    %0 = arith.muli %arg1, %c2_i32 : i32
    %c1_i32 = arith.constant 1 : i32
    %1 = arith.subi %0, %c1_i32 : i32
    %c0_i32 = arith.constant 0 : i32
    %2 = arith.maxsi %1, %c0_i32 : i32
    %c0_i32_0 = arith.constant 0 : i32
    %c0_i32_1 = arith.constant 0 : i32
    return %arg0, %2, %c0_i32_0 : i32, i32, i32
  }
  func.func @transform_2(%arg0: i32, %arg1: i32) -> (i32, i32, i32) {
    %c1_i32 = arith.constant 1 : i32
    %0 = arith.addi %arg1, %c1_i32 : i32
    %c2_i32 = arith.constant 2 : i32
    %1 = arith.muli %0, %c2_i32 : i32
    %c3_i32 = arith.constant 3 : i32
    %2 = arith.minsi %1, %c3_i32 : i32
    %c0_i32 = arith.constant 0 : i32
    %c0_i32_0 = arith.constant 0 : i32
    return %arg0, %2, %c0_i32 : i32, i32, i32
  }
  func.func @transform_3(%arg0: i32, %arg1: i32) -> (i32, i32) {
    %c0_i32 = arith.constant 0 : i32
    %c0_i32_0 = arith.constant 0 : i32
    %c0_i32_1 = arith.constant 0 : i32
    return %c0_i32, %c0_i32_0 : i32, i32
  }
  func.func @transform_4(%arg0: i32, %arg1: i32) -> (i32, i32) {
    %c0_i32 = arith.constant 0 : i32
    %c0_i32_0 = arith.constant 0 : i32
    %c0_i32_1 = arith.constant 0 : i32
    return %c0_i32, %c0_i32_0 : i32, i32
  }
  func.func @transform_5(%arg0: i32, %arg1: i32) -> (i32, i32, i32) {
    %c0_i32 = arith.constant 0 : i32
    %c0_i32_0 = arith.constant 0 : i32
    return %arg0, %arg1, %c0_i32 : i32, i32, i32
  }
  func.func @transform_6(%arg0: i32, %arg1: i32) -> (i32, i32, i32) {
    %c0_i32 = arith.constant 0 : i32
    %c0_i32_0 = arith.constant 0 : i32
    return %arg0, %arg1, %c0_i32 : i32, i32, i32
  }
}

module attributes {stable_mosaic.version = 11 : i64} {
  func.func @_conv1d_kernel(%arg0: i32, %arg1: i32, %arg2: memref<1x32x8xbf16, #tpu.memory_space<vmem>>, %arg3: memref<1x16x8xbf16, #tpu.memory_space<vmem>>, %arg4: memref<1x16x8xbf16, #tpu.memory_space<vmem>>, %arg5: memref<24x8xbf16, #tpu.memory_space<vmem>>, %arg6: memref<1x8xf32, #tpu.memory_space<vmem>>, %arg7: memref<1x32x8xbf16, #tpu.memory_space<vmem>>, %arg8: memref<1x32x8xbf16, #tpu.memory_space<vmem>>) attributes {dimension_semantics = [#tpu.dimension_semantics<parallel>, #tpu.dimension_semantics<parallel>], iteration_bounds = array<i64: 2, 2>, scalar_prefetch = 0 : i64, scratch_operands = 0 : i64, tpu.core_type = #tpu.core_type<tc>, window_params = [{transform_indices = @transform_0, window_bounds = array<i64: 1, 32, 8>}, {transform_indices = @transform_1, window_bounds = array<i64: 1, 16, 8>}, {transform_indices = @transform_2, window_bounds = array<i64: 1, 16, 8>}, {pipeline_mode = #tpu.pipeline_mode<synchronous>, transform_indices = @transform_3, window_bounds = array<i64: 24, 8>}, {pipeline_mode = #tpu.pipeline_mode<synchronous>, transform_indices = @transform_4, window_bounds = array<i64: 1, 8>}, {transform_indices = @transform_5, window_bounds = array<i64: 1, 32, 8>}, {transform_indices = @transform_6, window_bounds = array<i64: 1, 32, 8>}]} {
    %c32_i32 = arith.constant 32 : i32
    %0 = arith.muli %arg1, %c32_i32 : i32
    %c0 = arith.constant 0 : index
    %c0_0 = arith.constant 0 : index
    %c0_1 = arith.constant 0 : index
    %1 = vector.load %arg3[%c0, %c0_0, %c0_1] : memref<1x16x8xbf16, #tpu.memory_space<vmem>>, vector<1x16x8xbf16>
    %2 = vector.shape_cast %1 : vector<1x16x8xbf16> to vector<16x8xbf16>
    %c16_i32 = arith.constant 16 : i32
    %3 = arith.subi %0, %c16_i32 : i32
    %4 = tpu.iota {dimensions = array<i32: 0>} : vector<16x1xi32>
    %5 = vector.broadcast %3 : i32 to vector<16x1xi32>
    %6 = arith.addi %5, %4 : vector<16x1xi32>
    %c0_i32 = arith.constant 0 : i32
    %7 = vector.broadcast %c0_i32 : i32 to vector<16x1xi32>
    %8 = arith.cmpi sge, %6, %7 : vector<16x1xi32>
    %c64_i32 = arith.constant 64 : i32
    %9 = vector.broadcast %c64_i32 : i32 to vector<16x1xi32>
    %10 = arith.cmpi slt, %6, %9 : vector<16x1xi32>
    %11 = arith.andi %8, %10 : vector<16x1xi1>
    %cst = arith.constant 0.000000e+00 : bf16
    %12 = vector.broadcast %cst : bf16 to vector<16x8xbf16>
    %13 = vector.shape_cast %11 : vector<16x1xi1> to vector<16x1xi1>
    %14 = vector.broadcast %13 : vector<16x1xi1> to vector<16x8xi1>
    %15 = arith.select %14, %2, %12 : vector<16x8xi1>, vector<16x8xbf16>
    %16 = arith.extf %15 : vector<16x8xbf16> to vector<16x8xf32>
    %cst_2 = arith.constant 0.000000e+00 : f32
    %17 = vector.broadcast %cst_2 : f32 to vector<16x8xf32>
    %18 = arith.cmpf oge, %16, %17 : vector<16x8xf32>
    %cst_3 = arith.constant 1.000000e-01 : f32
    %19 = vector.broadcast %cst_3 : f32 to vector<16x8xf32>
    %20 = arith.mulf %19, %16 : vector<16x8xf32>
    %21 = arith.select %18, %16, %20 : vector<16x8xi1>, vector<16x8xf32>
    %22 = arith.truncf %21 : vector<16x8xf32> to vector<16x8xbf16>
    %c0_4 = arith.constant 0 : index
    %c0_5 = arith.constant 0 : index
    %c0_6 = arith.constant 0 : index
    %23 = vector.load %arg2[%c0_4, %c0_5, %c0_6] : memref<1x32x8xbf16, #tpu.memory_space<vmem>>, vector<1x32x8xbf16>
    %24 = vector.shape_cast %23 : vector<1x32x8xbf16> to vector<32x8xbf16>
    %25 = tpu.iota {dimensions = array<i32: 0>} : vector<32x1xi32>
    %26 = vector.broadcast %0 : i32 to vector<32x1xi32>
    %27 = arith.addi %26, %25 : vector<32x1xi32>
    %c0_i32_7 = arith.constant 0 : i32
    %28 = vector.broadcast %c0_i32_7 : i32 to vector<32x1xi32>
    %29 = arith.cmpi sge, %27, %28 : vector<32x1xi32>
    %c64_i32_8 = arith.constant 64 : i32
    %30 = vector.broadcast %c64_i32_8 : i32 to vector<32x1xi32>
    %31 = arith.cmpi slt, %27, %30 : vector<32x1xi32>
    %32 = arith.andi %29, %31 : vector<32x1xi1>
    %cst_9 = arith.constant 0.000000e+00 : bf16
    %33 = vector.broadcast %cst_9 : bf16 to vector<32x8xbf16>
    %34 = vector.shape_cast %32 : vector<32x1xi1> to vector<32x1xi1>
    %35 = vector.broadcast %34 : vector<32x1xi1> to vector<32x8xi1>
    %36 = arith.select %35, %24, %33 : vector<32x8xi1>, vector<32x8xbf16>
    %37 = arith.extf %36 : vector<32x8xbf16> to vector<32x8xf32>
    %cst_10 = arith.constant 0.000000e+00 : f32
    %38 = vector.broadcast %cst_10 : f32 to vector<32x8xf32>
    %39 = arith.cmpf oge, %37, %38 : vector<32x8xf32>
    %cst_11 = arith.constant 1.000000e-01 : f32
    %40 = vector.broadcast %cst_11 : f32 to vector<32x8xf32>
    %41 = arith.mulf %40, %37 : vector<32x8xf32>
    %42 = arith.select %39, %37, %41 : vector<32x8xi1>, vector<32x8xf32>
    %43 = arith.truncf %42 : vector<32x8xf32> to vector<32x8xbf16>
    %c0_12 = arith.constant 0 : index
    %c0_13 = arith.constant 0 : index
    %c0_14 = arith.constant 0 : index
    %44 = vector.load %arg4[%c0_12, %c0_13, %c0_14] : memref<1x16x8xbf16, #tpu.memory_space<vmem>>, vector<1x16x8xbf16>
    %45 = vector.shape_cast %44 : vector<1x16x8xbf16> to vector<16x8xbf16>
    %c32_i32_15 = arith.constant 32 : i32
    %46 = arith.addi %0, %c32_i32_15 : i32
    %47 = tpu.iota {dimensions = array<i32: 0>} : vector<16x1xi32>
    %48 = vector.broadcast %46 : i32 to vector<16x1xi32>
    %49 = arith.addi %48, %47 : vector<16x1xi32>
    %c0_i32_16 = arith.constant 0 : i32
    %50 = vector.broadcast %c0_i32_16 : i32 to vector<16x1xi32>
    %51 = arith.cmpi sge, %49, %50 : vector<16x1xi32>
    %c64_i32_17 = arith.constant 64 : i32
    %52 = vector.broadcast %c64_i32_17 : i32 to vector<16x1xi32>
    %53 = arith.cmpi slt, %49, %52 : vector<16x1xi32>
    %54 = arith.andi %51, %53 : vector<16x1xi1>
    %cst_18 = arith.constant 0.000000e+00 : bf16
    %55 = vector.broadcast %cst_18 : bf16 to vector<16x8xbf16>
    %56 = vector.shape_cast %54 : vector<16x1xi1> to vector<16x1xi1>
    %57 = vector.broadcast %56 : vector<16x1xi1> to vector<16x8xi1>
    %58 = arith.select %57, %45, %55 : vector<16x8xi1>, vector<16x8xbf16>
    %59 = arith.extf %58 : vector<16x8xbf16> to vector<16x8xf32>
    %cst_19 = arith.constant 0.000000e+00 : f32
    %60 = vector.broadcast %cst_19 : f32 to vector<16x8xf32>
    %61 = arith.cmpf oge, %59, %60 : vector<16x8xf32>
    %cst_20 = arith.constant 1.000000e-01 : f32
    %62 = vector.broadcast %cst_20 : f32 to vector<16x8xf32>
    %63 = arith.mulf %62, %59 : vector<16x8xf32>
    %64 = arith.select %61, %59, %63 : vector<16x8xi1>, vector<16x8xf32>
    %65 = arith.truncf %64 : vector<16x8xf32> to vector<16x8xbf16>
    %66 = tpu.concatenate %22, %43, %65 in 0 : vector<16x8xbf16>, vector<32x8xbf16>, vector<16x8xbf16> -> vector<64x8xbf16>
    %67 = vector.extract_strided_slice %66 {offsets = [13, 0], sizes = [32, 8], strides = [1, 1]} : vector<64x8xbf16> to vector<32x8xbf16>
    %68 = vector.extract_strided_slice %66 {offsets = [16, 0], sizes = [32, 8], strides = [1, 1]} : vector<64x8xbf16> to vector<32x8xbf16>
    %69 = vector.extract_strided_slice %66 {offsets = [19, 0], sizes = [32, 8], strides = [1, 1]} : vector<64x8xbf16> to vector<32x8xbf16>
    %70 = tpu.concatenate %67, %68, %69 in 1 : vector<32x8xbf16>, vector<32x8xbf16>, vector<32x8xbf16> -> vector<32x24xbf16>
    %c0_21 = arith.constant 0 : index
    %c0_22 = arith.constant 0 : index
    %71 = vector.load %arg5[%c0_21, %c0_22] : memref<24x8xbf16, #tpu.memory_space<vmem>>, vector<24x8xbf16>
    %cst_23 = arith.constant dense<0.000000e+00> : vector<32x8xf32>
    %72 = tpu.matmul %70, %71, %cst_23 {dimension_numbers = #tpu.dot_dimension_numbers<[1], [0], [0], [1], [0, 0, 1, 1], [], []>} : vector<32x24xbf16>, vector<24x8xbf16>, vector<32x8xf32> -> vector<32x8xf32>
    %c0_24 = arith.constant 0 : index
    %c0_25 = arith.constant 0 : index
    %73 = vector.load %arg6[%c0_24, %c0_25] : memref<1x8xf32, #tpu.memory_space<vmem>>, vector<1x8xf32>
    %74 = vector.broadcast %73 : vector<1x8xf32> to vector<32x8xf32>
    %75 = arith.addf %72, %74 : vector<32x8xf32>
    %c0_26 = arith.constant 0 : index
    %c0_27 = arith.constant 0 : index
    %c0_28 = arith.constant 0 : index
    %76 = vector.load %arg7[%c0_26, %c0_27, %c0_28] : memref<1x32x8xbf16, #tpu.memory_space<vmem>>, vector<1x32x8xbf16>
    %77 = vector.shape_cast %76 : vector<1x32x8xbf16> to vector<32x8xbf16>
    %78 = arith.extf %77 : vector<32x8xbf16> to vector<32x8xf32>
    %79 = arith.addf %75, %78 : vector<32x8xf32>
    %80 = arith.truncf %79 : vector<32x8xf32> to vector<32x8xbf16>
    %c0_29 = arith.constant 0 : index
    %c0_30 = arith.constant 0 : index
    %c0_31 = arith.constant 0 : index
    %81 = vector.load %arg8[%c0_29, %c0_30, %c0_31] : memref<1x32x8xbf16, #tpu.memory_space<vmem>>, vector<1x32x8xbf16>
    %82 = vector.shape_cast %81 : vector<1x32x8xbf16> to vector<32x8xbf16>
    %83 = vector.shape_cast %80 : vector<32x8xbf16> to vector<1x32x8xbf16>
    tpu.vector_store %arg8[%c0_29, %c0_30, %c0_31], %83 {strides = array<i32>} : memref<1x32x8xbf16, #tpu.memory_space<vmem>>, vector<1x32x8xbf16>,
    return
  }
  func.func @transform_0(%arg0: i32, %arg1: i32) -> (i32, i32, i32) {
    %c1_i32 = arith.constant 1 : i32
    %0 = arith.minsi %arg1, %c1_i32 : i32
    %c0_i32 = arith.constant 0 : i32
    %c0_i32_0 = arith.constant 0 : i32
    return %arg0, %0, %c0_i32 : i32, i32, i32
  }
  func.func @transform_1(%arg0: i32, %arg1: i32) -> (i32, i32, i32) {
    %c2_i32 = arith.constant 2 : i32
    %0 = arith.muli %arg1, %c2_i32 : i32
    %c1_i32 = arith.constant 1 : i32
    %1 = arith.subi %0, %c1_i32 : i32
    %c0_i32 = arith.constant 0 : i32
    %2 = arith.maxsi %1, %c0_i32 : i32
    %c0_i32_0 = arith.constant 0 : i32
    %c0_i32_1 = arith.constant 0 : i32
    return %arg0, %2, %c0_i32_0 : i32, i32, i32
  }
  func.func @transform_2(%arg0: i32, %arg1: i32) -> (i32, i32, i32) {
    %c1_i32 = arith.constant 1 : i32
    %0 = arith.addi %arg1, %c1_i32 : i32
    %c2_i32 = arith.constant 2 : i32
    %1 = arith.muli %0, %c2_i32 : i32
    %c3_i32 = arith.constant 3 : i32
    %2 = arith.minsi %1, %c3_i32 : i32
    %c0_i32 = arith.constant 0 : i32
    %c0_i32_0 = arith.constant 0 : i32
    return %arg0, %2, %c0_i32 : i32, i32, i32
  }
  func.func @transform_3(%arg0: i32, %arg1: i32) -> (i32, i32) {
    %c0_i32 = arith.constant 0 : i32
    %c0_i32_0 = arith.constant 0 : i32
    %c0_i32_1 = arith.constant 0 : i32
    return %c0_i32, %c0_i32_0 : i32, i32
  }
  func.func @transform_4(%arg0: i32, %arg1: i32) -> (i32, i32) {
    %c0_i32 = arith.constant 0 : i32
    %c0_i32_0 = arith.constant 0 : i32
    %c0_i32_1 = arith.constant 0 : i32
    return %c0_i32, %c0_i32_0 : i32, i32
  }
  func.func @transform_5(%arg0: i32, %arg1: i32) -> (i32, i32, i32) {
    %c0_i32 = arith.constant 0 : i32
    %c0_i32_0 = arith.constant 0 : i32
    return %arg0, %arg1, %c0_i32 : i32, i32, i32
  }
  func.func @transform_6(%arg0: i32, %arg1: i32) -> (i32, i32, i32) {
    %c0_i32 = arith.constant 0 : i32
    %c0_i32_0 = arith.constant 0 : i32
    return %arg0, %arg1, %c0_i32 : i32, i32, i32
  }
}

module attributes {stable_mosaic.version = 11 : i64} {
  func.func @_conv1d_kernel(%arg0: i32, %arg1: i32, %arg2: memref<1x32x8xbf16, #tpu.memory_space<vmem>>, %arg3: memref<1x16x8xbf16, #tpu.memory_space<vmem>>, %arg4: memref<1x16x8xbf16, #tpu.memory_space<vmem>>, %arg5: memref<56x1xbf16, #tpu.memory_space<vmem>>, %arg6: memref<1x1xf32, #tpu.memory_space<vmem>>, %arg7: memref<1x32x1xf32, #tpu.memory_space<vmem>>) attributes {dimension_semantics = [#tpu.dimension_semantics<parallel>, #tpu.dimension_semantics<parallel>], iteration_bounds = array<i64: 2, 2>, scalar_prefetch = 0 : i64, scratch_operands = 0 : i64, tpu.core_type = #tpu.core_type<tc>, window_params = [{transform_indices = @transform_0, window_bounds = array<i64: 1, 32, 8>}, {transform_indices = @transform_1, window_bounds = array<i64: 1, 16, 8>}, {transform_indices = @transform_2, window_bounds = array<i64: 1, 16, 8>}, {pipeline_mode = #tpu.pipeline_mode<synchronous>, transform_indices = @transform_3, window_bounds = array<i64: 56, 1>}, {pipeline_mode = #tpu.pipeline_mode<synchronous>, transform_indices = @transform_4, window_bounds = array<i64: 1, 1>}, {transform_indices = @transform_5, window_bounds = array<i64: 1, 32, 1>}]} {
    %c32_i32 = arith.constant 32 : i32
    %0 = arith.muli %arg1, %c32_i32 : i32
    %c0 = arith.constant 0 : index
    %c0_0 = arith.constant 0 : index
    %c0_1 = arith.constant 0 : index
    %1 = vector.load %arg3[%c0, %c0_0, %c0_1] : memref<1x16x8xbf16, #tpu.memory_space<vmem>>, vector<1x16x8xbf16>
    %2 = vector.shape_cast %1 : vector<1x16x8xbf16> to vector<16x8xbf16>
    %c16_i32 = arith.constant 16 : i32
    %3 = arith.subi %0, %c16_i32 : i32
    %4 = tpu.iota {dimensions = array<i32: 0>} : vector<16x1xi32>
    %5 = vector.broadcast %3 : i32 to vector<16x1xi32>
    %6 = arith.addi %5, %4 : vector<16x1xi32>
    %c0_i32 = arith.constant 0 : i32
    %7 = vector.broadcast %c0_i32 : i32 to vector<16x1xi32>
    %8 = arith.cmpi sge, %6, %7 : vector<16x1xi32>
    %c64_i32 = arith.constant 64 : i32
    %9 = vector.broadcast %c64_i32 : i32 to vector<16x1xi32>
    %10 = arith.cmpi slt, %6, %9 : vector<16x1xi32>
    %11 = arith.andi %8, %10 : vector<16x1xi1>
    %cst = arith.constant 0.000000e+00 : bf16
    %12 = vector.broadcast %cst : bf16 to vector<16x8xbf16>
    %13 = vector.shape_cast %11 : vector<16x1xi1> to vector<16x1xi1>
    %14 = vector.broadcast %13 : vector<16x1xi1> to vector<16x8xi1>
    %15 = arith.select %14, %2, %12 : vector<16x8xi1>, vector<16x8xbf16>
    %16 = arith.extf %15 : vector<16x8xbf16> to vector<16x8xf32>
    %cst_2 = arith.constant 0.000000e+00 : f32
    %17 = vector.broadcast %cst_2 : f32 to vector<16x8xf32>
    %18 = arith.cmpf oge, %16, %17 : vector<16x8xf32>
    %cst_3 = arith.constant 1.000000e-01 : f32
    %19 = vector.broadcast %cst_3 : f32 to vector<16x8xf32>
    %20 = arith.mulf %19, %16 : vector<16x8xf32>
    %21 = arith.select %18, %16, %20 : vector<16x8xi1>, vector<16x8xf32>
    %22 = arith.truncf %21 : vector<16x8xf32> to vector<16x8xbf16>
    %c0_4 = arith.constant 0 : index
    %c0_5 = arith.constant 0 : index
    %c0_6 = arith.constant 0 : index
    %23 = vector.load %arg2[%c0_4, %c0_5, %c0_6] : memref<1x32x8xbf16, #tpu.memory_space<vmem>>, vector<1x32x8xbf16>
    %24 = vector.shape_cast %23 : vector<1x32x8xbf16> to vector<32x8xbf16>
    %25 = tpu.iota {dimensions = array<i32: 0>} : vector<32x1xi32>
    %26 = vector.broadcast %0 : i32 to vector<32x1xi32>
    %27 = arith.addi %26, %25 : vector<32x1xi32>
    %c0_i32_7 = arith.constant 0 : i32
    %28 = vector.broadcast %c0_i32_7 : i32 to vector<32x1xi32>
    %29 = arith.cmpi sge, %27, %28 : vector<32x1xi32>
    %c64_i32_8 = arith.constant 64 : i32
    %30 = vector.broadcast %c64_i32_8 : i32 to vector<32x1xi32>
    %31 = arith.cmpi slt, %27, %30 : vector<32x1xi32>
    %32 = arith.andi %29, %31 : vector<32x1xi1>
    %cst_9 = arith.constant 0.000000e+00 : bf16
    %33 = vector.broadcast %cst_9 : bf16 to vector<32x8xbf16>
    %34 = vector.shape_cast %32 : vector<32x1xi1> to vector<32x1xi1>
    %35 = vector.broadcast %34 : vector<32x1xi1> to vector<32x8xi1>
    %36 = arith.select %35, %24, %33 : vector<32x8xi1>, vector<32x8xbf16>
    %37 = arith.extf %36 : vector<32x8xbf16> to vector<32x8xf32>
    %cst_10 = arith.constant 0.000000e+00 : f32
    %38 = vector.broadcast %cst_10 : f32 to vector<32x8xf32>
    %39 = arith.cmpf oge, %37, %38 : vector<32x8xf32>
    %cst_11 = arith.constant 1.000000e-01 : f32
    %40 = vector.broadcast %cst_11 : f32 to vector<32x8xf32>
    %41 = arith.mulf %40, %37 : vector<32x8xf32>
    %42 = arith.select %39, %37, %41 : vector<32x8xi1>, vector<32x8xf32>
    %43 = arith.truncf %42 : vector<32x8xf32> to vector<32x8xbf16>
    %c0_12 = arith.constant 0 : index
    %c0_13 = arith.constant 0 : index
    %c0_14 = arith.constant 0 : index
    %44 = vector.load %arg4[%c0_12, %c0_13, %c0_14] : memref<1x16x8xbf16, #tpu.memory_space<vmem>>, vector<1x16x8xbf16>
    %45 = vector.shape_cast %44 : vector<1x16x8xbf16> to vector<16x8xbf16>
    %c32_i32_15 = arith.constant 32 : i32
    %46 = arith.addi %0, %c32_i32_15 : i32
    %47 = tpu.iota {dimensions = array<i32: 0>} : vector<16x1xi32>
    %48 = vector.broadcast %46 : i32 to vector<16x1xi32>
    %49 = arith.addi %48, %47 : vector<16x1xi32>
    %c0_i32_16 = arith.constant 0 : i32
    %50 = vector.broadcast %c0_i32_16 : i32 to vector<16x1xi32>
    %51 = arith.cmpi sge, %49, %50 : vector<16x1xi32>
    %c64_i32_17 = arith.constant 64 : i32
    %52 = vector.broadcast %c64_i32_17 : i32 to vector<16x1xi32>
    %53 = arith.cmpi slt, %49, %52 : vector<16x1xi32>
    %54 = arith.andi %51, %53 : vector<16x1xi1>
    %cst_18 = arith.constant 0.000000e+00 : bf16
    %55 = vector.broadcast %cst_18 : bf16 to vector<16x8xbf16>
    %56 = vector.shape_cast %54 : vector<16x1xi1> to vector<16x1xi1>
    %57 = vector.broadcast %56 : vector<16x1xi1> to vector<16x8xi1>
    %58 = arith.select %57, %45, %55 : vector<16x8xi1>, vector<16x8xbf16>
    %59 = arith.extf %58 : vector<16x8xbf16> to vector<16x8xf32>
    %cst_19 = arith.constant 0.000000e+00 : f32
    %60 = vector.broadcast %cst_19 : f32 to vector<16x8xf32>
    %61 = arith.cmpf oge, %59, %60 : vector<16x8xf32>
    %cst_20 = arith.constant 1.000000e-01 : f32
    %62 = vector.broadcast %cst_20 : f32 to vector<16x8xf32>
    %63 = arith.mulf %62, %59 : vector<16x8xf32>
    %64 = arith.select %61, %59, %63 : vector<16x8xi1>, vector<16x8xf32>
    %65 = arith.truncf %64 : vector<16x8xf32> to vector<16x8xbf16>
    %66 = tpu.concatenate %22, %43, %65 in 0 : vector<16x8xbf16>, vector<32x8xbf16>, vector<16x8xbf16> -> vector<64x8xbf16>
    %67 = vector.extract_strided_slice %66 {offsets = [13, 0], sizes = [32, 8], strides = [1, 1]} : vector<64x8xbf16> to vector<32x8xbf16>
    %68 = vector.extract_strided_slice %66 {offsets = [14, 0], sizes = [32, 8], strides = [1, 1]} : vector<64x8xbf16> to vector<32x8xbf16>
    %69 = vector.extract_strided_slice %66 {offsets = [15, 0], sizes = [32, 8], strides = [1, 1]} : vector<64x8xbf16> to vector<32x8xbf16>
    %70 = vector.extract_strided_slice %66 {offsets = [16, 0], sizes = [32, 8], strides = [1, 1]} : vector<64x8xbf16> to vector<32x8xbf16>
    %71 = vector.extract_strided_slice %66 {offsets = [17, 0], sizes = [32, 8], strides = [1, 1]} : vector<64x8xbf16> to vector<32x8xbf16>
    %72 = vector.extract_strided_slice %66 {offsets = [18, 0], sizes = [32, 8], strides = [1, 1]} : vector<64x8xbf16> to vector<32x8xbf16>
    %73 = vector.extract_strided_slice %66 {offsets = [19, 0], sizes = [32, 8], strides = [1, 1]} : vector<64x8xbf16> to vector<32x8xbf16>
    %74 = tpu.concatenate %67, %68, %69, %70, %71, %72, %73 in 1 : vector<32x8xbf16>, vector<32x8xbf16>, vector<32x8xbf16>, vector<32x8xbf16>, vector<32x8xbf16>, vector<32x8xbf16>, vector<32x8xbf16> -> vector<32x56xbf16>
    %c0_21 = arith.constant 0 : index
    %c0_22 = arith.constant 0 : index
    %75 = vector.load %arg5[%c0_21, %c0_22] : memref<56x1xbf16, #tpu.memory_space<vmem>>, vector<56x1xbf16>
    %cst_23 = arith.constant dense<0.000000e+00> : vector<32x1xf32>
    %76 = tpu.matmul %74, %75, %cst_23 {dimension_numbers = #tpu.dot_dimension_numbers<[1], [0], [0], [1], [0, 0, 1, 1], [], []>} : vector<32x56xbf16>, vector<56x1xbf16>, vector<32x1xf32> -> vector<32x1xf32>
    %c0_24 = arith.constant 0 : index
    %c0_25 = arith.constant 0 : index
    %77 = vector.load %arg6[%c0_24, %c0_25] : memref<1x1xf32, #tpu.memory_space<vmem>>, vector<1x1xf32>
    %78 = vector.broadcast %77 : vector<1x1xf32> to vector<32x1xf32>
    %79 = arith.addf %76, %78 : vector<32x1xf32>
    %80 = math.tanh %79 : vector<32x1xf32>
    %c0_26 = arith.constant 0 : index
    %c0_27 = arith.constant 0 : index
    %c0_28 = arith.constant 0 : index
    %81 = vector.load %arg7[%c0_26, %c0_27, %c0_28] : memref<1x32x1xf32, #tpu.memory_space<vmem>>, vector<1x32x1xf32>
    %82 = vector.shape_cast %81 : vector<1x32x1xf32> to vector<32x1xf32>
    %83 = vector.shape_cast %80 : vector<32x1xf32> to vector<1x32x1xf32>
    tpu.vector_store %arg7[%c0_26, %c0_27, %c0_28], %83 {strides = array<i32>} : memref<1x32x1xf32, #tpu.memory_space<vmem>>, vector<1x32x1xf32>,
    return
  }
  func.func @transform_0(%arg0: i32, %arg1: i32) -> (i32, i32, i32) {
    %c1_i32 = arith.constant 1 : i32
    %0 = arith.minsi %arg1, %c1_i32 : i32
    %c0_i32 = arith.constant 0 : i32
    %c0_i32_0 = arith.constant 0 : i32
    return %arg0, %0, %c0_i32 : i32, i32, i32
  }
  func.func @transform_1(%arg0: i32, %arg1: i32) -> (i32, i32, i32) {
    %c2_i32 = arith.constant 2 : i32
    %0 = arith.muli %arg1, %c2_i32 : i32
    %c1_i32 = arith.constant 1 : i32
    %1 = arith.subi %0, %c1_i32 : i32
    %c0_i32 = arith.constant 0 : i32
    %2 = arith.maxsi %1, %c0_i32 : i32
    %c0_i32_0 = arith.constant 0 : i32
    %c0_i32_1 = arith.constant 0 : i32
    return %arg0, %2, %c0_i32_0 : i32, i32, i32
  }
  func.func @transform_2(%arg0: i32, %arg1: i32) -> (i32, i32, i32) {
    %c1_i32 = arith.constant 1 : i32
    %0 = arith.addi %arg1, %c1_i32 : i32
    %c2_i32 = arith.constant 2 : i32
    %1 = arith.muli %0, %c2_i32 : i32
    %c3_i32 = arith.constant 3 : i32
    %2 = arith.minsi %1, %c3_i32 : i32
    %c0_i32 = arith.constant 0 : i32
    %c0_i32_0 = arith.constant 0 : i32
    return %arg0, %2, %c0_i32 : i32, i32, i32
  }
  func.func @transform_3(%arg0: i32, %arg1: i32) -> (i32, i32) {
    %c0_i32 = arith.constant 0 : i32
    %c0_i32_0 = arith.constant 0 : i32
    %c0_i32_1 = arith.constant 0 : i32
    return %c0_i32, %c0_i32_0 : i32, i32
  }
  func.func @transform_4(%arg0: i32, %arg1: i32) -> (i32, i32) {
    %c0_i32 = arith.constant 0 : i32
    %c0_i32_0 = arith.constant 0 : i32
    %c0_i32_1 = arith.constant 0 : i32
    return %c0_i32, %c0_i32_0 : i32, i32
  }
  func.func @transform_5(%arg0: i32, %arg1: i32) -> (i32, i32, i32) {
    %c0_i32 = arith.constant 0 : i32
    %c0_i32_0 = arith.constant 0 : i32
    return %arg0, %arg1, %c0_i32 : i32, i32, i32
  }
}

</mosaic_0001>

<llo_original>
// kernel: tile.11
$region0: #{tile.11}
  %s0 = inlined_call_operand.vmem [shape: f32[2,1,1,16], index: 0, kind: input, shape index: {}]
  %s1 = inlined_call_operand.vmem [shape: f32[1,32], index: 1, kind: output, shape index: {}]
  $region1: #{tile.11} parent=0
    #allocation0 [shape = 'u8[4096]{0}', space=vmem, size = 0x1000, scoped, tag = 'scoped mem for output reshape']
    #allocation1 [shape = 'u8[4096]{0}', space=vmem, size = 0x1000, scoped, tag = 'scoped mem for input reshape']
    %s3 = ssub.s32 4, 1
    %v4 = vld [vmem:[%s0] sm:%s3]
    %5 = vst [vmem:[#allocation1] sm:%s3] %v4
    %v6 = vld [vmem:[#allocation1] sm:$0x1]
    %vm7 = vcmask 130048
    %8 = vst.msk [vmem:[#allocation0] sm:$0x1] %vm7, %v6
    %s9 = scalar_lea.vmem [#allocation1], 1
    %v10 = vld [vmem:[%s9] sm:$0x1]
    %11 = vrot.lane.b32.xlu0 %v10, 16
    %v12 = vpop.permute.xlu0 %11
    %vm13 = vcmask 261248
    %14 = vst.msk [vmem:[#allocation0] sm:$0x1] %vm13, %v12
    %s16 = ssub.s32 2, 1
    %v17 = vld [vmem:[#allocation0] sm:%s16]
    %s19 = ssub.s32 2, 1
    %20 = vst [vmem:[%s1] sm:%s19] %v17

// kernel: tile.15
$region0: #{tile.15}
  %s0 = inlined_call_operand.vmem [shape: f32[2,1,1,8], index: 0, kind: input, shape index: {}]
  %s1 = inlined_call_operand.vmem [shape: f32[1,16], index: 1, kind: output, shape index: {}]
  $region1: #{tile.15} parent=0
    #allocation0 [shape = 'u8[4096]{0}', space=vmem, size = 0x1000, scoped, tag = 'scoped mem for output reshape']
    #allocation1 [shape = 'u8[4096]{0}', space=vmem, size = 0x1000, scoped, tag = 'scoped mem for input reshape']
    %s3 = ssub.s32 4, 1
    %v4 = vld [vmem:[%s0] sm:%s3]
    %5 = vst [vmem:[#allocation1] sm:%s3] %v4
    %v6 = vld [vmem:[#allocation1] sm:$0x1]
    %vm7 = vcmask 64512
    %8 = vst.msk [vmem:[#allocation0] sm:$0x1] %vm7, %v6
    %s9 = scalar_lea.vmem [#allocation1], 1
    %v10 = vld [vmem:[%s9] sm:$0x1]
    %11 = vrot.lane.b32.xlu0 %v10, 8
    %v12 = vpop.permute.xlu0 %11
    %vm13 = vcmask 130112
    %14 = vst.msk [vmem:[#allocation0] sm:$0x1] %vm13, %v12
    %s16 = ssub.s32 2, 1
    %v17 = vld [vmem:[#allocation0] sm:%s16]
    %s19 = ssub.s32 2, 1
    %20 = vst [vmem:[%s1] sm:%s19] %v17

// kernel: tile.14
$region0: #{tile.14}
  #allocation0 [shape = 's32[1]{0}', space=sflag, size = 0x4, scoped, tag = 'scoped memory for tile.14']
  %s0 = inlined_call_operand.vmem [shape: f32[8], index: 0, kind: input, shape index: {}]
  %s1 = inlined_call_operand.vmem [shape: f32[2,1,1,8], index: 1, kind: output, shape index: {}]
  // Predicated region
  $region2: #{tile.14} parent=0 // pred_check
    _
  $region3: #{tile.14} parent=0 // pred_check_branch
    %3 = sbr.rel (0) target = $region5
  $region4: #{tile.14} parent=0 // pred_region
    _
  $region5: #{tile.14} parent=0 // pred_fallthru
    _
  %v4 = vld [vmem:[%s0] ss:$0 sm:$0xff]
  %5 = vst [vmem:[%s1] sm:$0x3] %v4

// kernel: tile.10
$region0: #{tile.10}
  #allocation0 [shape = 's32[1]{0}', space=sflag, size = 0x4, scoped, tag = 'scoped memory for tile.10']
  %s0 = inlined_call_operand.vmem [shape: f32[16], index: 0, kind: input, shape index: {}]
  %s1 = inlined_call_operand.vmem [shape: f32[2,1,1,16], index: 1, kind: output, shape index: {}]
  // Predicated region
  $region2: #{tile.10} parent=0 // pred_check
    _
  $region3: #{tile.10} parent=0 // pred_check_branch
    %3 = sbr.rel (0) target = $region5
  $region4: #{tile.10} parent=0 // pred_region
    _
  $region5: #{tile.10} parent=0 // pred_fallthru
    _
  %v4 = vld [vmem:[%s0] ss:$0 sm:$0xff]
  %5 = vst [vmem:[%s1] sm:$0x3] %v4

// kernel: hifigan_forward.8
$region0: #{hifigan_forward.8}
  #allocation0 [shape = 'u32[]', space=smem, size = 0x4, offset = 0x4, fixed_abs, tag = 'smem constant byte address 0x4 - core index']
  #allocation1 [shape = 'u32[72,128]{1,0:T(1,128)}', space=vmem, size = 0x9000, scoped, tag = 'internal scratch']
  %s0 = inlined_call_operand.vmem [shape: bf16[2,16,8], index: 0, kind: input, shape index: {}, may-alias: {0,1,2}]
  %s1 = inlined_call_operand.vmem [shape: bf16[2,16,8], index: 1, kind: input, shape index: {}, may-alias: {0,1,2}]
  %s2 = inlined_call_operand.vmem [shape: bf16[2,16,8], index: 2, kind: input, shape index: {}, may-alias: {0,1,2}]
  %s3 = inlined_call_operand.vmem [shape: bf16[56,32], index: 3, kind: input, shape index: {}]
  %s4 = inlined_call_operand.vmem [shape: f32[1,32], index: 4, kind: input, shape index: {}]
  %s5 = inlined_call_operand.vmem [shape: bf16[2,16,32], index: 5, kind: output, shape index: {}]
  %s6 = sld [smem:[#allocation0]]
  $region53: #{hifigan_forward.8} parent=0
    _
  %s8 = ssub.s32 1, %s6
  %s9 = scalar_select 0, %s8, %s6
  loop: start=0, step=1, limit=4
  $region2: #{hifigan_forward.8} parent=0 // loop_pre_header
    _
  $region3: #{hifigan_forward.8} parent=0 // loop_header
    %s11 = sphi 0, %s15
    %p12 = scmp.ge.s32.totalorder %s11, 4
    %s18 = sphi 0, %s30
    %s19 = sphi 0, %s26
    %s20 = sphi 0, %s18
    %s21 = sphi 0, %s19
    %s22 = sphi 0, %s20
    %s23 = sphi 0, %s21
    %s39 = sphi 0, %s41
    %s42 = sphi 0, %s39
    %s43 = sphi 0, %s42
    %s59 = sphi 0, %s43
    %s73 = sphi 0, %s75
    %s76 = sphi 0, %s73
    %s77 = sphi 0, %s76
    %s93 = sphi 0, %s77
    %s107 = sphi 0, %s109
    %s110 = sphi 0, %s107
    %s111 = sphi 0, %s110
    %s127 = sphi 0, %s111
    %s131 = sphi 0, %s131
    %s133 = sphi 0, %s131
    %s134 = sphi 0, %s133
    %s148 = sphi 0, %s134
    %s152 = sphi 0, %s152
    %s154 = sphi 0, %s152
    %s155 = sphi 0, %s154
    %s169 = sphi 0, %s155
    %s177 = sphi 0, %s179
    %s180 = sphi 0, %s177
    %s181 = sphi 0, %s180
    %s197 = sphi 0, %s181
  $region4: #{hifigan_forward.8} parent=0 // loop_header_branch
    %14 = sbr.rel (%p12) target = $region8
  $region5: #{hifigan_forward.8} parent=0 // loop_body
    %s16 = ssub.s32 %s11, 1
    %s17 = ssub.s32 %s11, 2
    %s24 = sadd.s32 1, %s19
    %p25 = scmp.ge.s32.totalorder %s24, 1
    %s26 = scalar_select %p25, 0, %s24
    %s27 = sadd.s32 1, %s18
    %s28 = scalar_select %p25, %s27, %s18
    %p29 = scmp.ge.s32.totalorder %s28, 2
    %s30 = scalar_select %p29, 0, %s28
    %p31 = scmp.lt.s32.totalorder %s19, 0
    %s32 = scalar_select %p31, %s19, 0
    %p33 = scmp.lt.s32.totalorder %s26, 0
    %s34 = scalar_select %p33, %s26, 0
    %s35 = ssub.s32 %s18, %s30
    %s36 = ssub.s32 %s32, %s34
    %s37 = sor.u32 %s35, %s36
    %p38 = scmp.eq.s32.totalorder %s37, 0
    %s40 = sadd.s32 %s39, 1
    %s41 = scalar_select %p38, %s39, %s40
    %p44 = pneg %p38
    %p45 = scmp.eq.s32.totalorder %s11, 1
    %p46 = por %p44, %p45
    %p47 = scmp.ne.s32.totalorder %s39, %s42
    %p48 = scmp.eq.s32.totalorder %s11, 0
    %p49 = por %p47, %p48
    %p50 = scmp.ne.s32.totalorder %s39, %s42
    %p51 = scmp.eq.s32.totalorder %s16, 1
    %p52 = por %p50, %p51
    %p53 = scmp.ne.s32.totalorder %s42, %s43
    %p54 = scmp.eq.s32.totalorder %s16, 0
    %p55 = por %p53, %p54
    %p56 = scmp.ne.s32.totalorder %s42, %s43
    %p57 = scmp.eq.s32.totalorder %s17, 1
    %p58 = por %p56, %p57
    %p60 = scmp.ne.s32.totalorder %s43, %s59
    %p61 = scmp.eq.s32.totalorder %s17, 0
    %p62 = por %p60, %p61
    %s63 = ssub.s32 %s19, 1
    %p64 = scmp.gt.s32.totalorder %s63, 0
    %s65 = scalar_select %p64, %s63, 0
    %s66 = ssub.s32 %s26, 1
    %p67 = scmp.gt.s32.totalorder %s66, 0
    %s68 = scalar_select %p67, %s66, 0
    %s69 = ssub.s32 %s18, %s30
    %s70 = ssub.s32 %s65, %s68
    %s71 = sor.u32 %s69, %s70
    %p72 = scmp.eq.s32.totalorder %s71, 0
    %s74 = sadd.s32 %s73, 1
    %s75 = scalar_select %p72, %s73, %s74
    %p78 = pneg %p72
    %p79 = scmp.eq.s32.totalorder %s11, 1
    %p80 = por %p78, %p79
    %p81 = scmp.ne.s32.totalorder %s73, %s76
    %p82 = scmp.eq.s32.totalorder %s11, 0
    %p83 = por %p81, %p82
    %p84 = scmp.ne.s32.totalorder %s73, %s76
    %p85 = scmp.eq.s32.totalorder %s16, 1
    %p86 = por %p84, %p85
    %p87 = scmp.ne.s32.totalorder %s76, %s77
    %p88 = scmp.eq.s32.totalorder %s16, 0
    %p89 = por %p87, %p88
    %p90 = scmp.ne.s32.totalorder %s76, %s77
    %p91 = scmp.eq.s32.totalorder %s17, 1
    %p92 = por %p90, %p91
    %p94 = scmp.ne.s32.totalorder %s77, %s93
    %p95 = scmp.eq.s32.totalorder %s17, 0
    %p96 = por %p94, %p95
    %s97 = sadd.s32 %s19, 1
    %p98 = scmp.lt.s32.totalorder %s97, 0
    %s99 = scalar_select %p98, %s97, 0
    %s100 = sadd.s32 %s26, 1
    %p101 = scmp.lt.s32.totalorder %s100, 0
    %s102 = scalar_select %p101, %s100, 0
    %s103 = ssub.s32 %s18, %s30
    %s104 = ssub.s32 %s99, %s102
    %s105 = sor.u32 %s103, %s104
    %p106 = scmp.eq.s32.totalorder %s105, 0
    %s108 = sadd.s32 %s107, 1
    %s109 = scalar_select %p106, %s107, %s108
    %p112 = pneg %p106
    %p113 = scmp.eq.s32.totalorder %s11, 1
    %p114 = por %p112, %p113
    %p115 = scmp.ne.s32.totalorder %s107, %s110
    %p116 = scmp.eq.s32.totalorder %s11, 0
    %p117 = por %p115, %p116
    %p118 = scmp.ne.s32.totalorder %s107, %s110
    %p119 = scmp.eq.s32.totalorder %s16, 1
    %p120 = por %p118, %p119
    %p121 = scmp.ne.s32.totalorder %s110, %s111
    %p122 = scmp.eq.s32.totalorder %s16, 0
    %p123 = por %p121, %p122
    %p124 = scmp.ne.s32.totalorder %s110, %s111
    %p125 = scmp.eq.s32.totalorder %s17, 1
    %p126 = por %p124, %p125
    %p128 = scmp.ne.s32.totalorder %s111, %s127
    %p129 = scmp.eq.s32.totalorder %s17, 0
    %p130 = por %p128, %p129
    %s132 = sadd.s32 %s131, 1
    %p135 = scmp.eq.s32.totalorder %s11, 1
    %p136 = scmp.ne.s32.totalorder %s131, %s133
    %p137 = scmp.eq.s32.totalorder %s11, 0
    %p138 = por %p136, %p137
    %p139 = scmp.ne.s32.totalorder %s131, %s133
    %p140 = scmp.eq.s32.totalorder %s16, 1
    %p141 = por %p139, %p140
    %p142 = scmp.ne.s32.totalorder %s133, %s134
    %p143 = scmp.eq.s32.totalorder %s16, 0
    %p144 = por %p142, %p143
    %p145 = scmp.ne.s32.totalorder %s133, %s134
    %p146 = scmp.eq.s32.totalorder %s17, 1
    %p147 = por %p145, %p146
    %p149 = scmp.ne.s32.totalorder %s134, %s148
    %p150 = scmp.eq.s32.totalorder %s17, 0
    %p151 = por %p149, %p150
    %s153 = sadd.s32 %s152, 1
    %p156 = scmp.eq.s32.totalorder %s11, 1
    %p157 = scmp.ne.s32.totalorder %s152, %s154
    %p158 = scmp.eq.s32.totalorder %s11, 0
    %p159 = por %p157, %p158
    %p160 = scmp.ne.s32.totalorder %s152, %s154
    %p161 = scmp.eq.s32.totalorder %s16, 1
    %p162 = por %p160, %p161
    %p163 = scmp.ne.s32.totalorder %s154, %s155
    %p164 = scmp.eq.s32.totalorder %s16, 0
    %p165 = por %p163, %p164
    %p166 = scmp.ne.s32.totalorder %s154, %s155
    %p167 = scmp.eq.s32.totalorder %s17, 1
    %p168 = por %p166, %p167
    %p170 = scmp.ne.s32.totalorder %s155, %s169
    %p171 = scmp.eq.s32.totalorder %s17, 0
    %p172 = por %p170, %p171
    %s173 = ssub.s32 %s18, %s30
    %s174 = ssub.s32 %s19, %s26
    %s175 = sor.u32 %s173, %s174
    %p176 = scmp.eq.s32.totalorder %s175, 0
    %s178 = sadd.s32 %s177, 1
    %s179 = scalar_select %p176, %s177, %s178
    %p182 = pneg %p176
    %p183 = scmp.eq.s32.totalorder %s11, 1
    %p184 = por %p182, %p183
    %p185 = scmp.ne.s32.totalorder %s177, %s180
    %p186 = scmp.eq.s32.totalorder %s11, 0
    %p187 = por %p185, %p186
    %p188 = scmp.ne.s32.totalorder %s177, %s180
    %p189 = scmp.eq.s32.totalorder %s16, 1
    %p190 = por %p188, %p189
    %p191 = scmp.ne.s32.totalorder %s180, %s181
    %p192 = scmp.eq.s32.totalorder %s16, 0
    %p193 = por %p191, %p192
    %p194 = scmp.ne.s32.totalorder %s180, %s181
    %p195 = scmp.eq.s32.totalorder %s17, 1
    %p196 = por %p194, %p195
    %p198 = scmp.ne.s32.totalorder %s181, %s197
    %p199 = scmp.eq.s32.totalorder %s17, 0
    %p200 = por %p198, %p199
    %p201 = scmp.le.s32.totalorder 1, %s11
    %p202 = scmp.lt.s32.totalorder %s11, 3
    %p203 = pnand %p201, %p202
    %p204 = pneg %p203
    // Predicated region
    $region9: #{hifigan_forward.8} parent=5 // pred_check
      _
    $region10: #{hifigan_forward.8} parent=5 // pred_check_branch
      %206 = sbr.rel (%p203) target = $region12
    $region11: #{hifigan_forward.8} parent=5 // pred_region
      %s207 = ssub.s32 %s11, 1
      // Predicated region
      $region13: #{hifigan_forward.8} parent=11 // pred_check
        %p208 = pneg %p144
      $region14: #{hifigan_forward.8} parent=11 // pred_check_branch
        %210 = sbr.rel (%p208) target = $region16
      $region15: #{hifigan_forward.8} parent=11 // pred_region
        _
      $region16: #{hifigan_forward.8} parent=11 // pred_fallthru
        _
      // Predicated region
      $region17: #{hifigan_forward.8} parent=11 // pred_check
        %p211 = pneg %p165
      $region18: #{hifigan_forward.8} parent=11 // pred_check_branch
        %213 = sbr.rel (%p211) target = $region20
      $region19: #{hifigan_forward.8} parent=11 // pred_region
        _
      $region20: #{hifigan_forward.8} parent=11 // pred_fallthru
        _
    $region12: #{hifigan_forward.8} parent=5 // pred_fallthru
      _
    %p214 = scmp.lt.s32.totalorder %s11, 2
    // Predicated region
    $region21: #{hifigan_forward.8} parent=5 // pred_check
      %p215 = pneg %p214
    $region22: #{hifigan_forward.8} parent=5 // pred_check_branch
      %217 = sbr.rel (%p215) target = $region24
    $region23: #{hifigan_forward.8} parent=5 // pred_region
      // Predicated region
      $region25: #{hifigan_forward.8} parent=23 // pred_check
        %p218 = pneg %p49
      $region26: #{hifigan_forward.8} parent=23 // pred_check_branch
        %220 = sbr.rel (%p218) target = $region28
      $region27: #{hifigan_forward.8} parent=23 // pred_region
        %p221 = scmp.lt.s32.totalorder %s19, 0
        %s222 = scalar_select %p221, %s19, 0
        %s223 = smul.u32 2, %s222
        %p224 = scmp.lt.s32.totalorder %s18, 1
        %s225 = scalar_select %p224, %s18, 1
        %p226 = scmp.lt.s32.totalorder %s223, 1
        %s227 = scalar_select %p226, %s223, 1
        %s228 = smul.addr %s225, 2
        %s229 = sadd.s32 %s227, %s228
        %s230 = smul.addr %s229, 4
        %s231 = scalar_lea.vmem %s0, %s230
        %p232 = scmp.lt.s32.totalorder %s19, 0
        %s233 = scalar_select %p232, %s19, 0
        %s234 = smul.u32 2, %s233
      $region28: #{hifigan_forward.8} parent=23 // pred_fallthru
        _
      // Predicated region
      $region29: #{hifigan_forward.8} parent=23 // pred_check
        %p235 = pneg %p83
      $region30: #{hifigan_forward.8} parent=23 // pred_check_branch
        %237 = sbr.rel (%p235) target = $region32
      $region31: #{hifigan_forward.8} parent=23 // pred_region
        %s238 = ssub.s32 %s19, 1
        %p239 = scmp.gt.s32.totalorder %s238, 0
        %s240 = scalar_select %p239, %s238, 0
        %s241 = smul.u32 2, %s240
        %p242 = scmp.lt.s32.totalorder %s18, 1
        %s243 = scalar_select %p242, %s18, 1
        %p244 = scmp.lt.s32.totalorder %s241, 1
        %s245 = scalar_select %p244, %s241, 1
        %s246 = smul.addr %s243, 2
        %s247 = sadd.s32 %s245, %s246
        %s248 = smul.addr %s247, 4
        %s249 = scalar_lea.vmem %s1, %s248
        %s250 = ssub.s32 %s19, 1
        %p251 = scmp.gt.s32.totalorder %s250, 0
        %s252 = scalar_select %p251, %s250, 0
        %s253 = smul.u32 2, %s252
      $region32: #{hifigan_forward.8} parent=23 // pred_fallthru
        _
      // Predicated region
      $region33: #{hifigan_forward.8} parent=23 // pred_check
        %p254 = pneg %p117
      $region34: #{hifigan_forward.8} parent=23 // pred_check_branch
        %256 = sbr.rel (%p254) target = $region36
      $region35: #{hifigan_forward.8} parent=23 // pred_region
        %s257 = sadd.s32 %s19, 1
        %p258 = scmp.lt.s32.totalorder %s257, 0
        %s259 = scalar_select %p258, %s257, 0
        %s260 = smul.u32 2, %s259
        %p261 = scmp.lt.s32.totalorder %s18, 1
        %s262 = scalar_select %p261, %s18, 1
        %p263 = scmp.lt.s32.totalorder %s260, 1
        %s264 = scalar_select %p263, %s260, 1
        %s265 = smul.addr %s262, 2
        %s266 = sadd.s32 %s264, %s265
        %s267 = smul.addr %s266, 4
        %s268 = scalar_lea.vmem %s2, %s267
        %s269 = sadd.s32 %s19, 1
        %p270 = scmp.lt.s32.totalorder %s269, 0
        %s271 = scalar_select %p270, %s269, 0
        %s272 = smul.u32 2, %s271
      $region36: #{hifigan_forward.8} parent=23 // pred_fallthru
        _
    $region24: #{hifigan_forward.8} parent=5 // pred_fallthru
      _
    %p273 = scmp.le.s32.totalorder 1, %s11
    %p274 = scmp.lt.s32.totalorder %s11, 3
    %p275 = pnand %p273, %p274
    %p276 = pneg %p275
    // Predicated region
    $region37: #{hifigan_forward.8} parent=5 // pred_check
      _
    $region38: #{hifigan_forward.8} parent=5 // pred_check_branch
      %278 = sbr.rel (%p275) target = $region40
    $region39: #{hifigan_forward.8} parent=5 // pred_region
      %s279 = ssub.s32 %s11, 1
      %p280 = scmp.lt.s32.totalorder %s21, 0
      %s281 = scalar_select %p280, %s21, 0
      %s282 = smul.u32 2, %s281
      %p283 = scmp.lt.s32.totalorder %s20, 1
      %s284 = scalar_select %p283, %s20, 1
      %p285 = scmp.lt.s32.totalorder %s282, 1
      %s286 = scalar_select %p285, %s282, 1
      %s287 = smul.addr %s284, 2
      %s288 = sadd.s32 %s286, %s287
      %s289 = smul.addr %s288, 4
      %s290 = scalar_lea.vmem %s0, %s289
      %p291 = pneg %p55
      %p292 = pneg %p52
      %s293 = ssub.s32 %s21, 1
      %p294 = scmp.gt.s32.totalorder %s293, 0
      %s295 = scalar_select %p294, %s293, 0
      %s296 = smul.u32 2, %s295
      %p297 = scmp.lt.s32.totalorder %s20, 1
      %s298 = scalar_select %p297, %s20, 1
      %p299 = scmp.lt.s32.totalorder %s296, 1
      %s300 = scalar_select %p299, %s296, 1
      %s301 = smul.addr %s298, 2
      %s302 = sadd.s32 %s300, %s301
      %s303 = smul.addr %s302, 4
      %s304 = scalar_lea.vmem %s1, %s303
      %p305 = pneg %p89
      %p306 = pneg %p86
      %s307 = sadd.s32 %s21, 1
      %p308 = scmp.lt.s32.totalorder %s307, 0
      %s309 = scalar_select %p308, %s307, 0
      %s310 = smul.u32 2, %s309
      %p311 = scmp.lt.s32.totalorder %s20, 1
      %s312 = scalar_select %p311, %s20, 1
      %p313 = scmp.lt.s32.totalorder %s310, 1
      %s314 = scalar_select %p313, %s310, 1
      %s315 = smul.addr %s312, 2
      %s316 = sadd.s32 %s314, %s315
      %s317 = smul.addr %s316, 4
      %s318 = scalar_lea.vmem %s2, %s317
      %p319 = pneg %p123
      %p320 = pneg %p120
      %p321 = pneg %p144
      %p322 = pneg %p141
      %p323 = pneg %p165
      %p324 = pneg %p162
      %p325 = pneg %p193
      %p326 = pneg %p190
      %s327 = smul.u32 2, %s21
      %p328 = scmp.lt.s32.totalorder %s20, 1
      %s329 = scalar_select %p328, %s20, 1
      %p330 = scmp.lt.s32.totalorder %s327, 1
      %s331 = scalar_select %p330, %s327, 1
      %s332 = smul.addr %s329, 2
      %s333 = sadd.s32 %s331, %s332
      %s334 = smul.addr %s333, 4
      %s335 = scalar_lea.vmem %s5, %s334
      %p336 = scmp.lt.s32.totalorder %s21, 0
      %s337 = scalar_select %p336, %s21, 0
      %s338 = smul.u32 2, %s337
      %p339 = scmp.lt.s32.totalorder %s20, 1
      %s340 = scalar_select %p339, %s20, 1
      %p341 = scmp.lt.s32.totalorder %s338, 1
      %s342 = scalar_select %p341, %s338, 1
      %s343 = smul.addr %s340, 2
      %s344 = sadd.s32 %s342, %s343
      %s345 = smul.addr %s344, 4
      %s346 = scalar_lea.vmem %s0, %s345
      %p347 = scmp.lt.s32.totalorder %s21, 0
      %s348 = scalar_select %p347, %s21, 0
      %s349 = smul.u32 2, %s348
      %s350 = ssub.s32 %s21, 1
      %p351 = scmp.gt.s32.totalorder %s350, 0
      %s352 = scalar_select %p351, %s350, 0
      %s353 = smul.u32 2, %s352
      %p354 = scmp.lt.s32.totalorder %s20, 1
      %s355 = scalar_select %p354, %s20, 1
      %p356 = scmp.lt.s32.totalorder %s353, 1
      %s357 = scalar_select %p356, %s353, 1
      %s358 = smul.addr %s355, 2
      %s359 = sadd.s32 %s357, %s358
      %s360 = smul.addr %s359, 4
      %s361 = scalar_lea.vmem %s1, %s360
      %s362 = ssub.s32 %s21, 1
      %p363 = scmp.gt.s32.totalorder %s362, 0
      %s364 = scalar_select %p363, %s362, 0
      %s365 = smul.u32 2, %s364
      %s366 = sadd.s32 %s21, 1
      %p367 = scmp.lt.s32.totalorder %s366, 0
      %s368 = scalar_select %p367, %s366, 0
      %s369 = smul.u32 2, %s368
      %p370 = scmp.lt.s32.totalorder %s20, 1
      %s371 = scalar_select %p370, %s20, 1
      %p372 = scmp.lt.s32.totalorder %s369, 1
      %s373 = scalar_select %p372, %s369, 1
      %s374 = smul.addr %s371, 2
      %s375 = sadd.s32 %s373, %s374
      %s376 = smul.addr %s375, 4
      %s377 = scalar_lea.vmem %s2, %s376
      %s378 = sadd.s32 %s21, 1
      %p379 = scmp.lt.s32.totalorder %s378, 0
      %s380 = scalar_select %p379, %s378, 0
      %s381 = smul.u32 2, %s380
      %s382 = smul.u32 2, %s21
      %p383 = scmp.lt.s32.totalorder %s20, 1
      %s384 = scalar_select %p383, %s20, 1
      %p385 = scmp.lt.s32.totalorder %s382, 1
      %s386 = scalar_select %p385, %s382, 1
      %s387 = smul.addr %s384, 2
      %s388 = sadd.s32 %s386, %s387
      %s389 = smul.addr %s388, 4
      %s390 = scalar_lea.vmem %s5, %s389
      %s391 = smul.u32 2, %s21
      %s393 = smul.u32 %s21, 16
      %v394 = vld [vmem:[%s361] sm:$0xf]
      %v395 = vld [vmem:[%s361 + $0x4] sm:$0xf]
      %s396 = ssub.s32 %s393, 16
      %v397 = vlaneseq
      %v398 = vshrl.u32 %v397, 7
      %v399 = vadd.s32 %v398, 8
      %v400 = vstv %s396
      %v401 = vadd.s32 %v400, %v398
      %v402 = vadd.s32 %v400, %v399
      %vm403 = vcmp.ge.s32.totalorder %v401, 0
      %vm404 = vcmp.ge.s32.totalorder %v402, 0
      %vm405 = vcmp.lt.s32.totalorder %v401, 16
      %vm406 = vcmp.lt.s32.totalorder %v402, 16
      %vm407 = vmand %vm403, %vm405
      %vm408 = vmand %vm404, %vm406
      %v409 = vsel %vm407, 1, 0
      %v410 = vsel %vm408, 1, 0
      %vm411 = vcmp.eq.s32.totalorder %v409, 1
      %vm412 = vcmp.eq.s32.totalorder %v410, 1
      %vm413 = vmpackc.low %vm411, %vm411
      %vm414 = vmpackc.low %vm412, %vm412
      %v415 = vsel %vm413, %v394, 0
      %v416 = vsel %vm414, %v395, 0
      %v417 = vld [vmem:[%s346] sm:$0xf]
      %v418 = vld [vmem:[%s346 + $0x4] sm:$0xf]
      %v419 = vstv %s393
      %v420 = vadd.s32 %v419, %v398
      %v421 = vadd.s32 %v419, %v399
      %vm422 = vcmp.ge.s32.totalorder %v420, 0
      %vm423 = vcmp.ge.s32.totalorder %v421, 0
      %vm424 = vcmp.lt.s32.totalorder %v420, 16
      %vm425 = vcmp.lt.s32.totalorder %v421, 16
      %vm426 = vmand %vm422, %vm424
      %vm427 = vmand %vm423, %vm425
      %v428 = vsel %vm426, 1, 0
      %v429 = vsel %vm427, 1, 0
      %vm430 = vcmp.eq.s32.totalorder %v428, 1
      %vm431 = vcmp.eq.s32.totalorder %v429, 1
      %vm432 = vmpackc.low %vm430, %vm430
      %vm433 = vmpackc.low %vm431, %vm431
      %v434 = vsel %vm432, %v417, 0
      %v435 = vsel %vm433, %v418, 0
      %v436 = vld [vmem:[%s377] sm:$0xf]
      %v437 = vld [vmem:[%s377 + $0x4] sm:$0xf]
      %s438 = sadd.s32 %s393, 16
      %v439 = vstv %s438
      %v440 = vadd.s32 %v439, %v398
      %v441 = vadd.s32 %v439, %v399
      %vm442 = vcmp.ge.s32.totalorder %v440, 0
      %vm443 = vcmp.ge.s32.totalorder %v441, 0
      %vm444 = vcmp.lt.s32.totalorder %v440, 16
      %vm445 = vcmp.lt.s32.totalorder %v441, 16
      %vm446 = vmand %vm442, %vm444
      %vm447 = vmand %vm443, %vm445
      %v448 = vsel %vm446, 1, 0
      %v449 = vsel %vm447, 1, 0
      %vm450 = vcmp.eq.s32.totalorder %v448, 1
      %vm451 = vcmp.eq.s32.totalorder %v449, 1
      %vm452 = vmpackc.low %vm450, %vm450
      %vm453 = vmpackc.low %vm451, %vm451
      %v454 = vsel %vm452, %v436, 0
      %v455 = vsel %vm453, %v437, 0
      %v458 = vunpack.c.l.b16 %v415
      %v459 = vunpack.c.l.b16 %v416
      %v460 = vpack.c.b16 %v459, %v458
      %v463 = vunpack.c.l.b16 %v434
      %v464 = vunpack.c.l.b16 %v435
      %v465 = vpack.c.b16 %v464, %v463
      %v468 = vunpack.c.l.b16 %v454
      %v469 = vunpack.c.l.b16 %v455
      %v470 = vpack.c.b16 %v469, %v468
      %vm471 = vsmask.f32 7424
      %v473 = vshrl.u32 %v460, 16
      %v475 = vshll.u32 %v460, 16
      %v477 = vrot.slane %v475, 1
      %v478 = vor.u32 %v473, %v477
      %v480 = vshll.u32 %v465, 16
      %v482 = vrot.slane %v480, 1
      %v483 = vsel %vm471, %v478, %v482
      %v484 = vshrl.u32 %v465, 16
      %v486 = vor.u32 %v484, %v482
      %487 = vrot.lane.b32.xlu0 %v483, 8
      %v488 = vpop.permute.xlu0 %487
      %489 = vrot.lane.b32.xlu0 %v486, 8
      %v490 = vpop.permute.xlu0 %489
      %vm491 = vcmask 1046528
      %v492 = vrot.slane %v460, 1
      %v493 = vrot.slane %v465, 1
      %v494 = vsel %vm491, %v492, %v493
      %495 = vrot.lane.b32.xlu0 %v494, 16
      %v496 = vpop.permute.xlu0 %495
      %497 = vrot.lane.b32.xlu0 %v493, 16
      %v498 = vpop.permute.xlu0 %497
      %v499 = vrot.slane %v484, 1
      %v500 = vrot.slane %v480, 2
      %v501 = vor.u32 %v499, %v500
      %502 = vrot.lane.b32.xlu0 %v501, 24
      %v503 = vpop.permute.xlu0 %502
      %vm504 = vcmask 1045504
      %v505 = vrot.slane %v465, 2
      %v506 = vrot.slane %v470, 2
      %v507 = vsel %vm504, %v505, %v506
      %508 = vrot.lane.b32.xlu0 %v505, 32
      %v509 = vpop.permute.xlu0 %508
      %510 = vrot.lane.b32.xlu0 %v507, 32
      %v511 = vpop.permute.xlu0 %510
      %vm512 = vsmask.f32 5376
      %v513 = vrot.slane %v484, 2
      %v514 = vrot.slane %v480, 3
      %v515 = vor.u32 %v513, %v514
      %v517 = vshrl.u32 %v470, 16
      %v519 = vrot.slane %v517, 2
      %v520 = vshll.u32 %v470, 16
      %v522 = vrot.slane %v520, 3
      %v523 = vor.u32 %v519, %v522
      %v524 = vsel %vm512, %v515, %v523
      %525 = vrot.lane.b32.xlu0 %v515, 40
      %v526 = vpop.permute.xlu0 %525
      %527 = vrot.lane.b32.xlu0 %v524, 40
      %v528 = vpop.permute.xlu0 %527
      %vm529 = vcmask 1044480
      %v530 = vrot.slane %v465, 3
      %v531 = vrot.slane %v470, 3
      %v532 = vsel %vm529, %v530, %v531
      %533 = vrot.lane.b32.xlu0 %v530, 48
      %v534 = vpop.permute.xlu0 %533
      %535 = vrot.lane.b32.xlu0 %v532, 48
      %v536 = vpop.permute.xlu0 %535
      %vm537 = vcmask 64512
      %v539 = vsel %vm537, %v460, %v488
      %v541 = vsel %vm537, %v465, %v490
      %vm542 = vcmask 130048
      %v544 = vsel %vm542, %v539, %v496
      %v546 = vsel %vm542, %v541, %v498
      %vm547 = vcmask 195584
      %v549 = vsel %vm547, %v544, %v503
      %v550 = vsel %vm547, %v546, %v503
      %vm551 = vcmask 261120
      %v553 = vsel %vm551, %v549, %v509
      %v555 = vsel %vm551, %v550, %v511
      %vm556 = vcmask 326656
      %v558 = vsel %vm556, %v553, %v526
      %v560 = vsel %vm556, %v555, %v528
      %vm561 = vcmask 392192
      %v563 = vsel %vm561, %v558, %v534
      %v565 = vsel %vm561, %v560, %v536
      %v566 = vld [vmem:[%s3] sm:$0xf]
      %v567 = vld [vmem:[%s3 + $0x4] sm:$0xf]
      %v568 = vld [vmem:[%s3 + $0x8] sm:$0xf]
      %v569 = vld [vmem:[%s3 + $0xc] sm:$0xf]
      %v570 = vld [vmem:[%s3 + $0x10] sm:$0xf]
      %v571 = vld [vmem:[%s3 + $0x14] sm:$0xf]
      %v572 = vld [vmem:[%s3 + $0x18] sm:$0xf]
      %v573 = vld [vmem:[%s4] sm:$0x1]
      %v575 = vperm.slane %v573, 0
      %vm577 = vsmask.f32 1280
      %v578 = vshrl.u32 %v563, 16
      %v580 = vrot.slane %v578, 6
      %v581 = vshll.u32 %v563, 16
      %v583 = vrot.slane %v581, 7
      %v584 = vor.u32 %v580, %v583
      %v585 = vshrl.u32 %v565, 16
      %v587 = vrot.slane %v585, 6
      %v588 = vshll.u32 %v565, 16
      %v590 = vrot.slane %v588, 7
      %v591 = vor.u32 %v587, %v590
      %v592 = vsel %vm577, %v584, %v591
      %v600 = vunpack.c.l.b16 %v566
      %v601 = vunpack.c.l.b16 %v567
      %v602 = vunpack.c.l.b16 %v568
      %v603 = vunpack.c.l.b16 %v569
      %v604 = vunpack.c.l.b16 %v570
      %v605 = vunpack.c.l.b16 %v571
      %v606 = vunpack.c.l.b16 %v572
      %v607 = vpack.c.b16 %v601, %v600
      %v608 = vpack.c.b16 %v603, %v602
      %v609 = vpack.c.b16 %v605, %v604
      %v610 = vpack.c.b16 %v606, %v606
      %vm614 = vcmask 457728
      %v616 = vsel %vm614, %v592, 0
      %vm618 = vcmask 1043456
      %v620 = vsel %vm618, %v610, 0
      %622 = vmatpush.bf16.msra.mxu0 0
      %623 = vmatpush.bf16.msra.mxu0 0
      %624 = vmatpush.bf16.msra.mxu0 0
      %625 = vmatpush.bf16.msra.mxu0 0
      %626 = vmatpush.bf16.msra.mxu0 %v620
      %627 = vmatpush.bf16.msra.mxu0 %v609
      %628 = vmatpush.bf16.msra.mxu0 %v608
      %629 = vmatpush.bf16.msra.mxu0 %v607
      %630 = vmatmul.bf16.gmra.mxu0 %v616
      %v631 = vpop.f32.mrf.mxu0
      %v632 = vadd.f32 %v575, %v631
      %v633 = vpop.f32.mrf.mxu0
      %v634 = vadd.f32 %v575, %v633
      %635 = vdwg.mxu0
      %v636 = vpack.c.bf16 %v632, %v632
      %v637 = vpack.c.bf16 %v634, %v634
      %vm638 = vcmask 257024
      %639 = vst.msk [vmem:[%s390] sm:$0xf] %vm638, %v636
      %640 = vst.msk [vmem:[%s390 + $0x4] sm:$0xf] %vm638, %v637
      %s641 = smul.u32 2, %s21
      %p642 = scmp.lt.s32.totalorder %s20, 1
      %s643 = scalar_select %p642, %s20, 1
      %p644 = scmp.lt.s32.totalorder %s641, 1
      %s645 = scalar_select %p644, %s641, 1
      %s646 = smul.addr %s643, 2
      %s647 = sadd.s32 %s645, %s646
      %s648 = smul.addr %s647, 4
      %s649 = scalar_lea.vmem %s5, %s648
      // Predicated region
      $region41: #{hifigan_forward.8} parent=39 // pred_check
        %p650 = pneg %p190
      $region42: #{hifigan_forward.8} parent=39 // pred_check_branch
        %652 = sbr.rel (%p650) target = $region44
      $region43: #{hifigan_forward.8} parent=39 // pred_region
        %s653 = smul.u32 2, %s21
      $region44: #{hifigan_forward.8} parent=39 // pred_fallthru
        _
    $region40: #{hifigan_forward.8} parent=5 // pred_fallthru
      _
    %p654 = scmp.le.s32.totalorder 2, %s11
    // Predicated region
    $region45: #{hifigan_forward.8} parent=5 // pred_check
      %p655 = pneg %p654
    $region46: #{hifigan_forward.8} parent=5 // pred_check_branch
      %657 = sbr.rel (%p655) target = $region48
    $region47: #{hifigan_forward.8} parent=5 // pred_region
      %s658 = ssub.s32 %s11, 2
      // Predicated region
      $region49: #{hifigan_forward.8} parent=47 // pred_check
        %p659 = pneg %p196
      $region50: #{hifigan_forward.8} parent=47 // pred_check_branch
        %661 = sbr.rel (%p659) target = $region52
      $region51: #{hifigan_forward.8} parent=47 // pred_region
        %s662 = smul.u32 2, %s23
        %p663 = scmp.lt.s32.totalorder %s22, 1
        %s664 = scalar_select %p663, %s22, 1
        %p665 = scmp.lt.s32.totalorder %s662, 1
        %s666 = scalar_select %p665, %s662, 1
        %s667 = smul.addr %s664, 2
        %s668 = sadd.s32 %s666, %s667
        %s669 = smul.addr %s668, 4
        %s670 = scalar_lea.vmem %s5, %s669
      $region52: #{hifigan_forward.8} parent=47 // pred_fallthru
        _
    $region48: #{hifigan_forward.8} parent=5 // pred_fallthru
      _
  $region6: #{hifigan_forward.8} parent=0 // loop_footer
    %s15 = sadd.s32 1, %s11
  $region7: #{hifigan_forward.8} parent=0 // loop_footer_branch
    %10 = sbr.rel target = $region3
  $region8: #{hifigan_forward.8} parent=0 // loop_exit
    _

// kernel: hifigan_forward.9
$region0: #{hifigan_forward.9}
  #allocation0 [shape = 'u32[]', space=smem, size = 0x4, offset = 0x4, fixed_abs, tag = 'smem constant byte address 0x4 - core index']
  #allocation1 [shape = 'u32[72,128]{1,0:T(1,128)}', space=vmem, size = 0x9000, scoped, tag = 'internal scratch']
  %s0 = inlined_call_operand.vmem [shape: bf16[2,16,32], index: 0, kind: input, shape index: {}, may-alias: {0,1,2}]
  %s1 = inlined_call_operand.vmem [shape: bf16[2,16,32], index: 1, kind: input, shape index: {}, may-alias: {0,1,2}]
  %s2 = inlined_call_operand.vmem [shape: bf16[2,16,32], index: 2, kind: input, shape index: {}, may-alias: {0,1,2}]
  %s3 = inlined_call_operand.vmem [shape: bf16[96,32], index: 3, kind: input, shape index: {}]
  %s4 = inlined_call_operand.vmem [shape: f32[1,32], index: 4, kind: input, shape index: {}]
  %s5 = inlined_call_operand.vmem [shape: bf16[2,16,32], index: 5, kind: output, shape index: {}]
  %s6 = sld [smem:[#allocation0]]
  $region53: #{hifigan_forward.9} parent=0
    _
  %s8 = ssub.s32 1, %s6
  %s9 = scalar_select 0, %s8, %s6
  loop: start=0, step=1, limit=4
  $region2: #{hifigan_forward.9} parent=0 // loop_pre_header
    _
  $region3: #{hifigan_forward.9} parent=0 // loop_header
    %s11 = sphi 0, %s15
    %p12 = scmp.ge.s32.totalorder %s11, 4
    %s18 = sphi 0, %s30
    %s19 = sphi 0, %s26
    %s20 = sphi 0, %s18
    %s21 = sphi 0, %s19
    %s22 = sphi 0, %s20
    %s23 = sphi 0, %s21
    %s39 = sphi 0, %s41
    %s42 = sphi 0, %s39
    %s43 = sphi 0, %s42
    %s59 = sphi 0, %s43
    %s73 = sphi 0, %s75
    %s76 = sphi 0, %s73
    %s77 = sphi 0, %s76
    %s93 = sphi 0, %s77
    %s107 = sphi 0, %s109
    %s110 = sphi 0, %s107
    %s111 = sphi 0, %s110
    %s127 = sphi 0, %s111
    %s131 = sphi 0, %s131
    %s133 = sphi 0, %s131
    %s134 = sphi 0, %s133
    %s148 = sphi 0, %s134
    %s152 = sphi 0, %s152
    %s154 = sphi 0, %s152
    %s155 = sphi 0, %s154
    %s169 = sphi 0, %s155
    %s177 = sphi 0, %s179
    %s180 = sphi 0, %s177
    %s181 = sphi 0, %s180
    %s197 = sphi 0, %s181
  $region4: #{hifigan_forward.9} parent=0 // loop_header_branch
    %14 = sbr.rel (%p12) target = $region8
  $region5: #{hifigan_forward.9} parent=0 // loop_body
    %s16 = ssub.s32 %s11, 1
    %s17 = ssub.s32 %s11, 2
    %s24 = sadd.s32 1, %s19
    %p25 = scmp.ge.s32.totalorder %s24, 1
    %s26 = scalar_select %p25, 0, %s24
    %s27 = sadd.s32 1, %s18
    %s28 = scalar_select %p25, %s27, %s18
    %p29 = scmp.ge.s32.totalorder %s28, 2
    %s30 = scalar_select %p29, 0, %s28
    %p31 = scmp.lt.s32.totalorder %s19, 0
    %s32 = scalar_select %p31, %s19, 0
    %p33 = scmp.lt.s32.totalorder %s26, 0
    %s34 = scalar_select %p33, %s26, 0
    %s35 = ssub.s32 %s18, %s30
    %s36 = ssub.s32 %s32, %s34
    %s37 = sor.u32 %s35, %s36
    %p38 = scmp.eq.s32.totalorder %s37, 0
    %s40 = sadd.s32 %s39, 1
    %s41 = scalar_select %p38, %s39, %s40
    %p44 = pneg %p38
    %p45 = scmp.eq.s32.totalorder %s11, 1
    %p46 = por %p44, %p45
    %p47 = scmp.ne.s32.totalorder %s39, %s42
    %p48 = scmp.eq.s32.totalorder %s11, 0
    %p49 = por %p47, %p48
    %p50 = scmp.ne.s32.totalorder %s39, %s42
    %p51 = scmp.eq.s32.totalorder %s16, 1
    %p52 = por %p50, %p51
    %p53 = scmp.ne.s32.totalorder %s42, %s43
    %p54 = scmp.eq.s32.totalorder %s16, 0
    %p55 = por %p53, %p54
    %p56 = scmp.ne.s32.totalorder %s42, %s43
    %p57 = scmp.eq.s32.totalorder %s17, 1
    %p58 = por %p56, %p57
    %p60 = scmp.ne.s32.totalorder %s43, %s59
    %p61 = scmp.eq.s32.totalorder %s17, 0
    %p62 = por %p60, %p61
    %s63 = ssub.s32 %s19, 1
    %p64 = scmp.gt.s32.totalorder %s63, 0
    %s65 = scalar_select %p64, %s63, 0
    %s66 = ssub.s32 %s26, 1
    %p67 = scmp.gt.s32.totalorder %s66, 0
    %s68 = scalar_select %p67, %s66, 0
    %s69 = ssub.s32 %s18, %s30
    %s70 = ssub.s32 %s65, %s68
    %s71 = sor.u32 %s69, %s70
    %p72 = scmp.eq.s32.totalorder %s71, 0
    %s74 = sadd.s32 %s73, 1
    %s75 = scalar_select %p72, %s73, %s74
    %p78 = pneg %p72
    %p79 = scmp.eq.s32.totalorder %s11, 1
    %p80 = por %p78, %p79
    %p81 = scmp.ne.s32.totalorder %s73, %s76
    %p82 = scmp.eq.s32.totalorder %s11, 0
    %p83 = por %p81, %p82
    %p84 = scmp.ne.s32.totalorder %s73, %s76
    %p85 = scmp.eq.s32.totalorder %s16, 1
    %p86 = por %p84, %p85
    %p87 = scmp.ne.s32.totalorder %s76, %s77
    %p88 = scmp.eq.s32.totalorder %s16, 0
    %p89 = por %p87, %p88
    %p90 = scmp.ne.s32.totalorder %s76, %s77
    %p91 = scmp.eq.s32.totalorder %s17, 1
    %p92 = por %p90, %p91
    %p94 = scmp.ne.s32.totalorder %s77, %s93
    %p95 = scmp.eq.s32.totalorder %s17, 0
    %p96 = por %p94, %p95
    %s97 = sadd.s32 %s19, 1
    %p98 = scmp.lt.s32.totalorder %s97, 0
    %s99 = scalar_select %p98, %s97, 0
    %s100 = sadd.s32 %s26, 1
    %p101 = scmp.lt.s32.totalorder %s100, 0
    %s102 = scalar_select %p101, %s100, 0
    %s103 = ssub.s32 %s18, %s30
    %s104 = ssub.s32 %s99, %s102
    %s105 = sor.u32 %s103, %s104
    %p106 = scmp.eq.s32.totalorder %s105, 0
    %s108 = sadd.s32 %s107, 1
    %s109 = scalar_select %p106, %s107, %s108
    %p112 = pneg %p106
    %p113 = scmp.eq.s32.totalorder %s11, 1
    %p114 = por %p112, %p113
    %p115 = scmp.ne.s32.totalorder %s107, %s110
    %p116 = scmp.eq.s32.totalorder %s11, 0
    %p117 = por %p115, %p116
    %p118 = scmp.ne.s32.totalorder %s107, %s110
    %p119 = scmp.eq.s32.totalorder %s16, 1
    %p120 = por %p118, %p119
    %p121 = scmp.ne.s32.totalorder %s110, %s111
    %p122 = scmp.eq.s32.totalorder %s16, 0
    %p123 = por %p121, %p122
    %p124 = scmp.ne.s32.totalorder %s110, %s111
    %p125 = scmp.eq.s32.totalorder %s17, 1
    %p126 = por %p124, %p125
    %p128 = scmp.ne.s32.totalorder %s111, %s127
    %p129 = scmp.eq.s32.totalorder %s17, 0
    %p130 = por %p128, %p129
    %s132 = sadd.s32 %s131, 1
    %p135 = scmp.eq.s32.totalorder %s11, 1
    %p136 = scmp.ne.s32.totalorder %s131, %s133
    %p137 = scmp.eq.s32.totalorder %s11, 0
    %p138 = por %p136, %p137
    %p139 = scmp.ne.s32.totalorder %s131, %s133
    %p140 = scmp.eq.s32.totalorder %s16, 1
    %p141 = por %p139, %p140
    %p142 = scmp.ne.s32.totalorder %s133, %s134
    %p143 = scmp.eq.s32.totalorder %s16, 0
    %p144 = por %p142, %p143
    %p145 = scmp.ne.s32.totalorder %s133, %s134
    %p146 = scmp.eq.s32.totalorder %s17, 1
    %p147 = por %p145, %p146
    %p149 = scmp.ne.s32.totalorder %s134, %s148
    %p150 = scmp.eq.s32.totalorder %s17, 0
    %p151 = por %p149, %p150
    %s153 = sadd.s32 %s152, 1
    %p156 = scmp.eq.s32.totalorder %s11, 1
    %p157 = scmp.ne.s32.totalorder %s152, %s154
    %p158 = scmp.eq.s32.totalorder %s11, 0
    %p159 = por %p157, %p158
    %p160 = scmp.ne.s32.totalorder %s152, %s154
    %p161 = scmp.eq.s32.totalorder %s16, 1
    %p162 = por %p160, %p161
    %p163 = scmp.ne.s32.totalorder %s154, %s155
    %p164 = scmp.eq.s32.totalorder %s16, 0
    %p165 = por %p163, %p164
    %p166 = scmp.ne.s32.totalorder %s154, %s155
    %p167 = scmp.eq.s32.totalorder %s17, 1
    %p168 = por %p166, %p167
    %p170 = scmp.ne.s32.totalorder %s155, %s169
    %p171 = scmp.eq.s32.totalorder %s17, 0
    %p172 = por %p170, %p171
    %s173 = ssub.s32 %s18, %s30
    %s174 = ssub.s32 %s19, %s26
    %s175 = sor.u32 %s173, %s174
    %p176 = scmp.eq.s32.totalorder %s175, 0
    %s178 = sadd.s32 %s177, 1
    %s179 = scalar_select %p176, %s177, %s178
    %p182 = pneg %p176
    %p183 = scmp.eq.s32.totalorder %s11, 1
    %p184 = por %p182, %p183
    %p185 = scmp.ne.s32.totalorder %s177, %s180
    %p186 = scmp.eq.s32.totalorder %s11, 0
    %p187 = por %p185, %p186
    %p188 = scmp.ne.s32.totalorder %s177, %s180
    %p189 = scmp.eq.s32.totalorder %s16, 1
    %p190 = por %p188, %p189
    %p191 = scmp.ne.s32.totalorder %s180, %s181
    %p192 = scmp.eq.s32.totalorder %s16, 0
    %p193 = por %p191, %p192
    %p194 = scmp.ne.s32.totalorder %s180, %s181
    %p195 = scmp.eq.s32.totalorder %s17, 1
    %p196 = por %p194, %p195
    %p198 = scmp.ne.s32.totalorder %s181, %s197
    %p199 = scmp.eq.s32.totalorder %s17, 0
    %p200 = por %p198, %p199
    %p201 = scmp.le.s32.totalorder 1, %s11
    %p202 = scmp.lt.s32.totalorder %s11, 3
    %p203 = pnand %p201, %p202
    %p204 = pneg %p203
    // Predicated region
    $region9: #{hifigan_forward.9} parent=5 // pred_check
      _
    $region10: #{hifigan_forward.9} parent=5 // pred_check_branch
      %206 = sbr.rel (%p203) target = $region12
    $region11: #{hifigan_forward.9} parent=5 // pred_region
      %s207 = ssub.s32 %s11, 1
      // Predicated region
      $region13: #{hifigan_forward.9} parent=11 // pred_check
        %p208 = pneg %p144
      $region14: #{hifigan_forward.9} parent=11 // pred_check_branch
        %210 = sbr.rel (%p208) target = $region16
      $region15: #{hifigan_forward.9} parent=11 // pred_region
        _
      $region16: #{hifigan_forward.9} parent=11 // pred_fallthru
        _
      // Predicated region
      $region17: #{hifigan_forward.9} parent=11 // pred_check
        %p211 = pneg %p165
      $region18: #{hifigan_forward.9} parent=11 // pred_check_branch
        %213 = sbr.rel (%p211) target = $region20
      $region19: #{hifigan_forward.9} parent=11 // pred_region
        _
      $region20: #{hifigan_forward.9} parent=11 // pred_fallthru
        _
    $region12: #{hifigan_forward.9} parent=5 // pred_fallthru
      _
    %p214 = scmp.lt.s32.totalorder %s11, 2
    // Predicated region
    $region21: #{hifigan_forward.9} parent=5 // pred_check
      %p215 = pneg %p214
    $region22: #{hifigan_forward.9} parent=5 // pred_check_branch
      %217 = sbr.rel (%p215) target = $region24
    $region23: #{hifigan_forward.9} parent=5 // pred_region
      // Predicated region
      $region25: #{hifigan_forward.9} parent=23 // pred_check
        %p218 = pneg %p49
      $region26: #{hifigan_forward.9} parent=23 // pred_check_branch
        %220 = sbr.rel (%p218) target = $region28
      $region27: #{hifigan_forward.9} parent=23 // pred_region
        %p221 = scmp.lt.s32.totalorder %s19, 0
        %s222 = scalar_select %p221, %s19, 0
        %s223 = smul.u32 2, %s222
        %p224 = scmp.lt.s32.totalorder %s18, 1
        %s225 = scalar_select %p224, %s18, 1
        %p226 = scmp.lt.s32.totalorder %s223, 1
        %s227 = scalar_select %p226, %s223, 1
        %s228 = smul.addr %s225, 2
        %s229 = sadd.s32 %s227, %s228
        %s230 = smul.addr %s229, 4
        %s231 = scalar_lea.vmem %s0, %s230
        %p232 = scmp.lt.s32.totalorder %s19, 0
        %s233 = scalar_select %p232, %s19, 0
        %s234 = smul.u32 2, %s233
      $region28: #{hifigan_forward.9} parent=23 // pred_fallthru
        _
      // Predicated region
      $region29: #{hifigan_forward.9} parent=23 // pred_check
        %p235 = pneg %p83
      $region30: #{hifigan_forward.9} parent=23 // pred_check_branch
        %237 = sbr.rel (%p235) target = $region32
      $region31: #{hifigan_forward.9} parent=23 // pred_region
        %s238 = ssub.s32 %s19, 1
        %p239 = scmp.gt.s32.totalorder %s238, 0
        %s240 = scalar_select %p239, %s238, 0
        %s241 = smul.u32 2, %s240
        %p242 = scmp.lt.s32.totalorder %s18, 1
        %s243 = scalar_select %p242, %s18, 1
        %p244 = scmp.lt.s32.totalorder %s241, 1
        %s245 = scalar_select %p244, %s241, 1
        %s246 = smul.addr %s243, 2
        %s247 = sadd.s32 %s245, %s246
        %s248 = smul.addr %s247, 4
        %s249 = scalar_lea.vmem %s1, %s248
        %s250 = ssub.s32 %s19, 1
        %p251 = scmp.gt.s32.totalorder %s250, 0
        %s252 = scalar_select %p251, %s250, 0
        %s253 = smul.u32 2, %s252
      $region32: #{hifigan_forward.9} parent=23 // pred_fallthru
        _
      // Predicated region
      $region33: #{hifigan_forward.9} parent=23 // pred_check
        %p254 = pneg %p117
      $region34: #{hifigan_forward.9} parent=23 // pred_check_branch
        %256 = sbr.rel (%p254) target = $region36
      $region35: #{hifigan_forward.9} parent=23 // pred_region
        %s257 = sadd.s32 %s19, 1
        %p258 = scmp.lt.s32.totalorder %s257, 0
        %s259 = scalar_select %p258, %s257, 0
        %s260 = smul.u32 2, %s259
        %p261 = scmp.lt.s32.totalorder %s18, 1
        %s262 = scalar_select %p261, %s18, 1
        %p263 = scmp.lt.s32.totalorder %s260, 1
        %s264 = scalar_select %p263, %s260, 1
        %s265 = smul.addr %s262, 2
        %s266 = sadd.s32 %s264, %s265
        %s267 = smul.addr %s266, 4
        %s268 = scalar_lea.vmem %s2, %s267
        %s269 = sadd.s32 %s19, 1
        %p270 = scmp.lt.s32.totalorder %s269, 0
        %s271 = scalar_select %p270, %s269, 0
        %s272 = smul.u32 2, %s271
      $region36: #{hifigan_forward.9} parent=23 // pred_fallthru
        _
    $region24: #{hifigan_forward.9} parent=5 // pred_fallthru
      _
    %p273 = scmp.le.s32.totalorder 1, %s11
    %p274 = scmp.lt.s32.totalorder %s11, 3
    %p275 = pnand %p273, %p274
    %p276 = pneg %p275
    // Predicated region
    $region37: #{hifigan_forward.9} parent=5 // pred_check
      _
    $region38: #{hifigan_forward.9} parent=5 // pred_check_branch
      %278 = sbr.rel (%p275) target = $region40
    $region39: #{hifigan_forward.9} parent=5 // pred_region
      %s279 = ssub.s32 %s11, 1
      %p280 = scmp.lt.s32.totalorder %s21, 0
      %s281 = scalar_select %p280, %s21, 0
      %s282 = smul.u32 2, %s281
      %p283 = scmp.lt.s32.totalorder %s20, 1
      %s284 = scalar_select %p283, %s20, 1
      %p285 = scmp.lt.s32.totalorder %s282, 1
      %s286 = scalar_select %p285, %s282, 1
      %s287 = smul.addr %s284, 2
      %s288 = sadd.s32 %s286, %s287
      %s289 = smul.addr %s288, 4
      %s290 = scalar_lea.vmem %s0, %s289
      %p291 = pneg %p55
      %p292 = pneg %p52
      %s293 = ssub.s32 %s21, 1
      %p294 = scmp.gt.s32.totalorder %s293, 0
      %s295 = scalar_select %p294, %s293, 0
      %s296 = smul.u32 2, %s295
      %p297 = scmp.lt.s32.totalorder %s20, 1
      %s298 = scalar_select %p297, %s20, 1
      %p299 = scmp.lt.s32.totalorder %s296, 1
      %s300 = scalar_select %p299, %s296, 1
      %s301 = smul.addr %s298, 2
      %s302 = sadd.s32 %s300, %s301
      %s303 = smul.addr %s302, 4
      %s304 = scalar_lea.vmem %s1, %s303
      %p305 = pneg %p89
      %p306 = pneg %p86
      %s307 = sadd.s32 %s21, 1
      %p308 = scmp.lt.s32.totalorder %s307, 0
      %s309 = scalar_select %p308, %s307, 0
      %s310 = smul.u32 2, %s309
      %p311 = scmp.lt.s32.totalorder %s20, 1
      %s312 = scalar_select %p311, %s20, 1
      %p313 = scmp.lt.s32.totalorder %s310, 1
      %s314 = scalar_select %p313, %s310, 1
      %s315 = smul.addr %s312, 2
      %s316 = sadd.s32 %s314, %s315
      %s317 = smul.addr %s316, 4
      %s318 = scalar_lea.vmem %s2, %s317
      %p319 = pneg %p123
      %p320 = pneg %p120
      %p321 = pneg %p144
      %p322 = pneg %p141
      %p323 = pneg %p165
      %p324 = pneg %p162
      %p325 = pneg %p193
      %p326 = pneg %p190
      %s327 = smul.u32 2, %s21
      %p328 = scmp.lt.s32.totalorder %s20, 1
      %s329 = scalar_select %p328, %s20, 1
      %p330 = scmp.lt.s32.totalorder %s327, 1
      %s331 = scalar_select %p330, %s327, 1
      %s332 = smul.addr %s329, 2
      %s333 = sadd.s32 %s331, %s332
      %s334 = smul.addr %s333, 4
      %s335 = scalar_lea.vmem %s5, %s334
      %p336 = scmp.lt.s32.totalorder %s21, 0
      %s337 = scalar_select %p336, %s21, 0
      %s338 = smul.u32 2, %s337
      %p339 = scmp.lt.s32.totalorder %s20, 1
      %s340 = scalar_select %p339, %s20, 1
      %p341 = scmp.lt.s32.totalorder %s338, 1
      %s342 = scalar_select %p341, %s338, 1
      %s343 = smul.addr %s340, 2
      %s344 = sadd.s32 %s342, %s343
      %s345 = smul.addr %s344, 4
      %s346 = scalar_lea.vmem %s0, %s345
      %p347 = scmp.lt.s32.totalorder %s21, 0
      %s348 = scalar_select %p347, %s21, 0
      %s349 = smul.u32 2, %s348
      %s350 = ssub.s32 %s21, 1
      %p351 = scmp.gt.s32.totalorder %s350, 0
      %s352 = scalar_select %p351, %s350, 0
      %s353 = smul.u32 2, %s352
      %p354 = scmp.lt.s32.totalorder %s20, 1
      %s355 = scalar_select %p354, %s20, 1
      %p356 = scmp.lt.s32.totalorder %s353, 1
      %s357 = scalar_select %p356, %s353, 1
      %s358 = smul.addr %s355, 2
      %s359 = sadd.s32 %s357, %s358
      %s360 = smul.addr %s359, 4
      %s361 = scalar_lea.vmem %s1, %s360
      %s362 = ssub.s32 %s21, 1
      %p363 = scmp.gt.s32.totalorder %s362, 0
      %s364 = scalar_select %p363, %s362, 0
      %s365 = smul.u32 2, %s364
      %s366 = sadd.s32 %s21, 1
      %p367 = scmp.lt.s32.totalorder %s366, 0
      %s368 = scalar_select %p367, %s366, 0
      %s369 = smul.u32 2, %s368
      %p370 = scmp.lt.s32.totalorder %s20, 1
      %s371 = scalar_select %p370, %s20, 1
      %p372 = scmp.lt.s32.totalorder %s369, 1
      %s373 = scalar_select %p372, %s369, 1
      %s374 = smul.addr %s371, 2
      %s375 = sadd.s32 %s373, %s374
      %s376 = smul.addr %s375, 4
      %s377 = scalar_lea.vmem %s2, %s376
      %s378 = sadd.s32 %s21, 1
      %p379 = scmp.lt.s32.totalorder %s378, 0
      %s380 = scalar_select %p379, %s378, 0
      %s381 = smul.u32 2, %s380
      %s382 = smul.u32 2, %s21
      %p383 = scmp.lt.s32.totalorder %s20, 1
      %s384 = scalar_select %p383, %s20, 1
      %p385 = scmp.lt.s32.totalorder %s382, 1
      %s386 = scalar_select %p385, %s382, 1
      %s387 = smul.addr %s384, 2
      %s388 = sadd.s32 %s386, %s387
      %s389 = smul.addr %s388, 4
      %s390 = scalar_lea.vmem %s5, %s389
      %s391 = smul.u32 2, %s21
      %s393 = smul.u32 %s21, 16
      %v394 = vld [vmem:[%s361] sm:$0xf]
      %v395 = vld [vmem:[%s361 + $0x4] sm:$0xf]
      %s396 = ssub.s32 %s393, 16
      %v397 = vlaneseq
      %v398 = vshrl.u32 %v397, 7
      %v399 = vadd.s32 %v398, 8
      %v400 = vstv %s396
      %v401 = vadd.s32 %v400, %v398
      %v402 = vadd.s32 %v400, %v399
      %vm403 = vcmp.ge.s32.totalorder %v401, 0
      %vm404 = vcmp.ge.s32.totalorder %v402, 0
      %vm405 = vcmp.lt.s32.totalorder %v401, 16
      %vm406 = vcmp.lt.s32.totalorder %v402, 16
      %vm407 = vmand %vm403, %vm405
      %vm408 = vmand %vm404, %vm406
      %v409 = vsel %vm407, 1, 0
      %v410 = vsel %vm408, 1, 0
      %vm411 = vcmp.eq.s32.totalorder %v409, 1
      %vm412 = vcmp.eq.s32.totalorder %v410, 1
      %vm413 = vmpackc.low %vm411, %vm411
      %vm414 = vmpackc.low %vm412, %vm412
      %v415 = vsel %vm413, %v394, 0
      %v416 = vsel %vm414, %v395, 0
      %v417 = vunpack.c.l.bf16 %v415
      %v418 = vunpack.c.l.bf16 %v416
      %vm419 = vcmp.ge.f32.partialorder %v417, 0.0
      %vm420 = vcmp.ge.f32.partialorder %v418, 0.0
      %v421 = vmul.f32 %v417, 0.1
      %v422 = vmul.f32 %v418, 0.1
      %v423 = vsel %vm419, %v417, %v421
      %v424 = vsel %vm420, %v418, %v422
      %v425 = vpack.c.bf16 %v423, %v423
      %v426 = vpack.c.bf16 %v424, %v424
      %v427 = vld [vmem:[%s346] sm:$0xf]
      %v428 = vld [vmem:[%s346 + $0x4] sm:$0xf]
      %v429 = vstv %s393
      %v430 = vadd.s32 %v429, %v398
      %v431 = vadd.s32 %v429, %v399
      %vm432 = vcmp.ge.s32.totalorder %v430, 0
      %vm433 = vcmp.ge.s32.totalorder %v431, 0
      %vm434 = vcmp.lt.s32.totalorder %v430, 16
      %vm435 = vcmp.lt.s32.totalorder %v431, 16
      %vm436 = vmand %vm432, %vm434
      %vm437 = vmand %vm433, %vm435
      %v438 = vsel %vm436, 1, 0
      %v439 = vsel %vm437, 1, 0
      %vm440 = vcmp.eq.s32.totalorder %v438, 1
      %vm441 = vcmp.eq.s32.totalorder %v439, 1
      %vm442 = vmpackc.low %vm440, %vm440
      %vm443 = vmpackc.low %vm441, %vm441
      %v444 = vsel %vm442, %v427, 0
      %v445 = vsel %vm443, %v428, 0
      %v446 = vunpack.c.l.bf16 %v444
      %v447 = vunpack.c.l.bf16 %v445
      %vm448 = vcmp.ge.f32.partialorder %v446, 0.0
      %vm449 = vcmp.ge.f32.partialorder %v447, 0.0
      %v450 = vmul.f32 %v446, 0.1
      %v451 = vmul.f32 %v447, 0.1
      %v452 = vsel %vm448, %v446, %v450
      %v453 = vsel %vm449, %v447, %v451
      %v454 = vpack.c.bf16 %v452, %v452
      %v455 = vpack.c.bf16 %v453, %v453
      %v456 = vld [vmem:[%s377] sm:$0xf]
      %v457 = vld [vmem:[%s377 + $0x4] sm:$0xf]
      %s458 = sadd.s32 %s393, 16
      %v459 = vstv %s458
      %v460 = vadd.s32 %v459, %v398
      %v461 = vadd.s32 %v459, %v399
      %vm462 = vcmp.ge.s32.totalorder %v460, 0
      %vm463 = vcmp.ge.s32.totalorder %v461, 0
      %vm464 = vcmp.lt.s32.totalorder %v460, 16
      %vm465 = vcmp.lt.s32.totalorder %v461, 16
      %vm466 = vmand %vm462, %vm464
      %vm467 = vmand %vm463, %vm465
      %v468 = vsel %vm466, 1, 0
      %v469 = vsel %vm467, 1, 0
      %vm470 = vcmp.eq.s32.totalorder %v468, 1
      %vm471 = vcmp.eq.s32.totalorder %v469, 1
      %vm472 = vmpackc.low %vm470, %vm470
      %vm473 = vmpackc.low %vm471, %vm471
      %v474 = vsel %vm472, %v456, 0
      %v475 = vsel %vm473, %v457, 0
      %v476 = vunpack.c.l.bf16 %v474
      %v477 = vunpack.c.l.bf16 %v475
      %vm478 = vcmp.ge.f32.partialorder %v476, 0.0
      %vm479 = vcmp.ge.f32.partialorder %v477, 0.0
      %v480 = vmul.f32 %v476, 0.1
      %v481 = vmul.f32 %v477, 0.1
      %v482 = vsel %vm478, %v476, %v480
      %v483 = vsel %vm479, %v477, %v481
      %v484 = vpack.c.bf16 %v482, %v482
      %v485 = vpack.c.bf16 %v483, %v483
      %v488 = vunpack.c.l.b16 %v425
      %v489 = vunpack.c.l.b16 %v426
      %v490 = vpack.c.b16 %v489, %v488
      %v493 = vunpack.c.l.b16 %v454
      %v494 = vunpack.c.l.b16 %v455
      %v495 = vpack.c.b16 %v494, %v493
      %v498 = vunpack.c.l.b16 %v484
      %v499 = vunpack.c.l.b16 %v485
      %v500 = vpack.c.b16 %v499, %v498
      %v502 = vshll.u32 %v495, 16
      %v504 = vrot.slane %v502, 1
      %v505 = vshrl.u32 %v495, 16
      %v507 = vor.u32 %v505, %v504
      %508 = vrot.lane.b32.xlu0 %v504, 32
      %v509 = vpop.permute.xlu0 %508
      %510 = vrot.lane.b32.xlu0 %v507, 32
      %v511 = vpop.permute.xlu0 %510
      %vm512 = vcmask 1046528
      %v513 = vrot.slane %v495, 1
      %v514 = vrot.slane %v500, 1
      %v515 = vsel %vm512, %v513, %v514
      %516 = vrot.lane.b32.xlu0 %v513, 64
      %v517 = vpop.permute.xlu0 %516
      %518 = vrot.lane.b32.xlu0 %v515, 64
      %v519 = vpop.permute.xlu0 %518
      %vm520 = vcmask 261120
      %v523 = vsel %vm520, %v490, %v509
      %v525 = vsel %vm520, %v495, %v511
      %vm526 = vcmask 523264
      %v528 = vsel %vm526, %v523, %v517
      %v530 = vsel %vm526, %v525, %v519
      %v531 = vld [vmem:[%s3] sm:$0xf]
      %v532 = vld [vmem:[%s3 + $0x4] sm:$0xf]
      %v533 = vld [vmem:[%s3 + $0x8] sm:$0xf]
      %v534 = vld [vmem:[%s3 + $0xc] sm:$0xf]
      %v535 = vld [vmem:[%s3 + $0x10] sm:$0xf]
      %v536 = vld [vmem:[%s3 + $0x14] sm:$0xf]
      %v537 = vld [vmem:[%s3 + $0x18] sm:$0xf]
      %v538 = vld [vmem:[%s3 + $0x1c] sm:$0xf]
      %v539 = vld [vmem:[%s3 + $0x20] sm:$0xf]
      %v540 = vld [vmem:[%s3 + $0x24] sm:$0xf]
      %v541 = vld [vmem:[%s3 + $0x28] sm:$0xf]
      %v542 = vld [vmem:[%s3 + $0x2c] sm:$0xf]
      %v543 = vld [vmem:[%s4] sm:$0x1]
      %v545 = vperm.slane %v543, 0
      %vm547 = vsmask.f32 256
      %v548 = vshrl.u32 %v528, 16
      %v550 = vrot.slane %v548, 7
      %v551 = vshrl.u32 %v530, 16
      %v553 = vrot.slane %v551, 7
      %v554 = vshll.u32 %v530, 16
      %v556 = vor.u32 %v553, %v554
      %v557 = vsel %vm547, %v550, %v556
      %v570 = vunpack.c.l.b16 %v531
      %v571 = vunpack.c.l.b16 %v532
      %v572 = vunpack.c.l.b16 %v533
      %v573 = vunpack.c.l.b16 %v534
      %v574 = vunpack.c.l.b16 %v535
      %v575 = vunpack.c.l.b16 %v536
      %v576 = vunpack.c.l.b16 %v537
      %v577 = vunpack.c.l.b16 %v538
      %v578 = vunpack.c.l.b16 %v539
      %v579 = vunpack.c.l.b16 %v540
      %v580 = vunpack.c.l.b16 %v541
      %v581 = vunpack.c.l.b16 %v542
      %v582 = vpack.c.b16 %v571, %v570
      %v583 = vpack.c.b16 %v573, %v572
      %v584 = vpack.c.b16 %v575, %v574
      %v585 = vpack.c.b16 %v577, %v576
      %v586 = vpack.c.b16 %v579, %v578
      %v587 = vpack.c.b16 %v581, %v580
      %vm594 = vcmask 785408
      %v596 = vsel %vm594, %v557, 0
      %598 = vmatpush.bf16.msra.mxu0 0
      %599 = vmatpush.bf16.msra.mxu0 0
      %600 = vmatpush.bf16.msra.mxu0 %v587
      %601 = vmatpush.bf16.msra.mxu0 %v586
      %602 = vmatpush.bf16.msra.mxu0 %v585
      %603 = vmatpush.bf16.msra.mxu0 %v584
      %604 = vmatpush.bf16.msra.mxu0 %v583
      %605 = vmatpush.bf16.msra.mxu0 %v582
      %606 = vmatmul.bf16.gmra.mxu0 %v596
      %v607 = vpop.f32.mrf.mxu0
      %v608 = vadd.f32 %v545, %v607
      %v609 = vpop.f32.mrf.mxu0
      %v610 = vadd.f32 %v545, %v609
      %611 = vdwg.mxu0
      %v612 = vpack.c.bf16 %v608, %v608
      %v613 = vpack.c.bf16 %v610, %v610
      %vm614 = vcmask 257024
      %615 = vst.msk [vmem:[%s390] sm:$0xf] %vm614, %v612
      %616 = vst.msk [vmem:[%s390 + $0x4] sm:$0xf] %vm614, %v613
      %s617 = smul.u32 2, %s21
      %p618 = scmp.lt.s32.totalorder %s20, 1
      %s619 = scalar_select %p618, %s20, 1
      %p620 = scmp.lt.s32.totalorder %s617, 1
      %s621 = scalar_select %p620, %s617, 1
      %s622 = smul.addr %s619, 2
      %s623 = sadd.s32 %s621, %s622
      %s624 = smul.addr %s623, 4
      %s625 = scalar_lea.vmem %s5, %s624
      // Predicated region
      $region41: #{hifigan_forward.9} parent=39 // pred_check
        %p626 = pneg %p190
      $region42: #{hifigan_forward.9} parent=39 // pred_check_branch
        %628 = sbr.rel (%p626) target = $region44
      $region43: #{hifigan_forward.9} parent=39 // pred_region
        %s629 = smul.u32 2, %s21
      $region44: #{hifigan_forward.9} parent=39 // pred_fallthru
        _
    $region40: #{hifigan_forward.9} parent=5 // pred_fallthru
      _
    %p630 = scmp.le.s32.totalorder 2, %s11
    // Predicated region
    $region45: #{hifigan_forward.9} parent=5 // pred_check
      %p631 = pneg %p630
    $region46: #{hifigan_forward.9} parent=5 // pred_check_branch
      %633 = sbr.rel (%p631) target = $region48
    $region47: #{hifigan_forward.9} parent=5 // pred_region
      %s634 = ssub.s32 %s11, 2
      // Predicated region
      $region49: #{hifigan_forward.9} parent=47 // pred_check
        %p635 = pneg %p196
      $region50: #{hifigan_forward.9} parent=47 // pred_check_branch
        %637 = sbr.rel (%p635) target = $region52
      $region51: #{hifigan_forward.9} parent=47 // pred_region
        %s638 = smul.u32 2, %s23
        %p639 = scmp.lt.s32.totalorder %s22, 1
        %s640 = scalar_select %p639, %s22, 1
        %p641 = scmp.lt.s32.totalorder %s638, 1
        %s642 = scalar_select %p641, %s638, 1
        %s643 = smul.addr %s640, 2
        %s644 = sadd.s32 %s642, %s643
        %s645 = smul.addr %s644, 4
        %s646 = scalar_lea.vmem %s5, %s645
      $region52: #{hifigan_forward.9} parent=47 // pred_fallthru
        _
    $region48: #{hifigan_forward.9} parent=5 // pred_fallthru
      _
  $region6: #{hifigan_forward.9} parent=0 // loop_footer
    %s15 = sadd.s32 1, %s11
  $region7: #{hifigan_forward.9} parent=0 // loop_footer_branch
    %10 = sbr.rel target = $region3
  $region8: #{hifigan_forward.9} parent=0 // loop_exit
    _

// kernel: hifigan_forward.10
$region0: #{hifigan_forward.10}
  #allocation0 [shape = 'u32[]', space=smem, size = 0x4, offset = 0x4, fixed_abs, tag = 'smem constant byte address 0x4 - core index']
  #allocation1 [shape = 'u32[72,128]{1,0:T(1,128)}', space=vmem, size = 0x9000, scoped, tag = 'internal scratch']
  %s0 = inlined_call_operand.vmem [shape: bf16[2,32,16], index: 0, kind: input, shape index: {}, may-alias: {0,1,2,5}]
  %s1 = inlined_call_operand.vmem [shape: bf16[2,32,16], index: 1, kind: input, shape index: {}, may-alias: {0,1,2,5}]
  %s2 = inlined_call_operand.vmem [shape: bf16[2,32,16], index: 2, kind: input, shape index: {}, may-alias: {0,1,2,5}]
  %s3 = inlined_call_operand.vmem [shape: bf16[48,16], index: 3, kind: input, shape index: {}]
  %s4 = inlined_call_operand.vmem [shape: f32[1,16], index: 4, kind: input, shape index: {}]
  %s5 = inlined_call_operand.vmem [shape: bf16[2,32,16], index: 5, kind: input, shape index: {}, may-alias: {0,1,2,5}]
  %s6 = inlined_call_operand.vmem [shape: bf16[2,32,16], index: 6, kind: output, shape index: {}]
  %s7 = sld [smem:[#allocation0]]
  $region57: #{hifigan_forward.10} parent=0
    _
  %s9 = ssub.s32 1, %s7
  %s10 = scalar_select 0, %s9, %s7
  loop: start=0, step=1, limit=4
  $region2: #{hifigan_forward.10} parent=0 // loop_pre_header
    _
  $region3: #{hifigan_forward.10} parent=0 // loop_header
    %s12 = sphi 0, %s16
    %p13 = scmp.ge.s32.totalorder %s12, 4
    %s19 = sphi 0, %s31
    %s20 = sphi 0, %s27
    %s21 = sphi 0, %s19
    %s22 = sphi 0, %s20
    %s23 = sphi 0, %s21
    %s24 = sphi 0, %s22
    %s40 = sphi 0, %s42
    %s43 = sphi 0, %s40
    %s44 = sphi 0, %s43
    %s60 = sphi 0, %s44
    %s76 = sphi 0, %s78
    %s79 = sphi 0, %s76
    %s80 = sphi 0, %s79
    %s96 = sphi 0, %s80
    %s112 = sphi 0, %s114
    %s115 = sphi 0, %s112
    %s116 = sphi 0, %s115
    %s132 = sphi 0, %s116
    %s136 = sphi 0, %s136
    %s138 = sphi 0, %s136
    %s139 = sphi 0, %s138
    %s153 = sphi 0, %s139
    %s157 = sphi 0, %s157
    %s159 = sphi 0, %s157
    %s160 = sphi 0, %s159
    %s174 = sphi 0, %s160
    %s182 = sphi 0, %s184
    %s185 = sphi 0, %s182
    %s186 = sphi 0, %s185
    %s202 = sphi 0, %s186
    %s210 = sphi 0, %s212
    %s213 = sphi 0, %s210
    %s214 = sphi 0, %s213
    %s230 = sphi 0, %s214
  $region4: #{hifigan_forward.10} parent=0 // loop_header_branch
    %15 = sbr.rel (%p13) target = $region8
  $region5: #{hifigan_forward.10} parent=0 // loop_body
    %s17 = ssub.s32 %s12, 1
    %s18 = ssub.s32 %s12, 2
    %s25 = sadd.s32 1, %s20
    %p26 = scmp.ge.s32.totalorder %s25, 1
    %s27 = scalar_select %p26, 0, %s25
    %s28 = sadd.s32 1, %s19
    %s29 = scalar_select %p26, %s28, %s19
    %p30 = scmp.ge.s32.totalorder %s29, 2
    %s31 = scalar_select %p30, 0, %s29
    %p32 = scmp.lt.s32.totalorder %s20, 0
    %s33 = scalar_select %p32, %s20, 0
    %p34 = scmp.lt.s32.totalorder %s27, 0
    %s35 = scalar_select %p34, %s27, 0
    %s36 = ssub.s32 %s19, %s31
    %s37 = ssub.s32 %s33, %s35
    %s38 = sor.u32 %s36, %s37
    %p39 = scmp.eq.s32.totalorder %s38, 0
    %s41 = sadd.s32 %s40, 1
    %s42 = scalar_select %p39, %s40, %s41
    %p45 = pneg %p39
    %p46 = scmp.eq.s32.totalorder %s12, 1
    %p47 = por %p45, %p46
    %p48 = scmp.ne.s32.totalorder %s40, %s43
    %p49 = scmp.eq.s32.totalorder %s12, 0
    %p50 = por %p48, %p49
    %p51 = scmp.ne.s32.totalorder %s40, %s43
    %p52 = scmp.eq.s32.totalorder %s17, 1
    %p53 = por %p51, %p52
    %p54 = scmp.ne.s32.totalorder %s43, %s44
    %p55 = scmp.eq.s32.totalorder %s17, 0
    %p56 = por %p54, %p55
    %p57 = scmp.ne.s32.totalorder %s43, %s44
    %p58 = scmp.eq.s32.totalorder %s18, 1
    %p59 = por %p57, %p58
    %p61 = scmp.ne.s32.totalorder %s44, %s60
    %p62 = scmp.eq.s32.totalorder %s18, 0
    %p63 = por %p61, %p62
    %s64 = smul.u32 %s20, 2
    %s65 = ssub.s32 %s64, 1
    %p66 = scmp.gt.s32.totalorder %s65, 0
    %s67 = scalar_select %p66, %s65, 0
    %s68 = smul.u32 %s27, 2
    %s69 = ssub.s32 %s68, 1
    %p70 = scmp.gt.s32.totalorder %s69, 0
    %s71 = scalar_select %p70, %s69, 0
    %s72 = ssub.s32 %s19, %s31
    %s73 = ssub.s32 %s67, %s71
    %s74 = sor.u32 %s72, %s73
    %p75 = scmp.eq.s32.totalorder %s74, 0
    %s77 = sadd.s32 %s76, 1
    %s78 = scalar_select %p75, %s76, %s77
    %p81 = pneg %p75
    %p82 = scmp.eq.s32.totalorder %s12, 1
    %p83 = por %p81, %p82
    %p84 = scmp.ne.s32.totalorder %s76, %s79
    %p85 = scmp.eq.s32.totalorder %s12, 0
    %p86 = por %p84, %p85
    %p87 = scmp.ne.s32.totalorder %s76, %s79
    %p88 = scmp.eq.s32.totalorder %s17, 1
    %p89 = por %p87, %p88
    %p90 = scmp.ne.s32.totalorder %s79, %s80
    %p91 = scmp.eq.s32.totalorder %s17, 0
    %p92 = por %p90, %p91
    %p93 = scmp.ne.s32.totalorder %s79, %s80
    %p94 = scmp.eq.s32.totalorder %s18, 1
    %p95 = por %p93, %p94
    %p97 = scmp.ne.s32.totalorder %s80, %s96
    %p98 = scmp.eq.s32.totalorder %s18, 0
    %p99 = por %p97, %p98
    %s100 = sadd.s32 %s20, 1
    %s101 = smul.u32 %s100, 2
    %p102 = scmp.lt.s32.totalorder %s101, 1
    %s103 = scalar_select %p102, %s101, 1
    %s104 = sadd.s32 %s27, 1
    %s105 = smul.u32 %s104, 2
    %p106 = scmp.lt.s32.totalorder %s105, 1
    %s107 = scalar_select %p106, %s105, 1
    %s108 = ssub.s32 %s19, %s31
    %s109 = ssub.s32 %s103, %s107
    %s110 = sor.u32 %s108, %s109
    %p111 = scmp.eq.s32.totalorder %s110, 0
    %s113 = sadd.s32 %s112, 1
    %s114 = scalar_select %p111, %s112, %s113
    %p117 = pneg %p111
    %p118 = scmp.eq.s32.totalorder %s12, 1
    %p119 = por %p117, %p118
    %p120 = scmp.ne.s32.totalorder %s112, %s115
    %p121 = scmp.eq.s32.totalorder %s12, 0
    %p122 = por %p120, %p121
    %p123 = scmp.ne.s32.totalorder %s112, %s115
    %p124 = scmp.eq.s32.totalorder %s17, 1
    %p125 = por %p123, %p124
    %p126 = scmp.ne.s32.totalorder %s115, %s116
    %p127 = scmp.eq.s32.totalorder %s17, 0
    %p128 = por %p126, %p127
    %p129 = scmp.ne.s32.totalorder %s115, %s116
    %p130 = scmp.eq.s32.totalorder %s18, 1
    %p131 = por %p129, %p130
    %p133 = scmp.ne.s32.totalorder %s116, %s132
    %p134 = scmp.eq.s32.totalorder %s18, 0
    %p135 = por %p133, %p134
    %s137 = sadd.s32 %s136, 1
    %p140 = scmp.eq.s32.totalorder %s12, 1
    %p141 = scmp.ne.s32.totalorder %s136, %s138
    %p142 = scmp.eq.s32.totalorder %s12, 0
    %p143 = por %p141, %p142
    %p144 = scmp.ne.s32.totalorder %s136, %s138
    %p145 = scmp.eq.s32.totalorder %s17, 1
    %p146 = por %p144, %p145
    %p147 = scmp.ne.s32.totalorder %s138, %s139
    %p148 = scmp.eq.s32.totalorder %s17, 0
    %p149 = por %p147, %p148
    %p150 = scmp.ne.s32.totalorder %s138, %s139
    %p151 = scmp.eq.s32.totalorder %s18, 1
    %p152 = por %p150, %p151
    %p154 = scmp.ne.s32.totalorder %s139, %s153
    %p155 = scmp.eq.s32.totalorder %s18, 0
    %p156 = por %p154, %p155
    %s158 = sadd.s32 %s157, 1
    %p161 = scmp.eq.s32.totalorder %s12, 1
    %p162 = scmp.ne.s32.totalorder %s157, %s159
    %p163 = scmp.eq.s32.totalorder %s12, 0
    %p164 = por %p162, %p163
    %p165 = scmp.ne.s32.totalorder %s157, %s159
    %p166 = scmp.eq.s32.totalorder %s17, 1
    %p167 = por %p165, %p166
    %p168 = scmp.ne.s32.totalorder %s159, %s160
    %p169 = scmp.eq.s32.totalorder %s17, 0
    %p170 = por %p168, %p169
    %p171 = scmp.ne.s32.totalorder %s159, %s160
    %p172 = scmp.eq.s32.totalorder %s18, 1
    %p173 = por %p171, %p172
    %p175 = scmp.ne.s32.totalorder %s160, %s174
    %p176 = scmp.eq.s32.totalorder %s18, 0
    %p177 = por %p175, %p176
    %s178 = ssub.s32 %s19, %s31
    %s179 = ssub.s32 %s20, %s27
    %s180 = sor.u32 %s178, %s179
    %p181 = scmp.eq.s32.totalorder %s180, 0
    %s183 = sadd.s32 %s182, 1
    %s184 = scalar_select %p181, %s182, %s183
    %p187 = pneg %p181
    %p188 = scmp.eq.s32.totalorder %s12, 1
    %p189 = por %p187, %p188
    %p190 = scmp.ne.s32.totalorder %s182, %s185
    %p191 = scmp.eq.s32.totalorder %s12, 0
    %p192 = por %p190, %p191
    %p193 = scmp.ne.s32.totalorder %s182, %s185
    %p194 = scmp.eq.s32.totalorder %s17, 1
    %p195 = por %p193, %p194
    %p196 = scmp.ne.s32.totalorder %s185, %s186
    %p197 = scmp.eq.s32.totalorder %s17, 0
    %p198 = por %p196, %p197
    %p199 = scmp.ne.s32.totalorder %s185, %s186
    %p200 = scmp.eq.s32.totalorder %s18, 1
    %p201 = por %p199, %p200
    %p203 = scmp.ne.s32.totalorder %s186, %s202
    %p204 = scmp.eq.s32.totalorder %s18, 0
    %p205 = por %p203, %p204
    %s206 = ssub.s32 %s19, %s31
    %s207 = ssub.s32 %s20, %s27
    %s208 = sor.u32 %s206, %s207
    %p209 = scmp.eq.s32.totalorder %s208, 0
    %s211 = sadd.s32 %s210, 1
    %s212 = scalar_select %p209, %s210, %s211
    %p215 = pneg %p209
    %p216 = scmp.eq.s32.totalorder %s12, 1
    %p217 = por %p215, %p216
    %p218 = scmp.ne.s32.totalorder %s210, %s213
    %p219 = scmp.eq.s32.totalorder %s12, 0
    %p220 = por %p218, %p219
    %p221 = scmp.ne.s32.totalorder %s210, %s213
    %p222 = scmp.eq.s32.totalorder %s17, 1
    %p223 = por %p221, %p222
    %p224 = scmp.ne.s32.totalorder %s213, %s214
    %p225 = scmp.eq.s32.totalorder %s17, 0
    %p226 = por %p224, %p225
    %p227 = scmp.ne.s32.totalorder %s213, %s214
    %p228 = scmp.eq.s32.totalorder %s18, 1
    %p229 = por %p227, %p228
    %p231 = scmp.ne.s32.totalorder %s214, %s230
    %p232 = scmp.eq.s32.totalorder %s18, 0
    %p233 = por %p231, %p232
    %p234 = scmp.le.s32.totalorder 1, %s12
    %p235 = scmp.lt.s32.totalorder %s12, 3
    %p236 = pnand %p234, %p235
    %p237 = pneg %p236
    // Predicated region
    $region9: #{hifigan_forward.10} parent=5 // pred_check
      _
    $region10: #{hifigan_forward.10} parent=5 // pred_check_branch
      %239 = sbr.rel (%p236) target = $region12
    $region11: #{hifigan_forward.10} parent=5 // pred_region
      %s240 = ssub.s32 %s12, 1
      // Predicated region
      $region13: #{hifigan_forward.10} parent=11 // pred_check
        %p241 = pneg %p149
      $region14: #{hifigan_forward.10} parent=11 // pred_check_branch
        %243 = sbr.rel (%p241) target = $region16
      $region15: #{hifigan_forward.10} parent=11 // pred_region
        _
      $region16: #{hifigan_forward.10} parent=11 // pred_fallthru
        _
      // Predicated region
      $region17: #{hifigan_forward.10} parent=11 // pred_check
        %p244 = pneg %p170
      $region18: #{hifigan_forward.10} parent=11 // pred_check_branch
        %246 = sbr.rel (%p244) target = $region20
      $region19: #{hifigan_forward.10} parent=11 // pred_region
        _
      $region20: #{hifigan_forward.10} parent=11 // pred_fallthru
        _
    $region12: #{hifigan_forward.10} parent=5 // pred_fallthru
      _
    %p247 = scmp.lt.s32.totalorder %s12, 2
    // Predicated region
    $region21: #{hifigan_forward.10} parent=5 // pred_check
      %p248 = pneg %p247
    $region22: #{hifigan_forward.10} parent=5 // pred_check_branch
      %250 = sbr.rel (%p248) target = $region24
    $region23: #{hifigan_forward.10} parent=5 // pred_region
      // Predicated region
      $region25: #{hifigan_forward.10} parent=23 // pred_check
        %p251 = pneg %p50
      $region26: #{hifigan_forward.10} parent=23 // pred_check_branch
        %253 = sbr.rel (%p251) target = $region28
      $region27: #{hifigan_forward.10} parent=23 // pred_region
        %p254 = scmp.lt.s32.totalorder %s20, 0
        %s255 = scalar_select %p254, %s20, 0
        %s256 = smul.u32 4, %s255
        %p257 = scmp.lt.s32.totalorder %s19, 1
        %s258 = scalar_select %p257, %s19, 1
        %p259 = scmp.lt.s32.totalorder %s256, 3
        %s260 = scalar_select %p259, %s256, 3
        %s261 = smul.addr %s258, 4
        %s262 = sadd.s32 %s260, %s261
        %s263 = smul.addr %s262, 4
        %s264 = scalar_lea.vmem %s0, %s263
        %p265 = scmp.lt.s32.totalorder %s20, 0
        %s266 = scalar_select %p265, %s20, 0
        %s267 = smul.u32 4, %s266
      $region28: #{hifigan_forward.10} parent=23 // pred_fallthru
        _
      // Predicated region
      $region29: #{hifigan_forward.10} parent=23 // pred_check
        %p268 = pneg %p86
      $region30: #{hifigan_forward.10} parent=23 // pred_check_branch
        %270 = sbr.rel (%p268) target = $region32
      $region31: #{hifigan_forward.10} parent=23 // pred_region
        %s271 = smul.u32 %s20, 2
        %s272 = ssub.s32 %s271, 1
        %p273 = scmp.gt.s32.totalorder %s272, 0
        %s274 = scalar_select %p273, %s272, 0
        %s275 = smul.u32 2, %s274
        %p276 = scmp.lt.s32.totalorder %s19, 1
        %s277 = scalar_select %p276, %s19, 1
        %p278 = scmp.lt.s32.totalorder %s275, 3
        %s279 = scalar_select %p278, %s275, 3
        %s280 = smul.addr %s277, 4
        %s281 = sadd.s32 %s279, %s280
        %s282 = smul.addr %s281, 4
        %s283 = scalar_lea.vmem %s1, %s282
        %s284 = smul.u32 %s20, 2
        %s285 = ssub.s32 %s284, 1
        %p286 = scmp.gt.s32.totalorder %s285, 0
        %s287 = scalar_select %p286, %s285, 0
        %s288 = smul.u32 2, %s287
      $region32: #{hifigan_forward.10} parent=23 // pred_fallthru
        _
      // Predicated region
      $region33: #{hifigan_forward.10} parent=23 // pred_check
        %p289 = pneg %p122
      $region34: #{hifigan_forward.10} parent=23 // pred_check_branch
        %291 = sbr.rel (%p289) target = $region36
      $region35: #{hifigan_forward.10} parent=23 // pred_region
        %s292 = sadd.s32 %s20, 1
        %s293 = smul.u32 %s292, 2
        %p294 = scmp.lt.s32.totalorder %s293, 1
        %s295 = scalar_select %p294, %s293, 1
        %s296 = smul.u32 2, %s295
        %p297 = scmp.lt.s32.totalorder %s19, 1
        %s298 = scalar_select %p297, %s19, 1
        %p299 = scmp.lt.s32.totalorder %s296, 3
        %s300 = scalar_select %p299, %s296, 3
        %s301 = smul.addr %s298, 4
        %s302 = sadd.s32 %s300, %s301
        %s303 = smul.addr %s302, 4
        %s304 = scalar_lea.vmem %s2, %s303
        %s305 = sadd.s32 %s20, 1
        %s306 = smul.u32 %s305, 2
        %p307 = scmp.lt.s32.totalorder %s306, 1
        %s308 = scalar_select %p307, %s306, 1
        %s309 = smul.u32 2, %s308
      $region36: #{hifigan_forward.10} parent=23 // pred_fallthru
        _
      // Predicated region
      $region37: #{hifigan_forward.10} parent=23 // pred_check
        %p310 = pneg %p192
      $region38: #{hifigan_forward.10} parent=23 // pred_check_branch
        %312 = sbr.rel (%p310) target = $region40
      $region39: #{hifigan_forward.10} parent=23 // pred_region
        %s313 = smul.u32 4, %s20
        %p314 = scmp.lt.s32.totalorder %s19, 1
        %s315 = scalar_select %p314, %s19, 1
        %p316 = scmp.lt.s32.totalorder %s313, 3
        %s317 = scalar_select %p316, %s313, 3
        %s318 = smul.addr %s315, 4
        %s319 = sadd.s32 %s317, %s318
        %s320 = smul.addr %s319, 4
        %s321 = scalar_lea.vmem %s5, %s320
        %s322 = smul.u32 4, %s20
      $region40: #{hifigan_forward.10} parent=23 // pred_fallthru
        _
    $region24: #{hifigan_forward.10} parent=5 // pred_fallthru
      _
    %p323 = scmp.le.s32.totalorder 1, %s12
    %p324 = scmp.lt.s32.totalorder %s12, 3
    %p325 = pnand %p323, %p324
    %p326 = pneg %p325
    // Predicated region
    $region41: #{hifigan_forward.10} parent=5 // pred_check
      _
    $region42: #{hifigan_forward.10} parent=5 // pred_check_branch
      %328 = sbr.rel (%p325) target = $region44
    $region43: #{hifigan_forward.10} parent=5 // pred_region
      %s329 = ssub.s32 %s12, 1
      %p330 = scmp.lt.s32.totalorder %s22, 0
      %s331 = scalar_select %p330, %s22, 0
      %s332 = smul.u32 4, %s331
      %p333 = scmp.lt.s32.totalorder %s21, 1
      %s334 = scalar_select %p333, %s21, 1
      %p335 = scmp.lt.s32.totalorder %s332, 3
      %s336 = scalar_select %p335, %s332, 3
      %s337 = smul.addr %s334, 4
      %s338 = sadd.s32 %s336, %s337
      %s339 = smul.addr %s338, 4
      %s340 = scalar_lea.vmem %s0, %s339
      %p341 = pneg %p56
      %p342 = pneg %p53
      %s343 = smul.u32 %s22, 2
      %s344 = ssub.s32 %s343, 1
      %p345 = scmp.gt.s32.totalorder %s344, 0
      %s346 = scalar_select %p345, %s344, 0
      %s347 = smul.u32 2, %s346
      %p348 = scmp.lt.s32.totalorder %s21, 1
      %s349 = scalar_select %p348, %s21, 1
      %p350 = scmp.lt.s32.totalorder %s347, 3
      %s351 = scalar_select %p350, %s347, 3
      %s352 = smul.addr %s349, 4
      %s353 = sadd.s32 %s351, %s352
      %s354 = smul.addr %s353, 4
      %s355 = scalar_lea.vmem %s1, %s354
      %p356 = pneg %p92
      %p357 = pneg %p89
      %s358 = sadd.s32 %s22, 1
      %s359 = smul.u32 %s358, 2
      %p360 = scmp.lt.s32.totalorder %s359, 1
      %s361 = scalar_select %p360, %s359, 1
      %s362 = smul.u32 2, %s361
      %p363 = scmp.lt.s32.totalorder %s21, 1
      %s364 = scalar_select %p363, %s21, 1
      %p365 = scmp.lt.s32.totalorder %s362, 3
      %s366 = scalar_select %p365, %s362, 3
      %s367 = smul.addr %s364, 4
      %s368 = sadd.s32 %s366, %s367
      %s369 = smul.addr %s368, 4
      %s370 = scalar_lea.vmem %s2, %s369
      %p371 = pneg %p128
      %p372 = pneg %p125
      %p373 = pneg %p149
      %p374 = pneg %p146
      %p375 = pneg %p170
      %p376 = pneg %p167
      %s377 = smul.u32 4, %s22
      %p378 = scmp.lt.s32.totalorder %s21, 1
      %s379 = scalar_select %p378, %s21, 1
      %p380 = scmp.lt.s32.totalorder %s377, 3
      %s381 = scalar_select %p380, %s377, 3
      %s382 = smul.addr %s379, 4
      %s383 = sadd.s32 %s381, %s382
      %s384 = smul.addr %s383, 4
      %s385 = scalar_lea.vmem %s5, %s384
      %p386 = pneg %p198
      %p387 = pneg %p195
      %p388 = pneg %p226
      %p389 = pneg %p223
      %s390 = smul.u32 4, %s22
      %p391 = scmp.lt.s32.totalorder %s21, 1
      %s392 = scalar_select %p391, %s21, 1
      %p393 = scmp.lt.s32.totalorder %s390, 3
      %s394 = scalar_select %p393, %s390, 3
      %s395 = smul.addr %s392, 4
      %s396 = sadd.s32 %s394, %s395
      %s397 = smul.addr %s396, 4
      %s398 = scalar_lea.vmem %s6, %s397
      %p399 = scmp.lt.s32.totalorder %s22, 0
      %s400 = scalar_select %p399, %s22, 0
      %s401 = smul.u32 4, %s400
      %p402 = scmp.lt.s32.totalorder %s21, 1
      %s403 = scalar_select %p402, %s21, 1
      %p404 = scmp.lt.s32.totalorder %s401, 3
      %s405 = scalar_select %p404, %s401, 3
      %s406 = smul.addr %s403, 4
      %s407 = sadd.s32 %s405, %s406
      %s408 = smul.addr %s407, 4
      %s409 = scalar_lea.vmem %s0, %s408
      %p410 = scmp.lt.s32.totalorder %s22, 0
      %s411 = scalar_select %p410, %s22, 0
      %s412 = smul.u32 4, %s411
      %s413 = smul.u32 %s22, 2
      %s414 = ssub.s32 %s413, 1
      %p415 = scmp.gt.s32.totalorder %s414, 0
      %s416 = scalar_select %p415, %s414, 0
      %s417 = smul.u32 2, %s416
      %p418 = scmp.lt.s32.totalorder %s21, 1
      %s419 = scalar_select %p418, %s21, 1
      %p420 = scmp.lt.s32.totalorder %s417, 3
      %s421 = scalar_select %p420, %s417, 3
      %s422 = smul.addr %s419, 4
      %s423 = sadd.s32 %s421, %s422
      %s424 = smul.addr %s423, 4
      %s425 = scalar_lea.vmem %s1, %s424
      %s426 = smul.u32 %s22, 2
      %s427 = ssub.s32 %s426, 1
      %p428 = scmp.gt.s32.totalorder %s427, 0
      %s429 = scalar_select %p428, %s427, 0
      %s430 = smul.u32 2, %s429
      %s431 = sadd.s32 %s22, 1
      %s432 = smul.u32 %s431, 2
      %p433 = scmp.lt.s32.totalorder %s432, 1
      %s434 = scalar_select %p433, %s432, 1
      %s435 = smul.u32 2, %s434
      %p436 = scmp.lt.s32.totalorder %s21, 1
      %s437 = scalar_select %p436, %s21, 1
      %p438 = scmp.lt.s32.totalorder %s435, 3
      %s439 = scalar_select %p438, %s435, 3
      %s440 = smul.addr %s437, 4
      %s441 = sadd.s32 %s439, %s440
      %s442 = smul.addr %s441, 4
      %s443 = scalar_lea.vmem %s2, %s442
      %s444 = sadd.s32 %s22, 1
      %s445 = smul.u32 %s444, 2
      %p446 = scmp.lt.s32.totalorder %s445, 1
      %s447 = scalar_select %p446, %s445, 1
      %s448 = smul.u32 2, %s447
      %s449 = smul.u32 4, %s22
      %p450 = scmp.lt.s32.totalorder %s21, 1
      %s451 = scalar_select %p450, %s21, 1
      %p452 = scmp.lt.s32.totalorder %s449, 3
      %s453 = scalar_select %p452, %s449, 3
      %s454 = smul.addr %s451, 4
      %s455 = sadd.s32 %s453, %s454
      %s456 = smul.addr %s455, 4
      %s457 = scalar_lea.vmem %s5, %s456
      %s458 = smul.u32 4, %s22
      %s459 = smul.u32 4, %s22
      %p460 = scmp.lt.s32.totalorder %s21, 1
      %s461 = scalar_select %p460, %s21, 1
      %p462 = scmp.lt.s32.totalorder %s459, 3
      %s463 = scalar_select %p462, %s459, 3
      %s464 = smul.addr %s461, 4
      %s465 = sadd.s32 %s463, %s464
      %s466 = smul.addr %s465, 4
      %s467 = scalar_lea.vmem %s6, %s466
      %s468 = smul.u32 4, %s22
      %s470 = smul.u32 %s22, 32
      %v471 = vld [vmem:[%s425] sm:$0xf]
      %v472 = vld [vmem:[%s425 + $0x4] sm:$0xf]
      %s473 = ssub.s32 %s470, 16
      %v474 = vlaneseq
      %v475 = vshrl.u32 %v474, 7
      %v476 = vadd.s32 %v475, 8
      %v477 = vstv %s473
      %v478 = vadd.s32 %v477, %v475
      %v479 = vadd.s32 %v477, %v476
      %vm480 = vcmp.ge.s32.totalorder %v478, 0
      %vm481 = vcmp.ge.s32.totalorder %v479, 0
      %vm482 = vcmp.lt.s32.totalorder %v478, 32
      %vm483 = vcmp.lt.s32.totalorder %v479, 32
      %vm484 = vmand %vm480, %vm482
      %vm485 = vmand %vm481, %vm483
      %v486 = vsel %vm484, 1, 0
      %v487 = vsel %vm485, 1, 0
      %vm488 = vcmp.eq.s32.totalorder %v486, 1
      %vm489 = vcmp.eq.s32.totalorder %v487, 1
      %vm490 = vmpackc.low %vm488, %vm488
      %vm491 = vmpackc.low %vm489, %vm489
      %v492 = vsel %vm490, %v471, 0
      %v493 = vsel %vm491, %v472, 0
      %v494 = vunpack.c.l.bf16 %v492
      %v495 = vunpack.c.l.bf16 %v493
      %vm496 = vcmp.ge.f32.partialorder %v494, 0.0
      %vm497 = vcmp.ge.f32.partialorder %v495, 0.0
      %v498 = vmul.f32 %v494, 0.1
      %v499 = vmul.f32 %v495, 0.1
      %v500 = vsel %vm496, %v494, %v498
      %v501 = vsel %vm497, %v495, %v499
      %v502 = vpack.c.bf16 %v500, %v500
      %v503 = vpack.c.bf16 %v501, %v501
      %v504 = vld [vmem:[%s409] sm:$0xf]
      %v505 = vld [vmem:[%s409 + $0x4] sm:$0xf]
      %v506 = vld [vmem:[%s409 + $0x8] sm:$0xf]
      %v507 = vld [vmem:[%s409 + $0xc] sm:$0xf]
      %v508 = vadd.s32 %v475, 16
      %v509 = vadd.s32 %v475, 24
      %v510 = vstv %s470
      %v511 = vadd.s32 %v510, %v475
      %v512 = vadd.s32 %v510, %v476
      %v513 = vadd.s32 %v510, %v508
      %v514 = vadd.s32 %v510, %v509
      %vm515 = vcmp.ge.s32.totalorder %v511, 0
      %vm516 = vcmp.ge.s32.totalorder %v512, 0
      %vm517 = vcmp.ge.s32.totalorder %v513, 0
      %vm518 = vcmp.ge.s32.totalorder %v514, 0
      %vm519 = vcmp.lt.s32.totalorder %v511, 32
      %vm520 = vcmp.lt.s32.totalorder %v512, 32
      %vm521 = vcmp.lt.s32.totalorder %v513, 32
      %vm522 = vcmp.lt.s32.totalorder %v514, 32
      %vm523 = vmand %vm515, %vm519
      %vm524 = vmand %vm516, %vm520
      %vm525 = vmand %vm517, %vm521
      %vm526 = vmand %vm518, %vm522
      %v527 = vsel %vm523, 1, 0
      %v528 = vsel %vm524, 1, 0
      %v529 = vsel %vm525, 1, 0
      %v530 = vsel %vm526, 1, 0
      %vm531 = vcmp.eq.s32.totalorder %v527, 1
      %vm532 = vcmp.eq.s32.totalorder %v528, 1
      %vm533 = vcmp.eq.s32.totalorder %v529, 1
      %vm534 = vcmp.eq.s32.totalorder %v530, 1
      %vm535 = vmpackc.low %vm531, %vm531
      %vm536 = vmpackc.low %vm532, %vm532
      %vm537 = vmpackc.low %vm533, %vm533
      %vm538 = vmpackc.low %vm534, %vm534
      %v539 = vsel %vm535, %v504, 0
      %v540 = vsel %vm536, %v505, 0
      %v541 = vsel %vm537, %v506, 0
      %v542 = vsel %vm538, %v507, 0
      %v543 = vunpack.c.l.bf16 %v539
      %v544 = vunpack.c.l.bf16 %v540
      %v545 = vunpack.c.l.bf16 %v541
      %v546 = vunpack.c.l.bf16 %v542
      %vm547 = vcmp.ge.f32.partialorder %v543, 0.0
      %vm548 = vcmp.ge.f32.partialorder %v544, 0.0
      %vm549 = vcmp.ge.f32.partialorder %v545, 0.0
      %vm550 = vcmp.ge.f32.partialorder %v546, 0.0
      %v551 = vmul.f32 %v543, 0.1
      %v552 = vmul.f32 %v544, 0.1
      %v553 = vmul.f32 %v545, 0.1
      %v554 = vmul.f32 %v546, 0.1
      %v555 = vsel %vm547, %v543, %v551
      %v556 = vsel %vm548, %v544, %v552
      %v557 = vsel %vm549, %v545, %v553
      %v558 = vsel %vm550, %v546, %v554
      %v559 = vpack.c.bf16 %v555, %v555
      %v560 = vpack.c.bf16 %v556, %v556
      %v561 = vpack.c.bf16 %v557, %v557
      %v562 = vpack.c.bf16 %v558, %v558
      %v563 = vld [vmem:[%s443] sm:$0xf]
      %v564 = vld [vmem:[%s443 + $0x4] sm:$0xf]
      %s565 = sadd.s32 %s470, 32
      %v566 = vstv %s565
      %v567 = vadd.s32 %v566, %v475
      %v568 = vadd.s32 %v566, %v476
      %vm569 = vcmp.ge.s32.totalorder %v567, 0
      %vm570 = vcmp.ge.s32.totalorder %v568, 0
      %vm571 = vcmp.lt.s32.totalorder %v567, 32
      %vm572 = vcmp.lt.s32.totalorder %v568, 32
      %vm573 = vmand %vm569, %vm571
      %vm574 = vmand %vm570, %vm572
      %v575 = vsel %vm573, 1, 0
      %v576 = vsel %vm574, 1, 0
      %vm577 = vcmp.eq.s32.totalorder %v575, 1
      %vm578 = vcmp.eq.s32.totalorder %v576, 1
      %vm579 = vmpackc.low %vm577, %vm577
      %vm580 = vmpackc.low %vm578, %vm578
      %v581 = vsel %vm579, %v563, 0
      %v582 = vsel %vm580, %v564, 0
      %v583 = vunpack.c.l.bf16 %v581
      %v584 = vunpack.c.l.bf16 %v582
      %vm585 = vcmp.ge.f32.partialorder %v583, 0.0
      %vm586 = vcmp.ge.f32.partialorder %v584, 0.0
      %v587 = vmul.f32 %v583, 0.1
      %v588 = vmul.f32 %v584, 0.1
      %v589 = vsel %vm585, %v583, %v587
      %v590 = vsel %vm586, %v584, %v588
      %v591 = vpack.c.bf16 %v589, %v589
      %v592 = vpack.c.bf16 %v590, %v590
      %v595 = vunpack.c.l.b16 %v502
      %v596 = vunpack.c.l.b16 %v503
      %v597 = vpack.c.b16 %v596, %v595
      %v602 = vunpack.c.l.b16 %v559
      %v603 = vunpack.c.l.b16 %v560
      %v604 = vunpack.c.l.b16 %v561
      %v605 = vunpack.c.l.b16 %v562
      %v606 = vpack.c.b16 %v603, %v602
      %v607 = vpack.c.b16 %v605, %v604
      %v610 = vunpack.c.l.b16 %v591
      %v611 = vunpack.c.l.b16 %v592
      %v612 = vpack.c.b16 %v611, %v610
      %vm613 = vsmask.f32 7424
      %v615 = vshll.u32 %v606, 16
      %v617 = vrot.slane %v615, 1
      %v618 = vshrl.u32 %v606, 16
      %v620 = vor.u32 %v618, %v617
      %v622 = vshll.u32 %v607, 16
      %v624 = vrot.slane %v622, 1
      %v625 = vsel %vm613, %v620, %v624
      %v626 = vshrl.u32 %v607, 16
      %v628 = vor.u32 %v626, %v624
      %629 = vrot.lane.b32.xlu0 %v617, 16
      %v630 = vpop.permute.xlu0 %629
      %631 = vrot.lane.b32.xlu0 %v625, 16
      %v632 = vpop.permute.xlu0 %631
      %633 = vrot.lane.b32.xlu0 %v628, 16
      %v634 = vpop.permute.xlu0 %633
      %vm635 = vcmask 1046528
      %v636 = vrot.slane %v606, 1
      %v637 = vrot.slane %v607, 1
      %v638 = vsel %vm635, %v636, %v637
      %v639 = vrot.slane %v612, 1
      %v640 = vsel %vm635, %v637, %v639
      %641 = vrot.lane.b32.xlu0 %v636, 32
      %v642 = vpop.permute.xlu0 %641
      %643 = vrot.lane.b32.xlu0 %v638, 32
      %v644 = vpop.permute.xlu0 %643
      %645 = vrot.lane.b32.xlu0 %v640, 32
      %v646 = vpop.permute.xlu0 %645
      %vm647 = vcmask 130048
      %v650 = vsel %vm647, %v597, %v630
      %v652 = vsel %vm647, %v606, %v632
      %v654 = vsel %vm647, %v607, %v634
      %vm655 = vcmask 261120
      %v657 = vsel %vm655, %v650, %v642
      %v659 = vsel %vm655, %v652, %v644
      %v661 = vsel %vm655, %v654, %v646
      %v662 = vld [vmem:[%s3] sm:$0xf]
      %v663 = vld [vmem:[%s3 + $0x4] sm:$0xf]
      %v664 = vld [vmem:[%s3 + $0x8] sm:$0xf]
      %v665 = vld [vmem:[%s3 + $0xc] sm:$0xf]
      %v666 = vld [vmem:[%s3 + $0x10] sm:$0xf]
      %v667 = vld [vmem:[%s3 + $0x14] sm:$0xf]
      %v668 = vld [vmem:[%s4] sm:$0x1]
      %v670 = vperm.slane %v668, 0
      %vm672 = vsmask.f32 256
      %v673 = vshrl.u32 %v657, 16
      %v675 = vrot.slane %v673, 7
      %v676 = vshrl.u32 %v659, 16
      %v678 = vrot.slane %v676, 7
      %v679 = vshll.u32 %v659, 16
      %v681 = vor.u32 %v678, %v679
      %v682 = vsel %vm672, %v675, %v681
      %v683 = vshrl.u32 %v661, 16
      %v685 = vrot.slane %v683, 7
      %v686 = vshll.u32 %v661, 16
      %v688 = vor.u32 %v685, %v686
      %v689 = vsel %vm672, %v678, %v688
      %v696 = vunpack.c.l.b16 %v662
      %v697 = vunpack.c.l.b16 %v663
      %v698 = vunpack.c.l.b16 %v664
      %v699 = vunpack.c.l.b16 %v665
      %v700 = vunpack.c.l.b16 %v666
      %v701 = vunpack.c.l.b16 %v667
      %v702 = vpack.c.b16 %v697, %v696
      %v703 = vpack.c.b16 %v699, %v698
      %v704 = vpack.c.b16 %v701, %v700
      %vm708 = vcmask 392192
      %v710 = vsel %vm708, %v682, 0
      %v713 = vsel %vm708, %v689, 0
      %715 = vmatpush.bf16.msra.mxu0 0
      %716 = vmatpush.bf16.msra.mxu0 0
      %717 = vmatpush.bf16.msra.mxu0 0
      %718 = vmatpush.bf16.msra.mxu0 0
      %719 = vmatpush.bf16.msra.mxu0 0
      %720 = vmatpush.bf16.msra.mxu0 %v704
      %721 = vmatpush.bf16.msra.mxu0 %v703
      %722 = vmatpush.bf16.msra.mxu0 %v702
      %723 = vmatmul.bf16.gmra.mxu0 %v710
      %v724 = vpop.f32.mrf.mxu0
      %v725 = vadd.f32 %v670, %v724
      %v726 = vpop.f32.mrf.mxu0
      %v727 = vadd.f32 %v670, %v726
      %728 = vmatmul.bf16.gmra.mxu0 %v713
      %v729 = vpop.f32.mrf.mxu0
      %v730 = vadd.f32 %v670, %v729
      %v731 = vpop.f32.mrf.mxu0
      %v732 = vadd.f32 %v670, %v731
      %733 = vdwg.mxu0
      %v734 = vld [vmem:[%s457] sm:$0xf]
      %v735 = vld [vmem:[%s457 + $0x4] sm:$0xf]
      %v736 = vld [vmem:[%s457 + $0x8] sm:$0xf]
      %v737 = vld [vmem:[%s457 + $0xc] sm:$0xf]
      %v738 = vunpack.c.l.bf16 %v734
      %v739 = vunpack.c.l.bf16 %v735
      %v740 = vunpack.c.l.bf16 %v736
      %v741 = vunpack.c.l.bf16 %v737
      %v742 = vadd.f32 %v725, %v738
      %v743 = vadd.f32 %v727, %v739
      %v744 = vadd.f32 %v730, %v740
      %v745 = vadd.f32 %v732, %v741
      %v746 = vpack.c.bf16 %v742, %v742
      %v747 = vpack.c.bf16 %v743, %v743
      %v748 = vpack.c.bf16 %v744, %v744
      %v749 = vpack.c.bf16 %v745, %v745
      %vm750 = vcmask 125952
      %751 = vst.msk [vmem:[%s467] sm:$0xf] %vm750, %v746
      %752 = vst.msk [vmem:[%s467 + $0x4] sm:$0xf] %vm750, %v747
      %753 = vst.msk [vmem:[%s467 + $0x8] sm:$0xf] %vm750, %v748
      %754 = vst.msk [vmem:[%s467 + $0xc] sm:$0xf] %vm750, %v749
      %s755 = smul.u32 4, %s22
      %p756 = scmp.lt.s32.totalorder %s21, 1
      %s757 = scalar_select %p756, %s21, 1
      %p758 = scmp.lt.s32.totalorder %s755, 3
      %s759 = scalar_select %p758, %s755, 3
      %s760 = smul.addr %s757, 4
      %s761 = sadd.s32 %s759, %s760
      %s762 = smul.addr %s761, 4
      %s763 = scalar_lea.vmem %s6, %s762
      // Predicated region
      $region45: #{hifigan_forward.10} parent=43 // pred_check
        %p764 = pneg %p223
      $region46: #{hifigan_forward.10} parent=43 // pred_check_branch
        %766 = sbr.rel (%p764) target = $region48
      $region47: #{hifigan_forward.10} parent=43 // pred_region
        %s767 = smul.u32 4, %s22
      $region48: #{hifigan_forward.10} parent=43 // pred_fallthru
        _
    $region44: #{hifigan_forward.10} parent=5 // pred_fallthru
      _
    %p768 = scmp.le.s32.totalorder 2, %s12
    // Predicated region
    $region49: #{hifigan_forward.10} parent=5 // pred_check
      %p769 = pneg %p768
    $region50: #{hifigan_forward.10} parent=5 // pred_check_branch
      %771 = sbr.rel (%p769) target = $region52
    $region51: #{hifigan_forward.10} parent=5 // pred_region
      %s772 = ssub.s32 %s12, 2
      // Predicated region
      $region53: #{hifigan_forward.10} parent=51 // pred_check
        %p773 = pneg %p229
      $region54: #{hifigan_forward.10} parent=51 // pred_check_branch
        %775 = sbr.rel (%p773) target = $region56
      $region55: #{hifigan_forward.10} parent=51 // pred_region
        %s776 = smul.u32 4, %s24
        %p777 = scmp.lt.s32.totalorder %s23, 1
        %s778 = scalar_select %p777, %s23, 1
        %p779 = scmp.lt.s32.totalorder %s776, 3
        %s780 = scalar_select %p779, %s776, 3
        %s781 = smul.addr %s778, 4
        %s782 = sadd.s32 %s780, %s781
        %s783 = smul.addr %s782, 4
        %s784 = scalar_lea.vmem %s6, %s783
      $region56: #{hifigan_forward.10} parent=51 // pred_fallthru
        _
    $region52: #{hifigan_forward.10} parent=5 // pred_fallthru
      _
  $region6: #{hifigan_forward.10} parent=0 // loop_footer
    %s16 = sadd.s32 1, %s12
  $region7: #{hifigan_forward.10} parent=0 // loop_footer_branch
    %11 = sbr.rel target = $region3
  $region8: #{hifigan_forward.10} parent=0 // loop_exit
    _

// kernel: hifigan_forward.11
$region0: #{hifigan_forward.11}
  #allocation0 [shape = 'u32[]', space=smem, size = 0x4, offset = 0x4, fixed_abs, tag = 'smem constant byte address 0x4 - core index']
  #allocation1 [shape = 'u32[72,128]{1,0:T(1,128)}', space=vmem, size = 0x9000, scoped, tag = 'internal scratch']
  %s0 = inlined_call_operand.vmem [shape: bf16[2,32,16], index: 0, kind: input, shape index: {}, may-alias: {0,1,2,5}]
  %s1 = inlined_call_operand.vmem [shape: bf16[2,32,16], index: 1, kind: input, shape index: {}, may-alias: {0,1,2,5}]
  %s2 = inlined_call_operand.vmem [shape: bf16[2,32,16], index: 2, kind: input, shape index: {}, may-alias: {0,1,2,5}]
  %s3 = inlined_call_operand.vmem [shape: bf16[48,16], index: 3, kind: input, shape index: {}]
  %s4 = inlined_call_operand.vmem [shape: f32[1,16], index: 4, kind: input, shape index: {}]
  %s5 = inlined_call_operand.vmem [shape: bf16[2,32,16], index: 5, kind: input, shape index: {}, may-alias: {0,1,2,5}]
  %s6 = inlined_call_operand.vmem [shape: bf16[2,32,16], index: 6, kind: output, shape index: {}]
  %s7 = sld [smem:[#allocation0]]
  $region57: #{hifigan_forward.11} parent=0
    _
  %s9 = ssub.s32 1, %s7
  %s10 = scalar_select 0, %s9, %s7
  loop: start=0, step=1, limit=4
  $region2: #{hifigan_forward.11} parent=0 // loop_pre_header
    _
  $region3: #{hifigan_forward.11} parent=0 // loop_header
    %s12 = sphi 0, %s16
    %p13 = scmp.ge.s32.totalorder %s12, 4
    %s19 = sphi 0, %s31
    %s20 = sphi 0, %s27
    %s21 = sphi 0, %s19
    %s22 = sphi 0, %s20
    %s23 = sphi 0, %s21
    %s24 = sphi 0, %s22
    %s40 = sphi 0, %s42
    %s43 = sphi 0, %s40
    %s44 = sphi 0, %s43
    %s60 = sphi 0, %s44
    %s76 = sphi 0, %s78
    %s79 = sphi 0, %s76
    %s80 = sphi 0, %s79
    %s96 = sphi 0, %s80
    %s112 = sphi 0, %s114
    %s115 = sphi 0, %s112
    %s116 = sphi 0, %s115
    %s132 = sphi 0, %s116
    %s136 = sphi 0, %s136
    %s138 = sphi 0, %s136
    %s139 = sphi 0, %s138
    %s153 = sphi 0, %s139
    %s157 = sphi 0, %s157
    %s159 = sphi 0, %s157
    %s160 = sphi 0, %s159
    %s174 = sphi 0, %s160
    %s182 = sphi 0, %s184
    %s185 = sphi 0, %s182
    %s186 = sphi 0, %s185
    %s202 = sphi 0, %s186
    %s210 = sphi 0, %s212
    %s213 = sphi 0, %s210
    %s214 = sphi 0, %s213
    %s230 = sphi 0, %s214
  $region4: #{hifigan_forward.11} parent=0 // loop_header_branch
    %15 = sbr.rel (%p13) target = $region8
  $region5: #{hifigan_forward.11} parent=0 // loop_body
    %s17 = ssub.s32 %s12, 1
    %s18 = ssub.s32 %s12, 2
    %s25 = sadd.s32 1, %s20
    %p26 = scmp.ge.s32.totalorder %s25, 1
    %s27 = scalar_select %p26, 0, %s25
    %s28 = sadd.s32 1, %s19
    %s29 = scalar_select %p26, %s28, %s19
    %p30 = scmp.ge.s32.totalorder %s29, 2
    %s31 = scalar_select %p30, 0, %s29
    %p32 = scmp.lt.s32.totalorder %s20, 0
    %s33 = scalar_select %p32, %s20, 0
    %p34 = scmp.lt.s32.totalorder %s27, 0
    %s35 = scalar_select %p34, %s27, 0
    %s36 = ssub.s32 %s19, %s31
    %s37 = ssub.s32 %s33, %s35
    %s38 = sor.u32 %s36, %s37
    %p39 = scmp.eq.s32.totalorder %s38, 0
    %s41 = sadd.s32 %s40, 1
    %s42 = scalar_select %p39, %s40, %s41
    %p45 = pneg %p39
    %p46 = scmp.eq.s32.totalorder %s12, 1
    %p47 = por %p45, %p46
    %p48 = scmp.ne.s32.totalorder %s40, %s43
    %p49 = scmp.eq.s32.totalorder %s12, 0
    %p50 = por %p48, %p49
    %p51 = scmp.ne.s32.totalorder %s40, %s43
    %p52 = scmp.eq.s32.totalorder %s17, 1
    %p53 = por %p51, %p52
    %p54 = scmp.ne.s32.totalorder %s43, %s44
    %p55 = scmp.eq.s32.totalorder %s17, 0
    %p56 = por %p54, %p55
    %p57 = scmp.ne.s32.totalorder %s43, %s44
    %p58 = scmp.eq.s32.totalorder %s18, 1
    %p59 = por %p57, %p58
    %p61 = scmp.ne.s32.totalorder %s44, %s60
    %p62 = scmp.eq.s32.totalorder %s18, 0
    %p63 = por %p61, %p62
    %s64 = smul.u32 %s20, 2
    %s65 = ssub.s32 %s64, 1
    %p66 = scmp.gt.s32.totalorder %s65, 0
    %s67 = scalar_select %p66, %s65, 0
    %s68 = smul.u32 %s27, 2
    %s69 = ssub.s32 %s68, 1
    %p70 = scmp.gt.s32.totalorder %s69, 0
    %s71 = scalar_select %p70, %s69, 0
    %s72 = ssub.s32 %s19, %s31
    %s73 = ssub.s32 %s67, %s71
    %s74 = sor.u32 %s72, %s73
    %p75 = scmp.eq.s32.totalorder %s74, 0
    %s77 = sadd.s32 %s76, 1
    %s78 = scalar_select %p75, %s76, %s77
    %p81 = pneg %p75
    %p82 = scmp.eq.s32.totalorder %s12, 1
    %p83 = por %p81, %p82
    %p84 = scmp.ne.s32.totalorder %s76, %s79
    %p85 = scmp.eq.s32.totalorder %s12, 0
    %p86 = por %p84, %p85
    %p87 = scmp.ne.s32.totalorder %s76, %s79
    %p88 = scmp.eq.s32.totalorder %s17, 1
    %p89 = por %p87, %p88
    %p90 = scmp.ne.s32.totalorder %s79, %s80
    %p91 = scmp.eq.s32.totalorder %s17, 0
    %p92 = por %p90, %p91
    %p93 = scmp.ne.s32.totalorder %s79, %s80
    %p94 = scmp.eq.s32.totalorder %s18, 1
    %p95 = por %p93, %p94
    %p97 = scmp.ne.s32.totalorder %s80, %s96
    %p98 = scmp.eq.s32.totalorder %s18, 0
    %p99 = por %p97, %p98
    %s100 = sadd.s32 %s20, 1
    %s101 = smul.u32 %s100, 2
    %p102 = scmp.lt.s32.totalorder %s101, 1
    %s103 = scalar_select %p102, %s101, 1
    %s104 = sadd.s32 %s27, 1
    %s105 = smul.u32 %s104, 2
    %p106 = scmp.lt.s32.totalorder %s105, 1
    %s107 = scalar_select %p106, %s105, 1
    %s108 = ssub.s32 %s19, %s31
    %s109 = ssub.s32 %s103, %s107
    %s110 = sor.u32 %s108, %s109
    %p111 = scmp.eq.s32.totalorder %s110, 0
    %s113 = sadd.s32 %s112, 1
    %s114 = scalar_select %p111, %s112, %s113
    %p117 = pneg %p111
    %p118 = scmp.eq.s32.totalorder %s12, 1
    %p119 = por %p117, %p118
    %p120 = scmp.ne.s32.totalorder %s112, %s115
    %p121 = scmp.eq.s32.totalorder %s12, 0
    %p122 = por %p120, %p121
    %p123 = scmp.ne.s32.totalorder %s112, %s115
    %p124 = scmp.eq.s32.totalorder %s17, 1
    %p125 = por %p123, %p124
    %p126 = scmp.ne.s32.totalorder %s115, %s116
    %p127 = scmp.eq.s32.totalorder %s17, 0
    %p128 = por %p126, %p127
    %p129 = scmp.ne.s32.totalorder %s115, %s116
    %p130 = scmp.eq.s32.totalorder %s18, 1
    %p131 = por %p129, %p130
    %p133 = scmp.ne.s32.totalorder %s116, %s132
    %p134 = scmp.eq.s32.totalorder %s18, 0
    %p135 = por %p133, %p134
    %s137 = sadd.s32 %s136, 1
    %p140 = scmp.eq.s32.totalorder %s12, 1
    %p141 = scmp.ne.s32.totalorder %s136, %s138
    %p142 = scmp.eq.s32.totalorder %s12, 0
    %p143 = por %p141, %p142
    %p144 = scmp.ne.s32.totalorder %s136, %s138
    %p145 = scmp.eq.s32.totalorder %s17, 1
    %p146 = por %p144, %p145
    %p147 = scmp.ne.s32.totalorder %s138, %s139
    %p148 = scmp.eq.s32.totalorder %s17, 0
    %p149 = por %p147, %p148
    %p150 = scmp.ne.s32.totalorder %s138, %s139
    %p151 = scmp.eq.s32.totalorder %s18, 1
    %p152 = por %p150, %p151
    %p154 = scmp.ne.s32.totalorder %s139, %s153
    %p155 = scmp.eq.s32.totalorder %s18, 0
    %p156 = por %p154, %p155
    %s158 = sadd.s32 %s157, 1
    %p161 = scmp.eq.s32.totalorder %s12, 1
    %p162 = scmp.ne.s32.totalorder %s157, %s159
    %p163 = scmp.eq.s32.totalorder %s12, 0
    %p164 = por %p162, %p163
    %p165 = scmp.ne.s32.totalorder %s157, %s159
    %p166 = scmp.eq.s32.totalorder %s17, 1
    %p167 = por %p165, %p166
    %p168 = scmp.ne.s32.totalorder %s159, %s160
    %p169 = scmp.eq.s32.totalorder %s17, 0
    %p170 = por %p168, %p169
    %p171 = scmp.ne.s32.totalorder %s159, %s160
    %p172 = scmp.eq.s32.totalorder %s18, 1
    %p173 = por %p171, %p172
    %p175 = scmp.ne.s32.totalorder %s160, %s174
    %p176 = scmp.eq.s32.totalorder %s18, 0
    %p177 = por %p175, %p176
    %s178 = ssub.s32 %s19, %s31
    %s179 = ssub.s32 %s20, %s27
    %s180 = sor.u32 %s178, %s179
    %p181 = scmp.eq.s32.totalorder %s180, 0
    %s183 = sadd.s32 %s182, 1
    %s184 = scalar_select %p181, %s182, %s183
    %p187 = pneg %p181
    %p188 = scmp.eq.s32.totalorder %s12, 1
    %p189 = por %p187, %p188
    %p190 = scmp.ne.s32.totalorder %s182, %s185
    %p191 = scmp.eq.s32.totalorder %s12, 0
    %p192 = por %p190, %p191
    %p193 = scmp.ne.s32.totalorder %s182, %s185
    %p194 = scmp.eq.s32.totalorder %s17, 1
    %p195 = por %p193, %p194
    %p196 = scmp.ne.s32.totalorder %s185, %s186
    %p197 = scmp.eq.s32.totalorder %s17, 0
    %p198 = por %p196, %p197
    %p199 = scmp.ne.s32.totalorder %s185, %s186
    %p200 = scmp.eq.s32.totalorder %s18, 1
    %p201 = por %p199, %p200
    %p203 = scmp.ne.s32.totalorder %s186, %s202
    %p204 = scmp.eq.s32.totalorder %s18, 0
    %p205 = por %p203, %p204
    %s206 = ssub.s32 %s19, %s31
    %s207 = ssub.s32 %s20, %s27
    %s208 = sor.u32 %s206, %s207
    %p209 = scmp.eq.s32.totalorder %s208, 0
    %s211 = sadd.s32 %s210, 1
    %s212 = scalar_select %p209, %s210, %s211
    %p215 = pneg %p209
    %p216 = scmp.eq.s32.totalorder %s12, 1
    %p217 = por %p215, %p216
    %p218 = scmp.ne.s32.totalorder %s210, %s213
    %p219 = scmp.eq.s32.totalorder %s12, 0
    %p220 = por %p218, %p219
    %p221 = scmp.ne.s32.totalorder %s210, %s213
    %p222 = scmp.eq.s32.totalorder %s17, 1
    %p223 = por %p221, %p222
    %p224 = scmp.ne.s32.totalorder %s213, %s214
    %p225 = scmp.eq.s32.totalorder %s17, 0
    %p226 = por %p224, %p225
    %p227 = scmp.ne.s32.totalorder %s213, %s214
    %p228 = scmp.eq.s32.totalorder %s18, 1
    %p229 = por %p227, %p228
    %p231 = scmp.ne.s32.totalorder %s214, %s230
    %p232 = scmp.eq.s32.totalorder %s18, 0
    %p233 = por %p231, %p232
    %p234 = scmp.le.s32.totalorder 1, %s12
    %p235 = scmp.lt.s32.totalorder %s12, 3
    %p236 = pnand %p234, %p235
    %p237 = pneg %p236
    // Predicated region
    $region9: #{hifigan_forward.11} parent=5 // pred_check
      _
    $region10: #{hifigan_forward.11} parent=5 // pred_check_branch
      %239 = sbr.rel (%p236) target = $region12
    $region11: #{hifigan_forward.11} parent=5 // pred_region
      %s240 = ssub.s32 %s12, 1
      // Predicated region
      $region13: #{hifigan_forward.11} parent=11 // pred_check
        %p241 = pneg %p149
      $region14: #{hifigan_forward.11} parent=11 // pred_check_branch
        %243 = sbr.rel (%p241) target = $region16
      $region15: #{hifigan_forward.11} parent=11 // pred_region
        _
      $region16: #{hifigan_forward.11} parent=11 // pred_fallthru
        _
      // Predicated region
      $region17: #{hifigan_forward.11} parent=11 // pred_check
        %p244 = pneg %p170
      $region18: #{hifigan_forward.11} parent=11 // pred_check_branch
        %246 = sbr.rel (%p244) target = $region20
      $region19: #{hifigan_forward.11} parent=11 // pred_region
        _
      $region20: #{hifigan_forward.11} parent=11 // pred_fallthru
        _
    $region12: #{hifigan_forward.11} parent=5 // pred_fallthru
      _
    %p247 = scmp.lt.s32.totalorder %s12, 2
    // Predicated region
    $region21: #{hifigan_forward.11} parent=5 // pred_check
      %p248 = pneg %p247
    $region22: #{hifigan_forward.11} parent=5 // pred_check_branch
      %250 = sbr.rel (%p248) target = $region24
    $region23: #{hifigan_forward.11} parent=5 // pred_region
      // Predicated region
      $region25: #{hifigan_forward.11} parent=23 // pred_check
        %p251 = pneg %p50
      $region26: #{hifigan_forward.11} parent=23 // pred_check_branch
        %253 = sbr.rel (%p251) target = $region28
      $region27: #{hifigan_forward.11} parent=23 // pred_region
        %p254 = scmp.lt.s32.totalorder %s20, 0
        %s255 = scalar_select %p254, %s20, 0
        %s256 = smul.u32 4, %s255
        %p257 = scmp.lt.s32.totalorder %s19, 1
        %s258 = scalar_select %p257, %s19, 1
        %p259 = scmp.lt.s32.totalorder %s256, 3
        %s260 = scalar_select %p259, %s256, 3
        %s261 = smul.addr %s258, 4
        %s262 = sadd.s32 %s260, %s261
        %s263 = smul.addr %s262, 4
        %s264 = scalar_lea.vmem %s0, %s263
        %p265 = scmp.lt.s32.totalorder %s20, 0
        %s266 = scalar_select %p265, %s20, 0
        %s267 = smul.u32 4, %s266
      $region28: #{hifigan_forward.11} parent=23 // pred_fallthru
        _
      // Predicated region
      $region29: #{hifigan_forward.11} parent=23 // pred_check
        %p268 = pneg %p86
      $region30: #{hifigan_forward.11} parent=23 // pred_check_branch
        %270 = sbr.rel (%p268) target = $region32
      $region31: #{hifigan_forward.11} parent=23 // pred_region
        %s271 = smul.u32 %s20, 2
        %s272 = ssub.s32 %s271, 1
        %p273 = scmp.gt.s32.totalorder %s272, 0
        %s274 = scalar_select %p273, %s272, 0
        %s275 = smul.u32 2, %s274
        %p276 = scmp.lt.s32.totalorder %s19, 1
        %s277 = scalar_select %p276, %s19, 1
        %p278 = scmp.lt.s32.totalorder %s275, 3
        %s279 = scalar_select %p278, %s275, 3
        %s280 = smul.addr %s277, 4
        %s281 = sadd.s32 %s279, %s280
        %s282 = smul.addr %s281, 4
        %s283 = scalar_lea.vmem %s1, %s282
        %s284 = smul.u32 %s20, 2
        %s285 = ssub.s32 %s284, 1
        %p286 = scmp.gt.s32.totalorder %s285, 0
        %s287 = scalar_select %p286, %s285, 0
        %s288 = smul.u32 2, %s287
      $region32: #{hifigan_forward.11} parent=23 // pred_fallthru
        _
      // Predicated region
      $region33: #{hifigan_forward.11} parent=23 // pred_check
        %p289 = pneg %p122
      $region34: #{hifigan_forward.11} parent=23 // pred_check_branch
        %291 = sbr.rel (%p289) target = $region36
      $region35: #{hifigan_forward.11} parent=23 // pred_region
        %s292 = sadd.s32 %s20, 1
        %s293 = smul.u32 %s292, 2
        %p294 = scmp.lt.s32.totalorder %s293, 1
        %s295 = scalar_select %p294, %s293, 1
        %s296 = smul.u32 2, %s295
        %p297 = scmp.lt.s32.totalorder %s19, 1
        %s298 = scalar_select %p297, %s19, 1
        %p299 = scmp.lt.s32.totalorder %s296, 3
        %s300 = scalar_select %p299, %s296, 3
        %s301 = smul.addr %s298, 4
        %s302 = sadd.s32 %s300, %s301
        %s303 = smul.addr %s302, 4
        %s304 = scalar_lea.vmem %s2, %s303
        %s305 = sadd.s32 %s20, 1
        %s306 = smul.u32 %s305, 2
        %p307 = scmp.lt.s32.totalorder %s306, 1
        %s308 = scalar_select %p307, %s306, 1
        %s309 = smul.u32 2, %s308
      $region36: #{hifigan_forward.11} parent=23 // pred_fallthru
        _
      // Predicated region
      $region37: #{hifigan_forward.11} parent=23 // pred_check
        %p310 = pneg %p192
      $region38: #{hifigan_forward.11} parent=23 // pred_check_branch
        %312 = sbr.rel (%p310) target = $region40
      $region39: #{hifigan_forward.11} parent=23 // pred_region
        %s313 = smul.u32 4, %s20
        %p314 = scmp.lt.s32.totalorder %s19, 1
        %s315 = scalar_select %p314, %s19, 1
        %p316 = scmp.lt.s32.totalorder %s313, 3
        %s317 = scalar_select %p316, %s313, 3
        %s318 = smul.addr %s315, 4
        %s319 = sadd.s32 %s317, %s318
        %s320 = smul.addr %s319, 4
        %s321 = scalar_lea.vmem %s5, %s320
        %s322 = smul.u32 4, %s20
      $region40: #{hifigan_forward.11} parent=23 // pred_fallthru
        _
    $region24: #{hifigan_forward.11} parent=5 // pred_fallthru
      _
    %p323 = scmp.le.s32.totalorder 1, %s12
    %p324 = scmp.lt.s32.totalorder %s12, 3
    %p325 = pnand %p323, %p324
    %p326 = pneg %p325
    // Predicated region
    $region41: #{hifigan_forward.11} parent=5 // pred_check
      _
    $region42: #{hifigan_forward.11} parent=5 // pred_check_branch
      %328 = sbr.rel (%p325) target = $region44
    $region43: #{hifigan_forward.11} parent=5 // pred_region
      %s329 = ssub.s32 %s12, 1
      %p330 = scmp.lt.s32.totalorder %s22, 0
      %s331 = scalar_select %p330, %s22, 0
      %s332 = smul.u32 4, %s331
      %p333 = scmp.lt.s32.totalorder %s21, 1
      %s334 = scalar_select %p333, %s21, 1
      %p335 = scmp.lt.s32.totalorder %s332, 3
      %s336 = scalar_select %p335, %s332, 3
      %s337 = smul.addr %s334, 4
      %s338 = sadd.s32 %s336, %s337
      %s339 = smul.addr %s338, 4
      %s340 = scalar_lea.vmem %s0, %s339
      %p341 = pneg %p56
      %p342 = pneg %p53
      %s343 = smul.u32 %s22, 2
      %s344 = ssub.s32 %s343, 1
      %p345 = scmp.gt.s32.totalorder %s344, 0
      %s346 = scalar_select %p345, %s344, 0
      %s347 = smul.u32 2, %s346
      %p348 = scmp.lt.s32.totalorder %s21, 1
      %s349 = scalar_select %p348, %s21, 1
      %p350 = scmp.lt.s32.totalorder %s347, 3
      %s351 = scalar_select %p350, %s347, 3
      %s352 = smul.addr %s349, 4
      %s353 = sadd.s32 %s351, %s352
      %s354 = smul.addr %s353, 4
      %s355 = scalar_lea.vmem %s1, %s354
      %p356 = pneg %p92
      %p357 = pneg %p89
      %s358 = sadd.s32 %s22, 1
      %s359 = smul.u32 %s358, 2
      %p360 = scmp.lt.s32.totalorder %s359, 1
      %s361 = scalar_select %p360, %s359, 1
      %s362 = smul.u32 2, %s361
      %p363 = scmp.lt.s32.totalorder %s21, 1
      %s364 = scalar_select %p363, %s21, 1
      %p365 = scmp.lt.s32.totalorder %s362, 3
      %s366 = scalar_select %p365, %s362, 3
      %s367 = smul.addr %s364, 4
      %s368 = sadd.s32 %s366, %s367
      %s369 = smul.addr %s368, 4
      %s370 = scalar_lea.vmem %s2, %s369
      %p371 = pneg %p128
      %p372 = pneg %p125
      %p373 = pneg %p149
      %p374 = pneg %p146
      %p375 = pneg %p170
      %p376 = pneg %p167
      %s377 = smul.u32 4, %s22
      %p378 = scmp.lt.s32.totalorder %s21, 1
      %s379 = scalar_select %p378, %s21, 1
      %p380 = scmp.lt.s32.totalorder %s377, 3
      %s381 = scalar_select %p380, %s377, 3
      %s382 = smul.addr %s379, 4
      %s383 = sadd.s32 %s381, %s382
      %s384 = smul.addr %s383, 4
      %s385 = scalar_lea.vmem %s5, %s384
      %p386 = pneg %p198
      %p387 = pneg %p195
      %p388 = pneg %p226
      %p389 = pneg %p223
      %s390 = smul.u32 4, %s22
      %p391 = scmp.lt.s32.totalorder %s21, 1
      %s392 = scalar_select %p391, %s21, 1
      %p393 = scmp.lt.s32.totalorder %s390, 3
      %s394 = scalar_select %p393, %s390, 3
      %s395 = smul.addr %s392, 4
      %s396 = sadd.s32 %s394, %s395
      %s397 = smul.addr %s396, 4
      %s398 = scalar_lea.vmem %s6, %s397
      %p399 = scmp.lt.s32.totalorder %s22, 0
      %s400 = scalar_select %p399, %s22, 0
      %s401 = smul.u32 4, %s400
      %p402 = scmp.lt.s32.totalorder %s21, 1
      %s403 = scalar_select %p402, %s21, 1
      %p404 = scmp.lt.s32.totalorder %s401, 3
      %s405 = scalar_select %p404, %s401, 3
      %s406 = smul.addr %s403, 4
      %s407 = sadd.s32 %s405, %s406
      %s408 = smul.addr %s407, 4
      %s409 = scalar_lea.vmem %s0, %s408
      %p410 = scmp.lt.s32.totalorder %s22, 0
      %s411 = scalar_select %p410, %s22, 0
      %s412 = smul.u32 4, %s411
      %s413 = smul.u32 %s22, 2
      %s414 = ssub.s32 %s413, 1
      %p415 = scmp.gt.s32.totalorder %s414, 0
      %s416 = scalar_select %p415, %s414, 0
      %s417 = smul.u32 2, %s416
      %p418 = scmp.lt.s32.totalorder %s21, 1
      %s419 = scalar_select %p418, %s21, 1
      %p420 = scmp.lt.s32.totalorder %s417, 3
      %s421 = scalar_select %p420, %s417, 3
      %s422 = smul.addr %s419, 4
      %s423 = sadd.s32 %s421, %s422
      %s424 = smul.addr %s423, 4
      %s425 = scalar_lea.vmem %s1, %s424
      %s426 = smul.u32 %s22, 2
      %s427 = ssub.s32 %s426, 1
      %p428 = scmp.gt.s32.totalorder %s427, 0
      %s429 = scalar_select %p428, %s427, 0
      %s430 = smul.u32 2, %s429
      %s431 = sadd.s32 %s22, 1
      %s432 = smul.u32 %s431, 2
      %p433 = scmp.lt.s32.totalorder %s432, 1
      %s434 = scalar_select %p433, %s432, 1
      %s435 = smul.u32 2, %s434
      %p436 = scmp.lt.s32.totalorder %s21, 1
      %s437 = scalar_select %p436, %s21, 1
      %p438 = scmp.lt.s32.totalorder %s435, 3
      %s439 = scalar_select %p438, %s435, 3
      %s440 = smul.addr %s437, 4
      %s441 = sadd.s32 %s439, %s440
      %s442 = smul.addr %s441, 4
      %s443 = scalar_lea.vmem %s2, %s442
      %s444 = sadd.s32 %s22, 1
      %s445 = smul.u32 %s444, 2
      %p446 = scmp.lt.s32.totalorder %s445, 1
      %s447 = scalar_select %p446, %s445, 1
      %s448 = smul.u32 2, %s447
      %s449 = smul.u32 4, %s22
      %p450 = scmp.lt.s32.totalorder %s21, 1
      %s451 = scalar_select %p450, %s21, 1
      %p452 = scmp.lt.s32.totalorder %s449, 3
      %s453 = scalar_select %p452, %s449, 3
      %s454 = smul.addr %s451, 4
      %s455 = sadd.s32 %s453, %s454
      %s456 = smul.addr %s455, 4
      %s457 = scalar_lea.vmem %s5, %s456
      %s458 = smul.u32 4, %s22
      %s459 = smul.u32 4, %s22
      %p460 = scmp.lt.s32.totalorder %s21, 1
      %s461 = scalar_select %p460, %s21, 1
      %p462 = scmp.lt.s32.totalorder %s459, 3
      %s463 = scalar_select %p462, %s459, 3
      %s464 = smul.addr %s461, 4
      %s465 = sadd.s32 %s463, %s464
      %s466 = smul.addr %s465, 4
      %s467 = scalar_lea.vmem %s6, %s466
      %s468 = smul.u32 4, %s22
      %s470 = smul.u32 %s22, 32
      %v471 = vld [vmem:[%s425] sm:$0xf]
      %v472 = vld [vmem:[%s425 + $0x4] sm:$0xf]
      %s473 = ssub.s32 %s470, 16
      %v474 = vlaneseq
      %v475 = vshrl.u32 %v474, 7
      %v476 = vadd.s32 %v475, 8
      %v477 = vstv %s473
      %v478 = vadd.s32 %v477, %v475
      %v479 = vadd.s32 %v477, %v476
      %vm480 = vcmp.ge.s32.totalorder %v478, 0
      %vm481 = vcmp.ge.s32.totalorder %v479, 0
      %vm482 = vcmp.lt.s32.totalorder %v478, 32
      %vm483 = vcmp.lt.s32.totalorder %v479, 32
      %vm484 = vmand %vm480, %vm482
      %vm485 = vmand %vm481, %vm483
      %v486 = vsel %vm484, 1, 0
      %v487 = vsel %vm485, 1, 0
      %vm488 = vcmp.eq.s32.totalorder %v486, 1
      %vm489 = vcmp.eq.s32.totalorder %v487, 1
      %vm490 = vmpackc.low %vm488, %vm488
      %vm491 = vmpackc.low %vm489, %vm489
      %v492 = vsel %vm490, %v471, 0
      %v493 = vsel %vm491, %v472, 0
      %v494 = vunpack.c.l.bf16 %v492
      %v495 = vunpack.c.l.bf16 %v493
      %vm496 = vcmp.ge.f32.partialorder %v494, 0.0
      %vm497 = vcmp.ge.f32.partialorder %v495, 0.0
      %v498 = vmul.f32 %v494, 0.1
      %v499 = vmul.f32 %v495, 0.1
      %v500 = vsel %vm496, %v494, %v498
      %v501 = vsel %vm497, %v495, %v499
      %v502 = vpack.c.bf16 %v500, %v500
      %v503 = vpack.c.bf16 %v501, %v501
      %v504 = vld [vmem:[%s409] sm:$0xf]
      %v505 = vld [vmem:[%s409 + $0x4] sm:$0xf]
      %v506 = vld [vmem:[%s409 + $0x8] sm:$0xf]
      %v507 = vld [vmem:[%s409 + $0xc] sm:$0xf]
      %v508 = vadd.s32 %v475, 16
      %v509 = vadd.s32 %v475, 24
      %v510 = vstv %s470
      %v511 = vadd.s32 %v510, %v475
      %v512 = vadd.s32 %v510, %v476
      %v513 = vadd.s32 %v510, %v508
      %v514 = vadd.s32 %v510, %v509
      %vm515 = vcmp.ge.s32.totalorder %v511, 0
      %vm516 = vcmp.ge.s32.totalorder %v512, 0
      %vm517 = vcmp.ge.s32.totalorder %v513, 0
      %vm518 = vcmp.ge.s32.totalorder %v514, 0
      %vm519 = vcmp.lt.s32.totalorder %v511, 32
      %vm520 = vcmp.lt.s32.totalorder %v512, 32
      %vm521 = vcmp.lt.s32.totalorder %v513, 32
      %vm522 = vcmp.lt.s32.totalorder %v514, 32
      %vm523 = vmand %vm515, %vm519
      %vm524 = vmand %vm516, %vm520
      %vm525 = vmand %vm517, %vm521
      %vm526 = vmand %vm518, %vm522
      %v527 = vsel %vm523, 1, 0
      %v528 = vsel %vm524, 1, 0
      %v529 = vsel %vm525, 1, 0
      %v530 = vsel %vm526, 1, 0
      %vm531 = vcmp.eq.s32.totalorder %v527, 1
      %vm532 = vcmp.eq.s32.totalorder %v528, 1
      %vm533 = vcmp.eq.s32.totalorder %v529, 1
      %vm534 = vcmp.eq.s32.totalorder %v530, 1
      %vm535 = vmpackc.low %vm531, %vm531
      %vm536 = vmpackc.low %vm532, %vm532
      %vm537 = vmpackc.low %vm533, %vm533
      %vm538 = vmpackc.low %vm534, %vm534
      %v539 = vsel %vm535, %v504, 0
      %v540 = vsel %vm536, %v505, 0
      %v541 = vsel %vm537, %v506, 0
      %v542 = vsel %vm538, %v507, 0
      %v543 = vunpack.c.l.bf16 %v539
      %v544 = vunpack.c.l.bf16 %v540
      %v545 = vunpack.c.l.bf16 %v541
      %v546 = vunpack.c.l.bf16 %v542
      %vm547 = vcmp.ge.f32.partialorder %v543, 0.0
      %vm548 = vcmp.ge.f32.partialorder %v544, 0.0
      %vm549 = vcmp.ge.f32.partialorder %v545, 0.0
      %vm550 = vcmp.ge.f32.partialorder %v546, 0.0
      %v551 = vmul.f32 %v543, 0.1
      %v552 = vmul.f32 %v544, 0.1
      %v553 = vmul.f32 %v545, 0.1
      %v554 = vmul.f32 %v546, 0.1
      %v555 = vsel %vm547, %v543, %v551
      %v556 = vsel %vm548, %v544, %v552
      %v557 = vsel %vm549, %v545, %v553
      %v558 = vsel %vm550, %v546, %v554
      %v559 = vpack.c.bf16 %v555, %v555
      %v560 = vpack.c.bf16 %v556, %v556
      %v561 = vpack.c.bf16 %v557, %v557
      %v562 = vpack.c.bf16 %v558, %v558
      %v563 = vld [vmem:[%s443] sm:$0xf]
      %v564 = vld [vmem:[%s443 + $0x4] sm:$0xf]
      %s565 = sadd.s32 %s470, 32
      %v566 = vstv %s565
      %v567 = vadd.s32 %v566, %v475
      %v568 = vadd.s32 %v566, %v476
      %vm569 = vcmp.ge.s32.totalorder %v567, 0
      %vm570 = vcmp.ge.s32.totalorder %v568, 0
      %vm571 = vcmp.lt.s32.totalorder %v567, 32
      %vm572 = vcmp.lt.s32.totalorder %v568, 32
      %vm573 = vmand %vm569, %vm571
      %vm574 = vmand %vm570, %vm572
      %v575 = vsel %vm573, 1, 0
      %v576 = vsel %vm574, 1, 0
      %vm577 = vcmp.eq.s32.totalorder %v575, 1
      %vm578 = vcmp.eq.s32.totalorder %v576, 1
      %vm579 = vmpackc.low %vm577, %vm577
      %vm580 = vmpackc.low %vm578, %vm578
      %v581 = vsel %vm579, %v563, 0
      %v582 = vsel %vm580, %v564, 0
      %v583 = vunpack.c.l.bf16 %v581
      %v584 = vunpack.c.l.bf16 %v582
      %vm585 = vcmp.ge.f32.partialorder %v583, 0.0
      %vm586 = vcmp.ge.f32.partialorder %v584, 0.0
      %v587 = vmul.f32 %v583, 0.1
      %v588 = vmul.f32 %v584, 0.1
      %v589 = vsel %vm585, %v583, %v587
      %v590 = vsel %vm586, %v584, %v588
      %v591 = vpack.c.bf16 %v589, %v589
      %v592 = vpack.c.bf16 %v590, %v590
      %v595 = vunpack.c.l.b16 %v502
      %v596 = vunpack.c.l.b16 %v503
      %v597 = vpack.c.b16 %v596, %v595
      %v602 = vunpack.c.l.b16 %v559
      %v603 = vunpack.c.l.b16 %v560
      %v604 = vunpack.c.l.b16 %v561
      %v605 = vunpack.c.l.b16 %v562
      %v606 = vpack.c.b16 %v603, %v602
      %v607 = vpack.c.b16 %v605, %v604
      %v610 = vunpack.c.l.b16 %v591
      %v611 = vunpack.c.l.b16 %v592
      %v612 = vpack.c.b16 %v611, %v610
      %vm613 = vsmask.f32 6400
      %v615 = vshrl.u32 %v606, 16
      %v617 = vrot.slane %v615, 1
      %v618 = vshll.u32 %v606, 16
      %v620 = vrot.slane %v618, 2
      %v621 = vor.u32 %v617, %v620
      %v623 = vshrl.u32 %v607, 16
      %v625 = vrot.slane %v623, 1
      %v626 = vshll.u32 %v607, 16
      %v628 = vrot.slane %v626, 2
      %v629 = vor.u32 %v625, %v628
      %v630 = vsel %vm613, %v621, %v629
      %631 = vrot.lane.b32.xlu0 %v621, 16
      %v632 = vpop.permute.xlu0 %631
      %633 = vrot.lane.b32.xlu0 %v630, 16
      %v634 = vpop.permute.xlu0 %633
      %635 = vrot.lane.b32.xlu0 %v629, 16
      %v636 = vpop.permute.xlu0 %635
      %vm637 = vcmask 1044480
      %v638 = vrot.slane %v606, 3
      %v639 = vrot.slane %v607, 3
      %v640 = vsel %vm637, %v638, %v639
      %v641 = vrot.slane %v612, 3
      %v642 = vsel %vm637, %v639, %v641
      %643 = vrot.lane.b32.xlu0 %v638, 32
      %v644 = vpop.permute.xlu0 %643
      %645 = vrot.lane.b32.xlu0 %v640, 32
      %v646 = vpop.permute.xlu0 %645
      %647 = vrot.lane.b32.xlu0 %v642, 32
      %v648 = vpop.permute.xlu0 %647
      %vm649 = vcmask 130048
      %v652 = vsel %vm649, %v597, %v632
      %v654 = vsel %vm649, %v606, %v634
      %v656 = vsel %vm649, %v607, %v636
      %vm657 = vcmask 261120
      %v659 = vsel %vm657, %v652, %v644
      %v661 = vsel %vm657, %v654, %v646
      %v663 = vsel %vm657, %v656, %v648
      %v664 = vld [vmem:[%s3] sm:$0xf]
      %v665 = vld [vmem:[%s3 + $0x4] sm:$0xf]
      %v666 = vld [vmem:[%s3 + $0x8] sm:$0xf]
      %v667 = vld [vmem:[%s3 + $0xc] sm:$0xf]
      %v668 = vld [vmem:[%s3 + $0x10] sm:$0xf]
      %v669 = vld [vmem:[%s3 + $0x14] sm:$0xf]
      %v670 = vld [vmem:[%s4] sm:$0x1]
      %v672 = vperm.slane %v670, 0
      %vm674 = vsmask.f32 1280
      %v675 = vshrl.u32 %v659, 16
      %v677 = vrot.slane %v675, 6
      %v678 = vshll.u32 %v659, 16
      %v680 = vrot.slane %v678, 7
      %v681 = vor.u32 %v677, %v680
      %v682 = vshrl.u32 %v661, 16
      %v684 = vrot.slane %v682, 6
      %v685 = vshll.u32 %v661, 16
      %v687 = vrot.slane %v685, 7
      %v688 = vor.u32 %v684, %v687
      %v689 = vsel %vm674, %v681, %v688
      %v690 = vshrl.u32 %v663, 16
      %v692 = vrot.slane %v690, 6
      %v693 = vshll.u32 %v663, 16
      %v695 = vrot.slane %v693, 7
      %v696 = vor.u32 %v692, %v695
      %v697 = vsel %vm674, %v688, %v696
      %v704 = vunpack.c.l.b16 %v664
      %v705 = vunpack.c.l.b16 %v665
      %v706 = vunpack.c.l.b16 %v666
      %v707 = vunpack.c.l.b16 %v667
      %v708 = vunpack.c.l.b16 %v668
      %v709 = vunpack.c.l.b16 %v669
      %v710 = vpack.c.b16 %v705, %v704
      %v711 = vpack.c.b16 %v707, %v706
      %v712 = vpack.c.b16 %v709, %v708
      %vm716 = vcmask 392192
      %v718 = vsel %vm716, %v689, 0
      %v721 = vsel %vm716, %v697, 0
      %723 = vmatpush.bf16.msra.mxu0 0
      %724 = vmatpush.bf16.msra.mxu0 0
      %725 = vmatpush.bf16.msra.mxu0 0
      %726 = vmatpush.bf16.msra.mxu0 0
      %727 = vmatpush.bf16.msra.mxu0 0
      %728 = vmatpush.bf16.msra.mxu0 %v712
      %729 = vmatpush.bf16.msra.mxu0 %v711
      %730 = vmatpush.bf16.msra.mxu0 %v710
      %731 = vmatmul.bf16.gmra.mxu0 %v718
      %v732 = vpop.f32.mrf.mxu0
      %v733 = vadd.f32 %v672, %v732
      %v734 = vpop.f32.mrf.mxu0
      %v735 = vadd.f32 %v672, %v734
      %736 = vmatmul.bf16.gmra.mxu0 %v721
      %v737 = vpop.f32.mrf.mxu0
      %v738 = vadd.f32 %v672, %v737
      %v739 = vpop.f32.mrf.mxu0
      %v740 = vadd.f32 %v672, %v739
      %741 = vdwg.mxu0
      %v742 = vld [vmem:[%s457] sm:$0xf]
      %v743 = vld [vmem:[%s457 + $0x4] sm:$0xf]
      %v744 = vld [vmem:[%s457 + $0x8] sm:$0xf]
      %v745 = vld [vmem:[%s457 + $0xc] sm:$0xf]
      %v746 = vunpack.c.l.bf16 %v742
      %v747 = vunpack.c.l.bf16 %v743
      %v748 = vunpack.c.l.bf16 %v744
      %v749 = vunpack.c.l.bf16 %v745
      %v750 = vadd.f32 %v733, %v746
      %v751 = vadd.f32 %v735, %v747
      %v752 = vadd.f32 %v738, %v748
      %v753 = vadd.f32 %v740, %v749
      %v754 = vpack.c.bf16 %v750, %v750
      %v755 = vpack.c.bf16 %v751, %v751
      %v756 = vpack.c.bf16 %v752, %v752
      %v757 = vpack.c.bf16 %v753, %v753
      %vm758 = vcmask 125952
      %759 = vst.msk [vmem:[%s467] sm:$0xf] %vm758, %v754
      %760 = vst.msk [vmem:[%s467 + $0x4] sm:$0xf] %vm758, %v755
      %761 = vst.msk [vmem:[%s467 + $0x8] sm:$0xf] %vm758, %v756
      %762 = vst.msk [vmem:[%s467 + $0xc] sm:$0xf] %vm758, %v757
      %s763 = smul.u32 4, %s22
      %p764 = scmp.lt.s32.totalorder %s21, 1
      %s765 = scalar_select %p764, %s21, 1
      %p766 = scmp.lt.s32.totalorder %s763, 3
      %s767 = scalar_select %p766, %s763, 3
      %s768 = smul.addr %s765, 4
      %s769 = sadd.s32 %s767, %s768
      %s770 = smul.addr %s769, 4
      %s771 = scalar_lea.vmem %s6, %s770
      // Predicated region
      $region45: #{hifigan_forward.11} parent=43 // pred_check
        %p772 = pneg %p223
      $region46: #{hifigan_forward.11} parent=43 // pred_check_branch
        %774 = sbr.rel (%p772) target = $region48
      $region47: #{hifigan_forward.11} parent=43 // pred_region
        %s775 = smul.u32 4, %s22
      $region48: #{hifigan_forward.11} parent=43 // pred_fallthru
        _
    $region44: #{hifigan_forward.11} parent=5 // pred_fallthru
      _
    %p776 = scmp.le.s32.totalorder 2, %s12
    // Predicated region
    $region49: #{hifigan_forward.11} parent=5 // pred_check
      %p777 = pneg %p776
    $region50: #{hifigan_forward.11} parent=5 // pred_check_branch
      %779 = sbr.rel (%p777) target = $region52
    $region51: #{hifigan_forward.11} parent=5 // pred_region
      %s780 = ssub.s32 %s12, 2
      // Predicated region
      $region53: #{hifigan_forward.11} parent=51 // pred_check
        %p781 = pneg %p229
      $region54: #{hifigan_forward.11} parent=51 // pred_check_branch
        %783 = sbr.rel (%p781) target = $region56
      $region55: #{hifigan_forward.11} parent=51 // pred_region
        %s784 = smul.u32 4, %s24
        %p785 = scmp.lt.s32.totalorder %s23, 1
        %s786 = scalar_select %p785, %s23, 1
        %p787 = scmp.lt.s32.totalorder %s784, 3
        %s788 = scalar_select %p787, %s784, 3
        %s789 = smul.addr %s786, 4
        %s790 = sadd.s32 %s788, %s789
        %s791 = smul.addr %s790, 4
        %s792 = scalar_lea.vmem %s6, %s791
      $region56: #{hifigan_forward.11} parent=51 // pred_fallthru
        _
    $region52: #{hifigan_forward.11} parent=5 // pred_fallthru
      _
  $region6: #{hifigan_forward.11} parent=0 // loop_footer
    %s16 = sadd.s32 1, %s12
  $region7: #{hifigan_forward.11} parent=0 // loop_footer_branch
    %11 = sbr.rel target = $region3
  $region8: #{hifigan_forward.11} parent=0 // loop_exit
    _

// kernel: hifigan_forward.12
$region0: #{hifigan_forward.12}
  #allocation0 [shape = 'u32[]', space=smem, size = 0x4, offset = 0x4, fixed_abs, tag = 'smem constant byte address 0x4 - core index']
  #allocation1 [shape = 'u32[72,128]{1,0:T(1,128)}', space=vmem, size = 0x9000, scoped, tag = 'internal scratch']
  %s0 = inlined_call_operand.vmem [shape: bf16[2,32,16], index: 0, kind: input, shape index: {}, may-alias: {0,1,2}]
  %s1 = inlined_call_operand.vmem [shape: bf16[2,32,16], index: 1, kind: input, shape index: {}, may-alias: {0,1,2}]
  %s2 = inlined_call_operand.vmem [shape: bf16[2,32,16], index: 2, kind: input, shape index: {}, may-alias: {0,1,2}]
  %s3 = inlined_call_operand.vmem [shape: bf16[48,16], index: 3, kind: input, shape index: {}]
  %s4 = inlined_call_operand.vmem [shape: f32[1,16], index: 4, kind: input, shape index: {}]
  %s5 = inlined_call_operand.vmem [shape: bf16[2,32,16], index: 5, kind: output, shape index: {}]
  %s6 = sld [smem:[#allocation0]]
  $region53: #{hifigan_forward.12} parent=0
    _
  %s8 = ssub.s32 1, %s6
  %s9 = scalar_select 0, %s8, %s6
  loop: start=0, step=1, limit=4
  $region2: #{hifigan_forward.12} parent=0 // loop_pre_header
    _
  $region3: #{hifigan_forward.12} parent=0 // loop_header
    %s11 = sphi 0, %s15
    %p12 = scmp.ge.s32.totalorder %s11, 4
    %s18 = sphi 0, %s30
    %s19 = sphi 0, %s26
    %s20 = sphi 0, %s18
    %s21 = sphi 0, %s19
    %s22 = sphi 0, %s20
    %s23 = sphi 0, %s21
    %s39 = sphi 0, %s41
    %s42 = sphi 0, %s39
    %s43 = sphi 0, %s42
    %s59 = sphi 0, %s43
    %s75 = sphi 0, %s77
    %s78 = sphi 0, %s75
    %s79 = sphi 0, %s78
    %s95 = sphi 0, %s79
    %s111 = sphi 0, %s113
    %s114 = sphi 0, %s111
    %s115 = sphi 0, %s114
    %s131 = sphi 0, %s115
    %s135 = sphi 0, %s135
    %s137 = sphi 0, %s135
    %s138 = sphi 0, %s137
    %s152 = sphi 0, %s138
    %s156 = sphi 0, %s156
    %s158 = sphi 0, %s156
    %s159 = sphi 0, %s158
    %s173 = sphi 0, %s159
    %s181 = sphi 0, %s183
    %s184 = sphi 0, %s181
    %s185 = sphi 0, %s184
    %s201 = sphi 0, %s185
  $region4: #{hifigan_forward.12} parent=0 // loop_header_branch
    %14 = sbr.rel (%p12) target = $region8
  $region5: #{hifigan_forward.12} parent=0 // loop_body
    %s16 = ssub.s32 %s11, 1
    %s17 = ssub.s32 %s11, 2
    %s24 = sadd.s32 1, %s19
    %p25 = scmp.ge.s32.totalorder %s24, 1
    %s26 = scalar_select %p25, 0, %s24
    %s27 = sadd.s32 1, %s18
    %s28 = scalar_select %p25, %s27, %s18
    %p29 = scmp.ge.s32.totalorder %s28, 2
    %s30 = scalar_select %p29, 0, %s28
    %p31 = scmp.lt.s32.totalorder %s19, 0
    %s32 = scalar_select %p31, %s19, 0
    %p33 = scmp.lt.s32.totalorder %s26, 0
    %s34 = scalar_select %p33, %s26, 0
    %s35 = ssub.s32 %s18, %s30
    %s36 = ssub.s32 %s32, %s34
    %s37 = sor.u32 %s35, %s36
    %p38 = scmp.eq.s32.totalorder %s37, 0
    %s40 = sadd.s32 %s39, 1
    %s41 = scalar_select %p38, %s39, %s40
    %p44 = pneg %p38
    %p45 = scmp.eq.s32.totalorder %s11, 1
    %p46 = por %p44, %p45
    %p47 = scmp.ne.s32.totalorder %s39, %s42
    %p48 = scmp.eq.s32.totalorder %s11, 0
    %p49 = por %p47, %p48
    %p50 = scmp.ne.s32.totalorder %s39, %s42
    %p51 = scmp.eq.s32.totalorder %s16, 1
    %p52 = por %p50, %p51
    %p53 = scmp.ne.s32.totalorder %s42, %s43
    %p54 = scmp.eq.s32.totalorder %s16, 0
    %p55 = por %p53, %p54
    %p56 = scmp.ne.s32.totalorder %s42, %s43
    %p57 = scmp.eq.s32.totalorder %s17, 1
    %p58 = por %p56, %p57
    %p60 = scmp.ne.s32.totalorder %s43, %s59
    %p61 = scmp.eq.s32.totalorder %s17, 0
    %p62 = por %p60, %p61
    %s63 = smul.u32 %s19, 2
    %s64 = ssub.s32 %s63, 1
    %p65 = scmp.gt.s32.totalorder %s64, 0
    %s66 = scalar_select %p65, %s64, 0
    %s67 = smul.u32 %s26, 2
    %s68 = ssub.s32 %s67, 1
    %p69 = scmp.gt.s32.totalorder %s68, 0
    %s70 = scalar_select %p69, %s68, 0
    %s71 = ssub.s32 %s18, %s30
    %s72 = ssub.s32 %s66, %s70
    %s73 = sor.u32 %s71, %s72
    %p74 = scmp.eq.s32.totalorder %s73, 0
    %s76 = sadd.s32 %s75, 1
    %s77 = scalar_select %p74, %s75, %s76
    %p80 = pneg %p74
    %p81 = scmp.eq.s32.totalorder %s11, 1
    %p82 = por %p80, %p81
    %p83 = scmp.ne.s32.totalorder %s75, %s78
    %p84 = scmp.eq.s32.totalorder %s11, 0
    %p85 = por %p83, %p84
    %p86 = scmp.ne.s32.totalorder %s75, %s78
    %p87 = scmp.eq.s32.totalorder %s16, 1
    %p88 = por %p86, %p87
    %p89 = scmp.ne.s32.totalorder %s78, %s79
    %p90 = scmp.eq.s32.totalorder %s16, 0
    %p91 = por %p89, %p90
    %p92 = scmp.ne.s32.totalorder %s78, %s79
    %p93 = scmp.eq.s32.totalorder %s17, 1
    %p94 = por %p92, %p93
    %p96 = scmp.ne.s32.totalorder %s79, %s95
    %p97 = scmp.eq.s32.totalorder %s17, 0
    %p98 = por %p96, %p97
    %s99 = sadd.s32 %s19, 1
    %s100 = smul.u32 %s99, 2
    %p101 = scmp.lt.s32.totalorder %s100, 1
    %s102 = scalar_select %p101, %s100, 1
    %s103 = sadd.s32 %s26, 1
    %s104 = smul.u32 %s103, 2
    %p105 = scmp.lt.s32.totalorder %s104, 1
    %s106 = scalar_select %p105, %s104, 1
    %s107 = ssub.s32 %s18, %s30
    %s108 = ssub.s32 %s102, %s106
    %s109 = sor.u32 %s107, %s108
    %p110 = scmp.eq.s32.totalorder %s109, 0
    %s112 = sadd.s32 %s111, 1
    %s113 = scalar_select %p110, %s111, %s112
    %p116 = pneg %p110
    %p117 = scmp.eq.s32.totalorder %s11, 1
    %p118 = por %p116, %p117
    %p119 = scmp.ne.s32.totalorder %s111, %s114
    %p120 = scmp.eq.s32.totalorder %s11, 0
    %p121 = por %p119, %p120
    %p122 = scmp.ne.s32.totalorder %s111, %s114
    %p123 = scmp.eq.s32.totalorder %s16, 1
    %p124 = por %p122, %p123
    %p125 = scmp.ne.s32.totalorder %s114, %s115
    %p126 = scmp.eq.s32.totalorder %s16, 0
    %p127 = por %p125, %p126
    %p128 = scmp.ne.s32.totalorder %s114, %s115
    %p129 = scmp.eq.s32.totalorder %s17, 1
    %p130 = por %p128, %p129
    %p132 = scmp.ne.s32.totalorder %s115, %s131
    %p133 = scmp.eq.s32.totalorder %s17, 0
    %p134 = por %p132, %p133
    %s136 = sadd.s32 %s135, 1
    %p139 = scmp.eq.s32.totalorder %s11, 1
    %p140 = scmp.ne.s32.totalorder %s135, %s137
    %p141 = scmp.eq.s32.totalorder %s11, 0
    %p142 = por %p140, %p141
    %p143 = scmp.ne.s32.totalorder %s135, %s137
    %p144 = scmp.eq.s32.totalorder %s16, 1
    %p145 = por %p143, %p144
    %p146 = scmp.ne.s32.totalorder %s137, %s138
    %p147 = scmp.eq.s32.totalorder %s16, 0
    %p148 = por %p146, %p147
    %p149 = scmp.ne.s32.totalorder %s137, %s138
    %p150 = scmp.eq.s32.totalorder %s17, 1
    %p151 = por %p149, %p150
    %p153 = scmp.ne.s32.totalorder %s138, %s152
    %p154 = scmp.eq.s32.totalorder %s17, 0
    %p155 = por %p153, %p154
    %s157 = sadd.s32 %s156, 1
    %p160 = scmp.eq.s32.totalorder %s11, 1
    %p161 = scmp.ne.s32.totalorder %s156, %s158
    %p162 = scmp.eq.s32.totalorder %s11, 0
    %p163 = por %p161, %p162
    %p164 = scmp.ne.s32.totalorder %s156, %s158
    %p165 = scmp.eq.s32.totalorder %s16, 1
    %p166 = por %p164, %p165
    %p167 = scmp.ne.s32.totalorder %s158, %s159
    %p168 = scmp.eq.s32.totalorder %s16, 0
    %p169 = por %p167, %p168
    %p170 = scmp.ne.s32.totalorder %s158, %s159
    %p171 = scmp.eq.s32.totalorder %s17, 1
    %p172 = por %p170, %p171
    %p174 = scmp.ne.s32.totalorder %s159, %s173
    %p175 = scmp.eq.s32.totalorder %s17, 0
    %p176 = por %p174, %p175
    %s177 = ssub.s32 %s18, %s30
    %s178 = ssub.s32 %s19, %s26
    %s179 = sor.u32 %s177, %s178
    %p180 = scmp.eq.s32.totalorder %s179, 0
    %s182 = sadd.s32 %s181, 1
    %s183 = scalar_select %p180, %s181, %s182
    %p186 = pneg %p180
    %p187 = scmp.eq.s32.totalorder %s11, 1
    %p188 = por %p186, %p187
    %p189 = scmp.ne.s32.totalorder %s181, %s184
    %p190 = scmp.eq.s32.totalorder %s11, 0
    %p191 = por %p189, %p190
    %p192 = scmp.ne.s32.totalorder %s181, %s184
    %p193 = scmp.eq.s32.totalorder %s16, 1
    %p194 = por %p192, %p193
    %p195 = scmp.ne.s32.totalorder %s184, %s185
    %p196 = scmp.eq.s32.totalorder %s16, 0
    %p197 = por %p195, %p196
    %p198 = scmp.ne.s32.totalorder %s184, %s185
    %p199 = scmp.eq.s32.totalorder %s17, 1
    %p200 = por %p198, %p199
    %p202 = scmp.ne.s32.totalorder %s185, %s201
    %p203 = scmp.eq.s32.totalorder %s17, 0
    %p204 = por %p202, %p203
    %p205 = scmp.le.s32.totalorder 1, %s11
    %p206 = scmp.lt.s32.totalorder %s11, 3
    %p207 = pnand %p205, %p206
    %p208 = pneg %p207
    // Predicated region
    $region9: #{hifigan_forward.12} parent=5 // pred_check
      _
    $region10: #{hifigan_forward.12} parent=5 // pred_check_branch
      %210 = sbr.rel (%p207) target = $region12
    $region11: #{hifigan_forward.12} parent=5 // pred_region
      %s211 = ssub.s32 %s11, 1
      // Predicated region
      $region13: #{hifigan_forward.12} parent=11 // pred_check
        %p212 = pneg %p148
      $region14: #{hifigan_forward.12} parent=11 // pred_check_branch
        %214 = sbr.rel (%p212) target = $region16
      $region15: #{hifigan_forward.12} parent=11 // pred_region
        _
      $region16: #{hifigan_forward.12} parent=11 // pred_fallthru
        _
      // Predicated region
      $region17: #{hifigan_forward.12} parent=11 // pred_check
        %p215 = pneg %p169
      $region18: #{hifigan_forward.12} parent=11 // pred_check_branch
        %217 = sbr.rel (%p215) target = $region20
      $region19: #{hifigan_forward.12} parent=11 // pred_region
        _
      $region20: #{hifigan_forward.12} parent=11 // pred_fallthru
        _
    $region12: #{hifigan_forward.12} parent=5 // pred_fallthru
      _
    %p218 = scmp.lt.s32.totalorder %s11, 2
    // Predicated region
    $region21: #{hifigan_forward.12} parent=5 // pred_check
      %p219 = pneg %p218
    $region22: #{hifigan_forward.12} parent=5 // pred_check_branch
      %221 = sbr.rel (%p219) target = $region24
    $region23: #{hifigan_forward.12} parent=5 // pred_region
      // Predicated region
      $region25: #{hifigan_forward.12} parent=23 // pred_check
        %p222 = pneg %p49
      $region26: #{hifigan_forward.12} parent=23 // pred_check_branch
        %224 = sbr.rel (%p222) target = $region28
      $region27: #{hifigan_forward.12} parent=23 // pred_region
        %p225 = scmp.lt.s32.totalorder %s19, 0
        %s226 = scalar_select %p225, %s19, 0
        %s227 = smul.u32 4, %s226
        %p228 = scmp.lt.s32.totalorder %s18, 1
        %s229 = scalar_select %p228, %s18, 1
        %p230 = scmp.lt.s32.totalorder %s227, 3
        %s231 = scalar_select %p230, %s227, 3
        %s232 = smul.addr %s229, 4
        %s233 = sadd.s32 %s231, %s232
        %s234 = smul.addr %s233, 4
        %s235 = scalar_lea.vmem %s0, %s234
        %p236 = scmp.lt.s32.totalorder %s19, 0
        %s237 = scalar_select %p236, %s19, 0
        %s238 = smul.u32 4, %s237
      $region28: #{hifigan_forward.12} parent=23 // pred_fallthru
        _
      // Predicated region
      $region29: #{hifigan_forward.12} parent=23 // pred_check
        %p239 = pneg %p85
      $region30: #{hifigan_forward.12} parent=23 // pred_check_branch
        %241 = sbr.rel (%p239) target = $region32
      $region31: #{hifigan_forward.12} parent=23 // pred_region
        %s242 = smul.u32 %s19, 2
        %s243 = ssub.s32 %s242, 1
        %p244 = scmp.gt.s32.totalorder %s243, 0
        %s245 = scalar_select %p244, %s243, 0
        %s246 = smul.u32 2, %s245
        %p247 = scmp.lt.s32.totalorder %s18, 1
        %s248 = scalar_select %p247, %s18, 1
        %p249 = scmp.lt.s32.totalorder %s246, 3
        %s250 = scalar_select %p249, %s246, 3
        %s251 = smul.addr %s248, 4
        %s252 = sadd.s32 %s250, %s251
        %s253 = smul.addr %s252, 4
        %s254 = scalar_lea.vmem %s1, %s253
        %s255 = smul.u32 %s19, 2
        %s256 = ssub.s32 %s255, 1
        %p257 = scmp.gt.s32.totalorder %s256, 0
        %s258 = scalar_select %p257, %s256, 0
        %s259 = smul.u32 2, %s258
      $region32: #{hifigan_forward.12} parent=23 // pred_fallthru
        _
      // Predicated region
      $region33: #{hifigan_forward.12} parent=23 // pred_check
        %p260 = pneg %p121
      $region34: #{hifigan_forward.12} parent=23 // pred_check_branch
        %262 = sbr.rel (%p260) target = $region36
      $region35: #{hifigan_forward.12} parent=23 // pred_region
        %s263 = sadd.s32 %s19, 1
        %s264 = smul.u32 %s263, 2
        %p265 = scmp.lt.s32.totalorder %s264, 1
        %s266 = scalar_select %p265, %s264, 1
        %s267 = smul.u32 2, %s266
        %p268 = scmp.lt.s32.totalorder %s18, 1
        %s269 = scalar_select %p268, %s18, 1
        %p270 = scmp.lt.s32.totalorder %s267, 3
        %s271 = scalar_select %p270, %s267, 3
        %s272 = smul.addr %s269, 4
        %s273 = sadd.s32 %s271, %s272
        %s274 = smul.addr %s273, 4
        %s275 = scalar_lea.vmem %s2, %s274
        %s276 = sadd.s32 %s19, 1
        %s277 = smul.u32 %s276, 2
        %p278 = scmp.lt.s32.totalorder %s277, 1
        %s279 = scalar_select %p278, %s277, 1
        %s280 = smul.u32 2, %s279
      $region36: #{hifigan_forward.12} parent=23 // pred_fallthru
        _
    $region24: #{hifigan_forward.12} parent=5 // pred_fallthru
      _
    %p281 = scmp.le.s32.totalorder 1, %s11
    %p282 = scmp.lt.s32.totalorder %s11, 3
    %p283 = pnand %p281, %p282
    %p284 = pneg %p283
    // Predicated region
    $region37: #{hifigan_forward.12} parent=5 // pred_check
      _
    $region38: #{hifigan_forward.12} parent=5 // pred_check_branch
      %286 = sbr.rel (%p283) target = $region40
    $region39: #{hifigan_forward.12} parent=5 // pred_region
      %s287 = ssub.s32 %s11, 1
      %p288 = scmp.lt.s32.totalorder %s21, 0
      %s289 = scalar_select %p288, %s21, 0
      %s290 = smul.u32 4, %s289
      %p291 = scmp.lt.s32.totalorder %s20, 1
      %s292 = scalar_select %p291, %s20, 1
      %p293 = scmp.lt.s32.totalorder %s290, 3
      %s294 = scalar_select %p293, %s290, 3
      %s295 = smul.addr %s292, 4
      %s296 = sadd.s32 %s294, %s295
      %s297 = smul.addr %s296, 4
      %s298 = scalar_lea.vmem %s0, %s297
      %p299 = pneg %p55
      %p300 = pneg %p52
      %s301 = smul.u32 %s21, 2
      %s302 = ssub.s32 %s301, 1
      %p303 = scmp.gt.s32.totalorder %s302, 0
      %s304 = scalar_select %p303, %s302, 0
      %s305 = smul.u32 2, %s304
      %p306 = scmp.lt.s32.totalorder %s20, 1
      %s307 = scalar_select %p306, %s20, 1
      %p308 = scmp.lt.s32.totalorder %s305, 3
      %s309 = scalar_select %p308, %s305, 3
      %s310 = smul.addr %s307, 4
      %s311 = sadd.s32 %s309, %s310
      %s312 = smul.addr %s311, 4
      %s313 = scalar_lea.vmem %s1, %s312
      %p314 = pneg %p91
      %p315 = pneg %p88
      %s316 = sadd.s32 %s21, 1
      %s317 = smul.u32 %s316, 2
      %p318 = scmp.lt.s32.totalorder %s317, 1
      %s319 = scalar_select %p318, %s317, 1
      %s320 = smul.u32 2, %s319
      %p321 = scmp.lt.s32.totalorder %s20, 1
      %s322 = scalar_select %p321, %s20, 1
      %p323 = scmp.lt.s32.totalorder %s320, 3
      %s324 = scalar_select %p323, %s320, 3
      %s325 = smul.addr %s322, 4
      %s326 = sadd.s32 %s324, %s325
      %s327 = smul.addr %s326, 4
      %s328 = scalar_lea.vmem %s2, %s327
      %p329 = pneg %p127
      %p330 = pneg %p124
      %p331 = pneg %p148
      %p332 = pneg %p145
      %p333 = pneg %p169
      %p334 = pneg %p166
      %p335 = pneg %p197
      %p336 = pneg %p194
      %s337 = smul.u32 4, %s21
      %p338 = scmp.lt.s32.totalorder %s20, 1
      %s339 = scalar_select %p338, %s20, 1
      %p340 = scmp.lt.s32.totalorder %s337, 3
      %s341 = scalar_select %p340, %s337, 3
      %s342 = smul.addr %s339, 4
      %s343 = sadd.s32 %s341, %s342
      %s344 = smul.addr %s343, 4
      %s345 = scalar_lea.vmem %s5, %s344
      %p346 = scmp.lt.s32.totalorder %s21, 0
      %s347 = scalar_select %p346, %s21, 0
      %s348 = smul.u32 4, %s347
      %p349 = scmp.lt.s32.totalorder %s20, 1
      %s350 = scalar_select %p349, %s20, 1
      %p351 = scmp.lt.s32.totalorder %s348, 3
      %s352 = scalar_select %p351, %s348, 3
      %s353 = smul.addr %s350, 4
      %s354 = sadd.s32 %s352, %s353
      %s355 = smul.addr %s354, 4
      %s356 = scalar_lea.vmem %s0, %s355
      %p357 = scmp.lt.s32.totalorder %s21, 0
      %s358 = scalar_select %p357, %s21, 0
      %s359 = smul.u32 4, %s358
      %s360 = smul.u32 %s21, 2
      %s361 = ssub.s32 %s360, 1
      %p362 = scmp.gt.s32.totalorder %s361, 0
      %s363 = scalar_select %p362, %s361, 0
      %s364 = smul.u32 2, %s363
      %p365 = scmp.lt.s32.totalorder %s20, 1
      %s366 = scalar_select %p365, %s20, 1
      %p367 = scmp.lt.s32.totalorder %s364, 3
      %s368 = scalar_select %p367, %s364, 3
      %s369 = smul.addr %s366, 4
      %s370 = sadd.s32 %s368, %s369
      %s371 = smul.addr %s370, 4
      %s372 = scalar_lea.vmem %s1, %s371
      %s373 = smul.u32 %s21, 2
      %s374 = ssub.s32 %s373, 1
      %p375 = scmp.gt.s32.totalorder %s374, 0
      %s376 = scalar_select %p375, %s374, 0
      %s377 = smul.u32 2, %s376
      %s378 = sadd.s32 %s21, 1
      %s379 = smul.u32 %s378, 2
      %p380 = scmp.lt.s32.totalorder %s379, 1
      %s381 = scalar_select %p380, %s379, 1
      %s382 = smul.u32 2, %s381
      %p383 = scmp.lt.s32.totalorder %s20, 1
      %s384 = scalar_select %p383, %s20, 1
      %p385 = scmp.lt.s32.totalorder %s382, 3
      %s386 = scalar_select %p385, %s382, 3
      %s387 = smul.addr %s384, 4
      %s388 = sadd.s32 %s386, %s387
      %s389 = smul.addr %s388, 4
      %s390 = scalar_lea.vmem %s2, %s389
      %s391 = sadd.s32 %s21, 1
      %s392 = smul.u32 %s391, 2
      %p393 = scmp.lt.s32.totalorder %s392, 1
      %s394 = scalar_select %p393, %s392, 1
      %s395 = smul.u32 2, %s394
      %s396 = smul.u32 4, %s21
      %p397 = scmp.lt.s32.totalorder %s20, 1
      %s398 = scalar_select %p397, %s20, 1
      %p399 = scmp.lt.s32.totalorder %s396, 3
      %s400 = scalar_select %p399, %s396, 3
      %s401 = smul.addr %s398, 4
      %s402 = sadd.s32 %s400, %s401
      %s403 = smul.addr %s402, 4
      %s404 = scalar_lea.vmem %s5, %s403
      %s405 = smul.u32 4, %s21
      %s407 = smul.u32 %s21, 32
      %v408 = vld [vmem:[%s372] sm:$0xf]
      %v409 = vld [vmem:[%s372 + $0x4] sm:$0xf]
      %s410 = ssub.s32 %s407, 16
      %v411 = vlaneseq
      %v412 = vshrl.u32 %v411, 7
      %v413 = vadd.s32 %v412, 8
      %v414 = vstv %s410
      %v415 = vadd.s32 %v414, %v412
      %v416 = vadd.s32 %v414, %v413
      %vm417 = vcmp.ge.s32.totalorder %v415, 0
      %vm418 = vcmp.ge.s32.totalorder %v416, 0
      %vm419 = vcmp.lt.s32.totalorder %v415, 32
      %vm420 = vcmp.lt.s32.totalorder %v416, 32
      %vm421 = vmand %vm417, %vm419
      %vm422 = vmand %vm418, %vm420
      %v423 = vsel %vm421, 1, 0
      %v424 = vsel %vm422, 1, 0
      %vm425 = vcmp.eq.s32.totalorder %v423, 1
      %vm426 = vcmp.eq.s32.totalorder %v424, 1
      %vm427 = vmpackc.low %vm425, %vm425
      %vm428 = vmpackc.low %vm426, %vm426
      %v429 = vsel %vm427, %v408, 0
      %v430 = vsel %vm428, %v409, 0
      %v431 = vunpack.c.l.bf16 %v429
      %v432 = vunpack.c.l.bf16 %v430
      %vm433 = vcmp.ge.f32.partialorder %v431, 0.0
      %vm434 = vcmp.ge.f32.partialorder %v432, 0.0
      %v435 = vmul.f32 %v431, 0.1
      %v436 = vmul.f32 %v432, 0.1
      %v437 = vsel %vm433, %v431, %v435
      %v438 = vsel %vm434, %v432, %v436
      %v439 = vpack.c.bf16 %v437, %v437
      %v440 = vpack.c.bf16 %v438, %v438
      %v441 = vld [vmem:[%s356] sm:$0xf]
      %v442 = vld [vmem:[%s356 + $0x4] sm:$0xf]
      %v443 = vld [vmem:[%s356 + $0x8] sm:$0xf]
      %v444 = vld [vmem:[%s356 + $0xc] sm:$0xf]
      %v445 = vadd.s32 %v412, 16
      %v446 = vadd.s32 %v412, 24
      %v447 = vstv %s407
      %v448 = vadd.s32 %v447, %v412
      %v449 = vadd.s32 %v447, %v413
      %v450 = vadd.s32 %v447, %v445
      %v451 = vadd.s32 %v447, %v446
      %vm452 = vcmp.ge.s32.totalorder %v448, 0
      %vm453 = vcmp.ge.s32.totalorder %v449, 0
      %vm454 = vcmp.ge.s32.totalorder %v450, 0
      %vm455 = vcmp.ge.s32.totalorder %v451, 0
      %vm456 = vcmp.lt.s32.totalorder %v448, 32
      %vm457 = vcmp.lt.s32.totalorder %v449, 32
      %vm458 = vcmp.lt.s32.totalorder %v450, 32
      %vm459 = vcmp.lt.s32.totalorder %v451, 32
      %vm460 = vmand %vm452, %vm456
      %vm461 = vmand %vm453, %vm457
      %vm462 = vmand %vm454, %vm458
      %vm463 = vmand %vm455, %vm459
      %v464 = vsel %vm460, 1, 0
      %v465 = vsel %vm461, 1, 0
      %v466 = vsel %vm462, 1, 0
      %v467 = vsel %vm463, 1, 0
      %vm468 = vcmp.eq.s32.totalorder %v464, 1
      %vm469 = vcmp.eq.s32.totalorder %v465, 1
      %vm470 = vcmp.eq.s32.totalorder %v466, 1
      %vm471 = vcmp.eq.s32.totalorder %v467, 1
      %vm472 = vmpackc.low %vm468, %vm468
      %vm473 = vmpackc.low %vm469, %vm469
      %vm474 = vmpackc.low %vm470, %vm470
      %vm475 = vmpackc.low %vm471, %vm471
      %v476 = vsel %vm472, %v441, 0
      %v477 = vsel %vm473, %v442, 0
      %v478 = vsel %vm474, %v443, 0
      %v479 = vsel %vm475, %v444, 0
      %v480 = vunpack.c.l.bf16 %v476
      %v481 = vunpack.c.l.bf16 %v477
      %v482 = vunpack.c.l.bf16 %v478
      %v483 = vunpack.c.l.bf16 %v479
      %vm484 = vcmp.ge.f32.partialorder %v480, 0.0
      %vm485 = vcmp.ge.f32.partialorder %v481, 0.0
      %vm486 = vcmp.ge.f32.partialorder %v482, 0.0
      %vm487 = vcmp.ge.f32.partialorder %v483, 0.0
      %v488 = vmul.f32 %v480, 0.1
      %v489 = vmul.f32 %v481, 0.1
      %v490 = vmul.f32 %v482, 0.1
      %v491 = vmul.f32 %v483, 0.1
      %v492 = vsel %vm484, %v480, %v488
      %v493 = vsel %vm485, %v481, %v489
      %v494 = vsel %vm486, %v482, %v490
      %v495 = vsel %vm487, %v483, %v491
      %v496 = vpack.c.bf16 %v492, %v492
      %v497 = vpack.c.bf16 %v493, %v493
      %v498 = vpack.c.bf16 %v494, %v494
      %v499 = vpack.c.bf16 %v495, %v495
      %v500 = vld [vmem:[%s390] sm:$0xf]
      %v501 = vld [vmem:[%s390 + $0x4] sm:$0xf]
      %s502 = sadd.s32 %s407, 32
      %v503 = vstv %s502
      %v504 = vadd.s32 %v503, %v412
      %v505 = vadd.s32 %v503, %v413
      %vm506 = vcmp.ge.s32.totalorder %v504, 0
      %vm507 = vcmp.ge.s32.totalorder %v505, 0
      %vm508 = vcmp.lt.s32.totalorder %v504, 32
      %vm509 = vcmp.lt.s32.totalorder %v505, 32
      %vm510 = vmand %vm506, %vm508
      %vm511 = vmand %vm507, %vm509
      %v512 = vsel %vm510, 1, 0
      %v513 = vsel %vm511, 1, 0
      %vm514 = vcmp.eq.s32.totalorder %v512, 1
      %vm515 = vcmp.eq.s32.totalorder %v513, 1
      %vm516 = vmpackc.low %vm514, %vm514
      %vm517 = vmpackc.low %vm515, %vm515
      %v518 = vsel %vm516, %v500, 0
      %v519 = vsel %vm517, %v501, 0
      %v520 = vunpack.c.l.bf16 %v518
      %v521 = vunpack.c.l.bf16 %v519
      %vm522 = vcmp.ge.f32.partialorder %v520, 0.0
      %vm523 = vcmp.ge.f32.partialorder %v521, 0.0
      %v524 = vmul.f32 %v520, 0.1
      %v525 = vmul.f32 %v521, 0.1
      %v526 = vsel %vm522, %v520, %v524
      %v527 = vsel %vm523, %v521, %v525
      %v528 = vpack.c.bf16 %v526, %v526
      %v529 = vpack.c.bf16 %v527, %v527
      %v532 = vunpack.c.l.b16 %v439
      %v533 = vunpack.c.l.b16 %v440
      %v534 = vpack.c.b16 %v533, %v532
      %v539 = vunpack.c.l.b16 %v496
      %v540 = vunpack.c.l.b16 %v497
      %v541 = vunpack.c.l.b16 %v498
      %v542 = vunpack.c.l.b16 %v499
      %v543 = vpack.c.b16 %v540, %v539
      %v544 = vpack.c.b16 %v542, %v541
      %v547 = vunpack.c.l.b16 %v528
      %v548 = vunpack.c.l.b16 %v529
      %v549 = vpack.c.b16 %v548, %v547
      %vm550 = vsmask.f32 7424
      %v552 = vshll.u32 %v543, 16
      %v554 = vrot.slane %v552, 1
      %v555 = vshrl.u32 %v543, 16
      %v557 = vor.u32 %v555, %v554
      %v559 = vshll.u32 %v544, 16
      %v561 = vrot.slane %v559, 1
      %v562 = vsel %vm550, %v557, %v561
      %v563 = vshrl.u32 %v544, 16
      %v565 = vor.u32 %v563, %v561
      %566 = vrot.lane.b32.xlu0 %v554, 16
      %v567 = vpop.permute.xlu0 %566
      %568 = vrot.lane.b32.xlu0 %v562, 16
      %v569 = vpop.permute.xlu0 %568
      %570 = vrot.lane.b32.xlu0 %v565, 16
      %v571 = vpop.permute.xlu0 %570
      %vm572 = vcmask 1046528
      %v573 = vrot.slane %v543, 1
      %v574 = vrot.slane %v544, 1
      %v575 = vsel %vm572, %v573, %v574
      %v576 = vrot.slane %v549, 1
      %v577 = vsel %vm572, %v574, %v576
      %578 = vrot.lane.b32.xlu0 %v573, 32
      %v579 = vpop.permute.xlu0 %578
      %580 = vrot.lane.b32.xlu0 %v575, 32
      %v581 = vpop.permute.xlu0 %580
      %582 = vrot.lane.b32.xlu0 %v577, 32
      %v583 = vpop.permute.xlu0 %582
      %vm584 = vcmask 130048
      %v587 = vsel %vm584, %v534, %v567
      %v589 = vsel %vm584, %v543, %v569
      %v591 = vsel %vm584, %v544, %v571
      %vm592 = vcmask 261120
      %v594 = vsel %vm592, %v587, %v579
      %v596 = vsel %vm592, %v589, %v581
      %v598 = vsel %vm592, %v591, %v583
      %v599 = vld [vmem:[%s3] sm:$0xf]
      %v600 = vld [vmem:[%s3 + $0x4] sm:$0xf]
      %v601 = vld [vmem:[%s3 + $0x8] sm:$0xf]
      %v602 = vld [vmem:[%s3 + $0xc] sm:$0xf]
      %v603 = vld [vmem:[%s3 + $0x10] sm:$0xf]
      %v604 = vld [vmem:[%s3 + $0x14] sm:$0xf]
      %v605 = vld [vmem:[%s4] sm:$0x1]
      %v607 = vperm.slane %v605, 0
      %vm609 = vsmask.f32 256
      %v610 = vshrl.u32 %v594, 16
      %v612 = vrot.slane %v610, 7
      %v613 = vshrl.u32 %v596, 16
      %v615 = vrot.slane %v613, 7
      %v616 = vshll.u32 %v596, 16
      %v618 = vor.u32 %v615, %v616
      %v619 = vsel %vm609, %v612, %v618
      %v620 = vshrl.u32 %v598, 16
      %v622 = vrot.slane %v620, 7
      %v623 = vshll.u32 %v598, 16
      %v625 = vor.u32 %v622, %v623
      %v626 = vsel %vm609, %v615, %v625
      %v633 = vunpack.c.l.b16 %v599
      %v634 = vunpack.c.l.b16 %v600
      %v635 = vunpack.c.l.b16 %v601
      %v636 = vunpack.c.l.b16 %v602
      %v637 = vunpack.c.l.b16 %v603
      %v638 = vunpack.c.l.b16 %v604
      %v639 = vpack.c.b16 %v634, %v633
      %v640 = vpack.c.b16 %v636, %v635
      %v641 = vpack.c.b16 %v638, %v637
      %vm645 = vcmask 392192
      %v647 = vsel %vm645, %v619, 0
      %v650 = vsel %vm645, %v626, 0
      %652 = vmatpush.bf16.msra.mxu0 0
      %653 = vmatpush.bf16.msra.mxu0 0
      %654 = vmatpush.bf16.msra.mxu0 0
      %655 = vmatpush.bf16.msra.mxu0 0
      %656 = vmatpush.bf16.msra.mxu0 0
      %657 = vmatpush.bf16.msra.mxu0 %v641
      %658 = vmatpush.bf16.msra.mxu0 %v640
      %659 = vmatpush.bf16.msra.mxu0 %v639
      %660 = vmatmul.bf16.gmra.mxu0 %v647
      %v661 = vpop.f32.mrf.mxu0
      %v662 = vadd.f32 %v607, %v661
      %v663 = vpop.f32.mrf.mxu0
      %v664 = vadd.f32 %v607, %v663
      %665 = vmatmul.bf16.gmra.mxu0 %v650
      %v666 = vpop.f32.mrf.mxu0
      %v667 = vadd.f32 %v607, %v666
      %v668 = vpop.f32.mrf.mxu0
      %v669 = vadd.f32 %v607, %v668
      %670 = vdwg.mxu0
      %v671 = vpack.c.bf16 %v662, %v662
      %v672 = vpack.c.bf16 %v664, %v664
      %v673 = vpack.c.bf16 %v667, %v667
      %v674 = vpack.c.bf16 %v669, %v669
      %vm675 = vcmask 125952
      %676 = vst.msk [vmem:[%s404] sm:$0xf] %vm675, %v671
      %677 = vst.msk [vmem:[%s404 + $0x4] sm:$0xf] %vm675, %v672
      %678 = vst.msk [vmem:[%s404 + $0x8] sm:$0xf] %vm675, %v673
      %679 = vst.msk [vmem:[%s404 + $0xc] sm:$0xf] %vm675, %v674
      %s680 = smul.u32 4, %s21
      %p681 = scmp.lt.s32.totalorder %s20, 1
      %s682 = scalar_select %p681, %s20, 1
      %p683 = scmp.lt.s32.totalorder %s680, 3
      %s684 = scalar_select %p683, %s680, 3
      %s685 = smul.addr %s682, 4
      %s686 = sadd.s32 %s684, %s685
      %s687 = smul.addr %s686, 4
      %s688 = scalar_lea.vmem %s5, %s687
      // Predicated region
      $region41: #{hifigan_forward.12} parent=39 // pred_check
        %p689 = pneg %p194
      $region42: #{hifigan_forward.12} parent=39 // pred_check_branch
        %691 = sbr.rel (%p689) target = $region44
      $region43: #{hifigan_forward.12} parent=39 // pred_region
        %s692 = smul.u32 4, %s21
      $region44: #{hifigan_forward.12} parent=39 // pred_fallthru
        _
    $region40: #{hifigan_forward.12} parent=5 // pred_fallthru
      _
    %p693 = scmp.le.s32.totalorder 2, %s11
    // Predicated region
    $region45: #{hifigan_forward.12} parent=5 // pred_check
      %p694 = pneg %p693
    $region46: #{hifigan_forward.12} parent=5 // pred_check_branch
      %696 = sbr.rel (%p694) target = $region48
    $region47: #{hifigan_forward.12} parent=5 // pred_region
      %s697 = ssub.s32 %s11, 2
      // Predicated region
      $region49: #{hifigan_forward.12} parent=47 // pred_check
        %p698 = pneg %p200
      $region50: #{hifigan_forward.12} parent=47 // pred_check_branch
        %700 = sbr.rel (%p698) target = $region52
      $region51: #{hifigan_forward.12} parent=47 // pred_region
        %s701 = smul.u32 4, %s23
        %p702 = scmp.lt.s32.totalorder %s22, 1
        %s703 = scalar_select %p702, %s22, 1
        %p704 = scmp.lt.s32.totalorder %s701, 3
        %s705 = scalar_select %p704, %s701, 3
        %s706 = smul.addr %s703, 4
        %s707 = sadd.s32 %s705, %s706
        %s708 = smul.addr %s707, 4
        %s709 = scalar_lea.vmem %s5, %s708
      $region52: #{hifigan_forward.12} parent=47 // pred_fallthru
        _
    $region48: #{hifigan_forward.12} parent=5 // pred_fallthru
      _
  $region6: #{hifigan_forward.12} parent=0 // loop_footer
    %s15 = sadd.s32 1, %s11
  $region7: #{hifigan_forward.12} parent=0 // loop_footer_branch
    %10 = sbr.rel target = $region3
  $region8: #{hifigan_forward.12} parent=0 // loop_exit
    _

// kernel: hifigan_forward.13
$region0: #{hifigan_forward.13}
  #allocation0 [shape = 'u32[]', space=smem, size = 0x4, offset = 0x4, fixed_abs, tag = 'smem constant byte address 0x4 - core index']
  #allocation1 [shape = 'u32[72,128]{1,0:T(1,128)}', space=vmem, size = 0x9000, scoped, tag = 'internal scratch']
  %s0 = inlined_call_operand.vmem [shape: bf16[2,64,8], index: 0, kind: input, shape index: {}, may-alias: {0,1,2,5}]
  %s1 = inlined_call_operand.vmem [shape: bf16[2,64,8], index: 1, kind: input, shape index: {}, may-alias: {0,1,2,5}]
  %s2 = inlined_call_operand.vmem [shape: bf16[2,64,8], index: 2, kind: input, shape index: {}, may-alias: {0,1,2,5}]
  %s3 = inlined_call_operand.vmem [shape: bf16[24,8], index: 3, kind: input, shape index: {}]
  %s4 = inlined_call_operand.vmem [shape: f32[1,8], index: 4, kind: input, shape index: {}]
  %s5 = inlined_call_operand.vmem [shape: bf16[2,64,8], index: 5, kind: input, shape index: {}, may-alias: {0,1,2,5}]
  %s6 = inlined_call_operand.vmem [shape: bf16[2,64,8], index: 6, kind: output, shape index: {}]
  %s7 = sld [smem:[#allocation0]]
  $region57: #{hifigan_forward.13} parent=0
    _
  %s9 = ssub.s32 1, %s7
  %s10 = scalar_select 0, %s9, %s7
  loop: start=0, step=1, limit=6
  $region2: #{hifigan_forward.13} parent=0 // loop_pre_header
    _
  $region3: #{hifigan_forward.13} parent=0 // loop_header
    %s12 = sphi 0, %s16
    %p13 = scmp.ge.s32.totalorder %s12, 6
    %s19 = sphi 0, %s31
    %s20 = sphi 0, %s27
    %s21 = sphi 0, %s19
    %s22 = sphi 0, %s20
    %s23 = sphi 0, %s21
    %s24 = sphi 0, %s22
    %s40 = sphi 0, %s42
    %s43 = sphi 0, %s40
    %s44 = sphi 0, %s43
    %s60 = sphi 0, %s44
    %s76 = sphi 0, %s78
    %s79 = sphi 0, %s76
    %s80 = sphi 0, %s79
    %s96 = sphi 0, %s80
    %s112 = sphi 0, %s114
    %s115 = sphi 0, %s112
    %s116 = sphi 0, %s115
    %s132 = sphi 0, %s116
    %s136 = sphi 0, %s136
    %s138 = sphi 0, %s136
    %s139 = sphi 0, %s138
    %s153 = sphi 0, %s139
    %s157 = sphi 0, %s157
    %s159 = sphi 0, %s157
    %s160 = sphi 0, %s159
    %s174 = sphi 0, %s160
    %s182 = sphi 0, %s184
    %s185 = sphi 0, %s182
    %s186 = sphi 0, %s185
    %s202 = sphi 0, %s186
    %s210 = sphi 0, %s212
    %s213 = sphi 0, %s210
    %s214 = sphi 0, %s213
    %s230 = sphi 0, %s214
  $region4: #{hifigan_forward.13} parent=0 // loop_header_branch
    %15 = sbr.rel (%p13) target = $region8
  $region5: #{hifigan_forward.13} parent=0 // loop_body
    %s17 = ssub.s32 %s12, 1
    %s18 = ssub.s32 %s12, 2
    %s25 = sadd.s32 1, %s20
    %p26 = scmp.ge.s32.totalorder %s25, 2
    %s27 = scalar_select %p26, 0, %s25
    %s28 = sadd.s32 1, %s19
    %s29 = scalar_select %p26, %s28, %s19
    %p30 = scmp.ge.s32.totalorder %s29, 2
    %s31 = scalar_select %p30, 0, %s29
    %p32 = scmp.lt.s32.totalorder %s20, 1
    %s33 = scalar_select %p32, %s20, 1
    %p34 = scmp.lt.s32.totalorder %s27, 1
    %s35 = scalar_select %p34, %s27, 1
    %s36 = ssub.s32 %s19, %s31
    %s37 = ssub.s32 %s33, %s35
    %s38 = sor.u32 %s36, %s37
    %p39 = scmp.eq.s32.totalorder %s38, 0
    %s41 = sadd.s32 %s40, 1
    %s42 = scalar_select %p39, %s40, %s41
    %p45 = pneg %p39
    %p46 = scmp.eq.s32.totalorder %s12, 3
    %p47 = por %p45, %p46
    %p48 = scmp.ne.s32.totalorder %s40, %s43
    %p49 = scmp.eq.s32.totalorder %s12, 0
    %p50 = por %p48, %p49
    %p51 = scmp.ne.s32.totalorder %s40, %s43
    %p52 = scmp.eq.s32.totalorder %s17, 3
    %p53 = por %p51, %p52
    %p54 = scmp.ne.s32.totalorder %s43, %s44
    %p55 = scmp.eq.s32.totalorder %s17, 0
    %p56 = por %p54, %p55
    %p57 = scmp.ne.s32.totalorder %s43, %s44
    %p58 = scmp.eq.s32.totalorder %s18, 3
    %p59 = por %p57, %p58
    %p61 = scmp.ne.s32.totalorder %s44, %s60
    %p62 = scmp.eq.s32.totalorder %s18, 0
    %p63 = por %p61, %p62
    %s64 = smul.u32 %s20, 2
    %s65 = ssub.s32 %s64, 1
    %p66 = scmp.gt.s32.totalorder %s65, 0
    %s67 = scalar_select %p66, %s65, 0
    %s68 = smul.u32 %s27, 2
    %s69 = ssub.s32 %s68, 1
    %p70 = scmp.gt.s32.totalorder %s69, 0
    %s71 = scalar_select %p70, %s69, 0
    %s72 = ssub.s32 %s19, %s31
    %s73 = ssub.s32 %s67, %s71
    %s74 = sor.u32 %s72, %s73
    %p75 = scmp.eq.s32.totalorder %s74, 0
    %s77 = sadd.s32 %s76, 1
    %s78 = scalar_select %p75, %s76, %s77
    %p81 = pneg %p75
    %p82 = scmp.eq.s32.totalorder %s12, 3
    %p83 = por %p81, %p82
    %p84 = scmp.ne.s32.totalorder %s76, %s79
    %p85 = scmp.eq.s32.totalorder %s12, 0
    %p86 = por %p84, %p85
    %p87 = scmp.ne.s32.totalorder %s76, %s79
    %p88 = scmp.eq.s32.totalorder %s17, 3
    %p89 = por %p87, %p88
    %p90 = scmp.ne.s32.totalorder %s79, %s80
    %p91 = scmp.eq.s32.totalorder %s17, 0
    %p92 = por %p90, %p91
    %p93 = scmp.ne.s32.totalorder %s79, %s80
    %p94 = scmp.eq.s32.totalorder %s18, 3
    %p95 = por %p93, %p94
    %p97 = scmp.ne.s32.totalorder %s80, %s96
    %p98 = scmp.eq.s32.totalorder %s18, 0
    %p99 = por %p97, %p98
    %s100 = sadd.s32 %s20, 1
    %s101 = smul.u32 %s100, 2
    %p102 = scmp.lt.s32.totalorder %s101, 3
    %s103 = scalar_select %p102, %s101, 3
    %s104 = sadd.s32 %s27, 1
    %s105 = smul.u32 %s104, 2
    %p106 = scmp.lt.s32.totalorder %s105, 3
    %s107 = scalar_select %p106, %s105, 3
    %s108 = ssub.s32 %s19, %s31
    %s109 = ssub.s32 %s103, %s107
    %s110 = sor.u32 %s108, %s109
    %p111 = scmp.eq.s32.totalorder %s110, 0
    %s113 = sadd.s32 %s112, 1
    %s114 = scalar_select %p111, %s112, %s113
    %p117 = pneg %p111
    %p118 = scmp.eq.s32.totalorder %s12, 3
    %p119 = por %p117, %p118
    %p120 = scmp.ne.s32.totalorder %s112, %s115
    %p121 = scmp.eq.s32.totalorder %s12, 0
    %p122 = por %p120, %p121
    %p123 = scmp.ne.s32.totalorder %s112, %s115
    %p124 = scmp.eq.s32.totalorder %s17, 3
    %p125 = por %p123, %p124
    %p126 = scmp.ne.s32.totalorder %s115, %s116
    %p127 = scmp.eq.s32.totalorder %s17, 0
    %p128 = por %p126, %p127
    %p129 = scmp.ne.s32.totalorder %s115, %s116
    %p130 = scmp.eq.s32.totalorder %s18, 3
    %p131 = por %p129, %p130
    %p133 = scmp.ne.s32.totalorder %s116, %s132
    %p134 = scmp.eq.s32.totalorder %s18, 0
    %p135 = por %p133, %p134
    %s137 = sadd.s32 %s136, 1
    %p140 = scmp.eq.s32.totalorder %s12, 3
    %p141 = scmp.ne.s32.totalorder %s136, %s138
    %p142 = scmp.eq.s32.totalorder %s12, 0
    %p143 = por %p141, %p142
    %p144 = scmp.ne.s32.totalorder %s136, %s138
    %p145 = scmp.eq.s32.totalorder %s17, 3
    %p146 = por %p144, %p145
    %p147 = scmp.ne.s32.totalorder %s138, %s139
    %p148 = scmp.eq.s32.totalorder %s17, 0
    %p149 = por %p147, %p148
    %p150 = scmp.ne.s32.totalorder %s138, %s139
    %p151 = scmp.eq.s32.totalorder %s18, 3
    %p152 = por %p150, %p151
    %p154 = scmp.ne.s32.totalorder %s139, %s153
    %p155 = scmp.eq.s32.totalorder %s18, 0
    %p156 = por %p154, %p155
    %s158 = sadd.s32 %s157, 1
    %p161 = scmp.eq.s32.totalorder %s12, 3
    %p162 = scmp.ne.s32.totalorder %s157, %s159
    %p163 = scmp.eq.s32.totalorder %s12, 0
    %p164 = por %p162, %p163
    %p165 = scmp.ne.s32.totalorder %s157, %s159
    %p166 = scmp.eq.s32.totalorder %s17, 3
    %p167 = por %p165, %p166
    %p168 = scmp.ne.s32.totalorder %s159, %s160
    %p169 = scmp.eq.s32.totalorder %s17, 0
    %p170 = por %p168, %p169
    %p171 = scmp.ne.s32.totalorder %s159, %s160
    %p172 = scmp.eq.s32.totalorder %s18, 3
    %p173 = por %p171, %p172
    %p175 = scmp.ne.s32.totalorder %s160, %s174
    %p176 = scmp.eq.s32.totalorder %s18, 0
    %p177 = por %p175, %p176
    %s178 = ssub.s32 %s19, %s31
    %s179 = ssub.s32 %s20, %s27
    %s180 = sor.u32 %s178, %s179
    %p181 = scmp.eq.s32.totalorder %s180, 0
    %s183 = sadd.s32 %s182, 1
    %s184 = scalar_select %p181, %s182, %s183
    %p187 = pneg %p181
    %p188 = scmp.eq.s32.totalorder %s12, 3
    %p189 = por %p187, %p188
    %p190 = scmp.ne.s32.totalorder %s182, %s185
    %p191 = scmp.eq.s32.totalorder %s12, 0
    %p192 = por %p190, %p191
    %p193 = scmp.ne.s32.totalorder %s182, %s185
    %p194 = scmp.eq.s32.totalorder %s17, 3
    %p195 = por %p193, %p194
    %p196 = scmp.ne.s32.totalorder %s185, %s186
    %p197 = scmp.eq.s32.totalorder %s17, 0
    %p198 = por %p196, %p197
    %p199 = scmp.ne.s32.totalorder %s185, %s186
    %p200 = scmp.eq.s32.totalorder %s18, 3
    %p201 = por %p199, %p200
    %p203 = scmp.ne.s32.totalorder %s186, %s202
    %p204 = scmp.eq.s32.totalorder %s18, 0
    %p205 = por %p203, %p204
    %s206 = ssub.s32 %s19, %s31
    %s207 = ssub.s32 %s20, %s27
    %s208 = sor.u32 %s206, %s207
    %p209 = scmp.eq.s32.totalorder %s208, 0
    %s211 = sadd.s32 %s210, 1
    %s212 = scalar_select %p209, %s210, %s211
    %p215 = pneg %p209
    %p216 = scmp.eq.s32.totalorder %s12, 3
    %p217 = por %p215, %p216
    %p218 = scmp.ne.s32.totalorder %s210, %s213
    %p219 = scmp.eq.s32.totalorder %s12, 0
    %p220 = por %p218, %p219
    %p221 = scmp.ne.s32.totalorder %s210, %s213
    %p222 = scmp.eq.s32.totalorder %s17, 3
    %p223 = por %p221, %p222
    %p224 = scmp.ne.s32.totalorder %s213, %s214
    %p225 = scmp.eq.s32.totalorder %s17, 0
    %p226 = por %p224, %p225
    %p227 = scmp.ne.s32.totalorder %s213, %s214
    %p228 = scmp.eq.s32.totalorder %s18, 3
    %p229 = por %p227, %p228
    %p231 = scmp.ne.s32.totalorder %s214, %s230
    %p232 = scmp.eq.s32.totalorder %s18, 0
    %p233 = por %p231, %p232
    %p234 = scmp.le.s32.totalorder 1, %s12
    %p235 = scmp.lt.s32.totalorder %s12, 5
    %p236 = pnand %p234, %p235
    %p237 = pneg %p236
    // Predicated region
    $region9: #{hifigan_forward.13} parent=5 // pred_check
      _
    $region10: #{hifigan_forward.13} parent=5 // pred_check_branch
      %239 = sbr.rel (%p236) target = $region12
    $region11: #{hifigan_forward.13} parent=5 // pred_region
      %s240 = ssub.s32 %s12, 1
      // Predicated region
      $region13: #{hifigan_forward.13} parent=11 // pred_check
        %p241 = pneg %p149
      $region14: #{hifigan_forward.13} parent=11 // pred_check_branch
        %243 = sbr.rel (%p241) target = $region16
      $region15: #{hifigan_forward.13} parent=11 // pred_region
        _
      $region16: #{hifigan_forward.13} parent=11 // pred_fallthru
        _
      // Predicated region
      $region17: #{hifigan_forward.13} parent=11 // pred_check
        %p244 = pneg %p170
      $region18: #{hifigan_forward.13} parent=11 // pred_check_branch
        %246 = sbr.rel (%p244) target = $region20
      $region19: #{hifigan_forward.13} parent=11 // pred_region
        _
      $region20: #{hifigan_forward.13} parent=11 // pred_fallthru
        _
    $region12: #{hifigan_forward.13} parent=5 // pred_fallthru
      _
    %p247 = scmp.lt.s32.totalorder %s12, 4
    // Predicated region
    $region21: #{hifigan_forward.13} parent=5 // pred_check
      %p248 = pneg %p247
    $region22: #{hifigan_forward.13} parent=5 // pred_check_branch
      %250 = sbr.rel (%p248) target = $region24
    $region23: #{hifigan_forward.13} parent=5 // pred_region
      // Predicated region
      $region25: #{hifigan_forward.13} parent=23 // pred_check
        %p251 = pneg %p50
      $region26: #{hifigan_forward.13} parent=23 // pred_check_branch
        %253 = sbr.rel (%p251) target = $region28
      $region27: #{hifigan_forward.13} parent=23 // pred_region
        %p254 = scmp.lt.s32.totalorder %s20, 1
        %s255 = scalar_select %p254, %s20, 1
        %s256 = smul.u32 4, %s255
        %p257 = scmp.lt.s32.totalorder %s19, 1
        %s258 = scalar_select %p257, %s19, 1
        %p259 = scmp.lt.s32.totalorder %s256, 7
        %s260 = scalar_select %p259, %s256, 7
        %s261 = smul.addr %s258, 8
        %s262 = sadd.s32 %s260, %s261
        %s263 = smul.addr %s262, 4
        %s264 = scalar_lea.vmem %s0, %s263
        %p265 = scmp.lt.s32.totalorder %s20, 1
        %s266 = scalar_select %p265, %s20, 1
        %s267 = smul.u32 4, %s266
      $region28: #{hifigan_forward.13} parent=23 // pred_fallthru
        _
      // Predicated region
      $region29: #{hifigan_forward.13} parent=23 // pred_check
        %p268 = pneg %p86
      $region30: #{hifigan_forward.13} parent=23 // pred_check_branch
        %270 = sbr.rel (%p268) target = $region32
      $region31: #{hifigan_forward.13} parent=23 // pred_region
        %s271 = smul.u32 %s20, 2
        %s272 = ssub.s32 %s271, 1
        %p273 = scmp.gt.s32.totalorder %s272, 0
        %s274 = scalar_select %p273, %s272, 0
        %s275 = smul.u32 2, %s274
        %p276 = scmp.lt.s32.totalorder %s19, 1
        %s277 = scalar_select %p276, %s19, 1
        %p278 = scmp.lt.s32.totalorder %s275, 7
        %s279 = scalar_select %p278, %s275, 7
        %s280 = smul.addr %s277, 8
        %s281 = sadd.s32 %s279, %s280
        %s282 = smul.addr %s281, 4
        %s283 = scalar_lea.vmem %s1, %s282
        %s284 = smul.u32 %s20, 2
        %s285 = ssub.s32 %s284, 1
        %p286 = scmp.gt.s32.totalorder %s285, 0
        %s287 = scalar_select %p286, %s285, 0
        %s288 = smul.u32 2, %s287
      $region32: #{hifigan_forward.13} parent=23 // pred_fallthru
        _
      // Predicated region
      $region33: #{hifigan_forward.13} parent=23 // pred_check
        %p289 = pneg %p122
      $region34: #{hifigan_forward.13} parent=23 // pred_check_branch
        %291 = sbr.rel (%p289) target = $region36
      $region35: #{hifigan_forward.13} parent=23 // pred_region
        %s292 = sadd.s32 %s20, 1
        %s293 = smul.u32 %s292, 2
        %p294 = scmp.lt.s32.totalorder %s293, 3
        %s295 = scalar_select %p294, %s293, 3
        %s296 = smul.u32 2, %s295
        %p297 = scmp.lt.s32.totalorder %s19, 1
        %s298 = scalar_select %p297, %s19, 1
        %p299 = scmp.lt.s32.totalorder %s296, 7
        %s300 = scalar_select %p299, %s296, 7
        %s301 = smul.addr %s298, 8
        %s302 = sadd.s32 %s300, %s301
        %s303 = smul.addr %s302, 4
        %s304 = scalar_lea.vmem %s2, %s303
        %s305 = sadd.s32 %s20, 1
        %s306 = smul.u32 %s305, 2
        %p307 = scmp.lt.s32.totalorder %s306, 3
        %s308 = scalar_select %p307, %s306, 3
        %s309 = smul.u32 2, %s308
      $region36: #{hifigan_forward.13} parent=23 // pred_fallthru
        _
      // Predicated region
      $region37: #{hifigan_forward.13} parent=23 // pred_check
        %p310 = pneg %p192
      $region38: #{hifigan_forward.13} parent=23 // pred_check_branch
        %312 = sbr.rel (%p310) target = $region40
      $region39: #{hifigan_forward.13} parent=23 // pred_region
        %s313 = smul.u32 4, %s20
        %p314 = scmp.lt.s32.totalorder %s19, 1
        %s315 = scalar_select %p314, %s19, 1
        %p316 = scmp.lt.s32.totalorder %s313, 7
        %s317 = scalar_select %p316, %s313, 7
        %s318 = smul.addr %s315, 8
        %s319 = sadd.s32 %s317, %s318
        %s320 = smul.addr %s319, 4
        %s321 = scalar_lea.vmem %s5, %s320
        %s322 = smul.u32 4, %s20
      $region40: #{hifigan_forward.13} parent=23 // pred_fallthru
        _
    $region24: #{hifigan_forward.13} parent=5 // pred_fallthru
      _
    %p323 = scmp.le.s32.totalorder 1, %s12
    %p324 = scmp.lt.s32.totalorder %s12, 5
    %p325 = pnand %p323, %p324
    %p326 = pneg %p325
    // Predicated region
    $region41: #{hifigan_forward.13} parent=5 // pred_check
      _
    $region42: #{hifigan_forward.13} parent=5 // pred_check_branch
      %328 = sbr.rel (%p325) target = $region44
    $region43: #{hifigan_forward.13} parent=5 // pred_region
      %s329 = ssub.s32 %s12, 1
      %p330 = scmp.lt.s32.totalorder %s22, 1
      %s331 = scalar_select %p330, %s22, 1
      %s332 = smul.u32 4, %s331
      %p333 = scmp.lt.s32.totalorder %s21, 1
      %s334 = scalar_select %p333, %s21, 1
      %p335 = scmp.lt.s32.totalorder %s332, 7
      %s336 = scalar_select %p335, %s332, 7
      %s337 = smul.addr %s334, 8
      %s338 = sadd.s32 %s336, %s337
      %s339 = smul.addr %s338, 4
      %s340 = scalar_lea.vmem %s0, %s339
      %p341 = pneg %p56
      %p342 = pneg %p53
      %s343 = smul.u32 %s22, 2
      %s344 = ssub.s32 %s343, 1
      %p345 = scmp.gt.s32.totalorder %s344, 0
      %s346 = scalar_select %p345, %s344, 0
      %s347 = smul.u32 2, %s346
      %p348 = scmp.lt.s32.totalorder %s21, 1
      %s349 = scalar_select %p348, %s21, 1
      %p350 = scmp.lt.s32.totalorder %s347, 7
      %s351 = scalar_select %p350, %s347, 7
      %s352 = smul.addr %s349, 8
      %s353 = sadd.s32 %s351, %s352
      %s354 = smul.addr %s353, 4
      %s355 = scalar_lea.vmem %s1, %s354
      %p356 = pneg %p92
      %p357 = pneg %p89
      %s358 = sadd.s32 %s22, 1
      %s359 = smul.u32 %s358, 2
      %p360 = scmp.lt.s32.totalorder %s359, 3
      %s361 = scalar_select %p360, %s359, 3
      %s362 = smul.u32 2, %s361
      %p363 = scmp.lt.s32.totalorder %s21, 1
      %s364 = scalar_select %p363, %s21, 1
      %p365 = scmp.lt.s32.totalorder %s362, 7
      %s366 = scalar_select %p365, %s362, 7
      %s367 = smul.addr %s364, 8
      %s368 = sadd.s32 %s366, %s367
      %s369 = smul.addr %s368, 4
      %s370 = scalar_lea.vmem %s2, %s369
      %p371 = pneg %p128
      %p372 = pneg %p125
      %p373 = pneg %p149
      %p374 = pneg %p146
      %p375 = pneg %p170
      %p376 = pneg %p167
      %s377 = smul.u32 4, %s22
      %p378 = scmp.lt.s32.totalorder %s21, 1
      %s379 = scalar_select %p378, %s21, 1
      %p380 = scmp.lt.s32.totalorder %s377, 7
      %s381 = scalar_select %p380, %s377, 7
      %s382 = smul.addr %s379, 8
      %s383 = sadd.s32 %s381, %s382
      %s384 = smul.addr %s383, 4
      %s385 = scalar_lea.vmem %s5, %s384
      %p386 = pneg %p198
      %p387 = pneg %p195
      %p388 = pneg %p226
      %p389 = pneg %p223
      %s390 = smul.u32 4, %s22
      %p391 = scmp.lt.s32.totalorder %s21, 1
      %s392 = scalar_select %p391, %s21, 1
      %p393 = scmp.lt.s32.totalorder %s390, 7
      %s394 = scalar_select %p393, %s390, 7
      %s395 = smul.addr %s392, 8
      %s396 = sadd.s32 %s394, %s395
      %s397 = smul.addr %s396, 4
      %s398 = scalar_lea.vmem %s6, %s397
      %p399 = scmp.lt.s32.totalorder %s22, 1
      %s400 = scalar_select %p399, %s22, 1
      %s401 = smul.u32 4, %s400
      %p402 = scmp.lt.s32.totalorder %s21, 1
      %s403 = scalar_select %p402, %s21, 1
      %p404 = scmp.lt.s32.totalorder %s401, 7
      %s405 = scalar_select %p404, %s401, 7
      %s406 = smul.addr %s403, 8
      %s407 = sadd.s32 %s405, %s406
      %s408 = smul.addr %s407, 4
      %s409 = scalar_lea.vmem %s0, %s408
      %p410 = scmp.lt.s32.totalorder %s22, 1
      %s411 = scalar_select %p410, %s22, 1
      %s412 = smul.u32 4, %s411
      %s413 = smul.u32 %s22, 2
      %s414 = ssub.s32 %s413, 1
      %p415 = scmp.gt.s32.totalorder %s414, 0
      %s416 = scalar_select %p415, %s414, 0
      %s417 = smul.u32 2, %s416
      %p418 = scmp.lt.s32.totalorder %s21, 1
      %s419 = scalar_select %p418, %s21, 1
      %p420 = scmp.lt.s32.totalorder %s417, 7
      %s421 = scalar_select %p420, %s417, 7
      %s422 = smul.addr %s419, 8
      %s423 = sadd.s32 %s421, %s422
      %s424 = smul.addr %s423, 4
      %s425 = scalar_lea.vmem %s1, %s424
      %s426 = smul.u32 %s22, 2
      %s427 = ssub.s32 %s426, 1
      %p428 = scmp.gt.s32.totalorder %s427, 0
      %s429 = scalar_select %p428, %s427, 0
      %s430 = smul.u32 2, %s429
      %s431 = sadd.s32 %s22, 1
      %s432 = smul.u32 %s431, 2
      %p433 = scmp.lt.s32.totalorder %s432, 3
      %s434 = scalar_select %p433, %s432, 3
      %s435 = smul.u32 2, %s434
      %p436 = scmp.lt.s32.totalorder %s21, 1
      %s437 = scalar_select %p436, %s21, 1
      %p438 = scmp.lt.s32.totalorder %s435, 7
      %s439 = scalar_select %p438, %s435, 7
      %s440 = smul.addr %s437, 8
      %s441 = sadd.s32 %s439, %s440
      %s442 = smul.addr %s441, 4
      %s443 = scalar_lea.vmem %s2, %s442
      %s444 = sadd.s32 %s22, 1
      %s445 = smul.u32 %s444, 2
      %p446 = scmp.lt.s32.totalorder %s445, 3
      %s447 = scalar_select %p446, %s445, 3
      %s448 = smul.u32 2, %s447
      %s449 = smul.u32 4, %s22
      %p450 = scmp.lt.s32.totalorder %s21, 1
      %s451 = scalar_select %p450, %s21, 1
      %p452 = scmp.lt.s32.totalorder %s449, 7
      %s453 = scalar_select %p452, %s449, 7
      %s454 = smul.addr %s451, 8
      %s455 = sadd.s32 %s453, %s454
      %s456 = smul.addr %s455, 4
      %s457 = scalar_lea.vmem %s5, %s456
      %s458 = smul.u32 4, %s22
      %s459 = smul.u32 4, %s22
      %p460 = scmp.lt.s32.totalorder %s21, 1
      %s461 = scalar_select %p460, %s21, 1
      %p462 = scmp.lt.s32.totalorder %s459, 7
      %s463 = scalar_select %p462, %s459, 7
      %s464 = smul.addr %s461, 8
      %s465 = sadd.s32 %s463, %s464
      %s466 = smul.addr %s465, 4
      %s467 = scalar_lea.vmem %s6, %s466
      %s468 = smul.u32 4, %s22
      %s470 = smul.u32 %s22, 32
      %v471 = vld [vmem:[%s425] sm:$0xf]
      %v472 = vld [vmem:[%s425 + $0x4] sm:$0xf]
      %s473 = ssub.s32 %s470, 16
      %v474 = vlaneseq
      %v475 = vshrl.u32 %v474, 7
      %v476 = vadd.s32 %v475, 8
      %v477 = vstv %s473
      %v478 = vadd.s32 %v477, %v475
      %v479 = vadd.s32 %v477, %v476
      %vm480 = vcmp.ge.s32.totalorder %v478, 0
      %vm481 = vcmp.ge.s32.totalorder %v479, 0
      %vm482 = vcmp.lt.s32.totalorder %v478, 64
      %vm483 = vcmp.lt.s32.totalorder %v479, 64
      %vm484 = vmand %vm480, %vm482
      %vm485 = vmand %vm481, %vm483
      %v486 = vsel %vm484, 1, 0
      %v487 = vsel %vm485, 1, 0
      %vm488 = vcmp.eq.s32.totalorder %v486, 1
      %vm489 = vcmp.eq.s32.totalorder %v487, 1
      %vm490 = vmpackc.low %vm488, %vm488
      %vm491 = vmpackc.low %vm489, %vm489
      %v492 = vsel %vm490, %v471, 0
      %v493 = vsel %vm491, %v472, 0
      %v494 = vunpack.c.l.bf16 %v492
      %v495 = vunpack.c.l.bf16 %v493
      %vm496 = vcmp.ge.f32.partialorder %v494, 0.0
      %vm497 = vcmp.ge.f32.partialorder %v495, 0.0
      %v498 = vmul.f32 %v494, 0.1
      %v499 = vmul.f32 %v495, 0.1
      %v500 = vsel %vm496, %v494, %v498
      %v501 = vsel %vm497, %v495, %v499
      %v502 = vpack.c.bf16 %v500, %v500
      %v503 = vpack.c.bf16 %v501, %v501
      %v504 = vld [vmem:[%s409] sm:$0xf]
      %v505 = vld [vmem:[%s409 + $0x4] sm:$0xf]
      %v506 = vld [vmem:[%s409 + $0x8] sm:$0xf]
      %v507 = vld [vmem:[%s409 + $0xc] sm:$0xf]
      %v508 = vadd.s32 %v475, 16
      %v509 = vadd.s32 %v475, 24
      %v510 = vstv %s470
      %v511 = vadd.s32 %v510, %v475
      %v512 = vadd.s32 %v510, %v476
      %v513 = vadd.s32 %v510, %v508
      %v514 = vadd.s32 %v510, %v509
      %vm515 = vcmp.ge.s32.totalorder %v511, 0
      %vm516 = vcmp.ge.s32.totalorder %v512, 0
      %vm517 = vcmp.ge.s32.totalorder %v513, 0
      %vm518 = vcmp.ge.s32.totalorder %v514, 0
      %vm519 = vcmp.lt.s32.totalorder %v511, 64
      %vm520 = vcmp.lt.s32.totalorder %v512, 64
      %vm521 = vcmp.lt.s32.totalorder %v513, 64
      %vm522 = vcmp.lt.s32.totalorder %v514, 64
      %vm523 = vmand %vm515, %vm519
      %vm524 = vmand %vm516, %vm520
      %vm525 = vmand %vm517, %vm521
      %vm526 = vmand %vm518, %vm522
      %v527 = vsel %vm523, 1, 0
      %v528 = vsel %vm524, 1, 0
      %v529 = vsel %vm525, 1, 0
      %v530 = vsel %vm526, 1, 0
      %vm531 = vcmp.eq.s32.totalorder %v527, 1
      %vm532 = vcmp.eq.s32.totalorder %v528, 1
      %vm533 = vcmp.eq.s32.totalorder %v529, 1
      %vm534 = vcmp.eq.s32.totalorder %v530, 1
      %vm535 = vmpackc.low %vm531, %vm531
      %vm536 = vmpackc.low %vm532, %vm532
      %vm537 = vmpackc.low %vm533, %vm533
      %vm538 = vmpackc.low %vm534, %vm534
      %v539 = vsel %vm535, %v504, 0
      %v540 = vsel %vm536, %v505, 0
      %v541 = vsel %vm537, %v506, 0
      %v542 = vsel %vm538, %v507, 0
      %v543 = vunpack.c.l.bf16 %v539
      %v544 = vunpack.c.l.bf16 %v540
      %v545 = vunpack.c.l.bf16 %v541
      %v546 = vunpack.c.l.bf16 %v542
      %vm547 = vcmp.ge.f32.partialorder %v543, 0.0
      %vm548 = vcmp.ge.f32.partialorder %v544, 0.0
      %vm549 = vcmp.ge.f32.partialorder %v545, 0.0
      %vm550 = vcmp.ge.f32.partialorder %v546, 0.0
      %v551 = vmul.f32 %v543, 0.1
      %v552 = vmul.f32 %v544, 0.1
      %v553 = vmul.f32 %v545, 0.1
      %v554 = vmul.f32 %v546, 0.1
      %v555 = vsel %vm547, %v543, %v551
      %v556 = vsel %vm548, %v544, %v552
      %v557 = vsel %vm549, %v545, %v553
      %v558 = vsel %vm550, %v546, %v554
      %v559 = vpack.c.bf16 %v555, %v555
      %v560 = vpack.c.bf16 %v556, %v556
      %v561 = vpack.c.bf16 %v557, %v557
      %v562 = vpack.c.bf16 %v558, %v558
      %v563 = vld [vmem:[%s443] sm:$0xf]
      %v564 = vld [vmem:[%s443 + $0x4] sm:$0xf]
      %s565 = sadd.s32 %s470, 32
      %v566 = vstv %s565
      %v567 = vadd.s32 %v566, %v475
      %v568 = vadd.s32 %v566, %v476
      %vm569 = vcmp.ge.s32.totalorder %v567, 0
      %vm570 = vcmp.ge.s32.totalorder %v568, 0
      %vm571 = vcmp.lt.s32.totalorder %v567, 64
      %vm572 = vcmp.lt.s32.totalorder %v568, 64
      %vm573 = vmand %vm569, %vm571
      %vm574 = vmand %vm570, %vm572
      %v575 = vsel %vm573, 1, 0
      %v576 = vsel %vm574, 1, 0
      %vm577 = vcmp.eq.s32.totalorder %v575, 1
      %vm578 = vcmp.eq.s32.totalorder %v576, 1
      %vm579 = vmpackc.low %vm577, %vm577
      %vm580 = vmpackc.low %vm578, %vm578
      %v581 = vsel %vm579, %v563, 0
      %v582 = vsel %vm580, %v564, 0
      %v583 = vunpack.c.l.bf16 %v581
      %v584 = vunpack.c.l.bf16 %v582
      %vm585 = vcmp.ge.f32.partialorder %v583, 0.0
      %vm586 = vcmp.ge.f32.partialorder %v584, 0.0
      %v587 = vmul.f32 %v583, 0.1
      %v588 = vmul.f32 %v584, 0.1
      %v589 = vsel %vm585, %v583, %v587
      %v590 = vsel %vm586, %v584, %v588
      %v591 = vpack.c.bf16 %v589, %v589
      %v592 = vpack.c.bf16 %v590, %v590
      %v595 = vunpack.c.l.b16 %v502
      %v596 = vunpack.c.l.b16 %v503
      %v597 = vpack.c.b16 %v596, %v595
      %v602 = vunpack.c.l.b16 %v559
      %v603 = vunpack.c.l.b16 %v560
      %v604 = vunpack.c.l.b16 %v561
      %v605 = vunpack.c.l.b16 %v562
      %v606 = vpack.c.b16 %v603, %v602
      %v607 = vpack.c.b16 %v605, %v604
      %v610 = vunpack.c.l.b16 %v591
      %v611 = vunpack.c.l.b16 %v592
      %v612 = vpack.c.b16 %v611, %v610
      %vm613 = vsmask.f32 7424
      %v615 = vshll.u32 %v606, 16
      %v617 = vrot.slane %v615, 1
      %v618 = vshrl.u32 %v606, 16
      %v620 = vor.u32 %v618, %v617
      %v622 = vshll.u32 %v607, 16
      %v624 = vrot.slane %v622, 1
      %v625 = vsel %vm613, %v620, %v624
      %v626 = vshrl.u32 %v607, 16
      %v628 = vor.u32 %v626, %v624
      %629 = vrot.lane.b32.xlu0 %v617, 8
      %v630 = vpop.permute.xlu0 %629
      %631 = vrot.lane.b32.xlu0 %v625, 8
      %v632 = vpop.permute.xlu0 %631
      %633 = vrot.lane.b32.xlu0 %v628, 8
      %v634 = vpop.permute.xlu0 %633
      %vm635 = vcmask 1046528
      %v636 = vrot.slane %v606, 1
      %v637 = vrot.slane %v607, 1
      %v638 = vsel %vm635, %v636, %v637
      %v639 = vrot.slane %v612, 1
      %v640 = vsel %vm635, %v637, %v639
      %641 = vrot.lane.b32.xlu0 %v636, 16
      %v642 = vpop.permute.xlu0 %641
      %643 = vrot.lane.b32.xlu0 %v638, 16
      %v644 = vpop.permute.xlu0 %643
      %645 = vrot.lane.b32.xlu0 %v640, 16
      %v646 = vpop.permute.xlu0 %645
      %vm647 = vcmask 64512
      %v650 = vsel %vm647, %v597, %v630
      %v652 = vsel %vm647, %v606, %v632
      %v654 = vsel %vm647, %v607, %v634
      %vm655 = vcmask 130048
      %v657 = vsel %vm655, %v650, %v642
      %v659 = vsel %vm655, %v652, %v644
      %v661 = vsel %vm655, %v654, %v646
      %v662 = vld [vmem:[%s3] sm:$0xf]
      %v663 = vld [vmem:[%s3 + $0x4] sm:$0xf]
      %v664 = vld [vmem:[%s3 + $0x8] sm:$0xf]
      %v665 = vld [vmem:[%s4] sm:$0x1]
      %v667 = vperm.slane %v665, 0
      %vm669 = vsmask.f32 256
      %v670 = vshrl.u32 %v657, 16
      %v672 = vrot.slane %v670, 7
      %v673 = vshrl.u32 %v659, 16
      %v675 = vrot.slane %v673, 7
      %v676 = vshll.u32 %v659, 16
      %v678 = vor.u32 %v675, %v676
      %v679 = vsel %vm669, %v672, %v678
      %v680 = vshrl.u32 %v661, 16
      %v682 = vrot.slane %v680, 7
      %v683 = vshll.u32 %v661, 16
      %v685 = vor.u32 %v682, %v683
      %v686 = vsel %vm669, %v675, %v685
      %v690 = vunpack.c.l.b16 %v662
      %v691 = vunpack.c.l.b16 %v663
      %v692 = vunpack.c.l.b16 %v664
      %v693 = vpack.c.b16 %v691, %v690
      %v694 = vpack.c.b16 %v692, %v692
      %vm696 = vcmask 195584
      %v698 = vsel %vm696, %v679, 0
      %v701 = vsel %vm696, %v686, 0
      %vm703 = vcmask 1043456
      %v705 = vsel %vm703, %v694, 0
      %707 = vmatpush.bf16.msra.mxu0 0
      %708 = vmatpush.bf16.msra.mxu0 0
      %709 = vmatpush.bf16.msra.mxu0 0
      %710 = vmatpush.bf16.msra.mxu0 0
      %711 = vmatpush.bf16.msra.mxu0 0
      %712 = vmatpush.bf16.msra.mxu0 0
      %713 = vmatpush.bf16.msra.mxu0 %v705
      %714 = vmatpush.bf16.msra.mxu0 %v693
      %715 = vmatmul.bf16.gmra.mxu0 %v698
      %v716 = vpop.f32.mrf.mxu0
      %v717 = vadd.f32 %v667, %v716
      %v718 = vpop.f32.mrf.mxu0
      %v719 = vadd.f32 %v667, %v718
      %720 = vmatmul.bf16.gmra.mxu0 %v701
      %v721 = vpop.f32.mrf.mxu0
      %v722 = vadd.f32 %v667, %v721
      %v723 = vpop.f32.mrf.mxu0
      %v724 = vadd.f32 %v667, %v723
      %725 = vdwg.mxu0
      %v726 = vld [vmem:[%s457] sm:$0xf]
      %v727 = vld [vmem:[%s457 + $0x4] sm:$0xf]
      %v728 = vld [vmem:[%s457 + $0x8] sm:$0xf]
      %v729 = vld [vmem:[%s457 + $0xc] sm:$0xf]
      %v730 = vunpack.c.l.bf16 %v726
      %v731 = vunpack.c.l.bf16 %v727
      %v732 = vunpack.c.l.bf16 %v728
      %v733 = vunpack.c.l.bf16 %v729
      %v734 = vadd.f32 %v717, %v730
      %v735 = vadd.f32 %v719, %v731
      %v736 = vadd.f32 %v722, %v732
      %v737 = vadd.f32 %v724, %v733
      %v738 = vpack.c.bf16 %v734, %v734
      %v739 = vpack.c.bf16 %v735, %v735
      %v740 = vpack.c.bf16 %v736, %v736
      %v741 = vpack.c.bf16 %v737, %v737
      %vm742 = vcmask 60416
      %743 = vst.msk [vmem:[%s467] sm:$0xf] %vm742, %v738
      %744 = vst.msk [vmem:[%s467 + $0x4] sm:$0xf] %vm742, %v739
      %745 = vst.msk [vmem:[%s467 + $0x8] sm:$0xf] %vm742, %v740
      %746 = vst.msk [vmem:[%s467 + $0xc] sm:$0xf] %vm742, %v741
      %s747 = smul.u32 4, %s22
      %p748 = scmp.lt.s32.totalorder %s21, 1
      %s749 = scalar_select %p748, %s21, 1
      %p750 = scmp.lt.s32.totalorder %s747, 7
      %s751 = scalar_select %p750, %s747, 7
      %s752 = smul.addr %s749, 8
      %s753 = sadd.s32 %s751, %s752
      %s754 = smul.addr %s753, 4
      %s755 = scalar_lea.vmem %s6, %s754
      // Predicated region
      $region45: #{hifigan_forward.13} parent=43 // pred_check
        %p756 = pneg %p223
      $region46: #{hifigan_forward.13} parent=43 // pred_check_branch
        %758 = sbr.rel (%p756) target = $region48
      $region47: #{hifigan_forward.13} parent=43 // pred_region
        %s759 = smul.u32 4, %s22
      $region48: #{hifigan_forward.13} parent=43 // pred_fallthru
        _
    $region44: #{hifigan_forward.13} parent=5 // pred_fallthru
      _
    %p760 = scmp.le.s32.totalorder 2, %s12
    // Predicated region
    $region49: #{hifigan_forward.13} parent=5 // pred_check
      %p761 = pneg %p760
    $region50: #{hifigan_forward.13} parent=5 // pred_check_branch
      %763 = sbr.rel (%p761) target = $region52
    $region51: #{hifigan_forward.13} parent=5 // pred_region
      %s764 = ssub.s32 %s12, 2
      // Predicated region
      $region53: #{hifigan_forward.13} parent=51 // pred_check
        %p765 = pneg %p229
      $region54: #{hifigan_forward.13} parent=51 // pred_check_branch
        %767 = sbr.rel (%p765) target = $region56
      $region55: #{hifigan_forward.13} parent=51 // pred_region
        %s768 = smul.u32 4, %s24
        %p769 = scmp.lt.s32.totalorder %s23, 1
        %s770 = scalar_select %p769, %s23, 1
        %p771 = scmp.lt.s32.totalorder %s768, 7
        %s772 = scalar_select %p771, %s768, 7
        %s773 = smul.addr %s770, 8
        %s774 = sadd.s32 %s772, %s773
        %s775 = smul.addr %s774, 4
        %s776 = scalar_lea.vmem %s6, %s775
      $region56: #{hifigan_forward.13} parent=51 // pred_fallthru
        _
    $region52: #{hifigan_forward.13} parent=5 // pred_fallthru
      _
  $region6: #{hifigan_forward.13} parent=0 // loop_footer
    %s16 = sadd.s32 1, %s12
  $region7: #{hifigan_forward.13} parent=0 // loop_footer_branch
    %11 = sbr.rel target = $region3
  $region8: #{hifigan_forward.13} parent=0 // loop_exit
    _

// kernel: hifigan_forward.14
$region0: #{hifigan_forward.14}
  #allocation0 [shape = 'u32[]', space=smem, size = 0x4, offset = 0x4, fixed_abs, tag = 'smem constant byte address 0x4 - core index']
  #allocation1 [shape = 'u32[72,128]{1,0:T(1,128)}', space=vmem, size = 0x9000, scoped, tag = 'internal scratch']
  %s0 = inlined_call_operand.vmem [shape: bf16[2,64,8], index: 0, kind: input, shape index: {}, may-alias: {0,1,2,5}]
  %s1 = inlined_call_operand.vmem [shape: bf16[2,64,8], index: 1, kind: input, shape index: {}, may-alias: {0,1,2,5}]
  %s2 = inlined_call_operand.vmem [shape: bf16[2,64,8], index: 2, kind: input, shape index: {}, may-alias: {0,1,2,5}]
  %s3 = inlined_call_operand.vmem [shape: bf16[24,8], index: 3, kind: input, shape index: {}]
  %s4 = inlined_call_operand.vmem [shape: f32[1,8], index: 4, kind: input, shape index: {}]
  %s5 = inlined_call_operand.vmem [shape: bf16[2,64,8], index: 5, kind: input, shape index: {}, may-alias: {0,1,2,5}]
  %s6 = inlined_call_operand.vmem [shape: bf16[2,64,8], index: 6, kind: output, shape index: {}]
  %s7 = sld [smem:[#allocation0]]
  $region57: #{hifigan_forward.14} parent=0
    _
  %s9 = ssub.s32 1, %s7
  %s10 = scalar_select 0, %s9, %s7
  loop: start=0, step=1, limit=6
  $region2: #{hifigan_forward.14} parent=0 // loop_pre_header
    _
  $region3: #{hifigan_forward.14} parent=0 // loop_header
    %s12 = sphi 0, %s16
    %p13 = scmp.ge.s32.totalorder %s12, 6
    %s19 = sphi 0, %s31
    %s20 = sphi 0, %s27
    %s21 = sphi 0, %s19
    %s22 = sphi 0, %s20
    %s23 = sphi 0, %s21
    %s24 = sphi 0, %s22
    %s40 = sphi 0, %s42
    %s43 = sphi 0, %s40
    %s44 = sphi 0, %s43
    %s60 = sphi 0, %s44
    %s76 = sphi 0, %s78
    %s79 = sphi 0, %s76
    %s80 = sphi 0, %s79
    %s96 = sphi 0, %s80
    %s112 = sphi 0, %s114
    %s115 = sphi 0, %s112
    %s116 = sphi 0, %s115
    %s132 = sphi 0, %s116
    %s136 = sphi 0, %s136
    %s138 = sphi 0, %s136
    %s139 = sphi 0, %s138
    %s153 = sphi 0, %s139
    %s157 = sphi 0, %s157
    %s159 = sphi 0, %s157
    %s160 = sphi 0, %s159
    %s174 = sphi 0, %s160
    %s182 = sphi 0, %s184
    %s185 = sphi 0, %s182
    %s186 = sphi 0, %s185
    %s202 = sphi 0, %s186
    %s210 = sphi 0, %s212
    %s213 = sphi 0, %s210
    %s214 = sphi 0, %s213
    %s230 = sphi 0, %s214
  $region4: #{hifigan_forward.14} parent=0 // loop_header_branch
    %15 = sbr.rel (%p13) target = $region8
  $region5: #{hifigan_forward.14} parent=0 // loop_body
    %s17 = ssub.s32 %s12, 1
    %s18 = ssub.s32 %s12, 2
    %s25 = sadd.s32 1, %s20
    %p26 = scmp.ge.s32.totalorder %s25, 2
    %s27 = scalar_select %p26, 0, %s25
    %s28 = sadd.s32 1, %s19
    %s29 = scalar_select %p26, %s28, %s19
    %p30 = scmp.ge.s32.totalorder %s29, 2
    %s31 = scalar_select %p30, 0, %s29
    %p32 = scmp.lt.s32.totalorder %s20, 1
    %s33 = scalar_select %p32, %s20, 1
    %p34 = scmp.lt.s32.totalorder %s27, 1
    %s35 = scalar_select %p34, %s27, 1
    %s36 = ssub.s32 %s19, %s31
    %s37 = ssub.s32 %s33, %s35
    %s38 = sor.u32 %s36, %s37
    %p39 = scmp.eq.s32.totalorder %s38, 0
    %s41 = sadd.s32 %s40, 1
    %s42 = scalar_select %p39, %s40, %s41
    %p45 = pneg %p39
    %p46 = scmp.eq.s32.totalorder %s12, 3
    %p47 = por %p45, %p46
    %p48 = scmp.ne.s32.totalorder %s40, %s43
    %p49 = scmp.eq.s32.totalorder %s12, 0
    %p50 = por %p48, %p49
    %p51 = scmp.ne.s32.totalorder %s40, %s43
    %p52 = scmp.eq.s32.totalorder %s17, 3
    %p53 = por %p51, %p52
    %p54 = scmp.ne.s32.totalorder %s43, %s44
    %p55 = scmp.eq.s32.totalorder %s17, 0
    %p56 = por %p54, %p55
    %p57 = scmp.ne.s32.totalorder %s43, %s44
    %p58 = scmp.eq.s32.totalorder %s18, 3
    %p59 = por %p57, %p58
    %p61 = scmp.ne.s32.totalorder %s44, %s60
    %p62 = scmp.eq.s32.totalorder %s18, 0
    %p63 = por %p61, %p62
    %s64 = smul.u32 %s20, 2
    %s65 = ssub.s32 %s64, 1
    %p66 = scmp.gt.s32.totalorder %s65, 0
    %s67 = scalar_select %p66, %s65, 0
    %s68 = smul.u32 %s27, 2
    %s69 = ssub.s32 %s68, 1
    %p70 = scmp.gt.s32.totalorder %s69, 0
    %s71 = scalar_select %p70, %s69, 0
    %s72 = ssub.s32 %s19, %s31
    %s73 = ssub.s32 %s67, %s71
    %s74 = sor.u32 %s72, %s73
    %p75 = scmp.eq.s32.totalorder %s74, 0
    %s77 = sadd.s32 %s76, 1
    %s78 = scalar_select %p75, %s76, %s77
    %p81 = pneg %p75
    %p82 = scmp.eq.s32.totalorder %s12, 3
    %p83 = por %p81, %p82
    %p84 = scmp.ne.s32.totalorder %s76, %s79
    %p85 = scmp.eq.s32.totalorder %s12, 0
    %p86 = por %p84, %p85
    %p87 = scmp.ne.s32.totalorder %s76, %s79
    %p88 = scmp.eq.s32.totalorder %s17, 3
    %p89 = por %p87, %p88
    %p90 = scmp.ne.s32.totalorder %s79, %s80
    %p91 = scmp.eq.s32.totalorder %s17, 0
    %p92 = por %p90, %p91
    %p93 = scmp.ne.s32.totalorder %s79, %s80
    %p94 = scmp.eq.s32.totalorder %s18, 3
    %p95 = por %p93, %p94
    %p97 = scmp.ne.s32.totalorder %s80, %s96
    %p98 = scmp.eq.s32.totalorder %s18, 0
    %p99 = por %p97, %p98
    %s100 = sadd.s32 %s20, 1
    %s101 = smul.u32 %s100, 2
    %p102 = scmp.lt.s32.totalorder %s101, 3
    %s103 = scalar_select %p102, %s101, 3
    %s104 = sadd.s32 %s27, 1
    %s105 = smul.u32 %s104, 2
    %p106 = scmp.lt.s32.totalorder %s105, 3
    %s107 = scalar_select %p106, %s105, 3
    %s108 = ssub.s32 %s19, %s31
    %s109 = ssub.s32 %s103, %s107
    %s110 = sor.u32 %s108, %s109
    %p111 = scmp.eq.s32.totalorder %s110, 0
    %s113 = sadd.s32 %s112, 1
    %s114 = scalar_select %p111, %s112, %s113
    %p117 = pneg %p111
    %p118 = scmp.eq.s32.totalorder %s12, 3
    %p119 = por %p117, %p118
    %p120 = scmp.ne.s32.totalorder %s112, %s115
    %p121 = scmp.eq.s32.totalorder %s12, 0
    %p122 = por %p120, %p121
    %p123 = scmp.ne.s32.totalorder %s112, %s115
    %p124 = scmp.eq.s32.totalorder %s17, 3
    %p125 = por %p123, %p124
    %p126 = scmp.ne.s32.totalorder %s115, %s116
    %p127 = scmp.eq.s32.totalorder %s17, 0
    %p128 = por %p126, %p127
    %p129 = scmp.ne.s32.totalorder %s115, %s116
    %p130 = scmp.eq.s32.totalorder %s18, 3
    %p131 = por %p129, %p130
    %p133 = scmp.ne.s32.totalorder %s116, %s132
    %p134 = scmp.eq.s32.totalorder %s18, 0
    %p135 = por %p133, %p134
    %s137 = sadd.s32 %s136, 1
    %p140 = scmp.eq.s32.totalorder %s12, 3
    %p141 = scmp.ne.s32.totalorder %s136, %s138
    %p142 = scmp.eq.s32.totalorder %s12, 0
    %p143 = por %p141, %p142
    %p144 = scmp.ne.s32.totalorder %s136, %s138
    %p145 = scmp.eq.s32.totalorder %s17, 3
    %p146 = por %p144, %p145
    %p147 = scmp.ne.s32.totalorder %s138, %s139
    %p148 = scmp.eq.s32.totalorder %s17, 0
    %p149 = por %p147, %p148
    %p150 = scmp.ne.s32.totalorder %s138, %s139
    %p151 = scmp.eq.s32.totalorder %s18, 3
    %p152 = por %p150, %p151
    %p154 = scmp.ne.s32.totalorder %s139, %s153
    %p155 = scmp.eq.s32.totalorder %s18, 0
    %p156 = por %p154, %p155
    %s158 = sadd.s32 %s157, 1
    %p161 = scmp.eq.s32.totalorder %s12, 3
    %p162 = scmp.ne.s32.totalorder %s157, %s159
    %p163 = scmp.eq.s32.totalorder %s12, 0
    %p164 = por %p162, %p163
    %p165 = scmp.ne.s32.totalorder %s157, %s159
    %p166 = scmp.eq.s32.totalorder %s17, 3
    %p167 = por %p165, %p166
    %p168 = scmp.ne.s32.totalorder %s159, %s160
    %p169 = scmp.eq.s32.totalorder %s17, 0
    %p170 = por %p168, %p169
    %p171 = scmp.ne.s32.totalorder %s159, %s160
    %p172 = scmp.eq.s32.totalorder %s18, 3
    %p173 = por %p171, %p172
    %p175 = scmp.ne.s32.totalorder %s160, %s174
    %p176 = scmp.eq.s32.totalorder %s18, 0
    %p177 = por %p175, %p176
    %s178 = ssub.s32 %s19, %s31
    %s179 = ssub.s32 %s20, %s27
    %s180 = sor.u32 %s178, %s179
    %p181 = scmp.eq.s32.totalorder %s180, 0
    %s183 = sadd.s32 %s182, 1
    %s184 = scalar_select %p181, %s182, %s183
    %p187 = pneg %p181
    %p188 = scmp.eq.s32.totalorder %s12, 3
    %p189 = por %p187, %p188
    %p190 = scmp.ne.s32.totalorder %s182, %s185
    %p191 = scmp.eq.s32.totalorder %s12, 0
    %p192 = por %p190, %p191
    %p193 = scmp.ne.s32.totalorder %s182, %s185
    %p194 = scmp.eq.s32.totalorder %s17, 3
    %p195 = por %p193, %p194
    %p196 = scmp.ne.s32.totalorder %s185, %s186
    %p197 = scmp.eq.s32.totalorder %s17, 0
    %p198 = por %p196, %p197
    %p199 = scmp.ne.s32.totalorder %s185, %s186
    %p200 = scmp.eq.s32.totalorder %s18, 3
    %p201 = por %p199, %p200
    %p203 = scmp.ne.s32.totalorder %s186, %s202
    %p204 = scmp.eq.s32.totalorder %s18, 0
    %p205 = por %p203, %p204
    %s206 = ssub.s32 %s19, %s31
    %s207 = ssub.s32 %s20, %s27
    %s208 = sor.u32 %s206, %s207
    %p209 = scmp.eq.s32.totalorder %s208, 0
    %s211 = sadd.s32 %s210, 1
    %s212 = scalar_select %p209, %s210, %s211
    %p215 = pneg %p209
    %p216 = scmp.eq.s32.totalorder %s12, 3
    %p217 = por %p215, %p216
    %p218 = scmp.ne.s32.totalorder %s210, %s213
    %p219 = scmp.eq.s32.totalorder %s12, 0
    %p220 = por %p218, %p219
    %p221 = scmp.ne.s32.totalorder %s210, %s213
    %p222 = scmp.eq.s32.totalorder %s17, 3
    %p223 = por %p221, %p222
    %p224 = scmp.ne.s32.totalorder %s213, %s214
    %p225 = scmp.eq.s32.totalorder %s17, 0
    %p226 = por %p224, %p225
    %p227 = scmp.ne.s32.totalorder %s213, %s214
    %p228 = scmp.eq.s32.totalorder %s18, 3
    %p229 = por %p227, %p228
    %p231 = scmp.ne.s32.totalorder %s214, %s230
    %p232 = scmp.eq.s32.totalorder %s18, 0
    %p233 = por %p231, %p232
    %p234 = scmp.le.s32.totalorder 1, %s12
    %p235 = scmp.lt.s32.totalorder %s12, 5
    %p236 = pnand %p234, %p235
    %p237 = pneg %p236
    // Predicated region
    $region9: #{hifigan_forward.14} parent=5 // pred_check
      _
    $region10: #{hifigan_forward.14} parent=5 // pred_check_branch
      %239 = sbr.rel (%p236) target = $region12
    $region11: #{hifigan_forward.14} parent=5 // pred_region
      %s240 = ssub.s32 %s12, 1
      // Predicated region
      $region13: #{hifigan_forward.14} parent=11 // pred_check
        %p241 = pneg %p149
      $region14: #{hifigan_forward.14} parent=11 // pred_check_branch
        %243 = sbr.rel (%p241) target = $region16
      $region15: #{hifigan_forward.14} parent=11 // pred_region
        _
      $region16: #{hifigan_forward.14} parent=11 // pred_fallthru
        _
      // Predicated region
      $region17: #{hifigan_forward.14} parent=11 // pred_check
        %p244 = pneg %p170
      $region18: #{hifigan_forward.14} parent=11 // pred_check_branch
        %246 = sbr.rel (%p244) target = $region20
      $region19: #{hifigan_forward.14} parent=11 // pred_region
        _
      $region20: #{hifigan_forward.14} parent=11 // pred_fallthru
        _
    $region12: #{hifigan_forward.14} parent=5 // pred_fallthru
      _
    %p247 = scmp.lt.s32.totalorder %s12, 4
    // Predicated region
    $region21: #{hifigan_forward.14} parent=5 // pred_check
      %p248 = pneg %p247
    $region22: #{hifigan_forward.14} parent=5 // pred_check_branch
      %250 = sbr.rel (%p248) target = $region24
    $region23: #{hifigan_forward.14} parent=5 // pred_region
      // Predicated region
      $region25: #{hifigan_forward.14} parent=23 // pred_check
        %p251 = pneg %p50
      $region26: #{hifigan_forward.14} parent=23 // pred_check_branch
        %253 = sbr.rel (%p251) target = $region28
      $region27: #{hifigan_forward.14} parent=23 // pred_region
        %p254 = scmp.lt.s32.totalorder %s20, 1
        %s255 = scalar_select %p254, %s20, 1
        %s256 = smul.u32 4, %s255
        %p257 = scmp.lt.s32.totalorder %s19, 1
        %s258 = scalar_select %p257, %s19, 1
        %p259 = scmp.lt.s32.totalorder %s256, 7
        %s260 = scalar_select %p259, %s256, 7
        %s261 = smul.addr %s258, 8
        %s262 = sadd.s32 %s260, %s261
        %s263 = smul.addr %s262, 4
        %s264 = scalar_lea.vmem %s0, %s263
        %p265 = scmp.lt.s32.totalorder %s20, 1
        %s266 = scalar_select %p265, %s20, 1
        %s267 = smul.u32 4, %s266
      $region28: #{hifigan_forward.14} parent=23 // pred_fallthru
        _
      // Predicated region
      $region29: #{hifigan_forward.14} parent=23 // pred_check
        %p268 = pneg %p86
      $region30: #{hifigan_forward.14} parent=23 // pred_check_branch
        %270 = sbr.rel (%p268) target = $region32
      $region31: #{hifigan_forward.14} parent=23 // pred_region
        %s271 = smul.u32 %s20, 2
        %s272 = ssub.s32 %s271, 1
        %p273 = scmp.gt.s32.totalorder %s272, 0
        %s274 = scalar_select %p273, %s272, 0
        %s275 = smul.u32 2, %s274
        %p276 = scmp.lt.s32.totalorder %s19, 1
        %s277 = scalar_select %p276, %s19, 1
        %p278 = scmp.lt.s32.totalorder %s275, 7
        %s279 = scalar_select %p278, %s275, 7
        %s280 = smul.addr %s277, 8
        %s281 = sadd.s32 %s279, %s280
        %s282 = smul.addr %s281, 4
        %s283 = scalar_lea.vmem %s1, %s282
        %s284 = smul.u32 %s20, 2
        %s285 = ssub.s32 %s284, 1
        %p286 = scmp.gt.s32.totalorder %s285, 0
        %s287 = scalar_select %p286, %s285, 0
        %s288 = smul.u32 2, %s287
      $region32: #{hifigan_forward.14} parent=23 // pred_fallthru
        _
      // Predicated region
      $region33: #{hifigan_forward.14} parent=23 // pred_check
        %p289 = pneg %p122
      $region34: #{hifigan_forward.14} parent=23 // pred_check_branch
        %291 = sbr.rel (%p289) target = $region36
      $region35: #{hifigan_forward.14} parent=23 // pred_region
        %s292 = sadd.s32 %s20, 1
        %s293 = smul.u32 %s292, 2
        %p294 = scmp.lt.s32.totalorder %s293, 3
        %s295 = scalar_select %p294, %s293, 3
        %s296 = smul.u32 2, %s295
        %p297 = scmp.lt.s32.totalorder %s19, 1
        %s298 = scalar_select %p297, %s19, 1
        %p299 = scmp.lt.s32.totalorder %s296, 7
        %s300 = scalar_select %p299, %s296, 7
        %s301 = smul.addr %s298, 8
        %s302 = sadd.s32 %s300, %s301
        %s303 = smul.addr %s302, 4
        %s304 = scalar_lea.vmem %s2, %s303
        %s305 = sadd.s32 %s20, 1
        %s306 = smul.u32 %s305, 2
        %p307 = scmp.lt.s32.totalorder %s306, 3
        %s308 = scalar_select %p307, %s306, 3
        %s309 = smul.u32 2, %s308
      $region36: #{hifigan_forward.14} parent=23 // pred_fallthru
        _
      // Predicated region
      $region37: #{hifigan_forward.14} parent=23 // pred_check
        %p310 = pneg %p192
      $region38: #{hifigan_forward.14} parent=23 // pred_check_branch
        %312 = sbr.rel (%p310) target = $region40
      $region39: #{hifigan_forward.14} parent=23 // pred_region
        %s313 = smul.u32 4, %s20
        %p314 = scmp.lt.s32.totalorder %s19, 1
        %s315 = scalar_select %p314, %s19, 1
        %p316 = scmp.lt.s32.totalorder %s313, 7
        %s317 = scalar_select %p316, %s313, 7
        %s318 = smul.addr %s315, 8
        %s319 = sadd.s32 %s317, %s318
        %s320 = smul.addr %s319, 4
        %s321 = scalar_lea.vmem %s5, %s320
        %s322 = smul.u32 4, %s20
      $region40: #{hifigan_forward.14} parent=23 // pred_fallthru
        _
    $region24: #{hifigan_forward.14} parent=5 // pred_fallthru
      _
    %p323 = scmp.le.s32.totalorder 1, %s12
    %p324 = scmp.lt.s32.totalorder %s12, 5
    %p325 = pnand %p323, %p324
    %p326 = pneg %p325
    // Predicated region
    $region41: #{hifigan_forward.14} parent=5 // pred_check
      _
    $region42: #{hifigan_forward.14} parent=5 // pred_check_branch
      %328 = sbr.rel (%p325) target = $region44
    $region43: #{hifigan_forward.14} parent=5 // pred_region
      %s329 = ssub.s32 %s12, 1
      %p330 = scmp.lt.s32.totalorder %s22, 1
      %s331 = scalar_select %p330, %s22, 1
      %s332 = smul.u32 4, %s331
      %p333 = scmp.lt.s32.totalorder %s21, 1
      %s334 = scalar_select %p333, %s21, 1
      %p335 = scmp.lt.s32.totalorder %s332, 7
      %s336 = scalar_select %p335, %s332, 7
      %s337 = smul.addr %s334, 8
      %s338 = sadd.s32 %s336, %s337
      %s339 = smul.addr %s338, 4
      %s340 = scalar_lea.vmem %s0, %s339
      %p341 = pneg %p56
      %p342 = pneg %p53
      %s343 = smul.u32 %s22, 2
      %s344 = ssub.s32 %s343, 1
      %p345 = scmp.gt.s32.totalorder %s344, 0
      %s346 = scalar_select %p345, %s344, 0
      %s347 = smul.u32 2, %s346
      %p348 = scmp.lt.s32.totalorder %s21, 1
      %s349 = scalar_select %p348, %s21, 1
      %p350 = scmp.lt.s32.totalorder %s347, 7
      %s351 = scalar_select %p350, %s347, 7
      %s352 = smul.addr %s349, 8
      %s353 = sadd.s32 %s351, %s352
      %s354 = smul.addr %s353, 4
      %s355 = scalar_lea.vmem %s1, %s354
      %p356 = pneg %p92
      %p357 = pneg %p89
      %s358 = sadd.s32 %s22, 1
      %s359 = smul.u32 %s358, 2
      %p360 = scmp.lt.s32.totalorder %s359, 3
      %s361 = scalar_select %p360, %s359, 3
      %s362 = smul.u32 2, %s361
      %p363 = scmp.lt.s32.totalorder %s21, 1
      %s364 = scalar_select %p363, %s21, 1
      %p365 = scmp.lt.s32.totalorder %s362, 7
      %s366 = scalar_select %p365, %s362, 7
      %s367 = smul.addr %s364, 8
      %s368 = sadd.s32 %s366, %s367
      %s369 = smul.addr %s368, 4
      %s370 = scalar_lea.vmem %s2, %s369
      %p371 = pneg %p128
      %p372 = pneg %p125
      %p373 = pneg %p149
      %p374 = pneg %p146
      %p375 = pneg %p170
      %p376 = pneg %p167
      %s377 = smul.u32 4, %s22
      %p378 = scmp.lt.s32.totalorder %s21, 1
      %s379 = scalar_select %p378, %s21, 1
      %p380 = scmp.lt.s32.totalorder %s377, 7
      %s381 = scalar_select %p380, %s377, 7
      %s382 = smul.addr %s379, 8
      %s383 = sadd.s32 %s381, %s382
      %s384 = smul.addr %s383, 4
      %s385 = scalar_lea.vmem %s5, %s384
      %p386 = pneg %p198
      %p387 = pneg %p195
      %p388 = pneg %p226
      %p389 = pneg %p223
      %s390 = smul.u32 4, %s22
      %p391 = scmp.lt.s32.totalorder %s21, 1
      %s392 = scalar_select %p391, %s21, 1
      %p393 = scmp.lt.s32.totalorder %s390, 7
      %s394 = scalar_select %p393, %s390, 7
      %s395 = smul.addr %s392, 8
      %s396 = sadd.s32 %s394, %s395
      %s397 = smul.addr %s396, 4
      %s398 = scalar_lea.vmem %s6, %s397
      %p399 = scmp.lt.s32.totalorder %s22, 1
      %s400 = scalar_select %p399, %s22, 1
      %s401 = smul.u32 4, %s400
      %p402 = scmp.lt.s32.totalorder %s21, 1
      %s403 = scalar_select %p402, %s21, 1
      %p404 = scmp.lt.s32.totalorder %s401, 7
      %s405 = scalar_select %p404, %s401, 7
      %s406 = smul.addr %s403, 8
      %s407 = sadd.s32 %s405, %s406
      %s408 = smul.addr %s407, 4
      %s409 = scalar_lea.vmem %s0, %s408
      %p410 = scmp.lt.s32.totalorder %s22, 1
      %s411 = scalar_select %p410, %s22, 1
      %s412 = smul.u32 4, %s411
      %s413 = smul.u32 %s22, 2
      %s414 = ssub.s32 %s413, 1
      %p415 = scmp.gt.s32.totalorder %s414, 0
      %s416 = scalar_select %p415, %s414, 0
      %s417 = smul.u32 2, %s416
      %p418 = scmp.lt.s32.totalorder %s21, 1
      %s419 = scalar_select %p418, %s21, 1
      %p420 = scmp.lt.s32.totalorder %s417, 7
      %s421 = scalar_select %p420, %s417, 7
      %s422 = smul.addr %s419, 8
      %s423 = sadd.s32 %s421, %s422
      %s424 = smul.addr %s423, 4
      %s425 = scalar_lea.vmem %s1, %s424
      %s426 = smul.u32 %s22, 2
      %s427 = ssub.s32 %s426, 1
      %p428 = scmp.gt.s32.totalorder %s427, 0
      %s429 = scalar_select %p428, %s427, 0
      %s430 = smul.u32 2, %s429
      %s431 = sadd.s32 %s22, 1
      %s432 = smul.u32 %s431, 2
      %p433 = scmp.lt.s32.totalorder %s432, 3
      %s434 = scalar_select %p433, %s432, 3
      %s435 = smul.u32 2, %s434
      %p436 = scmp.lt.s32.totalorder %s21, 1
      %s437 = scalar_select %p436, %s21, 1
      %p438 = scmp.lt.s32.totalorder %s435, 7
      %s439 = scalar_select %p438, %s435, 7
      %s440 = smul.addr %s437, 8
      %s441 = sadd.s32 %s439, %s440
      %s442 = smul.addr %s441, 4
      %s443 = scalar_lea.vmem %s2, %s442
      %s444 = sadd.s32 %s22, 1
      %s445 = smul.u32 %s444, 2
      %p446 = scmp.lt.s32.totalorder %s445, 3
      %s447 = scalar_select %p446, %s445, 3
      %s448 = smul.u32 2, %s447
      %s449 = smul.u32 4, %s22
      %p450 = scmp.lt.s32.totalorder %s21, 1
      %s451 = scalar_select %p450, %s21, 1
      %p452 = scmp.lt.s32.totalorder %s449, 7
      %s453 = scalar_select %p452, %s449, 7
      %s454 = smul.addr %s451, 8
      %s455 = sadd.s32 %s453, %s454
      %s456 = smul.addr %s455, 4
      %s457 = scalar_lea.vmem %s5, %s456
      %s458 = smul.u32 4, %s22
      %s459 = smul.u32 4, %s22
      %p460 = scmp.lt.s32.totalorder %s21, 1
      %s461 = scalar_select %p460, %s21, 1
      %p462 = scmp.lt.s32.totalorder %s459, 7
      %s463 = scalar_select %p462, %s459, 7
      %s464 = smul.addr %s461, 8
      %s465 = sadd.s32 %s463, %s464
      %s466 = smul.addr %s465, 4
      %s467 = scalar_lea.vmem %s6, %s466
      %s468 = smul.u32 4, %s22
      %s470 = smul.u32 %s22, 32
      %v471 = vld [vmem:[%s425] sm:$0xf]
      %v472 = vld [vmem:[%s425 + $0x4] sm:$0xf]
      %s473 = ssub.s32 %s470, 16
      %v474 = vlaneseq
      %v475 = vshrl.u32 %v474, 7
      %v476 = vadd.s32 %v475, 8
      %v477 = vstv %s473
      %v478 = vadd.s32 %v477, %v475
      %v479 = vadd.s32 %v477, %v476
      %vm480 = vcmp.ge.s32.totalorder %v478, 0
      %vm481 = vcmp.ge.s32.totalorder %v479, 0
      %vm482 = vcmp.lt.s32.totalorder %v478, 64
      %vm483 = vcmp.lt.s32.totalorder %v479, 64
      %vm484 = vmand %vm480, %vm482
      %vm485 = vmand %vm481, %vm483
      %v486 = vsel %vm484, 1, 0
      %v487 = vsel %vm485, 1, 0
      %vm488 = vcmp.eq.s32.totalorder %v486, 1
      %vm489 = vcmp.eq.s32.totalorder %v487, 1
      %vm490 = vmpackc.low %vm488, %vm488
      %vm491 = vmpackc.low %vm489, %vm489
      %v492 = vsel %vm490, %v471, 0
      %v493 = vsel %vm491, %v472, 0
      %v494 = vunpack.c.l.bf16 %v492
      %v495 = vunpack.c.l.bf16 %v493
      %vm496 = vcmp.ge.f32.partialorder %v494, 0.0
      %vm497 = vcmp.ge.f32.partialorder %v495, 0.0
      %v498 = vmul.f32 %v494, 0.1
      %v499 = vmul.f32 %v495, 0.1
      %v500 = vsel %vm496, %v494, %v498
      %v501 = vsel %vm497, %v495, %v499
      %v502 = vpack.c.bf16 %v500, %v500
      %v503 = vpack.c.bf16 %v501, %v501
      %v504 = vld [vmem:[%s409] sm:$0xf]
      %v505 = vld [vmem:[%s409 + $0x4] sm:$0xf]
      %v506 = vld [vmem:[%s409 + $0x8] sm:$0xf]
      %v507 = vld [vmem:[%s409 + $0xc] sm:$0xf]
      %v508 = vadd.s32 %v475, 16
      %v509 = vadd.s32 %v475, 24
      %v510 = vstv %s470
      %v511 = vadd.s32 %v510, %v475
      %v512 = vadd.s32 %v510, %v476
      %v513 = vadd.s32 %v510, %v508
      %v514 = vadd.s32 %v510, %v509
      %vm515 = vcmp.ge.s32.totalorder %v511, 0
      %vm516 = vcmp.ge.s32.totalorder %v512, 0
      %vm517 = vcmp.ge.s32.totalorder %v513, 0
      %vm518 = vcmp.ge.s32.totalorder %v514, 0
      %vm519 = vcmp.lt.s32.totalorder %v511, 64
      %vm520 = vcmp.lt.s32.totalorder %v512, 64
      %vm521 = vcmp.lt.s32.totalorder %v513, 64
      %vm522 = vcmp.lt.s32.totalorder %v514, 64
      %vm523 = vmand %vm515, %vm519
      %vm524 = vmand %vm516, %vm520
      %vm525 = vmand %vm517, %vm521
      %vm526 = vmand %vm518, %vm522
      %v527 = vsel %vm523, 1, 0
      %v528 = vsel %vm524, 1, 0
      %v529 = vsel %vm525, 1, 0
      %v530 = vsel %vm526, 1, 0
      %vm531 = vcmp.eq.s32.totalorder %v527, 1
      %vm532 = vcmp.eq.s32.totalorder %v528, 1
      %vm533 = vcmp.eq.s32.totalorder %v529, 1
      %vm534 = vcmp.eq.s32.totalorder %v530, 1
      %vm535 = vmpackc.low %vm531, %vm531
      %vm536 = vmpackc.low %vm532, %vm532
      %vm537 = vmpackc.low %vm533, %vm533
      %vm538 = vmpackc.low %vm534, %vm534
      %v539 = vsel %vm535, %v504, 0
      %v540 = vsel %vm536, %v505, 0
      %v541 = vsel %vm537, %v506, 0
      %v542 = vsel %vm538, %v507, 0
      %v543 = vunpack.c.l.bf16 %v539
      %v544 = vunpack.c.l.bf16 %v540
      %v545 = vunpack.c.l.bf16 %v541
      %v546 = vunpack.c.l.bf16 %v542
      %vm547 = vcmp.ge.f32.partialorder %v543, 0.0
      %vm548 = vcmp.ge.f32.partialorder %v544, 0.0
      %vm549 = vcmp.ge.f32.partialorder %v545, 0.0
      %vm550 = vcmp.ge.f32.partialorder %v546, 0.0
      %v551 = vmul.f32 %v543, 0.1
      %v552 = vmul.f32 %v544, 0.1
      %v553 = vmul.f32 %v545, 0.1
      %v554 = vmul.f32 %v546, 0.1
      %v555 = vsel %vm547, %v543, %v551
      %v556 = vsel %vm548, %v544, %v552
      %v557 = vsel %vm549, %v545, %v553
      %v558 = vsel %vm550, %v546, %v554
      %v559 = vpack.c.bf16 %v555, %v555
      %v560 = vpack.c.bf16 %v556, %v556
      %v561 = vpack.c.bf16 %v557, %v557
      %v562 = vpack.c.bf16 %v558, %v558
      %v563 = vld [vmem:[%s443] sm:$0xf]
      %v564 = vld [vmem:[%s443 + $0x4] sm:$0xf]
      %s565 = sadd.s32 %s470, 32
      %v566 = vstv %s565
      %v567 = vadd.s32 %v566, %v475
      %v568 = vadd.s32 %v566, %v476
      %vm569 = vcmp.ge.s32.totalorder %v567, 0
      %vm570 = vcmp.ge.s32.totalorder %v568, 0
      %vm571 = vcmp.lt.s32.totalorder %v567, 64
      %vm572 = vcmp.lt.s32.totalorder %v568, 64
      %vm573 = vmand %vm569, %vm571
      %vm574 = vmand %vm570, %vm572
      %v575 = vsel %vm573, 1, 0
      %v576 = vsel %vm574, 1, 0
      %vm577 = vcmp.eq.s32.totalorder %v575, 1
      %vm578 = vcmp.eq.s32.totalorder %v576, 1
      %vm579 = vmpackc.low %vm577, %vm577
      %vm580 = vmpackc.low %vm578, %vm578
      %v581 = vsel %vm579, %v563, 0
      %v582 = vsel %vm580, %v564, 0
      %v583 = vunpack.c.l.bf16 %v581
      %v584 = vunpack.c.l.bf16 %v582
      %vm585 = vcmp.ge.f32.partialorder %v583, 0.0
      %vm586 = vcmp.ge.f32.partialorder %v584, 0.0
      %v587 = vmul.f32 %v583, 0.1
      %v588 = vmul.f32 %v584, 0.1
      %v589 = vsel %vm585, %v583, %v587
      %v590 = vsel %vm586, %v584, %v588
      %v591 = vpack.c.bf16 %v589, %v589
      %v592 = vpack.c.bf16 %v590, %v590
      %v595 = vunpack.c.l.b16 %v502
      %v596 = vunpack.c.l.b16 %v503
      %v597 = vpack.c.b16 %v596, %v595
      %v602 = vunpack.c.l.b16 %v559
      %v603 = vunpack.c.l.b16 %v560
      %v604 = vunpack.c.l.b16 %v561
      %v605 = vunpack.c.l.b16 %v562
      %v606 = vpack.c.b16 %v603, %v602
      %v607 = vpack.c.b16 %v605, %v604
      %v610 = vunpack.c.l.b16 %v591
      %v611 = vunpack.c.l.b16 %v592
      %v612 = vpack.c.b16 %v611, %v610
      %vm613 = vsmask.f32 6400
      %v615 = vshrl.u32 %v606, 16
      %v617 = vrot.slane %v615, 1
      %v618 = vshll.u32 %v606, 16
      %v620 = vrot.slane %v618, 2
      %v621 = vor.u32 %v617, %v620
      %v623 = vshrl.u32 %v607, 16
      %v625 = vrot.slane %v623, 1
      %v626 = vshll.u32 %v607, 16
      %v628 = vrot.slane %v626, 2
      %v629 = vor.u32 %v625, %v628
      %v630 = vsel %vm613, %v621, %v629
      %631 = vrot.lane.b32.xlu0 %v621, 8
      %v632 = vpop.permute.xlu0 %631
      %633 = vrot.lane.b32.xlu0 %v630, 8
      %v634 = vpop.permute.xlu0 %633
      %635 = vrot.lane.b32.xlu0 %v629, 8
      %v636 = vpop.permute.xlu0 %635
      %vm637 = vcmask 1044480
      %v638 = vrot.slane %v606, 3
      %v639 = vrot.slane %v607, 3
      %v640 = vsel %vm637, %v638, %v639
      %v641 = vrot.slane %v612, 3
      %v642 = vsel %vm637, %v639, %v641
      %643 = vrot.lane.b32.xlu0 %v638, 16
      %v644 = vpop.permute.xlu0 %643
      %645 = vrot.lane.b32.xlu0 %v640, 16
      %v646 = vpop.permute.xlu0 %645
      %647 = vrot.lane.b32.xlu0 %v642, 16
      %v648 = vpop.permute.xlu0 %647
      %vm649 = vcmask 64512
      %v652 = vsel %vm649, %v597, %v632
      %v654 = vsel %vm649, %v606, %v634
      %v656 = vsel %vm649, %v607, %v636
      %vm657 = vcmask 130048
      %v659 = vsel %vm657, %v652, %v644
      %v661 = vsel %vm657, %v654, %v646
      %v663 = vsel %vm657, %v656, %v648
      %v664 = vld [vmem:[%s3] sm:$0xf]
      %v665 = vld [vmem:[%s3 + $0x4] sm:$0xf]
      %v666 = vld [vmem:[%s3 + $0x8] sm:$0xf]
      %v667 = vld [vmem:[%s4] sm:$0x1]
      %v669 = vperm.slane %v667, 0
      %vm671 = vsmask.f32 1280
      %v672 = vshrl.u32 %v659, 16
      %v674 = vrot.slane %v672, 6
      %v675 = vshll.u32 %v659, 16
      %v677 = vrot.slane %v675, 7
      %v678 = vor.u32 %v674, %v677
      %v679 = vshrl.u32 %v661, 16
      %v681 = vrot.slane %v679, 6
      %v682 = vshll.u32 %v661, 16
      %v684 = vrot.slane %v682, 7
      %v685 = vor.u32 %v681, %v684
      %v686 = vsel %vm671, %v678, %v685
      %v687 = vshrl.u32 %v663, 16
      %v689 = vrot.slane %v687, 6
      %v690 = vshll.u32 %v663, 16
      %v692 = vrot.slane %v690, 7
      %v693 = vor.u32 %v689, %v692
      %v694 = vsel %vm671, %v685, %v693
      %v698 = vunpack.c.l.b16 %v664
      %v699 = vunpack.c.l.b16 %v665
      %v700 = vunpack.c.l.b16 %v666
      %v701 = vpack.c.b16 %v699, %v698
      %v702 = vpack.c.b16 %v700, %v700
      %vm704 = vcmask 195584
      %v706 = vsel %vm704, %v686, 0
      %v709 = vsel %vm704, %v694, 0
      %vm711 = vcmask 1043456
      %v713 = vsel %vm711, %v702, 0
      %715 = vmatpush.bf16.msra.mxu0 0
      %716 = vmatpush.bf16.msra.mxu0 0
      %717 = vmatpush.bf16.msra.mxu0 0
      %718 = vmatpush.bf16.msra.mxu0 0
      %719 = vmatpush.bf16.msra.mxu0 0
      %720 = vmatpush.bf16.msra.mxu0 0
      %721 = vmatpush.bf16.msra.mxu0 %v713
      %722 = vmatpush.bf16.msra.mxu0 %v701
      %723 = vmatmul.bf16.gmra.mxu0 %v706
      %v724 = vpop.f32.mrf.mxu0
      %v725 = vadd.f32 %v669, %v724
      %v726 = vpop.f32.mrf.mxu0
      %v727 = vadd.f32 %v669, %v726
      %728 = vmatmul.bf16.gmra.mxu0 %v709
      %v729 = vpop.f32.mrf.mxu0
      %v730 = vadd.f32 %v669, %v729
      %v731 = vpop.f32.mrf.mxu0
      %v732 = vadd.f32 %v669, %v731
      %733 = vdwg.mxu0
      %v734 = vld [vmem:[%s457] sm:$0xf]
      %v735 = vld [vmem:[%s457 + $0x4] sm:$0xf]
      %v736 = vld [vmem:[%s457 + $0x8] sm:$0xf]
      %v737 = vld [vmem:[%s457 + $0xc] sm:$0xf]
      %v738 = vunpack.c.l.bf16 %v734
      %v739 = vunpack.c.l.bf16 %v735
      %v740 = vunpack.c.l.bf16 %v736
      %v741 = vunpack.c.l.bf16 %v737
      %v742 = vadd.f32 %v725, %v738
      %v743 = vadd.f32 %v727, %v739
      %v744 = vadd.f32 %v730, %v740
      %v745 = vadd.f32 %v732, %v741
      %v746 = vpack.c.bf16 %v742, %v742
      %v747 = vpack.c.bf16 %v743, %v743
      %v748 = vpack.c.bf16 %v744, %v744
      %v749 = vpack.c.bf16 %v745, %v745
      %vm750 = vcmask 60416
      %751 = vst.msk [vmem:[%s467] sm:$0xf] %vm750, %v746
      %752 = vst.msk [vmem:[%s467 + $0x4] sm:$0xf] %vm750, %v747
      %753 = vst.msk [vmem:[%s467 + $0x8] sm:$0xf] %vm750, %v748
      %754 = vst.msk [vmem:[%s467 + $0xc] sm:$0xf] %vm750, %v749
      %s755 = smul.u32 4, %s22
      %p756 = scmp.lt.s32.totalorder %s21, 1
      %s757 = scalar_select %p756, %s21, 1
      %p758 = scmp.lt.s32.totalorder %s755, 7
      %s759 = scalar_select %p758, %s755, 7
      %s760 = smul.addr %s757, 8
      %s761 = sadd.s32 %s759, %s760
      %s762 = smul.addr %s761, 4
      %s763 = scalar_lea.vmem %s6, %s762
      // Predicated region
      $region45: #{hifigan_forward.14} parent=43 // pred_check
        %p764 = pneg %p223
      $region46: #{hifigan_forward.14} parent=43 // pred_check_branch
        %766 = sbr.rel (%p764) target = $region48
      $region47: #{hifigan_forward.14} parent=43 // pred_region
        %s767 = smul.u32 4, %s22
      $region48: #{hifigan_forward.14} parent=43 // pred_fallthru
        _
    $region44: #{hifigan_forward.14} parent=5 // pred_fallthru
      _
    %p768 = scmp.le.s32.totalorder 2, %s12
    // Predicated region
    $region49: #{hifigan_forward.14} parent=5 // pred_check
      %p769 = pneg %p768
    $region50: #{hifigan_forward.14} parent=5 // pred_check_branch
      %771 = sbr.rel (%p769) target = $region52
    $region51: #{hifigan_forward.14} parent=5 // pred_region
      %s772 = ssub.s32 %s12, 2
      // Predicated region
      $region53: #{hifigan_forward.14} parent=51 // pred_check
        %p773 = pneg %p229
      $region54: #{hifigan_forward.14} parent=51 // pred_check_branch
        %775 = sbr.rel (%p773) target = $region56
      $region55: #{hifigan_forward.14} parent=51 // pred_region
        %s776 = smul.u32 4, %s24
        %p777 = scmp.lt.s32.totalorder %s23, 1
        %s778 = scalar_select %p777, %s23, 1
        %p779 = scmp.lt.s32.totalorder %s776, 7
        %s780 = scalar_select %p779, %s776, 7
        %s781 = smul.addr %s778, 8
        %s782 = sadd.s32 %s780, %s781
        %s783 = smul.addr %s782, 4
        %s784 = scalar_lea.vmem %s6, %s783
      $region56: #{hifigan_forward.14} parent=51 // pred_fallthru
        _
    $region52: #{hifigan_forward.14} parent=5 // pred_fallthru
      _
  $region6: #{hifigan_forward.14} parent=0 // loop_footer
    %s16 = sadd.s32 1, %s12
  $region7: #{hifigan_forward.14} parent=0 // loop_footer_branch
    %11 = sbr.rel target = $region3
  $region8: #{hifigan_forward.14} parent=0 // loop_exit
    _

// kernel: hifigan_forward.15
$region0: #{hifigan_forward.15}
  #allocation0 [shape = 'u32[]', space=smem, size = 0x4, offset = 0x4, fixed_abs, tag = 'smem constant byte address 0x4 - core index']
  #allocation1 [shape = 'u32[72,128]{1,0:T(1,128)}', space=vmem, size = 0x9000, scoped, tag = 'internal scratch']
  #allocation2 [shape = 'f32[1,1]{1,0:T(1,128)S(1)}', space=vmem, size = 0x200, scoped, tag = 'scoped memory for hifigan_forward.15']
  %s0 = inlined_call_operand.vmem [shape: bf16[2,64,8], index: 0, kind: input, shape index: {}, may-alias: {0,1,2}]
  %s1 = inlined_call_operand.vmem [shape: bf16[2,64,8], index: 1, kind: input, shape index: {}, may-alias: {0,1,2}]
  %s2 = inlined_call_operand.vmem [shape: bf16[2,64,8], index: 2, kind: input, shape index: {}, may-alias: {0,1,2}]
  %s3 = inlined_call_operand.vmem [shape: bf16[56,1], index: 3, kind: input, shape index: {}]
  %s4 = inlined_call_operand.<no memory space> [shape: f32[1,1], index: 4, kind: input, shape index: {}]
  %s5 = inlined_call_operand.vmem [shape: f32[2,64,1], index: 5, kind: output, shape index: {}]
  %s6 = sld [smem:[#allocation0]]
  $region53: #{hifigan_forward.15} parent=0
    _
  %s8 = ssub.s32 1, %s6
  %s9 = scalar_select 0, %s8, %s6
  %v10 = vstv %s4
  %11 = vst [vmem:[#allocation2] sm:$0x1] %v10
  loop: start=0, step=1, limit=6
  $region2: #{hifigan_forward.15} parent=0 // loop_pre_header
    _
  $region3: #{hifigan_forward.15} parent=0 // loop_header
    %s13 = sphi 0, %s17
    %p14 = scmp.ge.s32.totalorder %s13, 6
    %s20 = sphi 0, %s32
    %s21 = sphi 0, %s28
    %s22 = sphi 0, %s20
    %s23 = sphi 0, %s21
    %s24 = sphi 0, %s22
    %s25 = sphi 0, %s23
    %s41 = sphi 0, %s43
    %s44 = sphi 0, %s41
    %s45 = sphi 0, %s44
    %s61 = sphi 0, %s45
    %s77 = sphi 0, %s79
    %s80 = sphi 0, %s77
    %s81 = sphi 0, %s80
    %s97 = sphi 0, %s81
    %s113 = sphi 0, %s115
    %s116 = sphi 0, %s113
    %s117 = sphi 0, %s116
    %s133 = sphi 0, %s117
    %s137 = sphi 0, %s137
    %s139 = sphi 0, %s137
    %s140 = sphi 0, %s139
    %s154 = sphi 0, %s140
    %s158 = sphi 0, %s158
    %s160 = sphi 0, %s158
    %s161 = sphi 0, %s160
    %s175 = sphi 0, %s161
    %s183 = sphi 0, %s185
    %s186 = sphi 0, %s183
    %s187 = sphi 0, %s186
    %s203 = sphi 0, %s187
  $region4: #{hifigan_forward.15} parent=0 // loop_header_branch
    %16 = sbr.rel (%p14) target = $region8
  $region5: #{hifigan_forward.15} parent=0 // loop_body
    %s18 = ssub.s32 %s13, 1
    %s19 = ssub.s32 %s13, 2
    %s26 = sadd.s32 1, %s21
    %p27 = scmp.ge.s32.totalorder %s26, 2
    %s28 = scalar_select %p27, 0, %s26
    %s29 = sadd.s32 1, %s20
    %s30 = scalar_select %p27, %s29, %s20
    %p31 = scmp.ge.s32.totalorder %s30, 2
    %s32 = scalar_select %p31, 0, %s30
    %p33 = scmp.lt.s32.totalorder %s21, 1
    %s34 = scalar_select %p33, %s21, 1
    %p35 = scmp.lt.s32.totalorder %s28, 1
    %s36 = scalar_select %p35, %s28, 1
    %s37 = ssub.s32 %s20, %s32
    %s38 = ssub.s32 %s34, %s36
    %s39 = sor.u32 %s37, %s38
    %p40 = scmp.eq.s32.totalorder %s39, 0
    %s42 = sadd.s32 %s41, 1
    %s43 = scalar_select %p40, %s41, %s42
    %p46 = pneg %p40
    %p47 = scmp.eq.s32.totalorder %s13, 3
    %p48 = por %p46, %p47
    %p49 = scmp.ne.s32.totalorder %s41, %s44
    %p50 = scmp.eq.s32.totalorder %s13, 0
    %p51 = por %p49, %p50
    %p52 = scmp.ne.s32.totalorder %s41, %s44
    %p53 = scmp.eq.s32.totalorder %s18, 3
    %p54 = por %p52, %p53
    %p55 = scmp.ne.s32.totalorder %s44, %s45
    %p56 = scmp.eq.s32.totalorder %s18, 0
    %p57 = por %p55, %p56
    %p58 = scmp.ne.s32.totalorder %s44, %s45
    %p59 = scmp.eq.s32.totalorder %s19, 3
    %p60 = por %p58, %p59
    %p62 = scmp.ne.s32.totalorder %s45, %s61
    %p63 = scmp.eq.s32.totalorder %s19, 0
    %p64 = por %p62, %p63
    %s65 = smul.u32 %s21, 2
    %s66 = ssub.s32 %s65, 1
    %p67 = scmp.gt.s32.totalorder %s66, 0
    %s68 = scalar_select %p67, %s66, 0
    %s69 = smul.u32 %s28, 2
    %s70 = ssub.s32 %s69, 1
    %p71 = scmp.gt.s32.totalorder %s70, 0
    %s72 = scalar_select %p71, %s70, 0
    %s73 = ssub.s32 %s20, %s32
    %s74 = ssub.s32 %s68, %s72
    %s75 = sor.u32 %s73, %s74
    %p76 = scmp.eq.s32.totalorder %s75, 0
    %s78 = sadd.s32 %s77, 1
    %s79 = scalar_select %p76, %s77, %s78
    %p82 = pneg %p76
    %p83 = scmp.eq.s32.totalorder %s13, 3
    %p84 = por %p82, %p83
    %p85 = scmp.ne.s32.totalorder %s77, %s80
    %p86 = scmp.eq.s32.totalorder %s13, 0
    %p87 = por %p85, %p86
    %p88 = scmp.ne.s32.totalorder %s77, %s80
    %p89 = scmp.eq.s32.totalorder %s18, 3
    %p90 = por %p88, %p89
    %p91 = scmp.ne.s32.totalorder %s80, %s81
    %p92 = scmp.eq.s32.totalorder %s18, 0
    %p93 = por %p91, %p92
    %p94 = scmp.ne.s32.totalorder %s80, %s81
    %p95 = scmp.eq.s32.totalorder %s19, 3
    %p96 = por %p94, %p95
    %p98 = scmp.ne.s32.totalorder %s81, %s97
    %p99 = scmp.eq.s32.totalorder %s19, 0
    %p100 = por %p98, %p99
    %s101 = sadd.s32 %s21, 1
    %s102 = smul.u32 %s101, 2
    %p103 = scmp.lt.s32.totalorder %s102, 3
    %s104 = scalar_select %p103, %s102, 3
    %s105 = sadd.s32 %s28, 1
    %s106 = smul.u32 %s105, 2
    %p107 = scmp.lt.s32.totalorder %s106, 3
    %s108 = scalar_select %p107, %s106, 3
    %s109 = ssub.s32 %s20, %s32
    %s110 = ssub.s32 %s104, %s108
    %s111 = sor.u32 %s109, %s110
    %p112 = scmp.eq.s32.totalorder %s111, 0
    %s114 = sadd.s32 %s113, 1
    %s115 = scalar_select %p112, %s113, %s114
    %p118 = pneg %p112
    %p119 = scmp.eq.s32.totalorder %s13, 3
    %p120 = por %p118, %p119
    %p121 = scmp.ne.s32.totalorder %s113, %s116
    %p122 = scmp.eq.s32.totalorder %s13, 0
    %p123 = por %p121, %p122
    %p124 = scmp.ne.s32.totalorder %s113, %s116
    %p125 = scmp.eq.s32.totalorder %s18, 3
    %p126 = por %p124, %p125
    %p127 = scmp.ne.s32.totalorder %s116, %s117
    %p128 = scmp.eq.s32.totalorder %s18, 0
    %p129 = por %p127, %p128
    %p130 = scmp.ne.s32.totalorder %s116, %s117
    %p131 = scmp.eq.s32.totalorder %s19, 3
    %p132 = por %p130, %p131
    %p134 = scmp.ne.s32.totalorder %s117, %s133
    %p135 = scmp.eq.s32.totalorder %s19, 0
    %p136 = por %p134, %p135
    %s138 = sadd.s32 %s137, 1
    %p141 = scmp.eq.s32.totalorder %s13, 3
    %p142 = scmp.ne.s32.totalorder %s137, %s139
    %p143 = scmp.eq.s32.totalorder %s13, 0
    %p144 = por %p142, %p143
    %p145 = scmp.ne.s32.totalorder %s137, %s139
    %p146 = scmp.eq.s32.totalorder %s18, 3
    %p147 = por %p145, %p146
    %p148 = scmp.ne.s32.totalorder %s139, %s140
    %p149 = scmp.eq.s32.totalorder %s18, 0
    %p150 = por %p148, %p149
    %p151 = scmp.ne.s32.totalorder %s139, %s140
    %p152 = scmp.eq.s32.totalorder %s19, 3
    %p153 = por %p151, %p152
    %p155 = scmp.ne.s32.totalorder %s140, %s154
    %p156 = scmp.eq.s32.totalorder %s19, 0
    %p157 = por %p155, %p156
    %s159 = sadd.s32 %s158, 1
    %p162 = scmp.eq.s32.totalorder %s13, 3
    %p163 = scmp.ne.s32.totalorder %s158, %s160
    %p164 = scmp.eq.s32.totalorder %s13, 0
    %p165 = por %p163, %p164
    %p166 = scmp.ne.s32.totalorder %s158, %s160
    %p167 = scmp.eq.s32.totalorder %s18, 3
    %p168 = por %p166, %p167
    %p169 = scmp.ne.s32.totalorder %s160, %s161
    %p170 = scmp.eq.s32.totalorder %s18, 0
    %p171 = por %p169, %p170
    %p172 = scmp.ne.s32.totalorder %s160, %s161
    %p173 = scmp.eq.s32.totalorder %s19, 3
    %p174 = por %p172, %p173
    %p176 = scmp.ne.s32.totalorder %s161, %s175
    %p177 = scmp.eq.s32.totalorder %s19, 0
    %p178 = por %p176, %p177
    %s179 = ssub.s32 %s20, %s32
    %s180 = ssub.s32 %s21, %s28
    %s181 = sor.u32 %s179, %s180
    %p182 = scmp.eq.s32.totalorder %s181, 0
    %s184 = sadd.s32 %s183, 1
    %s185 = scalar_select %p182, %s183, %s184
    %p188 = pneg %p182
    %p189 = scmp.eq.s32.totalorder %s13, 3
    %p190 = por %p188, %p189
    %p191 = scmp.ne.s32.totalorder %s183, %s186
    %p192 = scmp.eq.s32.totalorder %s13, 0
    %p193 = por %p191, %p192
    %p194 = scmp.ne.s32.totalorder %s183, %s186
    %p195 = scmp.eq.s32.totalorder %s18, 3
    %p196 = por %p194, %p195
    %p197 = scmp.ne.s32.totalorder %s186, %s187
    %p198 = scmp.eq.s32.totalorder %s18, 0
    %p199 = por %p197, %p198
    %p200 = scmp.ne.s32.totalorder %s186, %s187
    %p201 = scmp.eq.s32.totalorder %s19, 3
    %p202 = por %p200, %p201
    %p204 = scmp.ne.s32.totalorder %s187, %s203
    %p205 = scmp.eq.s32.totalorder %s19, 0
    %p206 = por %p204, %p205
    %p207 = scmp.le.s32.totalorder 1, %s13
    %p208 = scmp.lt.s32.totalorder %s13, 5
    %p209 = pnand %p207, %p208
    %p210 = pneg %p209
    // Predicated region
    $region9: #{hifigan_forward.15} parent=5 // pred_check
      _
    $region10: #{hifigan_forward.15} parent=5 // pred_check_branch
      %212 = sbr.rel (%p209) target = $region12
    $region11: #{hifigan_forward.15} parent=5 // pred_region
      %s213 = ssub.s32 %s13, 1
      // Predicated region
      $region13: #{hifigan_forward.15} parent=11 // pred_check
        %p214 = pneg %p150
      $region14: #{hifigan_forward.15} parent=11 // pred_check_branch
        %216 = sbr.rel (%p214) target = $region16
      $region15: #{hifigan_forward.15} parent=11 // pred_region
        _
      $region16: #{hifigan_forward.15} parent=11 // pred_fallthru
        _
      // Predicated region
      $region17: #{hifigan_forward.15} parent=11 // pred_check
        %p217 = pneg %p171
      $region18: #{hifigan_forward.15} parent=11 // pred_check_branch
        %219 = sbr.rel (%p217) target = $region20
      $region19: #{hifigan_forward.15} parent=11 // pred_region
        _
      $region20: #{hifigan_forward.15} parent=11 // pred_fallthru
        _
    $region12: #{hifigan_forward.15} parent=5 // pred_fallthru
      _
    %p220 = scmp.lt.s32.totalorder %s13, 4
    // Predicated region
    $region21: #{hifigan_forward.15} parent=5 // pred_check
      %p221 = pneg %p220
    $region22: #{hifigan_forward.15} parent=5 // pred_check_branch
      %223 = sbr.rel (%p221) target = $region24
    $region23: #{hifigan_forward.15} parent=5 // pred_region
      // Predicated region
      $region25: #{hifigan_forward.15} parent=23 // pred_check
        %p224 = pneg %p51
      $region26: #{hifigan_forward.15} parent=23 // pred_check_branch
        %226 = sbr.rel (%p224) target = $region28
      $region27: #{hifigan_forward.15} parent=23 // pred_region
        %p227 = scmp.lt.s32.totalorder %s21, 1
        %s228 = scalar_select %p227, %s21, 1
        %s229 = smul.u32 4, %s228
        %p230 = scmp.lt.s32.totalorder %s20, 1
        %s231 = scalar_select %p230, %s20, 1
        %p232 = scmp.lt.s32.totalorder %s229, 7
        %s233 = scalar_select %p232, %s229, 7
        %s234 = smul.addr %s231, 8
        %s235 = sadd.s32 %s233, %s234
        %s236 = smul.addr %s235, 4
        %s237 = scalar_lea.vmem %s0, %s236
        %p238 = scmp.lt.s32.totalorder %s21, 1
        %s239 = scalar_select %p238, %s21, 1
        %s240 = smul.u32 4, %s239
      $region28: #{hifigan_forward.15} parent=23 // pred_fallthru
        _
      // Predicated region
      $region29: #{hifigan_forward.15} parent=23 // pred_check
        %p241 = pneg %p87
      $region30: #{hifigan_forward.15} parent=23 // pred_check_branch
        %243 = sbr.rel (%p241) target = $region32
      $region31: #{hifigan_forward.15} parent=23 // pred_region
        %s244 = smul.u32 %s21, 2
        %s245 = ssub.s32 %s244, 1
        %p246 = scmp.gt.s32.totalorder %s245, 0
        %s247 = scalar_select %p246, %s245, 0
        %s248 = smul.u32 2, %s247
        %p249 = scmp.lt.s32.totalorder %s20, 1
        %s250 = scalar_select %p249, %s20, 1
        %p251 = scmp.lt.s32.totalorder %s248, 7
        %s252 = scalar_select %p251, %s248, 7
        %s253 = smul.addr %s250, 8
        %s254 = sadd.s32 %s252, %s253
        %s255 = smul.addr %s254, 4
        %s256 = scalar_lea.vmem %s1, %s255
        %s257 = smul.u32 %s21, 2
        %s258 = ssub.s32 %s257, 1
        %p259 = scmp.gt.s32.totalorder %s258, 0
        %s260 = scalar_select %p259, %s258, 0
        %s261 = smul.u32 2, %s260
      $region32: #{hifigan_forward.15} parent=23 // pred_fallthru
        _
      // Predicated region
      $region33: #{hifigan_forward.15} parent=23 // pred_check
        %p262 = pneg %p123
      $region34: #{hifigan_forward.15} parent=23 // pred_check_branch
        %264 = sbr.rel (%p262) target = $region36
      $region35: #{hifigan_forward.15} parent=23 // pred_region
        %s265 = sadd.s32 %s21, 1
        %s266 = smul.u32 %s265, 2
        %p267 = scmp.lt.s32.totalorder %s266, 3
        %s268 = scalar_select %p267, %s266, 3
        %s269 = smul.u32 2, %s268
        %p270 = scmp.lt.s32.totalorder %s20, 1
        %s271 = scalar_select %p270, %s20, 1
        %p272 = scmp.lt.s32.totalorder %s269, 7
        %s273 = scalar_select %p272, %s269, 7
        %s274 = smul.addr %s271, 8
        %s275 = sadd.s32 %s273, %s274
        %s276 = smul.addr %s275, 4
        %s277 = scalar_lea.vmem %s2, %s276
        %s278 = sadd.s32 %s21, 1
        %s279 = smul.u32 %s278, 2
        %p280 = scmp.lt.s32.totalorder %s279, 3
        %s281 = scalar_select %p280, %s279, 3
        %s282 = smul.u32 2, %s281
      $region36: #{hifigan_forward.15} parent=23 // pred_fallthru
        _
    $region24: #{hifigan_forward.15} parent=5 // pred_fallthru
      _
    %p283 = scmp.le.s32.totalorder 1, %s13
    %p284 = scmp.lt.s32.totalorder %s13, 5
    %p285 = pnand %p283, %p284
    %p286 = pneg %p285
    // Predicated region
    $region37: #{hifigan_forward.15} parent=5 // pred_check
      _
    $region38: #{hifigan_forward.15} parent=5 // pred_check_branch
      %288 = sbr.rel (%p285) target = $region40
    $region39: #{hifigan_forward.15} parent=5 // pred_region
      %s289 = ssub.s32 %s13, 1
      %p290 = scmp.lt.s32.totalorder %s23, 1
      %s291 = scalar_select %p290, %s23, 1
      %s292 = smul.u32 4, %s291
      %p293 = scmp.lt.s32.totalorder %s22, 1
      %s294 = scalar_select %p293, %s22, 1
      %p295 = scmp.lt.s32.totalorder %s292, 7
      %s296 = scalar_select %p295, %s292, 7
      %s297 = smul.addr %s294, 8
      %s298 = sadd.s32 %s296, %s297
      %s299 = smul.addr %s298, 4
      %s300 = scalar_lea.vmem %s0, %s299
      %p301 = pneg %p57
      %p302 = pneg %p54
      %s303 = smul.u32 %s23, 2
      %s304 = ssub.s32 %s303, 1
      %p305 = scmp.gt.s32.totalorder %s304, 0
      %s306 = scalar_select %p305, %s304, 0
      %s307 = smul.u32 2, %s306
      %p308 = scmp.lt.s32.totalorder %s22, 1
      %s309 = scalar_select %p308, %s22, 1
      %p310 = scmp.lt.s32.totalorder %s307, 7
      %s311 = scalar_select %p310, %s307, 7
      %s312 = smul.addr %s309, 8
      %s313 = sadd.s32 %s311, %s312
      %s314 = smul.addr %s313, 4
      %s315 = scalar_lea.vmem %s1, %s314
      %p316 = pneg %p93
      %p317 = pneg %p90
      %s318 = sadd.s32 %s23, 1
      %s319 = smul.u32 %s318, 2
      %p320 = scmp.lt.s32.totalorder %s319, 3
      %s321 = scalar_select %p320, %s319, 3
      %s322 = smul.u32 2, %s321
      %p323 = scmp.lt.s32.totalorder %s22, 1
      %s324 = scalar_select %p323, %s22, 1
      %p325 = scmp.lt.s32.totalorder %s322, 7
      %s326 = scalar_select %p325, %s322, 7
      %s327 = smul.addr %s324, 8
      %s328 = sadd.s32 %s326, %s327
      %s329 = smul.addr %s328, 4
      %s330 = scalar_lea.vmem %s2, %s329
      %p331 = pneg %p129
      %p332 = pneg %p126
      %p333 = pneg %p150
      %p334 = pneg %p147
      %p335 = pneg %p171
      %p336 = pneg %p168
      %p337 = pneg %p199
      %p338 = pneg %p196
      %s339 = smul.u32 4, %s23
      %p340 = scmp.lt.s32.totalorder %s22, 1
      %s341 = scalar_select %p340, %s22, 1
      %p342 = scmp.lt.s32.totalorder %s339, 7
      %s343 = scalar_select %p342, %s339, 7
      %s344 = smul.addr %s341, 8
      %s345 = sadd.s32 %s343, %s344
      %s346 = smul.addr %s345, 8
      %s347 = scalar_lea.vmem %s5, %s346
      %p348 = scmp.lt.s32.totalorder %s23, 1
      %s349 = scalar_select %p348, %s23, 1
      %s350 = smul.u32 4, %s349
      %p351 = scmp.lt.s32.totalorder %s22, 1
      %s352 = scalar_select %p351, %s22, 1
      %p353 = scmp.lt.s32.totalorder %s350, 7
      %s354 = scalar_select %p353, %s350, 7
      %s355 = smul.addr %s352, 8
      %s356 = sadd.s32 %s354, %s355
      %s357 = smul.addr %s356, 4
      %s358 = scalar_lea.vmem %s0, %s357
      %p359 = scmp.lt.s32.totalorder %s23, 1
      %s360 = scalar_select %p359, %s23, 1
      %s361 = smul.u32 4, %s360
      %s362 = smul.u32 %s23, 2
      %s363 = ssub.s32 %s362, 1
      %p364 = scmp.gt.s32.totalorder %s363, 0
      %s365 = scalar_select %p364, %s363, 0
      %s366 = smul.u32 2, %s365
      %p367 = scmp.lt.s32.totalorder %s22, 1
      %s368 = scalar_select %p367, %s22, 1
      %p369 = scmp.lt.s32.totalorder %s366, 7
      %s370 = scalar_select %p369, %s366, 7
      %s371 = smul.addr %s368, 8
      %s372 = sadd.s32 %s370, %s371
      %s373 = smul.addr %s372, 4
      %s374 = scalar_lea.vmem %s1, %s373
      %s375 = smul.u32 %s23, 2
      %s376 = ssub.s32 %s375, 1
      %p377 = scmp.gt.s32.totalorder %s376, 0
      %s378 = scalar_select %p377, %s376, 0
      %s379 = smul.u32 2, %s378
      %s380 = sadd.s32 %s23, 1
      %s381 = smul.u32 %s380, 2
      %p382 = scmp.lt.s32.totalorder %s381, 3
      %s383 = scalar_select %p382, %s381, 3
      %s384 = smul.u32 2, %s383
      %p385 = scmp.lt.s32.totalorder %s22, 1
      %s386 = scalar_select %p385, %s22, 1
      %p387 = scmp.lt.s32.totalorder %s384, 7
      %s388 = scalar_select %p387, %s384, 7
      %s389 = smul.addr %s386, 8
      %s390 = sadd.s32 %s388, %s389
      %s391 = smul.addr %s390, 4
      %s392 = scalar_lea.vmem %s2, %s391
      %s393 = sadd.s32 %s23, 1
      %s394 = smul.u32 %s393, 2
      %p395 = scmp.lt.s32.totalorder %s394, 3
      %s396 = scalar_select %p395, %s394, 3
      %s397 = smul.u32 2, %s396
      %s398 = smul.u32 4, %s23
      %p399 = scmp.lt.s32.totalorder %s22, 1
      %s400 = scalar_select %p399, %s22, 1
      %p401 = scmp.lt.s32.totalorder %s398, 7
      %s402 = scalar_select %p401, %s398, 7
      %s403 = smul.addr %s400, 8
      %s404 = sadd.s32 %s402, %s403
      %s405 = smul.addr %s404, 8
      %s406 = scalar_lea.vmem %s5, %s405
      %s407 = smul.u32 4, %s23
      %s409 = smul.u32 %s23, 32
      %v410 = vld [vmem:[%s374] sm:$0xf]
      %v411 = vld [vmem:[%s374 + $0x4] sm:$0xf]
      %s412 = ssub.s32 %s409, 16
      %v413 = vlaneseq
      %v414 = vshrl.u32 %v413, 7
      %v415 = vadd.s32 %v414, 8
      %v416 = vstv %s412
      %v417 = vadd.s32 %v416, %v414
      %v418 = vadd.s32 %v416, %v415
      %vm419 = vcmp.ge.s32.totalorder %v417, 0
      %vm420 = vcmp.ge.s32.totalorder %v418, 0
      %vm421 = vcmp.lt.s32.totalorder %v417, 64
      %vm422 = vcmp.lt.s32.totalorder %v418, 64
      %vm423 = vmand %vm419, %vm421
      %vm424 = vmand %vm420, %vm422
      %v425 = vsel %vm423, 1, 0
      %v426 = vsel %vm424, 1, 0
      %vm427 = vcmp.eq.s32.totalorder %v425, 1
      %vm428 = vcmp.eq.s32.totalorder %v426, 1
      %vm429 = vmpackc.low %vm427, %vm427
      %vm430 = vmpackc.low %vm428, %vm428
      %v431 = vsel %vm429, %v410, 0
      %v432 = vsel %vm430, %v411, 0
      %v433 = vunpack.c.l.bf16 %v431
      %v434 = vunpack.c.l.bf16 %v432
      %vm435 = vcmp.ge.f32.partialorder %v433, 0.0
      %vm436 = vcmp.ge.f32.partialorder %v434, 0.0
      %v437 = vmul.f32 %v433, 0.1
      %v438 = vmul.f32 %v434, 0.1
      %v439 = vsel %vm435, %v433, %v437
      %v440 = vsel %vm436, %v434, %v438
      %v441 = vpack.c.bf16 %v439, %v439
      %v442 = vpack.c.bf16 %v440, %v440
      %v443 = vld [vmem:[%s358] sm:$0xf]
      %v444 = vld [vmem:[%s358 + $0x4] sm:$0xf]
      %v445 = vld [vmem:[%s358 + $0x8] sm:$0xf]
      %v446 = vld [vmem:[%s358 + $0xc] sm:$0xf]
      %v447 = vadd.s32 %v414, 16
      %v448 = vadd.s32 %v414, 24
      %v449 = vstv %s409
      %v450 = vadd.s32 %v449, %v414
      %v451 = vadd.s32 %v449, %v415
      %v452 = vadd.s32 %v449, %v447
      %v453 = vadd.s32 %v449, %v448
      %vm454 = vcmp.ge.s32.totalorder %v450, 0
      %vm455 = vcmp.ge.s32.totalorder %v451, 0
      %vm456 = vcmp.ge.s32.totalorder %v452, 0
      %vm457 = vcmp.ge.s32.totalorder %v453, 0
      %vm458 = vcmp.lt.s32.totalorder %v450, 64
      %vm459 = vcmp.lt.s32.totalorder %v451, 64
      %vm460 = vcmp.lt.s32.totalorder %v452, 64
      %vm461 = vcmp.lt.s32.totalorder %v453, 64
      %vm462 = vmand %vm454, %vm458
      %vm463 = vmand %vm455, %vm459
      %vm464 = vmand %vm456, %vm460
      %vm465 = vmand %vm457, %vm461
      %v466 = vsel %vm462, 1, 0
      %v467 = vsel %vm463, 1, 0
      %v468 = vsel %vm464, 1, 0
      %v469 = vsel %vm465, 1, 0
      %vm470 = vcmp.eq.s32.totalorder %v466, 1
      %vm471 = vcmp.eq.s32.totalorder %v467, 1
      %vm472 = vcmp.eq.s32.totalorder %v468, 1
      %vm473 = vcmp.eq.s32.totalorder %v469, 1
      %vm474 = vmpackc.low %vm470, %vm470
      %vm475 = vmpackc.low %vm471, %vm471
      %vm476 = vmpackc.low %vm472, %vm472
      %vm477 = vmpackc.low %vm473, %vm473
      %v478 = vsel %vm474, %v443, 0
      %v479 = vsel %vm475, %v444, 0
      %v480 = vsel %vm476, %v445, 0
      %v481 = vsel %vm477, %v446, 0
      %v482 = vunpack.c.l.bf16 %v478
      %v483 = vunpack.c.l.bf16 %v479
      %v484 = vunpack.c.l.bf16 %v480
      %v485 = vunpack.c.l.bf16 %v481
      %vm486 = vcmp.ge.f32.partialorder %v482, 0.0
      %vm487 = vcmp.ge.f32.partialorder %v483, 0.0
      %vm488 = vcmp.ge.f32.partialorder %v484, 0.0
      %vm489 = vcmp.ge.f32.partialorder %v485, 0.0
      %v490 = vmul.f32 %v482, 0.1
      %v491 = vmul.f32 %v483, 0.1
      %v492 = vmul.f32 %v484, 0.1
      %v493 = vmul.f32 %v485, 0.1
      %v494 = vsel %vm486, %v482, %v490
      %v495 = vsel %vm487, %v483, %v491
      %v496 = vsel %vm488, %v484, %v492
      %v497 = vsel %vm489, %v485, %v493
      %v498 = vpack.c.bf16 %v494, %v494
      %v499 = vpack.c.bf16 %v495, %v495
      %v500 = vpack.c.bf16 %v496, %v496
      %v501 = vpack.c.bf16 %v497, %v497
      %v502 = vld [vmem:[%s392] sm:$0xf]
      %v503 = vld [vmem:[%s392 + $0x4] sm:$0xf]
      %s504 = sadd.s32 %s409, 32
      %v505 = vstv %s504
      %v506 = vadd.s32 %v505, %v414
      %v507 = vadd.s32 %v505, %v415
      %vm508 = vcmp.ge.s32.totalorder %v506, 0
      %vm509 = vcmp.ge.s32.totalorder %v507, 0
      %vm510 = vcmp.lt.s32.totalorder %v506, 64
      %vm511 = vcmp.lt.s32.totalorder %v507, 64
      %vm512 = vmand %vm508, %vm510
      %vm513 = vmand %vm509, %vm511
      %v514 = vsel %vm512, 1, 0
      %v515 = vsel %vm513, 1, 0
      %vm516 = vcmp.eq.s32.totalorder %v514, 1
      %vm517 = vcmp.eq.s32.totalorder %v515, 1
      %vm518 = vmpackc.low %vm516, %vm516
      %vm519 = vmpackc.low %vm517, %vm517
      %v520 = vsel %vm518, %v502, 0
      %v521 = vsel %vm519, %v503, 0
      %v522 = vunpack.c.l.bf16 %v520
      %v523 = vunpack.c.l.bf16 %v521
      %vm524 = vcmp.ge.f32.partialorder %v522, 0.0
      %vm525 = vcmp.ge.f32.partialorder %v523, 0.0
      %v526 = vmul.f32 %v522, 0.1
      %v527 = vmul.f32 %v523, 0.1
      %v528 = vsel %vm524, %v522, %v526
      %v529 = vsel %vm525, %v523, %v527
      %v530 = vpack.c.bf16 %v528, %v528
      %v531 = vpack.c.bf16 %v529, %v529
      %v534 = vunpack.c.l.b16 %v441
      %v535 = vunpack.c.l.b16 %v442
      %v536 = vpack.c.b16 %v535, %v534
      %v541 = vunpack.c.l.b16 %v498
      %v542 = vunpack.c.l.b16 %v499
      %v543 = vunpack.c.l.b16 %v500
      %v544 = vunpack.c.l.b16 %v501
      %v545 = vpack.c.b16 %v542, %v541
      %v546 = vpack.c.b16 %v544, %v543
      %v549 = vunpack.c.l.b16 %v530
      %v550 = vunpack.c.l.b16 %v531
      %v551 = vpack.c.b16 %v550, %v549
      %vm552 = vsmask.f32 7424
      %v554 = vshrl.u32 %v536, 16
      %v556 = vshll.u32 %v536, 16
      %v558 = vrot.slane %v556, 1
      %v559 = vor.u32 %v554, %v558
      %v561 = vshll.u32 %v545, 16
      %v563 = vrot.slane %v561, 1
      %v564 = vsel %vm552, %v559, %v563
      %v565 = vshrl.u32 %v545, 16
      %v567 = vor.u32 %v565, %v563
      %v569 = vshll.u32 %v546, 16
      %v571 = vrot.slane %v569, 1
      %v572 = vsel %vm552, %v567, %v571
      %v573 = vshrl.u32 %v546, 16
      %v575 = vor.u32 %v573, %v571
      %576 = vrot.lane.b32.xlu0 %v564, 8
      %v577 = vpop.permute.xlu0 %576
      %578 = vrot.lane.b32.xlu0 %v572, 8
      %v579 = vpop.permute.xlu0 %578
      %580 = vrot.lane.b32.xlu0 %v575, 8
      %v581 = vpop.permute.xlu0 %580
      %vm582 = vcmask 1046528
      %v583 = vrot.slane %v536, 1
      %v584 = vrot.slane %v545, 1
      %v585 = vsel %vm582, %v583, %v584
      %v586 = vrot.slane %v546, 1
      %v587 = vsel %vm582, %v584, %v586
      %588 = vrot.lane.b32.xlu0 %v585, 16
      %v589 = vpop.permute.xlu0 %588
      %590 = vrot.lane.b32.xlu0 %v587, 16
      %v591 = vpop.permute.xlu0 %590
      %592 = vrot.lane.b32.xlu0 %v586, 16
      %v593 = vpop.permute.xlu0 %592
      %vm594 = vsmask.f32 6400
      %v595 = vrot.slane %v565, 1
      %v596 = vrot.slane %v561, 2
      %v597 = vor.u32 %v595, %v596
      %v598 = vrot.slane %v573, 1
      %v599 = vrot.slane %v569, 2
      %v600 = vor.u32 %v598, %v599
      %v601 = vsel %vm594, %v597, %v600
      %602 = vrot.lane.b32.xlu0 %v597, 24
      %v603 = vpop.permute.xlu0 %602
      %604 = vrot.lane.b32.xlu0 %v601, 24
      %v605 = vpop.permute.xlu0 %604
      %606 = vrot.lane.b32.xlu0 %v600, 24
      %v607 = vpop.permute.xlu0 %606
      %vm608 = vcmask 1045504
      %v609 = vrot.slane %v545, 2
      %v610 = vrot.slane %v546, 2
      %v611 = vsel %vm608, %v609, %v610
      %v612 = vrot.slane %v551, 2
      %v613 = vsel %vm608, %v610, %v612
      %614 = vrot.lane.b32.xlu0 %v609, 32
      %v615 = vpop.permute.xlu0 %614
      %616 = vrot.lane.b32.xlu0 %v611, 32
      %v617 = vpop.permute.xlu0 %616
      %618 = vrot.lane.b32.xlu0 %v613, 32
      %v619 = vpop.permute.xlu0 %618
      %vm620 = vsmask.f32 5376
      %v621 = vrot.slane %v565, 2
      %v622 = vrot.slane %v561, 3
      %v623 = vor.u32 %v621, %v622
      %v624 = vrot.slane %v573, 2
      %v625 = vrot.slane %v569, 3
      %v626 = vor.u32 %v624, %v625
      %v627 = vsel %vm620, %v623, %v626
      %v629 = vshrl.u32 %v551, 16
      %v631 = vrot.slane %v629, 2
      %v632 = vshll.u32 %v551, 16
      %v634 = vrot.slane %v632, 3
      %v635 = vor.u32 %v631, %v634
      %v636 = vsel %vm620, %v626, %v635
      %637 = vrot.lane.b32.xlu0 %v623, 40
      %v638 = vpop.permute.xlu0 %637
      %639 = vrot.lane.b32.xlu0 %v627, 40
      %v640 = vpop.permute.xlu0 %639
      %641 = vrot.lane.b32.xlu0 %v636, 40
      %v642 = vpop.permute.xlu0 %641
      %vm643 = vcmask 1044480
      %v644 = vrot.slane %v545, 3
      %v645 = vrot.slane %v546, 3
      %v646 = vsel %vm643, %v644, %v645
      %v647 = vrot.slane %v551, 3
      %v648 = vsel %vm643, %v645, %v647
      %649 = vrot.lane.b32.xlu0 %v644, 48
      %v650 = vpop.permute.xlu0 %649
      %651 = vrot.lane.b32.xlu0 %v646, 48
      %v652 = vpop.permute.xlu0 %651
      %653 = vrot.lane.b32.xlu0 %v648, 48
      %v654 = vpop.permute.xlu0 %653
      %vm655 = vcmask 64512
      %v657 = vsel %vm655, %v536, %v577
      %v659 = vsel %vm655, %v545, %v579
      %v661 = vsel %vm655, %v546, %v581
      %vm662 = vcmask 130048
      %v664 = vsel %vm662, %v657, %v589
      %v666 = vsel %vm662, %v659, %v591
      %v668 = vsel %vm662, %v661, %v593
      %vm669 = vcmask 195584
      %v671 = vsel %vm669, %v664, %v603
      %v673 = vsel %vm669, %v666, %v605
      %v675 = vsel %vm669, %v668, %v607
      %vm676 = vcmask 261120
      %v678 = vsel %vm676, %v671, %v615
      %v680 = vsel %vm676, %v673, %v617
      %v682 = vsel %vm676, %v675, %v619
      %vm683 = vcmask 326656
      %v685 = vsel %vm683, %v678, %v638
      %v687 = vsel %vm683, %v680, %v640
      %v689 = vsel %vm683, %v682, %v642
      %vm690 = vcmask 392192
      %v692 = vsel %vm690, %v685, %v650
      %v694 = vsel %vm690, %v687, %v652
      %v696 = vsel %vm690, %v689, %v654
      %v697 = vld [vmem:[%s3] sm:$0xf]
      %v698 = vld [vmem:[%s3 + $0x4] sm:$0xf]
      %v699 = vld [vmem:[%s3 + $0x8] sm:$0xf]
      %v700 = vld [vmem:[%s3 + $0xc] sm:$0xf]
      %v701 = vld [vmem:[%s3 + $0x10] sm:$0xf]
      %v702 = vld [vmem:[%s3 + $0x14] sm:$0xf]
      %v703 = vld [vmem:[%s3 + $0x18] sm:$0xf]
      %v704 = vld [vmem:[#allocation2] sm:$0x1]
      %v706 = vperm.slane %v704, 0
      %vm708 = vsmask.f32 1280
      %v709 = vshrl.u32 %v692, 16
      %v711 = vrot.slane %v709, 6
      %v712 = vshll.u32 %v692, 16
      %v714 = vrot.slane %v712, 7
      %v715 = vor.u32 %v711, %v714
      %v716 = vshrl.u32 %v694, 16
      %v718 = vrot.slane %v716, 6
      %v719 = vshll.u32 %v694, 16
      %v721 = vrot.slane %v719, 7
      %v722 = vor.u32 %v718, %v721
      %v723 = vsel %vm708, %v715, %v722
      %v724 = vshrl.u32 %v696, 16
      %v726 = vrot.slane %v724, 6
      %v727 = vshll.u32 %v696, 16
      %v729 = vrot.slane %v727, 7
      %v730 = vor.u32 %v726, %v729
      %v731 = vsel %vm708, %v722, %v730
      %v739 = vunpack.c.l.b16 %v697
      %v740 = vunpack.c.l.b16 %v698
      %v741 = vunpack.c.l.b16 %v699
      %v742 = vunpack.c.l.b16 %v700
      %v743 = vunpack.c.l.b16 %v701
      %v744 = vunpack.c.l.b16 %v702
      %v745 = vunpack.c.l.b16 %v703
      %v746 = vpack.c.b16 %v740, %v739
      %v747 = vpack.c.b16 %v742, %v741
      %v748 = vpack.c.b16 %v744, %v743
      %v749 = vpack.c.b16 %v745, %v745
      %vm753 = vcmask 457728
      %v755 = vsel %vm753, %v723, 0
      %v758 = vsel %vm753, %v731, 0
      %vm760 = vcmask 1043456
      %v762 = vsel %vm760, %v749, 0
      %764 = vmatpush.bf16.msra.mxu0 0
      %765 = vmatpush.bf16.msra.mxu0 0
      %766 = vmatpush.bf16.msra.mxu0 0
      %767 = vmatpush.bf16.msra.mxu0 0
      %768 = vmatpush.bf16.msra.mxu0 %v762
      %769 = vmatpush.bf16.msra.mxu0 %v748
      %770 = vmatpush.bf16.msra.mxu0 %v747
      %771 = vmatpush.bf16.msra.mxu0 %v746
      %772 = vmatmul.bf16.gmra.mxu0 %v755
      %v773 = vpop.f32.mrf.mxu0
      %v774 = vadd.f32 %v706, %v773
      %v775 = vpop.f32.mrf.mxu0
      %v776 = vadd.f32 %v706, %v775
      %777 = vmatmul.bf16.gmra.mxu0 %v758
      %v778 = vpop.f32.mrf.mxu0
      %v779 = vadd.f32 %v706, %v778
      %v780 = vpop.f32.mrf.mxu0
      %v781 = vadd.f32 %v706, %v780
      %782 = vdwg.mxu0
      %v783 = vtanh.pop %v774
      %v784 = vtanh.pop %v776
      %v785 = vtanh.pop %v779
      %v786 = vtanh.pop %v781
      %vm787 = vcmask 7168
      %788 = vst.msk [vmem:[%s406] sm:$0xff] %vm787, %v783
      %789 = vst.msk [vmem:[%s406 + $0x8] sm:$0xff] %vm787, %v784
      %790 = vst.msk [vmem:[%s406 + $0x10] sm:$0xff] %vm787, %v785
      %791 = vst.msk [vmem:[%s406 + $0x18] sm:$0xff] %vm787, %v786
      %s792 = smul.u32 4, %s23
      %p793 = scmp.lt.s32.totalorder %s22, 1
      %s794 = scalar_select %p793, %s22, 1
      %p795 = scmp.lt.s32.totalorder %s792, 7
      %s796 = scalar_select %p795, %s792, 7
      %s797 = smul.addr %s794, 8
      %s798 = sadd.s32 %s796, %s797
      %s799 = smul.addr %s798, 8
      %s800 = scalar_lea.vmem %s5, %s799
      // Predicated region
      $region41: #{hifigan_forward.15} parent=39 // pred_check
        %p801 = pneg %p196
      $region42: #{hifigan_forward.15} parent=39 // pred_check_branch
        %803 = sbr.rel (%p801) target = $region44
      $region43: #{hifigan_forward.15} parent=39 // pred_region
        %s804 = smul.u32 4, %s23
      $region44: #{hifigan_forward.15} parent=39 // pred_fallthru
        _
    $region40: #{hifigan_forward.15} parent=5 // pred_fallthru
      _
    %p805 = scmp.le.s32.totalorder 2, %s13
    // Predicated region
    $region45: #{hifigan_forward.15} parent=5 // pred_check
      %p806 = pneg %p805
    $region46: #{hifigan_forward.15} parent=5 // pred_check_branch
      %808 = sbr.rel (%p806) target = $region48
    $region47: #{hifigan_forward.15} parent=5 // pred_region
      %s809 = ssub.s32 %s13, 2
      // Predicated region
      $region49: #{hifigan_forward.15} parent=47 // pred_check
        %p810 = pneg %p202
      $region50: #{hifigan_forward.15} parent=47 // pred_check_branch
        %812 = sbr.rel (%p810) target = $region52
      $region51: #{hifigan_forward.15} parent=47 // pred_region
        %s813 = smul.u32 4, %s25
        %p814 = scmp.lt.s32.totalorder %s24, 1
        %s815 = scalar_select %p814, %s24, 1
        %p816 = scmp.lt.s32.totalorder %s813, 7
        %s817 = scalar_select %p816, %s813, 7
        %s818 = smul.addr %s815, 8
        %s819 = sadd.s32 %s817, %s818
        %s820 = smul.addr %s819, 8
        %s821 = scalar_lea.vmem %s5, %s820
      $region52: #{hifigan_forward.15} parent=47 // pred_fallthru
        _
    $region48: #{hifigan_forward.15} parent=5 // pred_fallthru
      _
  $region6: #{hifigan_forward.15} parent=0 // loop_footer
    %s17 = sadd.s32 1, %s13
  $region7: #{hifigan_forward.15} parent=0 // loop_footer_branch
    %12 = sbr.rel target = $region3
  $region8: #{hifigan_forward.15} parent=0 // loop_exit
    _

</llo_original>
